<compile_context>
chip_gen: v6e
topology: v6e:2x2x1
jax: 0.10.0
libtpu: 0.0.40
codegen_flags: <defaults>
</compile_context>

<pallas_src>
import functools

import jax
import jax.numpy as jnp
from jax import lax
from jax.experimental import pallas as pl
from jax.experimental.pallas import tpu as pltpu

EPS = 1e-5
LANE = 128


def _round_up(x, m):
    return (x + m - 1) // m * m


def _vmem_limit_bytes():
    # Budget ~3/4 of physical VMEM (v5e/v6e: 128 MiB, v7x: 64 MiB), capped.
    try:
        cap = pltpu.get_tpu_info().vmem_capacity_bytes
    except Exception:
        cap = 64 * 1024 * 1024
    return int(min(cap * 3 // 4, 110 * 1024 * 1024))


def _conv_bn_stats_kernel(x_ref, w_ref, scale_ref, shift_ref, y_ref, stats_ref,
                          *, H, W, apply_act):
    """One strip (one image) of: [BN+ReLU ->] conv3x3 -> partial BN stats.

    x_ref    : (Hp, Wp, CP) bf16  spatially zero-padded input strip
    w_ref    : (9, CP, CP)  bf16  tap-major (ky*3+kx) conv weights
    scale/shift_ref : (1, CP) f32 folded BN of the *previous* layer
    y_ref    : (Hp, Wp, CP) bf16  spatially padded conv output (interior only)
    stats_ref: (8, CP) f32        row 0 = sum(y), row 1 = sum(y*y) (interior)
    """
    Hp, Wp, CP = x_ref.shape

    x = x_ref[...]
    if apply_act:
        # Fused BN+ReLU of the previous layer, restricted to the interior: the
        # conv zero-padding must stay exactly zero *after* the activation
        # (act(0) != 0 in general), and x's halo may hold unwritten garbage.
        row = lax.broadcasted_iota(jnp.int32, (Hp, Wp, CP), 0)
        col = lax.broadcasted_iota(jnp.int32, (Hp, Wp, CP), 1)
        interior = (row >= 1) & (row <= H) & (col >= 1) & (col <= W)
        sc = scale_ref[...].reshape(1, 1, CP)
        sh = shift_ref[...].reshape(1, 1, CP)
        act = jnp.maximum(x.astype(jnp.float32) * sc + sh, 0.0)
        x = jnp.where(interior, act, 0.0).astype(jnp.bfloat16)

    # 3x3 conv = 9 accumulated (H*W, CP) x (CP, CP) MXU matmuls, f32 acc.
    # TODO(synk): if Mosaic lowers the dx-shifted sublane slices as relayout
    # copies, switch to pltpu.roll(shift=+/-1, axis=1) + edge masking.
    acc = jnp.zeros((H * W, CP), jnp.float32)
    t = 0
    for dy in range(3):
        for dx in range(3):
            xs = x[dy:dy + H, dx:dx + W, :].reshape(H * W, CP)
            acc = acc + jnp.dot(xs, w_ref[t],
                                preferred_element_type=jnp.float32)
            t += 1

    # Per-strip partial BatchNorm statistics (finalized in plain JAX outside;
    # rows 2..7 of the stats block are never read).
    stats_ref[0:1, :] = jnp.sum(acc, axis=0, keepdims=True)
    stats_ref[1:2, :] = jnp.sum(acc * acc, axis=0, keepdims=True)

    # Store only the interior (bf16).  The spatial halo of y is left unwritten:
    # the next pass masks it (see `interior` above) / only reads the interior.
    y_ref[1:H + 1, 1:W + 1, :] = acc.reshape(H, W, CP).astype(y_ref.dtype)


def _bn_relu_kernel(y_ref, scale_ref, shift_ref, o_ref, *, H, W):
    """Final folded BN + ReLU on the interior of a padded conv-output strip."""
    CP = y_ref.shape[-1]
    y = y_ref[1:H + 1, 1:W + 1, :].astype(jnp.float32)
    sc = scale_ref[...].reshape(1, 1, CP)
    sh = shift_ref[...].reshape(1, 1, CP)
    o_ref[...] = jnp.maximum(y * sc + sh, 0.0).astype(o_ref.dtype)


def _conv_pass(x_pad, w, scale, shift, H, W, *, apply_act, vmem_limit):
    N, Hp, Wp, CP = x_pad.shape
    kernel = functools.partial(_conv_bn_stats_kernel, H=H, W=W,
                               apply_act=apply_act)
    return pl.pallas_call(
        kernel,
        out_shape=(jax.ShapeDtypeStruct((N, Hp, Wp, CP), jnp.bfloat16),
                   jax.ShapeDtypeStruct((N, 8, CP), jnp.float32)),
        grid=(N,),
        in_specs=[
            pl.BlockSpec((None, Hp, Wp, CP), lambda n: (n, 0, 0, 0)),
            pl.BlockSpec((9, CP, CP), lambda n: (0, 0, 0)),
            pl.BlockSpec((1, CP), lambda n: (0, 0)),
            pl.BlockSpec((1, CP), lambda n: (0, 0)),
        ],
        out_specs=(
            pl.BlockSpec((None, Hp, Wp, CP), lambda n: (n, 0, 0, 0)),
            pl.BlockSpec((None, 8, CP), lambda n: (n, 0, 0)),
        ),
        compiler_params=pltpu.CompilerParams(
            dimension_semantics=("parallel",),
            vmem_limit_bytes=vmem_limit),
    )(x_pad, w, scale, shift)


def _bn_relu_pass(y_pad, scale, shift, H, W, *, vmem_limit):
    N, Hp, Wp, CP = y_pad.shape
    kernel = functools.partial(_bn_relu_kernel, H=H, W=W)
    return pl.pallas_call(
        kernel,
        out_shape=jax.ShapeDtypeStruct((N, H, W, CP), jnp.bfloat16),
        grid=(N,),
        in_specs=[
            pl.BlockSpec((None, Hp, Wp, CP), lambda n: (n, 0, 0, 0)),
            pl.BlockSpec((1, CP), lambda n: (0, 0)),
            pl.BlockSpec((1, CP), lambda n: (0, 0)),
        ],
        out_specs=pl.BlockSpec((None, H, W, CP), lambda n: (n, 0, 0, 0)),
        compiler_params=pltpu.CompilerParams(
            dimension_semantics=("parallel",),
            vmem_limit_bytes=vmem_limit),
    )(y_pad, scale, shift)


def _finalize_bn(stats, gamma_p, beta_p, count):
    """Per-channel scale/shift from per-strip partial sums (tiny, plain JAX)."""
    ssum = jnp.sum(stats[:, 0, :], axis=0)
    ssq = jnp.sum(stats[:, 1, :], axis=0)
    mean = ssum / count
    # One-pass E[y^2] - mean^2 can go slightly negative from f32 cancellation.
    var = jnp.maximum(ssq / count - mean * mean, 0.0)
    scale = gamma_p * lax.rsqrt(var + EPS)
    shift = beta_p - mean * scale
    return scale.reshape(1, -1), shift.reshape(1, -1)


def conv_block_forward(x_nchw, params):
    """(Conv3x3 -> BN(train) -> ReLU) x 2.  Input/output are NCHW like PyTorch."""
    N, cin, H, W = x_nchw.shape
    cout = params["w1"].shape[0]
    # TODO(synk): at genuinely tiny channel counts (like this 4->8 test) the
    # CP=128 lane padding makes the MXU do mostly dead-K work; a taps-into-K
    # packing would fix that.  Production UNet channels are >=128 where this
    # lane-dense layout is the right one.
    CP = _round_up(max(cin, cout, 1), LANE)
    Hp = H + 2
    Wp = _round_up(W + 2, 8)             # sublane-aligned padded width
    vmem_limit = _vmem_limit_bytes()
    count = float(N * H * W)              # BN reduces over (N, H, W)

    # NCHW -> NHWC; zero-pad spatially and pad channels to CP lanes; bf16.
    x = jnp.transpose(x_nchw, (0, 2, 3, 1))
    x = jnp.pad(x, ((0, 0), (1, 1), (1, Wp - W - 1), (0, CP - cin)))
    x = x.astype(jnp.bfloat16)

    def prep_w(w):
        o, i, _, _ = w.shape
        w = jnp.transpose(w, (2, 3, 1, 0)).reshape(9, i, o)   # (ky*3+kx, I, O)
        return jnp.pad(w, ((0, 0), (0, CP - i), (0, CP - o))).astype(jnp.bfloat16)

    def prep_v(v):
        return jnp.pad(v.astype(jnp.float32), (0, CP - v.shape[0]))

    w1, w2 = prep_w(params["w1"]), prep_w(params["w2"])
    g1, be1 = prep_v(params["g1"]), prep_v(params["beta1"])
    g2, be2 = prep_v(params["g2"]), prep_v(params["beta2"])
    # NOTE: conv biases b1/b2 are intentionally NOT passed to the kernels: with
    # training-mode BatchNorm a per-channel bias is exactly cancelled by the
    # batch-mean subtraction.  The pure-JAX reference keeps them; results match.

    ones = jnp.ones((1, CP), jnp.float32)
    zeros = jnp.zeros((1, CP), jnp.float32)

    # TODO(synk): when N is small and H/W are production-sized, additionally
    # tile each image into H row-strips (halo rows via manual make_async_copy)
    # so each strip fits the per-generation VMEM budget; the two-phase BN below
    # already supports that split.

    # Pass 1: conv1 + partial BN1 stats.
    y1, stats1 = _conv_pass(x, w1, ones, zeros, H, W,
                            apply_act=False, vmem_limit=vmem_limit)
    scale1, shift1 = _finalize_bn(stats1, g1, be1, count)

    # Pass 2: fused BN1+ReLU -> conv2 + partial BN2 stats.
    y2, stats2 = _conv_pass(y1, w2, scale1, shift1, H, W,
                            apply_act=True, vmem_limit=vmem_limit)
    scale2, shift2 = _finalize_bn(stats2, g2, be2, count)

    # Pass 3: final BN2+ReLU (kernel emits bf16, lane-dense).
    out = _bn_relu_pass(y2, scale2, shift2, H, W, vmem_limit=vmem_limit)

    # Drop channel padding, NHWC -> NCHW, back to f32 like the PyTorch module.
    return jnp.transpose(out[..., :cout], (0, 3, 1, 2)).astype(jnp.float32)


def conv_block_reference(x_nchw, params):
    """Pure-JAX reference of the PyTorch forward (training-mode BatchNorm)."""
    def conv(x, w, b):
        y = lax.conv_general_dilated(
            x, w, window_strides=(1, 1), padding=((1, 1), (1, 1)),
            dimension_numbers=("NCHW", "OIHW", "NCHW"))
        return y + b.reshape(1, -1, 1, 1)

    def bn_relu(y, g, be):
        mean = jnp.mean(y, axis=(0, 2, 3), keepdims=True)
        var = jnp.mean((y - mean) ** 2, axis=(0, 2, 3), keepdims=True)
        y = (y - mean) / jnp.sqrt(var + EPS)
        y = y * g.reshape(1, -1, 1, 1) + be.reshape(1, -1, 1, 1)
        return jnp.maximum(y, 0.0)

    h = bn_relu(conv(x_nchw, params["w1"], params["b1"]),
                params["g1"], params["beta1"])
    return bn_relu(conv(h, params["w2"], params["b2"]),
                   params["g2"], params["beta2"])


def init_params(key, ch_in, ch_out):
    k1, k2, k3, k4 = jax.random.split(key, 4)
    return {
        # Conv2d weights/biases (biases are used by the reference only: they
        # are mathematically cancelled by training-mode BatchNorm).
        "w1": 0.1 * jax.random.normal(k1, (ch_out, ch_in, 3, 3), jnp.float32),
        "b1": 0.1 * jax.random.normal(k2, (ch_out,), jnp.float32),
        "w2": 0.1 * jax.random.normal(k3, (ch_out, ch_out, 3, 3), jnp.float32),
        "b2": 0.1 * jax.random.normal(k4, (ch_out,), jnp.float32),
        # BatchNorm2d affine params at PyTorch defaults (gamma=1, beta=0).
        "g1": jnp.ones((ch_out,), jnp.float32),
        "beta1": jnp.zeros((ch_out,), jnp.float32),
        "g2": jnp.ones((ch_out,), jnp.float32),
        "beta2": jnp.zeros((ch_out,), jnp.float32),
    }


if __name__ == "__main__":
    key = jax.random.PRNGKey(0)
    kx, kp = jax.random.split(key)

    N, CH_IN, CH_OUT, HW = 2, 4, 8, 16
    x = jax.random.normal(kx, (N, CH_IN, HW, HW), jnp.float32)    # NCHW input
    params = init_params(kp, CH_IN, CH_OUT)

    out = jax.block_until_ready(jax.jit(conv_block_forward)(x, params))
    ref = jax.block_until_ready(conv_block_reference(x, params))

    assert out.shape == (N, CH_OUT, HW, HW), out.shape
    max_err = float(jnp.max(jnp.abs(out - ref)))
    # bf16 MXU matmuls + bf16 intermediates (f32 stats) vs f32 reference.
    assert max_err < 5e-2, f"mismatch vs reference: {max_err}"

    print("KERNEL_OK")
</pallas_src>

<mosaic_0001>
module attributes {stable_mosaic.version = 11 : i64} {
  func.func @_conv_bn_stats_kernel(%arg0: i32, %arg1: memref<1x18x24x128xbf16, #tpu.memory_space<vmem>>, %arg2: memref<9x128x128xbf16, #tpu.memory_space<vmem>>, %arg3: memref<1x128xf32, #tpu.memory_space<vmem>>, %arg4: memref<1x128xf32, #tpu.memory_space<vmem>>, %arg5: memref<1x18x24x128xbf16, #tpu.memory_space<vmem>>, %arg6: memref<1x8x128xf32, #tpu.memory_space<vmem>>) attributes {dimension_semantics = [#tpu.dimension_semantics<parallel>], iteration_bounds = array<i64: 2>, scalar_prefetch = 0 : i64, scratch_operands = 0 : i64, tpu.core_type = #tpu.core_type<tc>, window_params = [{transform_indices = @transform_0, window_bounds = array<i64: 1, 18, 24, 128>}, {pipeline_mode = #tpu.pipeline_mode<synchronous>, transform_indices = @transform_1, window_bounds = array<i64: 9, 128, 128>}, {pipeline_mode = #tpu.pipeline_mode<synchronous>, transform_indices = @transform_2, window_bounds = array<i64: 1, 128>}, {pipeline_mode = #tpu.pipeline_mode<synchronous>, transform_indices = @transform_3, window_bounds = array<i64: 1, 128>}, {transform_indices = @transform_4, window_bounds = array<i64: 1, 18, 24, 128>}, {transform_indices = @transform_5, window_bounds = array<i64: 1, 8, 128>}]} {
    %c0 = arith.constant 0 : index
    %c0_0 = arith.constant 0 : index
    %c0_1 = arith.constant 0 : index
    %c0_2 = arith.constant 0 : index
    %0 = vector.load %arg1[%c0, %c0_0, %c0_1, %c0_2] : memref<1x18x24x128xbf16, #tpu.memory_space<vmem>>, vector<1x18x24x128xbf16>
    %1 = vector.shape_cast %0 : vector<1x18x24x128xbf16> to vector<18x24x128xbf16>
    %cst = arith.constant 0.000000e+00 : f32
    %2 = vector.broadcast %cst : f32 to vector<256x128xf32>
    %3 = vector.extract_strided_slice %1 {offsets = [0, 0, 0], sizes = [16, 16, 128], strides = [1, 1, 1]} : vector<18x24x128xbf16> to vector<16x16x128xbf16>
    %4 = vector.shape_cast %3 : vector<16x16x128xbf16> to vector<256x128xbf16>
    %c0_3 = arith.constant 0 : index
    %c0_4 = arith.constant 0 : index
    %c0_5 = arith.constant 0 : index
    %5 = vector.load %arg2[%c0_3, %c0_4, %c0_5] : memref<9x128x128xbf16, #tpu.memory_space<vmem>>, vector<1x128x128xbf16>
    %6 = vector.shape_cast %5 : vector<1x128x128xbf16> to vector<128x128xbf16>
    %cst_6 = arith.constant dense<0.000000e+00> : vector<256x128xf32>
    %7 = tpu.matmul %4, %6, %cst_6 {dimension_numbers = #tpu.dot_dimension_numbers<[1], [0], [0], [1], [0, 0, 1, 1], [], []>} : vector<256x128xbf16>, vector<128x128xbf16>, vector<256x128xf32> -> vector<256x128xf32>
    %8 = arith.addf %2, %7 : vector<256x128xf32>
    %9 = vector.extract_strided_slice %1 {offsets = [0, 1, 0], sizes = [16, 16, 128], strides = [1, 1, 1]} : vector<18x24x128xbf16> to vector<16x16x128xbf16>
    %10 = vector.shape_cast %9 : vector<16x16x128xbf16> to vector<256x128xbf16>
    %c1 = arith.constant 1 : index
    %c0_7 = arith.constant 0 : index
    %c0_8 = arith.constant 0 : index
    %11 = vector.load %arg2[%c1, %c0_7, %c0_8] : memref<9x128x128xbf16, #tpu.memory_space<vmem>>, vector<1x128x128xbf16>
    %12 = vector.shape_cast %11 : vector<1x128x128xbf16> to vector<128x128xbf16>
    %cst_9 = arith.constant dense<0.000000e+00> : vector<256x128xf32>
    %13 = tpu.matmul %10, %12, %cst_9 {dimension_numbers = #tpu.dot_dimension_numbers<[1], [0], [0], [1], [0, 0, 1, 1], [], []>} : vector<256x128xbf16>, vector<128x128xbf16>, vector<256x128xf32> -> vector<256x128xf32>
    %14 = arith.addf %8, %13 : vector<256x128xf32>
    %15 = vector.extract_strided_slice %1 {offsets = [0, 2, 0], sizes = [16, 16, 128], strides = [1, 1, 1]} : vector<18x24x128xbf16> to vector<16x16x128xbf16>
    %16 = vector.shape_cast %15 : vector<16x16x128xbf16> to vector<256x128xbf16>
    %c2 = arith.constant 2 : index
    %c0_10 = arith.constant 0 : index
    %c0_11 = arith.constant 0 : index
    %17 = vector.load %arg2[%c2, %c0_10, %c0_11] : memref<9x128x128xbf16, #tpu.memory_space<vmem>>, vector<1x128x128xbf16>
    %18 = vector.shape_cast %17 : vector<1x128x128xbf16> to vector<128x128xbf16>
    %cst_12 = arith.constant dense<0.000000e+00> : vector<256x128xf32>
    %19 = tpu.matmul %16, %18, %cst_12 {dimension_numbers = #tpu.dot_dimension_numbers<[1], [0], [0], [1], [0, 0, 1, 1], [], []>} : vector<256x128xbf16>, vector<128x128xbf16>, vector<256x128xf32> -> vector<256x128xf32>
    %20 = arith.addf %14, %19 : vector<256x128xf32>
    %21 = vector.extract_strided_slice %1 {offsets = [1, 0, 0], sizes = [16, 16, 128], strides = [1, 1, 1]} : vector<18x24x128xbf16> to vector<16x16x128xbf16>
    %22 = vector.shape_cast %21 : vector<16x16x128xbf16> to vector<256x128xbf16>
    %c3 = arith.constant 3 : index
    %c0_13 = arith.constant 0 : index
    %c0_14 = arith.constant 0 : index
    %23 = vector.load %arg2[%c3, %c0_13, %c0_14] : memref<9x128x128xbf16, #tpu.memory_space<vmem>>, vector<1x128x128xbf16>
    %24 = vector.shape_cast %23 : vector<1x128x128xbf16> to vector<128x128xbf16>
    %cst_15 = arith.constant dense<0.000000e+00> : vector<256x128xf32>
    %25 = tpu.matmul %22, %24, %cst_15 {dimension_numbers = #tpu.dot_dimension_numbers<[1], [0], [0], [1], [0, 0, 1, 1], [], []>} : vector<256x128xbf16>, vector<128x128xbf16>, vector<256x128xf32> -> vector<256x128xf32>
    %26 = arith.addf %20, %25 : vector<256x128xf32>
    %27 = vector.extract_strided_slice %1 {offsets = [1, 1, 0], sizes = [16, 16, 128], strides = [1, 1, 1]} : vector<18x24x128xbf16> to vector<16x16x128xbf16>
    %28 = vector.shape_cast %27 : vector<16x16x128xbf16> to vector<256x128xbf16>
    %c4 = arith.constant 4 : index
    %c0_16 = arith.constant 0 : index
    %c0_17 = arith.constant 0 : index
    %29 = vector.load %arg2[%c4, %c0_16, %c0_17] : memref<9x128x128xbf16, #tpu.memory_space<vmem>>, vector<1x128x128xbf16>
    %30 = vector.shape_cast %29 : vector<1x128x128xbf16> to vector<128x128xbf16>
    %cst_18 = arith.constant dense<0.000000e+00> : vector<256x128xf32>
    %31 = tpu.matmul %28, %30, %cst_18 {dimension_numbers = #tpu.dot_dimension_numbers<[1], [0], [0], [1], [0, 0, 1, 1], [], []>} : vector<256x128xbf16>, vector<128x128xbf16>, vector<256x128xf32> -> vector<256x128xf32>
    %32 = arith.addf %26, %31 : vector<256x128xf32>
    %33 = vector.extract_strided_slice %1 {offsets = [1, 2, 0], sizes = [16, 16, 128], strides = [1, 1, 1]} : vector<18x24x128xbf16> to vector<16x16x128xbf16>
    %34 = vector.shape_cast %33 : vector<16x16x128xbf16> to vector<256x128xbf16>
    %c5 = arith.constant 5 : index
    %c0_19 = arith.constant 0 : index
    %c0_20 = arith.constant 0 : index
    %35 = vector.load %arg2[%c5, %c0_19, %c0_20] : memref<9x128x128xbf16, #tpu.memory_space<vmem>>, vector<1x128x128xbf16>
    %36 = vector.shape_cast %35 : vector<1x128x128xbf16> to vector<128x128xbf16>
    %cst_21 = arith.constant dense<0.000000e+00> : vector<256x128xf32>
    %37 = tpu.matmul %34, %36, %cst_21 {dimension_numbers = #tpu.dot_dimension_numbers<[1], [0], [0], [1], [0, 0, 1, 1], [], []>} : vector<256x128xbf16>, vector<128x128xbf16>, vector<256x128xf32> -> vector<256x128xf32>
    %38 = arith.addf %32, %37 : vector<256x128xf32>
    %39 = vector.extract_strided_slice %1 {offsets = [2, 0, 0], sizes = [16, 16, 128], strides = [1, 1, 1]} : vector<18x24x128xbf16> to vector<16x16x128xbf16>
    %40 = vector.shape_cast %39 : vector<16x16x128xbf16> to vector<256x128xbf16>
    %c6 = arith.constant 6 : index
    %c0_22 = arith.constant 0 : index
    %c0_23 = arith.constant 0 : index
    %41 = vector.load %arg2[%c6, %c0_22, %c0_23] : memref<9x128x128xbf16, #tpu.memory_space<vmem>>, vector<1x128x128xbf16>
    %42 = vector.shape_cast %41 : vector<1x128x128xbf16> to vector<128x128xbf16>
    %cst_24 = arith.constant dense<0.000000e+00> : vector<256x128xf32>
    %43 = tpu.matmul %40, %42, %cst_24 {dimension_numbers = #tpu.dot_dimension_numbers<[1], [0], [0], [1], [0, 0, 1, 1], [], []>} : vector<256x128xbf16>, vector<128x128xbf16>, vector<256x128xf32> -> vector<256x128xf32>
    %44 = arith.addf %38, %43 : vector<256x128xf32>
    %45 = vector.extract_strided_slice %1 {offsets = [2, 1, 0], sizes = [16, 16, 128], strides = [1, 1, 1]} : vector<18x24x128xbf16> to vector<16x16x128xbf16>
    %46 = vector.shape_cast %45 : vector<16x16x128xbf16> to vector<256x128xbf16>
    %c7 = arith.constant 7 : index
    %c0_25 = arith.constant 0 : index
    %c0_26 = arith.constant 0 : index
    %47 = vector.load %arg2[%c7, %c0_25, %c0_26] : memref<9x128x128xbf16, #tpu.memory_space<vmem>>, vector<1x128x128xbf16>
    %48 = vector.shape_cast %47 : vector<1x128x128xbf16> to vector<128x128xbf16>
    %cst_27 = arith.constant dense<0.000000e+00> : vector<256x128xf32>
    %49 = tpu.matmul %46, %48, %cst_27 {dimension_numbers = #tpu.dot_dimension_numbers<[1], [0], [0], [1], [0, 0, 1, 1], [], []>} : vector<256x128xbf16>, vector<128x128xbf16>, vector<256x128xf32> -> vector<256x128xf32>
    %50 = arith.addf %44, %49 : vector<256x128xf32>
    %51 = vector.extract_strided_slice %1 {offsets = [2, 2, 0], sizes = [16, 16, 128], strides = [1, 1, 1]} : vector<18x24x128xbf16> to vector<16x16x128xbf16>
    %52 = vector.shape_cast %51 : vector<16x16x128xbf16> to vector<256x128xbf16>
    %c8 = arith.constant 8 : index
    %c0_28 = arith.constant 0 : index
    %c0_29 = arith.constant 0 : index
    %53 = vector.load %arg2[%c8, %c0_28, %c0_29] : memref<9x128x128xbf16, #tpu.memory_space<vmem>>, vector<1x128x128xbf16>
    %54 = vector.shape_cast %53 : vector<1x128x128xbf16> to vector<128x128xbf16>
    %cst_30 = arith.constant dense<0.000000e+00> : vector<256x128xf32>
    %55 = tpu.matmul %52, %54, %cst_30 {dimension_numbers = #tpu.dot_dimension_numbers<[1], [0], [0], [1], [0, 0, 1, 1], [], []>} : vector<256x128xbf16>, vector<128x128xbf16>, vector<256x128xf32> -> vector<256x128xf32>
    %56 = arith.addf %50, %55 : vector<256x128xf32>
    %cst_31 = arith.constant dense<0.000000e+00> : vector<128xf32>
    %57 = vector.multi_reduction <add>, %56, %cst_31 [0] : vector<256x128xf32> to vector<128xf32>
    %58 = vector.shape_cast %57 : vector<128xf32> to vector<1x128xf32>
    %c0_32 = arith.constant 0 : index
    %c0_33 = arith.constant 0 : index
    %c0_34 = arith.constant 0 : index
    %59 = vector.load %arg6[%c0_32, %c0_33, %c0_34] : memref<1x8x128xf32, #tpu.memory_space<vmem>>, vector<1x1x128xf32>
    %60 = vector.shape_cast %59 : vector<1x1x128xf32> to vector<1x128xf32>
    %61 = vector.shape_cast %58 : vector<1x128xf32> to vector<1x1x128xf32>
    tpu.vector_store %arg6[%c0_32, %c0_33, %c0_34], %61 {strides = array<i32>} : memref<1x8x128xf32, #tpu.memory_space<vmem>>, vector<1x1x128xf32>,
    %62 = arith.mulf %56, %56 : vector<256x128xf32>
    %cst_35 = arith.constant dense<0.000000e+00> : vector<128xf32>
    %63 = vector.multi_reduction <add>, %62, %cst_35 [0] : vector<256x128xf32> to vector<128xf32>
    %64 = vector.shape_cast %63 : vector<128xf32> to vector<1x128xf32>
    %c0_36 = arith.constant 0 : index
    %c1_37 = arith.constant 1 : index
    %c0_38 = arith.constant 0 : index
    %65 = vector.load %arg6[%c0_36, %c1_37, %c0_38] : memref<1x8x128xf32, #tpu.memory_space<vmem>>, vector<1x1x128xf32>
    %66 = vector.shape_cast %65 : vector<1x1x128xf32> to vector<1x128xf32>
    %67 = vector.shape_cast %64 : vector<1x128xf32> to vector<1x1x128xf32>
    tpu.vector_store %arg6[%c0_36, %c1_37, %c0_38], %67 {strides = array<i32>} : memref<1x8x128xf32, #tpu.memory_space<vmem>>, vector<1x1x128xf32>,
    %68 = vector.shape_cast %56 : vector<256x128xf32> to vector<16x16x128xf32>
    %69 = arith.truncf %68 : vector<16x16x128xf32> to vector<16x16x128xbf16>
    %c0_39 = arith.constant 0 : index
    %c1_40 = arith.constant 1 : index
    %c1_41 = arith.constant 1 : index
    %c0_42 = arith.constant 0 : index
    %70 = vector.load %arg5[%c0_39, %c1_40, %c1_41, %c0_42] : memref<1x18x24x128xbf16, #tpu.memory_space<vmem>>, vector<1x16x16x128xbf16>
    %71 = vector.shape_cast %70 : vector<1x16x16x128xbf16> to vector<16x16x128xbf16>
    %72 = vector.shape_cast %69 : vector<16x16x128xbf16> to vector<1x16x16x128xbf16>
    tpu.vector_store %arg5[%c0_39, %c1_40, %c1_41, %c0_42], %72 {strides = array<i32>} : memref<1x18x24x128xbf16, #tpu.memory_space<vmem>>, vector<1x16x16x128xbf16>,
    return
  }
  func.func @transform_0(%arg0: i32) -> (i32, i32, i32, i32) {
    %c0_i32 = arith.constant 0 : i32
    %c0_i32_0 = arith.constant 0 : i32
    %c0_i32_1 = arith.constant 0 : i32
    %c0_i32_2 = arith.constant 0 : i32
    return %arg0, %c0_i32, %c0_i32_0, %c0_i32_1 : i32, i32, i32, i32
  }
  func.func @transform_1(%arg0: i32) -> (i32, i32, i32) {
    %c0_i32 = arith.constant 0 : i32
    %c0_i32_0 = arith.constant 0 : i32
    %c0_i32_1 = arith.constant 0 : i32
    %c0_i32_2 = arith.constant 0 : i32
    return %c0_i32, %c0_i32_0, %c0_i32_1 : i32, i32, i32
  }
  func.func @transform_2(%arg0: i32) -> (i32, i32) {
    %c0_i32 = arith.constant 0 : i32
    %c0_i32_0 = arith.constant 0 : i32
    %c0_i32_1 = arith.constant 0 : i32
    return %c0_i32, %c0_i32_0 : i32, i32
  }
  func.func @transform_3(%arg0: i32) -> (i32, i32) {
    %c0_i32 = arith.constant 0 : i32
    %c0_i32_0 = arith.constant 0 : i32
    %c0_i32_1 = arith.constant 0 : i32
    return %c0_i32, %c0_i32_0 : i32, i32
  }
  func.func @transform_4(%arg0: i32) -> (i32, i32, i32, i32) {
    %c0_i32 = arith.constant 0 : i32
    %c0_i32_0 = arith.constant 0 : i32
    %c0_i32_1 = arith.constant 0 : i32
    %c0_i32_2 = arith.constant 0 : i32
    return %arg0, %c0_i32, %c0_i32_0, %c0_i32_1 : i32, i32, i32, i32
  }
  func.func @transform_5(%arg0: i32) -> (i32, i32, i32) {
    %c0_i32 = arith.constant 0 : i32
    %c0_i32_0 = arith.constant 0 : i32
    %c0_i32_1 = arith.constant 0 : i32
    return %arg0, %c0_i32, %c0_i32_0 : i32, i32, i32
  }
}

module attributes {stable_mosaic.version = 11 : i64} {
  func.func @_conv_bn_stats_kernel(%arg0: i32, %arg1: memref<1x18x24x128xbf16, #tpu.memory_space<vmem>>, %arg2: memref<9x128x128xbf16, #tpu.memory_space<vmem>>, %arg3: memref<1x128xf32, #tpu.memory_space<vmem>>, %arg4: memref<1x128xf32, #tpu.memory_space<vmem>>, %arg5: memref<1x18x24x128xbf16, #tpu.memory_space<vmem>>, %arg6: memref<1x8x128xf32, #tpu.memory_space<vmem>>) attributes {dimension_semantics = [#tpu.dimension_semantics<parallel>], iteration_bounds = array<i64: 2>, scalar_prefetch = 0 : i64, scratch_operands = 0 : i64, tpu.core_type = #tpu.core_type<tc>, window_params = [{transform_indices = @transform_0, window_bounds = array<i64: 1, 18, 24, 128>}, {pipeline_mode = #tpu.pipeline_mode<synchronous>, transform_indices = @transform_1, window_bounds = array<i64: 9, 128, 128>}, {pipeline_mode = #tpu.pipeline_mode<synchronous>, transform_indices = @transform_2, window_bounds = array<i64: 1, 128>}, {pipeline_mode = #tpu.pipeline_mode<synchronous>, transform_indices = @transform_3, window_bounds = array<i64: 1, 128>}, {transform_indices = @transform_4, window_bounds = array<i64: 1, 18, 24, 128>}, {transform_indices = @transform_5, window_bounds = array<i64: 1, 8, 128>}]} {
    %c0 = arith.constant 0 : index
    %c0_0 = arith.constant 0 : index
    %c0_1 = arith.constant 0 : index
    %c0_2 = arith.constant 0 : index
    %0 = vector.load %arg1[%c0, %c0_0, %c0_1, %c0_2] : memref<1x18x24x128xbf16, #tpu.memory_space<vmem>>, vector<1x18x24x128xbf16>
    %1 = vector.shape_cast %0 : vector<1x18x24x128xbf16> to vector<18x24x128xbf16>
    %2 = tpu.iota {dimensions = array<i32: 0>} : vector<18x24x128xi32>
    %3 = tpu.iota {dimensions = array<i32: 1>} : vector<18x24x128xi32>
    %c1_i32 = arith.constant 1 : i32
    %4 = vector.broadcast %c1_i32 : i32 to vector<18x24x128xi32>
    %5 = arith.cmpi sge, %2, %4 : vector<18x24x128xi32>
    %c16_i32 = arith.constant 16 : i32
    %6 = vector.broadcast %c16_i32 : i32 to vector<18x24x128xi32>
    %7 = arith.cmpi sle, %2, %6 : vector<18x24x128xi32>
    %8 = arith.andi %5, %7 : vector<18x24x128xi1>
    %c1_i32_3 = arith.constant 1 : i32
    %9 = vector.broadcast %c1_i32_3 : i32 to vector<18x24x128xi32>
    %10 = arith.cmpi sge, %3, %9 : vector<18x24x128xi32>
    %11 = arith.andi %8, %10 : vector<18x24x128xi1>
    %c16_i32_4 = arith.constant 16 : i32
    %12 = vector.broadcast %c16_i32_4 : i32 to vector<18x24x128xi32>
    %13 = arith.cmpi sle, %3, %12 : vector<18x24x128xi32>
    %14 = arith.andi %11, %13 : vector<18x24x128xi1>
    %c0_5 = arith.constant 0 : index
    %c0_6 = arith.constant 0 : index
    %15 = vector.load %arg3[%c0_5, %c0_6] : memref<1x128xf32, #tpu.memory_space<vmem>>, vector<1x128xf32>
    %16 = vector.shape_cast %15 : vector<1x128xf32> to vector<1x1x128xf32>
    %c0_7 = arith.constant 0 : index
    %c0_8 = arith.constant 0 : index
    %17 = vector.load %arg4[%c0_7, %c0_8] : memref<1x128xf32, #tpu.memory_space<vmem>>, vector<1x128xf32>
    %18 = vector.shape_cast %17 : vector<1x128xf32> to vector<1x1x128xf32>
    %19 = arith.extf %1 : vector<18x24x128xbf16> to vector<18x24x128xf32>
    %20 = vector.broadcast %16 : vector<1x1x128xf32> to vector<18x24x128xf32>
    %21 = arith.mulf %19, %20 : vector<18x24x128xf32>
    %22 = vector.broadcast %18 : vector<1x1x128xf32> to vector<18x24x128xf32>
    %23 = arith.addf %21, %22 : vector<18x24x128xf32>
    %cst = arith.constant 0.000000e+00 : f32
    %24 = vector.broadcast %cst : f32 to vector<18x24x128xf32>
    %25 = arith.maximumf %23, %24 : vector<18x24x128xf32>
    %cst_9 = arith.constant 0.000000e+00 : f32
    %26 = vector.broadcast %cst_9 : f32 to vector<18x24x128xf32>
    %27 = arith.select %14, %25, %26 : vector<18x24x128xi1>, vector<18x24x128xf32>
    %28 = arith.truncf %27 : vector<18x24x128xf32> to vector<18x24x128xbf16>
    %cst_10 = arith.constant 0.000000e+00 : f32
    %29 = vector.broadcast %cst_10 : f32 to vector<256x128xf32>
    %30 = vector.extract_strided_slice %28 {offsets = [0, 0, 0], sizes = [16, 16, 128], strides = [1, 1, 1]} : vector<18x24x128xbf16> to vector<16x16x128xbf16>
    %31 = vector.shape_cast %30 : vector<16x16x128xbf16> to vector<256x128xbf16>
    %c0_11 = arith.constant 0 : index
    %c0_12 = arith.constant 0 : index
    %c0_13 = arith.constant 0 : index
    %32 = vector.load %arg2[%c0_11, %c0_12, %c0_13] : memref<9x128x128xbf16, #tpu.memory_space<vmem>>, vector<1x128x128xbf16>
    %33 = vector.shape_cast %32 : vector<1x128x128xbf16> to vector<128x128xbf16>
    %cst_14 = arith.constant dense<0.000000e+00> : vector<256x128xf32>
    %34 = tpu.matmul %31, %33, %cst_14 {dimension_numbers = #tpu.dot_dimension_numbers<[1], [0], [0], [1], [0, 0, 1, 1], [], []>} : vector<256x128xbf16>, vector<128x128xbf16>, vector<256x128xf32> -> vector<256x128xf32>
    %35 = arith.addf %29, %34 : vector<256x128xf32>
    %36 = vector.extract_strided_slice %28 {offsets = [0, 1, 0], sizes = [16, 16, 128], strides = [1, 1, 1]} : vector<18x24x128xbf16> to vector<16x16x128xbf16>
    %37 = vector.shape_cast %36 : vector<16x16x128xbf16> to vector<256x128xbf16>
    %c1 = arith.constant 1 : index
    %c0_15 = arith.constant 0 : index
    %c0_16 = arith.constant 0 : index
    %38 = vector.load %arg2[%c1, %c0_15, %c0_16] : memref<9x128x128xbf16, #tpu.memory_space<vmem>>, vector<1x128x128xbf16>
    %39 = vector.shape_cast %38 : vector<1x128x128xbf16> to vector<128x128xbf16>
    %cst_17 = arith.constant dense<0.000000e+00> : vector<256x128xf32>
    %40 = tpu.matmul %37, %39, %cst_17 {dimension_numbers = #tpu.dot_dimension_numbers<[1], [0], [0], [1], [0, 0, 1, 1], [], []>} : vector<256x128xbf16>, vector<128x128xbf16>, vector<256x128xf32> -> vector<256x128xf32>
    %41 = arith.addf %35, %40 : vector<256x128xf32>
    %42 = vector.extract_strided_slice %28 {offsets = [0, 2, 0], sizes = [16, 16, 128], strides = [1, 1, 1]} : vector<18x24x128xbf16> to vector<16x16x128xbf16>
    %43 = vector.shape_cast %42 : vector<16x16x128xbf16> to vector<256x128xbf16>
    %c2 = arith.constant 2 : index
    %c0_18 = arith.constant 0 : index
    %c0_19 = arith.constant 0 : index
    %44 = vector.load %arg2[%c2, %c0_18, %c0_19] : memref<9x128x128xbf16, #tpu.memory_space<vmem>>, vector<1x128x128xbf16>
    %45 = vector.shape_cast %44 : vector<1x128x128xbf16> to vector<128x128xbf16>
    %cst_20 = arith.constant dense<0.000000e+00> : vector<256x128xf32>
    %46 = tpu.matmul %43, %45, %cst_20 {dimension_numbers = #tpu.dot_dimension_numbers<[1], [0], [0], [1], [0, 0, 1, 1], [], []>} : vector<256x128xbf16>, vector<128x128xbf16>, vector<256x128xf32> -> vector<256x128xf32>
    %47 = arith.addf %41, %46 : vector<256x128xf32>
    %48 = vector.extract_strided_slice %28 {offsets = [1, 0, 0], sizes = [16, 16, 128], strides = [1, 1, 1]} : vector<18x24x128xbf16> to vector<16x16x128xbf16>
    %49 = vector.shape_cast %48 : vector<16x16x128xbf16> to vector<256x128xbf16>
    %c3 = arith.constant 3 : index
    %c0_21 = arith.constant 0 : index
    %c0_22 = arith.constant 0 : index
    %50 = vector.load %arg2[%c3, %c0_21, %c0_22] : memref<9x128x128xbf16, #tpu.memory_space<vmem>>, vector<1x128x128xbf16>
    %51 = vector.shape_cast %50 : vector<1x128x128xbf16> to vector<128x128xbf16>
    %cst_23 = arith.constant dense<0.000000e+00> : vector<256x128xf32>
    %52 = tpu.matmul %49, %51, %cst_23 {dimension_numbers = #tpu.dot_dimension_numbers<[1], [0], [0], [1], [0, 0, 1, 1], [], []>} : vector<256x128xbf16>, vector<128x128xbf16>, vector<256x128xf32> -> vector<256x128xf32>
    %53 = arith.addf %47, %52 : vector<256x128xf32>
    %54 = vector.extract_strided_slice %28 {offsets = [1, 1, 0], sizes = [16, 16, 128], strides = [1, 1, 1]} : vector<18x24x128xbf16> to vector<16x16x128xbf16>
    %55 = vector.shape_cast %54 : vector<16x16x128xbf16> to vector<256x128xbf16>
    %c4 = arith.constant 4 : index
    %c0_24 = arith.constant 0 : index
    %c0_25 = arith.constant 0 : index
    %56 = vector.load %arg2[%c4, %c0_24, %c0_25] : memref<9x128x128xbf16, #tpu.memory_space<vmem>>, vector<1x128x128xbf16>
    %57 = vector.shape_cast %56 : vector<1x128x128xbf16> to vector<128x128xbf16>
    %cst_26 = arith.constant dense<0.000000e+00> : vector<256x128xf32>
    %58 = tpu.matmul %55, %57, %cst_26 {dimension_numbers = #tpu.dot_dimension_numbers<[1], [0], [0], [1], [0, 0, 1, 1], [], []>} : vector<256x128xbf16>, vector<128x128xbf16>, vector<256x128xf32> -> vector<256x128xf32>
    %59 = arith.addf %53, %58 : vector<256x128xf32>
    %60 = vector.extract_strided_slice %28 {offsets = [1, 2, 0], sizes = [16, 16, 128], strides = [1, 1, 1]} : vector<18x24x128xbf16> to vector<16x16x128xbf16>
    %61 = vector.shape_cast %60 : vector<16x16x128xbf16> to vector<256x128xbf16>
    %c5 = arith.constant 5 : index
    %c0_27 = arith.constant 0 : index
    %c0_28 = arith.constant 0 : index
    %62 = vector.load %arg2[%c5, %c0_27, %c0_28] : memref<9x128x128xbf16, #tpu.memory_space<vmem>>, vector<1x128x128xbf16>
    %63 = vector.shape_cast %62 : vector<1x128x128xbf16> to vector<128x128xbf16>
    %cst_29 = arith.constant dense<0.000000e+00> : vector<256x128xf32>
    %64 = tpu.matmul %61, %63, %cst_29 {dimension_numbers = #tpu.dot_dimension_numbers<[1], [0], [0], [1], [0, 0, 1, 1], [], []>} : vector<256x128xbf16>, vector<128x128xbf16>, vector<256x128xf32> -> vector<256x128xf32>
    %65 = arith.addf %59, %64 : vector<256x128xf32>
    %66 = vector.extract_strided_slice %28 {offsets = [2, 0, 0], sizes = [16, 16, 128], strides = [1, 1, 1]} : vector<18x24x128xbf16> to vector<16x16x128xbf16>
    %67 = vector.shape_cast %66 : vector<16x16x128xbf16> to vector<256x128xbf16>
    %c6 = arith.constant 6 : index
    %c0_30 = arith.constant 0 : index
    %c0_31 = arith.constant 0 : index
    %68 = vector.load %arg2[%c6, %c0_30, %c0_31] : memref<9x128x128xbf16, #tpu.memory_space<vmem>>, vector<1x128x128xbf16>
    %69 = vector.shape_cast %68 : vector<1x128x128xbf16> to vector<128x128xbf16>
    %cst_32 = arith.constant dense<0.000000e+00> : vector<256x128xf32>
    %70 = tpu.matmul %67, %69, %cst_32 {dimension_numbers = #tpu.dot_dimension_numbers<[1], [0], [0], [1], [0, 0, 1, 1], [], []>} : vector<256x128xbf16>, vector<128x128xbf16>, vector<256x128xf32> -> vector<256x128xf32>
    %71 = arith.addf %65, %70 : vector<256x128xf32>
    %72 = vector.extract_strided_slice %28 {offsets = [2, 1, 0], sizes = [16, 16, 128], strides = [1, 1, 1]} : vector<18x24x128xbf16> to vector<16x16x128xbf16>
    %73 = vector.shape_cast %72 : vector<16x16x128xbf16> to vector<256x128xbf16>
    %c7 = arith.constant 7 : index
    %c0_33 = arith.constant 0 : index
    %c0_34 = arith.constant 0 : index
    %74 = vector.load %arg2[%c7, %c0_33, %c0_34] : memref<9x128x128xbf16, #tpu.memory_space<vmem>>, vector<1x128x128xbf16>
    %75 = vector.shape_cast %74 : vector<1x128x128xbf16> to vector<128x128xbf16>
    %cst_35 = arith.constant dense<0.000000e+00> : vector<256x128xf32>
    %76 = tpu.matmul %73, %75, %cst_35 {dimension_numbers = #tpu.dot_dimension_numbers<[1], [0], [0], [1], [0, 0, 1, 1], [], []>} : vector<256x128xbf16>, vector<128x128xbf16>, vector<256x128xf32> -> vector<256x128xf32>
    %77 = arith.addf %71, %76 : vector<256x128xf32>
    %78 = vector.extract_strided_slice %28 {offsets = [2, 2, 0], sizes = [16, 16, 128], strides = [1, 1, 1]} : vector<18x24x128xbf16> to vector<16x16x128xbf16>
    %79 = vector.shape_cast %78 : vector<16x16x128xbf16> to vector<256x128xbf16>
    %c8 = arith.constant 8 : index
    %c0_36 = arith.constant 0 : index
    %c0_37 = arith.constant 0 : index
    %80 = vector.load %arg2[%c8, %c0_36, %c0_37] : memref<9x128x128xbf16, #tpu.memory_space<vmem>>, vector<1x128x128xbf16>
    %81 = vector.shape_cast %80 : vector<1x128x128xbf16> to vector<128x128xbf16>
    %cst_38 = arith.constant dense<0.000000e+00> : vector<256x128xf32>
    %82 = tpu.matmul %79, %81, %cst_38 {dimension_numbers = #tpu.dot_dimension_numbers<[1], [0], [0], [1], [0, 0, 1, 1], [], []>} : vector<256x128xbf16>, vector<128x128xbf16>, vector<256x128xf32> -> vector<256x128xf32>
    %83 = arith.addf %77, %82 : vector<256x128xf32>
    %cst_39 = arith.constant dense<0.000000e+00> : vector<128xf32>
    %84 = vector.multi_reduction <add>, %83, %cst_39 [0] : vector<256x128xf32> to vector<128xf32>
    %85 = vector.shape_cast %84 : vector<128xf32> to vector<1x128xf32>
    %c0_40 = arith.constant 0 : index
    %c0_41 = arith.constant 0 : index
    %c0_42 = arith.constant 0 : index
    %86 = vector.load %arg6[%c0_40, %c0_41, %c0_42] : memref<1x8x128xf32, #tpu.memory_space<vmem>>, vector<1x1x128xf32>
    %87 = vector.shape_cast %86 : vector<1x1x128xf32> to vector<1x128xf32>
    %88 = vector.shape_cast %85 : vector<1x128xf32> to vector<1x1x128xf32>
    tpu.vector_store %arg6[%c0_40, %c0_41, %c0_42], %88 {strides = array<i32>} : memref<1x8x128xf32, #tpu.memory_space<vmem>>, vector<1x1x128xf32>,
    %89 = arith.mulf %83, %83 : vector<256x128xf32>
    %cst_43 = arith.constant dense<0.000000e+00> : vector<128xf32>
    %90 = vector.multi_reduction <add>, %89, %cst_43 [0] : vector<256x128xf32> to vector<128xf32>
    %91 = vector.shape_cast %90 : vector<128xf32> to vector<1x128xf32>
    %c0_44 = arith.constant 0 : index
    %c1_45 = arith.constant 1 : index
    %c0_46 = arith.constant 0 : index
    %92 = vector.load %arg6[%c0_44, %c1_45, %c0_46] : memref<1x8x128xf32, #tpu.memory_space<vmem>>, vector<1x1x128xf32>
    %93 = vector.shape_cast %92 : vector<1x1x128xf32> to vector<1x128xf32>
    %94 = vector.shape_cast %91 : vector<1x128xf32> to vector<1x1x128xf32>
    tpu.vector_store %arg6[%c0_44, %c1_45, %c0_46], %94 {strides = array<i32>} : memref<1x8x128xf32, #tpu.memory_space<vmem>>, vector<1x1x128xf32>,
    %95 = vector.shape_cast %83 : vector<256x128xf32> to vector<16x16x128xf32>
    %96 = arith.truncf %95 : vector<16x16x128xf32> to vector<16x16x128xbf16>
    %c0_47 = arith.constant 0 : index
    %c1_48 = arith.constant 1 : index
    %c1_49 = arith.constant 1 : index
    %c0_50 = arith.constant 0 : index
    %97 = vector.load %arg5[%c0_47, %c1_48, %c1_49, %c0_50] : memref<1x18x24x128xbf16, #tpu.memory_space<vmem>>, vector<1x16x16x128xbf16>
    %98 = vector.shape_cast %97 : vector<1x16x16x128xbf16> to vector<16x16x128xbf16>
    %99 = vector.shape_cast %96 : vector<16x16x128xbf16> to vector<1x16x16x128xbf16>
    tpu.vector_store %arg5[%c0_47, %c1_48, %c1_49, %c0_50], %99 {strides = array<i32>} : memref<1x18x24x128xbf16, #tpu.memory_space<vmem>>, vector<1x16x16x128xbf16>,
    return
  }
  func.func @transform_0(%arg0: i32) -> (i32, i32, i32, i32) {
    %c0_i32 = arith.constant 0 : i32
    %c0_i32_0 = arith.constant 0 : i32
    %c0_i32_1 = arith.constant 0 : i32
    %c0_i32_2 = arith.constant 0 : i32
    return %arg0, %c0_i32, %c0_i32_0, %c0_i32_1 : i32, i32, i32, i32
  }
  func.func @transform_1(%arg0: i32) -> (i32, i32, i32) {
    %c0_i32 = arith.constant 0 : i32
    %c0_i32_0 = arith.constant 0 : i32
    %c0_i32_1 = arith.constant 0 : i32
    %c0_i32_2 = arith.constant 0 : i32
    return %c0_i32, %c0_i32_0, %c0_i32_1 : i32, i32, i32
  }
  func.func @transform_2(%arg0: i32) -> (i32, i32) {
    %c0_i32 = arith.constant 0 : i32
    %c0_i32_0 = arith.constant 0 : i32
    %c0_i32_1 = arith.constant 0 : i32
    return %c0_i32, %c0_i32_0 : i32, i32
  }
  func.func @transform_3(%arg0: i32) -> (i32, i32) {
    %c0_i32 = arith.constant 0 : i32
    %c0_i32_0 = arith.constant 0 : i32
    %c0_i32_1 = arith.constant 0 : i32
    return %c0_i32, %c0_i32_0 : i32, i32
  }
  func.func @transform_4(%arg0: i32) -> (i32, i32, i32, i32) {
    %c0_i32 = arith.constant 0 : i32
    %c0_i32_0 = arith.constant 0 : i32
    %c0_i32_1 = arith.constant 0 : i32
    %c0_i32_2 = arith.constant 0 : i32
    return %arg0, %c0_i32, %c0_i32_0, %c0_i32_1 : i32, i32, i32, i32
  }
  func.func @transform_5(%arg0: i32) -> (i32, i32, i32) {
    %c0_i32 = arith.constant 0 : i32
    %c0_i32_0 = arith.constant 0 : i32
    %c0_i32_1 = arith.constant 0 : i32
    return %arg0, %c0_i32, %c0_i32_0 : i32, i32, i32
  }
}

module attributes {stable_mosaic.version = 11 : i64} {
  func.func @_bn_relu_kernel(%arg0: i32, %arg1: memref<1x18x24x128xbf16, #tpu.memory_space<vmem>>, %arg2: memref<1x128xf32, #tpu.memory_space<vmem>>, %arg3: memref<1x128xf32, #tpu.memory_space<vmem>>, %arg4: memref<1x16x16x128xbf16, #tpu.memory_space<vmem>>) attributes {dimension_semantics = [#tpu.dimension_semantics<parallel>], iteration_bounds = array<i64: 2>, scalar_prefetch = 0 : i64, scratch_operands = 0 : i64, tpu.core_type = #tpu.core_type<tc>, window_params = [{transform_indices = @transform_0, window_bounds = array<i64: 1, 18, 24, 128>}, {pipeline_mode = #tpu.pipeline_mode<synchronous>, transform_indices = @transform_1, window_bounds = array<i64: 1, 128>}, {pipeline_mode = #tpu.pipeline_mode<synchronous>, transform_indices = @transform_2, window_bounds = array<i64: 1, 128>}, {transform_indices = @transform_3, window_bounds = array<i64: 1, 16, 16, 128>}]} {
    %c0 = arith.constant 0 : index
    %c1 = arith.constant 1 : index
    %c1_0 = arith.constant 1 : index
    %c0_1 = arith.constant 0 : index
    %0 = vector.load %arg1[%c0, %c1, %c1_0, %c0_1] : memref<1x18x24x128xbf16, #tpu.memory_space<vmem>>, vector<1x16x16x128xbf16>
    %1 = vector.shape_cast %0 : vector<1x16x16x128xbf16> to vector<16x16x128xbf16>
    %2 = arith.extf %1 : vector<16x16x128xbf16> to vector<16x16x128xf32>
    %c0_2 = arith.constant 0 : index
    %c0_3 = arith.constant 0 : index
    %3 = vector.load %arg2[%c0_2, %c0_3] : memref<1x128xf32, #tpu.memory_space<vmem>>, vector<1x128xf32>
    %4 = vector.shape_cast %3 : vector<1x128xf32> to vector<1x1x128xf32>
    %c0_4 = arith.constant 0 : index
    %c0_5 = arith.constant 0 : index
    %5 = vector.load %arg3[%c0_4, %c0_5] : memref<1x128xf32, #tpu.memory_space<vmem>>, vector<1x128xf32>
    %6 = vector.shape_cast %5 : vector<1x128xf32> to vector<1x1x128xf32>
    %7 = vector.broadcast %4 : vector<1x1x128xf32> to vector<16x16x128xf32>
    %8 = arith.mulf %2, %7 : vector<16x16x128xf32>
    %9 = vector.broadcast %6 : vector<1x1x128xf32> to vector<16x16x128xf32>
    %10 = arith.addf %8, %9 : vector<16x16x128xf32>
    %cst = arith.constant 0.000000e+00 : f32
    %11 = vector.broadcast %cst : f32 to vector<16x16x128xf32>
    %12 = arith.maximumf %10, %11 : vector<16x16x128xf32>
    %13 = arith.truncf %12 : vector<16x16x128xf32> to vector<16x16x128xbf16>
    %c0_6 = arith.constant 0 : index
    %c0_7 = arith.constant 0 : index
    %c0_8 = arith.constant 0 : index
    %c0_9 = arith.constant 0 : index
    %14 = vector.load %arg4[%c0_6, %c0_7, %c0_8, %c0_9] : memref<1x16x16x128xbf16, #tpu.memory_space<vmem>>, vector<1x16x16x128xbf16>
    %15 = vector.shape_cast %14 : vector<1x16x16x128xbf16> to vector<16x16x128xbf16>
    %16 = vector.shape_cast %13 : vector<16x16x128xbf16> to vector<1x16x16x128xbf16>
    tpu.vector_store %arg4[%c0_6, %c0_7, %c0_8, %c0_9], %16 {strides = array<i32>} : memref<1x16x16x128xbf16, #tpu.memory_space<vmem>>, vector<1x16x16x128xbf16>,
    return
  }
  func.func @transform_0(%arg0: i32) -> (i32, i32, i32, i32) {
    %c0_i32 = arith.constant 0 : i32
    %c0_i32_0 = arith.constant 0 : i32
    %c0_i32_1 = arith.constant 0 : i32
    %c0_i32_2 = arith.constant 0 : i32
    return %arg0, %c0_i32, %c0_i32_0, %c0_i32_1 : i32, i32, i32, i32
  }
  func.func @transform_1(%arg0: i32) -> (i32, i32) {
    %c0_i32 = arith.constant 0 : i32
    %c0_i32_0 = arith.constant 0 : i32
    %c0_i32_1 = arith.constant 0 : i32
    return %c0_i32, %c0_i32_0 : i32, i32
  }
  func.func @transform_2(%arg0: i32) -> (i32, i32) {
    %c0_i32 = arith.constant 0 : i32
    %c0_i32_0 = arith.constant 0 : i32
    %c0_i32_1 = arith.constant 0 : i32
    return %c0_i32, %c0_i32_0 : i32, i32
  }
  func.func @transform_3(%arg0: i32) -> (i32, i32, i32, i32) {
    %c0_i32 = arith.constant 0 : i32
    %c0_i32_0 = arith.constant 0 : i32
    %c0_i32_1 = arith.constant 0 : i32
    %c0_i32_2 = arith.constant 0 : i32
    return %arg0, %c0_i32, %c0_i32_0, %c0_i32_1 : i32, i32, i32, i32
  }
}

</mosaic_0001>

<llo_original>
// kernel: conv_block_forward.5
$region0: #{conv_block_forward.5}
  #allocation0 [shape = 'u32[]', space=smem, size = 0x4, offset = 0x4, fixed_abs, tag = 'smem constant byte address 0x4 - core index']
  #allocation1 [shape = 'u32[144,128]{1,0:T(1,128)}', space=vmem, size = 0x12000, scoped, tag = 'internal scratch']
  %s0 = inlined_call_operand.vmem [shape: bf16[2,18,24,128], index: 0, kind: input, shape index: {}]
  %s1 = inlined_call_operand.vmem [shape: f32[1,128], index: 1, kind: input, shape index: {}]
  %s2 = inlined_call_operand.vmem [shape: f32[1,128], index: 2, kind: input, shape index: {}]
  %s3 = inlined_call_operand.vmem [shape: bf16[2,16,16,128], index: 3, kind: output, shape index: {}]
  %s4 = sld [smem:[#allocation0]]
  $region45: #{conv_block_forward.5} parent=0
    _
  %s6 = ssub.s32 1, %s4
  %s7 = scalar_select 0, %s6, %s4
  loop: start=0, step=1, limit=4
  $region2: #{conv_block_forward.5} parent=0 // loop_pre_header
    _
  $region3: #{conv_block_forward.5} parent=0 // loop_header
    %s9 = sphi 0, %s13
    %p10 = scmp.ge.s32.totalorder %s9, 4
    %s19 = sphi 0, %s21
    %s22 = sphi 0, %s19
    %s23 = sphi 0, %s22
    %s39 = sphi 0, %s23
    %s43 = sphi 0, %s43
    %s45 = sphi 0, %s43
    %s46 = sphi 0, %s45
    %s60 = sphi 0, %s46
    %s64 = sphi 0, %s64
    %s66 = sphi 0, %s64
    %s67 = sphi 0, %s66
    %s81 = sphi 0, %s67
    %s87 = sphi 0, %s89
    %s90 = sphi 0, %s87
    %s91 = sphi 0, %s90
    %s107 = sphi 0, %s91
  $region4: #{conv_block_forward.5} parent=0 // loop_header_branch
    %12 = sbr.rel (%p10) target = $region8
  $region5: #{conv_block_forward.5} parent=0 // loop_body
    %s14 = ssub.s32 %s9, 1
    %s15 = ssub.s32 %s9, 2
    %s16 = sadd.s32 %s9, 1
    %s17 = ssub.s32 %s9, %s16
    %p18 = scmp.eq.s32.totalorder %s17, 0
    %s20 = sadd.s32 %s19, 1
    %s21 = scalar_select %p18, %s19, %s20
    %p24 = pneg %p18
    %p25 = scmp.eq.s32.totalorder %s9, 1
    %p26 = por %p24, %p25
    %p27 = scmp.ne.s32.totalorder %s19, %s22
    %p28 = scmp.eq.s32.totalorder %s9, 0
    %p29 = por %p27, %p28
    %p30 = scmp.ne.s32.totalorder %s19, %s22
    %p31 = scmp.eq.s32.totalorder %s14, 1
    %p32 = por %p30, %p31
    %p33 = scmp.ne.s32.totalorder %s22, %s23
    %p34 = scmp.eq.s32.totalorder %s14, 0
    %p35 = por %p33, %p34
    %p36 = scmp.ne.s32.totalorder %s22, %s23
    %p37 = scmp.eq.s32.totalorder %s15, 1
    %p38 = por %p36, %p37
    %p40 = scmp.ne.s32.totalorder %s23, %s39
    %p41 = scmp.eq.s32.totalorder %s15, 0
    %p42 = por %p40, %p41
    %s44 = sadd.s32 %s43, 1
    %p47 = scmp.eq.s32.totalorder %s9, 1
    %p48 = scmp.ne.s32.totalorder %s43, %s45
    %p49 = scmp.eq.s32.totalorder %s9, 0
    %p50 = por %p48, %p49
    %p51 = scmp.ne.s32.totalorder %s43, %s45
    %p52 = scmp.eq.s32.totalorder %s14, 1
    %p53 = por %p51, %p52
    %p54 = scmp.ne.s32.totalorder %s45, %s46
    %p55 = scmp.eq.s32.totalorder %s14, 0
    %p56 = por %p54, %p55
    %p57 = scmp.ne.s32.totalorder %s45, %s46
    %p58 = scmp.eq.s32.totalorder %s15, 1
    %p59 = por %p57, %p58
    %p61 = scmp.ne.s32.totalorder %s46, %s60
    %p62 = scmp.eq.s32.totalorder %s15, 0
    %p63 = por %p61, %p62
    %s65 = sadd.s32 %s64, 1
    %p68 = scmp.eq.s32.totalorder %s9, 1
    %p69 = scmp.ne.s32.totalorder %s64, %s66
    %p70 = scmp.eq.s32.totalorder %s9, 0
    %p71 = por %p69, %p70
    %p72 = scmp.ne.s32.totalorder %s64, %s66
    %p73 = scmp.eq.s32.totalorder %s14, 1
    %p74 = por %p72, %p73
    %p75 = scmp.ne.s32.totalorder %s66, %s67
    %p76 = scmp.eq.s32.totalorder %s14, 0
    %p77 = por %p75, %p76
    %p78 = scmp.ne.s32.totalorder %s66, %s67
    %p79 = scmp.eq.s32.totalorder %s15, 1
    %p80 = por %p78, %p79
    %p82 = scmp.ne.s32.totalorder %s67, %s81
    %p83 = scmp.eq.s32.totalorder %s15, 0
    %p84 = por %p82, %p83
    %s85 = ssub.s32 %s9, %s16
    %p86 = scmp.eq.s32.totalorder %s85, 0
    %s88 = sadd.s32 %s87, 1
    %s89 = scalar_select %p86, %s87, %s88
    %p92 = pneg %p86
    %p93 = scmp.eq.s32.totalorder %s9, 1
    %p94 = por %p92, %p93
    %p95 = scmp.ne.s32.totalorder %s87, %s90
    %p96 = scmp.eq.s32.totalorder %s9, 0
    %p97 = por %p95, %p96
    %p98 = scmp.ne.s32.totalorder %s87, %s90
    %p99 = scmp.eq.s32.totalorder %s14, 1
    %p100 = por %p98, %p99
    %p101 = scmp.ne.s32.totalorder %s90, %s91
    %p102 = scmp.eq.s32.totalorder %s14, 0
    %p103 = por %p101, %p102
    %p104 = scmp.ne.s32.totalorder %s90, %s91
    %p105 = scmp.eq.s32.totalorder %s15, 1
    %p106 = por %p104, %p105
    %p108 = scmp.ne.s32.totalorder %s91, %s107
    %p109 = scmp.eq.s32.totalorder %s15, 0
    %p110 = por %p108, %p109
    %p111 = scmp.le.s32.totalorder 1, %s9
    %p112 = scmp.lt.s32.totalorder %s9, 3
    %p113 = pnand %p111, %p112
    %p114 = pneg %p113
    // Predicated region
    $region9: #{conv_block_forward.5} parent=5 // pred_check
      _
    $region10: #{conv_block_forward.5} parent=5 // pred_check_branch
      %116 = sbr.rel (%p113) target = $region12
    $region11: #{conv_block_forward.5} parent=5 // pred_region
      %s117 = ssub.s32 %s9, 1
      // Predicated region
      $region13: #{conv_block_forward.5} parent=11 // pred_check
        %p118 = pneg %p56
      $region14: #{conv_block_forward.5} parent=11 // pred_check_branch
        %120 = sbr.rel (%p118) target = $region16
      $region15: #{conv_block_forward.5} parent=11 // pred_region
        _
      $region16: #{conv_block_forward.5} parent=11 // pred_fallthru
        _
      // Predicated region
      $region17: #{conv_block_forward.5} parent=11 // pred_check
        %p121 = pneg %p77
      $region18: #{conv_block_forward.5} parent=11 // pred_check_branch
        %123 = sbr.rel (%p121) target = $region20
      $region19: #{conv_block_forward.5} parent=11 // pred_region
        _
      $region20: #{conv_block_forward.5} parent=11 // pred_fallthru
        _
    $region12: #{conv_block_forward.5} parent=5 // pred_fallthru
      _
    %p124 = scmp.lt.s32.totalorder %s9, 2
    // Predicated region
    $region21: #{conv_block_forward.5} parent=5 // pred_check
      %p125 = pneg %p124
    $region22: #{conv_block_forward.5} parent=5 // pred_check_branch
      %127 = sbr.rel (%p125) target = $region24
    $region23: #{conv_block_forward.5} parent=5 // pred_region
      // Predicated region
      $region25: #{conv_block_forward.5} parent=23 // pred_check
        %p128 = pneg %p29
      $region26: #{conv_block_forward.5} parent=23 // pred_check_branch
        %130 = sbr.rel (%p128) target = $region28
      $region27: #{conv_block_forward.5} parent=23 // pred_region
        %p131 = scmp.lt.s32.totalorder %s9, 1
        %s132 = scalar_select %p131, %s9, 1
        %s133 = smul.addr %s132, 54
        %s134 = smul.addr %s133, 4
        %s135 = scalar_lea.vmem %s0, %s134
      $region28: #{conv_block_forward.5} parent=23 // pred_fallthru
        _
    $region24: #{conv_block_forward.5} parent=5 // pred_fallthru
      _
    %p136 = scmp.le.s32.totalorder 1, %s9
    %p137 = scmp.lt.s32.totalorder %s9, 3
    %p138 = pnand %p136, %p137
    %p139 = pneg %p138
    // Predicated region
    $region29: #{conv_block_forward.5} parent=5 // pred_check
      _
    $region30: #{conv_block_forward.5} parent=5 // pred_check_branch
      %141 = sbr.rel (%p138) target = $region32
    $region31: #{conv_block_forward.5} parent=5 // pred_region
      %s142 = ssub.s32 %s9, 1
      %p143 = scmp.lt.s32.totalorder %s14, 1
      %s144 = scalar_select %p143, %s14, 1
      %s145 = smul.addr %s144, 54
      %s146 = smul.addr %s145, 4
      %s147 = scalar_lea.vmem %s0, %s146
      %p148 = pneg %p35
      %p149 = pneg %p32
      %p150 = pneg %p56
      %p151 = pneg %p53
      %p152 = pneg %p77
      %p153 = pneg %p74
      %p154 = pneg %p103
      %p155 = pneg %p100
      %p156 = scmp.lt.s32.totalorder %s14, 1
      %s157 = scalar_select %p156, %s14, 1
      %s158 = smul.addr %s157, 32
      %s159 = smul.addr %s158, 4
      %s160 = scalar_lea.vmem %s3, %s159
      %p161 = scmp.lt.s32.totalorder %s14, 1
      %s162 = scalar_select %p161, %s14, 1
      %s163 = smul.addr %s162, 54
      %s164 = smul.addr %s163, 4
      %s165 = scalar_lea.vmem %s0, %s164
      %p166 = scmp.lt.s32.totalorder %s14, 1
      %s167 = scalar_select %p166, %s14, 1
      %s168 = smul.addr %s167, 32
      %s169 = smul.addr %s168, 4
      %s170 = scalar_lea.vmem %s3, %s169
      %s171 = scalar_lea.vmem %s165, 12
      %v172 = vld [vmem:[%s171] sm:$0xf]
      %v173 = vld [vmem:[%s171 + $0x4] sm:$0xf]
      %v174 = vld [vmem:[%s171 + $0x8] sm:$0x1]
      %v175 = vld [vmem:[%s171 + $0xc] sm:$0xf]
      %v176 = vld [vmem:[%s171 + $0x10] sm:$0xf]
      %v177 = vld [vmem:[%s171 + $0x14] sm:$0x1]
      %v178 = vld [vmem:[%s171 + $0x18] sm:$0xf]
      %v179 = vld [vmem:[%s171 + $0x1c] sm:$0xf]
      %v180 = vld [vmem:[%s171 + $0x20] sm:$0x1]
      %v181 = vld [vmem:[%s171 + $0x24] sm:$0xf]
      %v182 = vld [vmem:[%s171 + $0x28] sm:$0xf]
      %v183 = vld [vmem:[%s171 + $0x2c] sm:$0x1]
      %v184 = vld [vmem:[%s171 + $0x30] sm:$0xf]
      %v185 = vld [vmem:[%s171 + $0x34] sm:$0xf]
      %v186 = vld [vmem:[%s171 + $0x38] sm:$0x1]
      %v187 = vld [vmem:[%s171 + $0x3c] sm:$0xf]
      %v188 = vld [vmem:[%s171 + $0x40] sm:$0xf]
      %v189 = vld [vmem:[%s171 + $0x44] sm:$0x1]
      %v190 = vld [vmem:[%s171 + $0x48] sm:$0xf]
      %v191 = vld [vmem:[%s171 + $0x4c] sm:$0xf]
      %v192 = vld [vmem:[%s171 + $0x50] sm:$0x1]
      %v193 = vld [vmem:[%s171 + $0x54] sm:$0xf]
      %v194 = vld [vmem:[%s171 + $0x58] sm:$0xf]
      %v195 = vld [vmem:[%s171 + $0x5c] sm:$0x1]
      %v196 = vld [vmem:[%s171 + $0x60] sm:$0xf]
      %v197 = vld [vmem:[%s171 + $0x64] sm:$0xf]
      %v198 = vld [vmem:[%s171 + $0x68] sm:$0x1]
      %v199 = vld [vmem:[%s171 + $0x6c] sm:$0xf]
      %v200 = vld [vmem:[%s171 + $0x70] sm:$0xf]
      %v201 = vld [vmem:[%s171 + $0x74] sm:$0x1]
      %v202 = vld [vmem:[%s171 + $0x78] sm:$0xf]
      %v203 = vld [vmem:[%s171 + $0x7c] sm:$0xf]
      %v204 = vld [vmem:[%s171 + $0x80] sm:$0x1]
      %v205 = vld [vmem:[%s171 + $0x84] sm:$0xf]
      %v206 = vld [vmem:[%s171 + $0x88] sm:$0xf]
      %v207 = vld [vmem:[%s171 + $0x8c] sm:$0x1]
      %v208 = vld [vmem:[%s171 + $0x90] sm:$0xf]
      %v209 = vld [vmem:[%s171 + $0x94] sm:$0xf]
      %v210 = vld [vmem:[%s171 + $0x98] sm:$0x1]
      %v211 = vld [vmem:[%s171 + $0x9c] sm:$0xf]
      %v212 = vld [vmem:[%s171 + $0xa0] sm:$0xf]
      %v213 = vld [vmem:[%s171 + $0xa4] sm:$0x1]
      %v214 = vld [vmem:[%s171 + $0xa8] sm:$0xf]
      %v215 = vld [vmem:[%s171 + $0xac] sm:$0xf]
      %v216 = vld [vmem:[%s171 + $0xb0] sm:$0x1]
      %v217 = vld [vmem:[%s171 + $0xb4] sm:$0xf]
      %v218 = vld [vmem:[%s171 + $0xb8] sm:$0xf]
      %v219 = vld [vmem:[%s171 + $0xbc] sm:$0x1]
      %v220 = vunpack.c.l.bf16 %v172
      %v221 = vunpack.c.l.bf16 %v173
      %v222 = vunpack.c.l.bf16 %v174
      %v223 = vunpack.c.l.bf16 %v175
      %v224 = vunpack.c.l.bf16 %v176
      %v225 = vunpack.c.l.bf16 %v177
      %v226 = vunpack.c.l.bf16 %v178
      %v227 = vunpack.c.l.bf16 %v179
      %v228 = vunpack.c.l.bf16 %v180
      %v229 = vunpack.c.l.bf16 %v181
      %v230 = vunpack.c.l.bf16 %v182
      %v231 = vunpack.c.l.bf16 %v183
      %v232 = vunpack.c.l.bf16 %v184
      %v233 = vunpack.c.l.bf16 %v185
      %v234 = vunpack.c.l.bf16 %v186
      %v235 = vunpack.c.l.bf16 %v187
      %v236 = vunpack.c.l.bf16 %v188
      %v237 = vunpack.c.l.bf16 %v189
      %v238 = vunpack.c.l.bf16 %v190
      %v239 = vunpack.c.l.bf16 %v191
      %v240 = vunpack.c.l.bf16 %v192
      %v241 = vunpack.c.l.bf16 %v193
      %v242 = vunpack.c.l.bf16 %v194
      %v243 = vunpack.c.l.bf16 %v195
      %v244 = vunpack.c.l.bf16 %v196
      %v245 = vunpack.c.l.bf16 %v197
      %v246 = vunpack.c.l.bf16 %v198
      %v247 = vunpack.c.l.bf16 %v199
      %v248 = vunpack.c.l.bf16 %v200
      %v249 = vunpack.c.l.bf16 %v201
      %v250 = vunpack.c.l.bf16 %v202
      %v251 = vunpack.c.l.bf16 %v203
      %v252 = vunpack.c.l.bf16 %v204
      %v253 = vunpack.c.l.bf16 %v205
      %v254 = vunpack.c.l.bf16 %v206
      %v255 = vunpack.c.l.bf16 %v207
      %v256 = vunpack.c.l.bf16 %v208
      %v257 = vunpack.c.l.bf16 %v209
      %v258 = vunpack.c.l.bf16 %v210
      %v259 = vunpack.c.l.bf16 %v211
      %v260 = vunpack.c.l.bf16 %v212
      %v261 = vunpack.c.l.bf16 %v213
      %v262 = vunpack.c.l.bf16 %v214
      %v263 = vunpack.c.l.bf16 %v215
      %v264 = vunpack.c.l.bf16 %v216
      %v265 = vunpack.c.l.bf16 %v217
      %v266 = vunpack.c.l.bf16 %v218
      %v267 = vunpack.c.l.bf16 %v219
      %v268 = vld [vmem:[%s1] sm:$0x1]
      %v269 = vld [vmem:[%s2] sm:$0x1]
      %v271 = vlaneseq
      %v272 = vshrl.u32 %v271, 7
      %v273 = vsub.s32 0, %v272
      %v274 = vrot.slane %v268, %v273
      %v276 = vmul.f32 %v220, %v274
      %v277 = vmul.f32 %v221, %v274
      %v278 = vmul.f32 %v222, %v274
      %v279 = vmul.f32 %v223, %v274
      %v280 = vmul.f32 %v224, %v274
      %v281 = vmul.f32 %v225, %v274
      %v282 = vmul.f32 %v226, %v274
      %v283 = vmul.f32 %v227, %v274
      %v284 = vmul.f32 %v228, %v274
      %v285 = vmul.f32 %v229, %v274
      %v286 = vmul.f32 %v230, %v274
      %v287 = vmul.f32 %v231, %v274
      %v288 = vmul.f32 %v232, %v274
      %v289 = vmul.f32 %v233, %v274
      %v290 = vmul.f32 %v234, %v274
      %v291 = vmul.f32 %v235, %v274
      %v292 = vmul.f32 %v236, %v274
      %v293 = vmul.f32 %v237, %v274
      %v294 = vmul.f32 %v238, %v274
      %v295 = vmul.f32 %v239, %v274
      %v296 = vmul.f32 %v240, %v274
      %v297 = vmul.f32 %v241, %v274
      %v298 = vmul.f32 %v242, %v274
      %v299 = vmul.f32 %v243, %v274
      %v300 = vmul.f32 %v244, %v274
      %v301 = vmul.f32 %v245, %v274
      %v302 = vmul.f32 %v246, %v274
      %v303 = vmul.f32 %v247, %v274
      %v304 = vmul.f32 %v248, %v274
      %v305 = vmul.f32 %v249, %v274
      %v306 = vmul.f32 %v250, %v274
      %v307 = vmul.f32 %v251, %v274
      %v308 = vmul.f32 %v252, %v274
      %v309 = vmul.f32 %v253, %v274
      %v310 = vmul.f32 %v254, %v274
      %v311 = vmul.f32 %v255, %v274
      %v312 = vmul.f32 %v256, %v274
      %v313 = vmul.f32 %v257, %v274
      %v314 = vmul.f32 %v258, %v274
      %v315 = vmul.f32 %v259, %v274
      %v316 = vmul.f32 %v260, %v274
      %v317 = vmul.f32 %v261, %v274
      %v318 = vmul.f32 %v262, %v274
      %v319 = vmul.f32 %v263, %v274
      %v320 = vmul.f32 %v264, %v274
      %v321 = vmul.f32 %v265, %v274
      %v322 = vmul.f32 %v266, %v274
      %v323 = vmul.f32 %v267, %v274
      %v325 = vlaneseq
      %v326 = vshrl.u32 %v325, 7
      %v327 = vsub.s32 0, %v326
      %v328 = vrot.slane %v269, %v327
      %v330 = vadd.f32 %v276, %v328
      %v331 = vadd.f32 %v277, %v328
      %v332 = vadd.f32 %v278, %v328
      %v333 = vadd.f32 %v279, %v328
      %v334 = vadd.f32 %v280, %v328
      %v335 = vadd.f32 %v281, %v328
      %v336 = vadd.f32 %v282, %v328
      %v337 = vadd.f32 %v283, %v328
      %v338 = vadd.f32 %v284, %v328
      %v339 = vadd.f32 %v285, %v328
      %v340 = vadd.f32 %v286, %v328
      %v341 = vadd.f32 %v287, %v328
      %v342 = vadd.f32 %v288, %v328
      %v343 = vadd.f32 %v289, %v328
      %v344 = vadd.f32 %v290, %v328
      %v345 = vadd.f32 %v291, %v328
      %v346 = vadd.f32 %v292, %v328
      %v347 = vadd.f32 %v293, %v328
      %v348 = vadd.f32 %v294, %v328
      %v349 = vadd.f32 %v295, %v328
      %v350 = vadd.f32 %v296, %v328
      %v351 = vadd.f32 %v297, %v328
      %v352 = vadd.f32 %v298, %v328
      %v353 = vadd.f32 %v299, %v328
      %v354 = vadd.f32 %v300, %v328
      %v355 = vadd.f32 %v301, %v328
      %v356 = vadd.f32 %v302, %v328
      %v357 = vadd.f32 %v303, %v328
      %v358 = vadd.f32 %v304, %v328
      %v359 = vadd.f32 %v305, %v328
      %v360 = vadd.f32 %v306, %v328
      %v361 = vadd.f32 %v307, %v328
      %v362 = vadd.f32 %v308, %v328
      %v363 = vadd.f32 %v309, %v328
      %v364 = vadd.f32 %v310, %v328
      %v365 = vadd.f32 %v311, %v328
      %v366 = vadd.f32 %v312, %v328
      %v367 = vadd.f32 %v313, %v328
      %v368 = vadd.f32 %v314, %v328
      %v369 = vadd.f32 %v315, %v328
      %v370 = vadd.f32 %v316, %v328
      %v371 = vadd.f32 %v317, %v328
      %v372 = vadd.f32 %v318, %v328
      %v373 = vadd.f32 %v319, %v328
      %v374 = vadd.f32 %v320, %v328
      %v375 = vadd.f32 %v321, %v328
      %v376 = vadd.f32 %v322, %v328
      %v377 = vadd.f32 %v323, %v328
      %v378 = vmax.f32 %v330, 0.0
      %v379 = vmax.f32 %v331, 0.0
      %v380 = vmax.f32 %v332, 0.0
      %v381 = vmax.f32 %v333, 0.0
      %v382 = vmax.f32 %v334, 0.0
      %v383 = vmax.f32 %v335, 0.0
      %v384 = vmax.f32 %v336, 0.0
      %v385 = vmax.f32 %v337, 0.0
      %v386 = vmax.f32 %v338, 0.0
      %v387 = vmax.f32 %v339, 0.0
      %v388 = vmax.f32 %v340, 0.0
      %v389 = vmax.f32 %v341, 0.0
      %v390 = vmax.f32 %v342, 0.0
      %v391 = vmax.f32 %v343, 0.0
      %v392 = vmax.f32 %v344, 0.0
      %v393 = vmax.f32 %v345, 0.0
      %v394 = vmax.f32 %v346, 0.0
      %v395 = vmax.f32 %v347, 0.0
      %v396 = vmax.f32 %v348, 0.0
      %v397 = vmax.f32 %v349, 0.0
      %v398 = vmax.f32 %v350, 0.0
      %v399 = vmax.f32 %v351, 0.0
      %v400 = vmax.f32 %v352, 0.0
      %v401 = vmax.f32 %v353, 0.0
      %v402 = vmax.f32 %v354, 0.0
      %v403 = vmax.f32 %v355, 0.0
      %v404 = vmax.f32 %v356, 0.0
      %v405 = vmax.f32 %v357, 0.0
      %v406 = vmax.f32 %v358, 0.0
      %v407 = vmax.f32 %v359, 0.0
      %v408 = vmax.f32 %v360, 0.0
      %v409 = vmax.f32 %v361, 0.0
      %v410 = vmax.f32 %v362, 0.0
      %v411 = vmax.f32 %v363, 0.0
      %v412 = vmax.f32 %v364, 0.0
      %v413 = vmax.f32 %v365, 0.0
      %v414 = vmax.f32 %v366, 0.0
      %v415 = vmax.f32 %v367, 0.0
      %v416 = vmax.f32 %v368, 0.0
      %v417 = vmax.f32 %v369, 0.0
      %v418 = vmax.f32 %v370, 0.0
      %v419 = vmax.f32 %v371, 0.0
      %v420 = vmax.f32 %v372, 0.0
      %v421 = vmax.f32 %v373, 0.0
      %v422 = vmax.f32 %v374, 0.0
      %v423 = vmax.f32 %v375, 0.0
      %v424 = vmax.f32 %v376, 0.0
      %v425 = vmax.f32 %v377, 0.0
      %v426 = vpack.c.bf16 %v379, %v378
      %v427 = vpack.c.bf16 %v380, %v380
      %v428 = vpack.c.bf16 %v382, %v381
      %v429 = vpack.c.bf16 %v383, %v383
      %v430 = vpack.c.bf16 %v385, %v384
      %v431 = vpack.c.bf16 %v386, %v386
      %v432 = vpack.c.bf16 %v388, %v387
      %v433 = vpack.c.bf16 %v389, %v389
      %v434 = vpack.c.bf16 %v391, %v390
      %v435 = vpack.c.bf16 %v392, %v392
      %v436 = vpack.c.bf16 %v394, %v393
      %v437 = vpack.c.bf16 %v395, %v395
      %v438 = vpack.c.bf16 %v397, %v396
      %v439 = vpack.c.bf16 %v398, %v398
      %v440 = vpack.c.bf16 %v400, %v399
      %v441 = vpack.c.bf16 %v401, %v401
      %v442 = vpack.c.bf16 %v403, %v402
      %v443 = vpack.c.bf16 %v404, %v404
      %v444 = vpack.c.bf16 %v406, %v405
      %v445 = vpack.c.bf16 %v407, %v407
      %v446 = vpack.c.bf16 %v409, %v408
      %v447 = vpack.c.bf16 %v410, %v410
      %v448 = vpack.c.bf16 %v412, %v411
      %v449 = vpack.c.bf16 %v413, %v413
      %v450 = vpack.c.bf16 %v415, %v414
      %v451 = vpack.c.bf16 %v416, %v416
      %v452 = vpack.c.bf16 %v418, %v417
      %v453 = vpack.c.bf16 %v419, %v419
      %v454 = vpack.c.bf16 %v421, %v420
      %v455 = vpack.c.bf16 %v422, %v422
      %v456 = vpack.c.bf16 %v424, %v423
      %v457 = vpack.c.bf16 %v425, %v425
      %v490 = vunpack.c.l.b16 %v426
      %v491 = vunpack.c.h.b16 %v426
      %v492 = vunpack.c.l.b16 %v427
      %v493 = vunpack.c.l.b16 %v428
      %v494 = vunpack.c.h.b16 %v428
      %v495 = vunpack.c.l.b16 %v429
      %v496 = vunpack.c.l.b16 %v430
      %v497 = vunpack.c.h.b16 %v430
      %v498 = vunpack.c.l.b16 %v431
      %v499 = vunpack.c.l.b16 %v432
      %v500 = vunpack.c.h.b16 %v432
      %v501 = vunpack.c.l.b16 %v433
      %v502 = vunpack.c.l.b16 %v434
      %v503 = vunpack.c.h.b16 %v434
      %v504 = vunpack.c.l.b16 %v435
      %v505 = vunpack.c.l.b16 %v436
      %v506 = vunpack.c.h.b16 %v436
      %v507 = vunpack.c.l.b16 %v437
      %v508 = vunpack.c.l.b16 %v438
      %v509 = vunpack.c.h.b16 %v438
      %v510 = vunpack.c.l.b16 %v439
      %v511 = vunpack.c.l.b16 %v440
      %v512 = vunpack.c.h.b16 %v440
      %v513 = vunpack.c.l.b16 %v441
      %v514 = vunpack.c.l.b16 %v442
      %v515 = vunpack.c.h.b16 %v442
      %v516 = vunpack.c.l.b16 %v443
      %v517 = vunpack.c.l.b16 %v444
      %v518 = vunpack.c.h.b16 %v444
      %v519 = vunpack.c.l.b16 %v445
      %v520 = vunpack.c.l.b16 %v446
      %v521 = vunpack.c.h.b16 %v446
      %v522 = vunpack.c.l.b16 %v447
      %v523 = vunpack.c.l.b16 %v448
      %v524 = vunpack.c.h.b16 %v448
      %v525 = vunpack.c.l.b16 %v449
      %v526 = vunpack.c.l.b16 %v450
      %v527 = vunpack.c.h.b16 %v450
      %v528 = vunpack.c.l.b16 %v451
      %v529 = vunpack.c.l.b16 %v452
      %v530 = vunpack.c.h.b16 %v452
      %v531 = vunpack.c.l.b16 %v453
      %v532 = vunpack.c.l.b16 %v454
      %v533 = vunpack.c.h.b16 %v454
      %v534 = vunpack.c.l.b16 %v455
      %v535 = vunpack.c.l.b16 %v456
      %v536 = vunpack.c.h.b16 %v456
      %v537 = vunpack.c.l.b16 %v457
      %v538 = vpack.c.b16 %v490, %v490
      %v539 = vpack.c.b16 %v491, %v491
      %v540 = vpack.c.b16 %v492, %v492
      %v541 = vpack.c.b16 %v493, %v493
      %v542 = vpack.c.b16 %v494, %v494
      %v543 = vpack.c.b16 %v495, %v495
      %v544 = vpack.c.b16 %v496, %v496
      %v545 = vpack.c.b16 %v497, %v497
      %v546 = vpack.c.b16 %v498, %v498
      %v547 = vpack.c.b16 %v499, %v499
      %v548 = vpack.c.b16 %v500, %v500
      %v549 = vpack.c.b16 %v501, %v501
      %v550 = vpack.c.b16 %v502, %v502
      %v551 = vpack.c.b16 %v503, %v503
      %v552 = vpack.c.b16 %v504, %v504
      %v553 = vpack.c.b16 %v505, %v505
      %v554 = vpack.c.b16 %v506, %v506
      %v555 = vpack.c.b16 %v507, %v507
      %v556 = vpack.c.b16 %v508, %v508
      %v557 = vpack.c.b16 %v509, %v509
      %v558 = vpack.c.b16 %v510, %v510
      %v559 = vpack.c.b16 %v511, %v511
      %v560 = vpack.c.b16 %v512, %v512
      %v561 = vpack.c.b16 %v513, %v513
      %v562 = vpack.c.b16 %v514, %v514
      %v563 = vpack.c.b16 %v515, %v515
      %v564 = vpack.c.b16 %v516, %v516
      %v565 = vpack.c.b16 %v517, %v517
      %v566 = vpack.c.b16 %v518, %v518
      %v567 = vpack.c.b16 %v519, %v519
      %v568 = vpack.c.b16 %v520, %v520
      %v569 = vpack.c.b16 %v521, %v521
      %v570 = vpack.c.b16 %v522, %v522
      %v571 = vpack.c.b16 %v523, %v523
      %v572 = vpack.c.b16 %v524, %v524
      %v573 = vpack.c.b16 %v525, %v525
      %v574 = vpack.c.b16 %v526, %v526
      %v575 = vpack.c.b16 %v527, %v527
      %v576 = vpack.c.b16 %v528, %v528
      %v577 = vpack.c.b16 %v529, %v529
      %v578 = vpack.c.b16 %v530, %v530
      %v579 = vpack.c.b16 %v531, %v531
      %v580 = vpack.c.b16 %v532, %v532
      %v581 = vpack.c.b16 %v533, %v533
      %v582 = vpack.c.b16 %v534, %v534
      %v583 = vpack.c.b16 %v535, %v535
      %v584 = vpack.c.b16 %v536, %v536
      %v585 = vpack.c.b16 %v537, %v537
      %vm586 = vsmask.f32 3328
      %vm587 = vsmask.f32 7440
      %vm588 = vmor %vm586, %vm587
      %v590 = vshrl.u32 %v538, 16
      %v592 = vrot.slane %v590, 4
      %v593 = vshll.u32 %v538, 16
      %v595 = vrot.slane %v593, 5
      %v596 = vor.u32 %v592, %v595
      %v597 = vrot.slane %v596, 4
      %v599 = vshll.u32 %v539, 16
      %v601 = vrot.slane %v599, 5
      %v602 = vsel %vm588, %v597, %v601
      %v603 = vshrl.u32 %v539, 16
      %v605 = vrot.slane %v603, 4
      %v606 = vor.u32 %v605, %v601
      %v607 = vrot.slane %v606, 4
      %v609 = vshll.u32 %v540, 16
      %v611 = vrot.slane %v609, 5
      %v612 = vsel %vm588, %v607, %v611
      %v614 = vshrl.u32 %v541, 16
      %v616 = vrot.slane %v614, 4
      %v617 = vshll.u32 %v541, 16
      %v619 = vrot.slane %v617, 5
      %v620 = vor.u32 %v616, %v619
      %v621 = vrot.slane %v620, 4
      %v623 = vshll.u32 %v542, 16
      %v625 = vrot.slane %v623, 5
      %v626 = vsel %vm588, %v621, %v625
      %v627 = vshrl.u32 %v542, 16
      %v629 = vrot.slane %v627, 4
      %v630 = vor.u32 %v629, %v625
      %v631 = vrot.slane %v630, 4
      %v633 = vshll.u32 %v543, 16
      %v635 = vrot.slane %v633, 5
      %v636 = vsel %vm588, %v631, %v635
      %v638 = vshrl.u32 %v544, 16
      %v640 = vrot.slane %v638, 4
      %v641 = vshll.u32 %v544, 16
      %v643 = vrot.slane %v641, 5
      %v644 = vor.u32 %v640, %v643
      %v645 = vrot.slane %v644, 4
      %v647 = vshll.u32 %v545, 16
      %v649 = vrot.slane %v647, 5
      %v650 = vsel %vm588, %v645, %v649
      %v651 = vshrl.u32 %v545, 16
      %v653 = vrot.slane %v651, 4
      %v654 = vor.u32 %v653, %v649
      %v655 = vrot.slane %v654, 4
      %v657 = vshll.u32 %v546, 16
      %v659 = vrot.slane %v657, 5
      %v660 = vsel %vm588, %v655, %v659
      %v662 = vshrl.u32 %v547, 16
      %v664 = vrot.slane %v662, 4
      %v665 = vshll.u32 %v547, 16
      %v667 = vrot.slane %v665, 5
      %v668 = vor.u32 %v664, %v667
      %v669 = vrot.slane %v668, 4
      %v671 = vshll.u32 %v548, 16
      %v673 = vrot.slane %v671, 5
      %v674 = vsel %vm588, %v669, %v673
      %v675 = vshrl.u32 %v548, 16
      %v677 = vrot.slane %v675, 4
      %v678 = vor.u32 %v677, %v673
      %v679 = vrot.slane %v678, 4
      %v681 = vshll.u32 %v549, 16
      %v683 = vrot.slane %v681, 5
      %v684 = vsel %vm588, %v679, %v683
      %v686 = vshrl.u32 %v550, 16
      %v688 = vrot.slane %v686, 4
      %v689 = vshll.u32 %v550, 16
      %v691 = vrot.slane %v689, 5
      %v692 = vor.u32 %v688, %v691
      %v693 = vrot.slane %v692, 4
      %v695 = vshll.u32 %v551, 16
      %v697 = vrot.slane %v695, 5
      %v698 = vsel %vm588, %v693, %v697
      %v699 = vshrl.u32 %v551, 16
      %v701 = vrot.slane %v699, 4
      %v702 = vor.u32 %v701, %v697
      %v703 = vrot.slane %v702, 4
      %v705 = vshll.u32 %v552, 16
      %v707 = vrot.slane %v705, 5
      %v708 = vsel %vm588, %v703, %v707
      %v710 = vshrl.u32 %v553, 16
      %v712 = vrot.slane %v710, 4
      %v713 = vshll.u32 %v553, 16
      %v715 = vrot.slane %v713, 5
      %v716 = vor.u32 %v712, %v715
      %v717 = vrot.slane %v716, 4
      %v719 = vshll.u32 %v554, 16
      %v721 = vrot.slane %v719, 5
      %v722 = vsel %vm588, %v717, %v721
      %v723 = vshrl.u32 %v554, 16
      %v725 = vrot.slane %v723, 4
      %v726 = vor.u32 %v725, %v721
      %v727 = vrot.slane %v726, 4
      %v729 = vshll.u32 %v555, 16
      %v731 = vrot.slane %v729, 5
      %v732 = vsel %vm588, %v727, %v731
      %v734 = vshrl.u32 %v556, 16
      %v736 = vrot.slane %v734, 4
      %v737 = vshll.u32 %v556, 16
      %v739 = vrot.slane %v737, 5
      %v740 = vor.u32 %v736, %v739
      %v741 = vrot.slane %v740, 4
      %v743 = vshll.u32 %v557, 16
      %v745 = vrot.slane %v743, 5
      %v746 = vsel %vm588, %v741, %v745
      %v747 = vshrl.u32 %v557, 16
      %v749 = vrot.slane %v747, 4
      %v750 = vor.u32 %v749, %v745
      %v751 = vrot.slane %v750, 4
      %v753 = vshll.u32 %v558, 16
      %v755 = vrot.slane %v753, 5
      %v756 = vsel %vm588, %v751, %v755
      %v758 = vshrl.u32 %v559, 16
      %v760 = vrot.slane %v758, 4
      %v761 = vshll.u32 %v559, 16
      %v763 = vrot.slane %v761, 5
      %v764 = vor.u32 %v760, %v763
      %v765 = vrot.slane %v764, 4
      %v767 = vshll.u32 %v560, 16
      %v769 = vrot.slane %v767, 5
      %v770 = vsel %vm588, %v765, %v769
      %v771 = vshrl.u32 %v560, 16
      %v773 = vrot.slane %v771, 4
      %v774 = vor.u32 %v773, %v769
      %v775 = vrot.slane %v774, 4
      %v777 = vshll.u32 %v561, 16
      %v779 = vrot.slane %v777, 5
      %v780 = vsel %vm588, %v775, %v779
      %v782 = vshrl.u32 %v562, 16
      %v784 = vrot.slane %v782, 4
      %v785 = vshll.u32 %v562, 16
      %v787 = vrot.slane %v785, 5
      %v788 = vor.u32 %v784, %v787
      %v789 = vrot.slane %v788, 4
      %v791 = vshll.u32 %v563, 16
      %v793 = vrot.slane %v791, 5
      %v794 = vsel %vm588, %v789, %v793
      %v795 = vshrl.u32 %v563, 16
      %v797 = vrot.slane %v795, 4
      %v798 = vor.u32 %v797, %v793
      %v799 = vrot.slane %v798, 4
      %v801 = vshll.u32 %v564, 16
      %v803 = vrot.slane %v801, 5
      %v804 = vsel %vm588, %v799, %v803
      %v806 = vshrl.u32 %v565, 16
      %v808 = vrot.slane %v806, 4
      %v809 = vshll.u32 %v565, 16
      %v811 = vrot.slane %v809, 5
      %v812 = vor.u32 %v808, %v811
      %v813 = vrot.slane %v812, 4
      %v815 = vshll.u32 %v566, 16
      %v817 = vrot.slane %v815, 5
      %v818 = vsel %vm588, %v813, %v817
      %v819 = vshrl.u32 %v566, 16
      %v821 = vrot.slane %v819, 4
      %v822 = vor.u32 %v821, %v817
      %v823 = vrot.slane %v822, 4
      %v825 = vshll.u32 %v567, 16
      %v827 = vrot.slane %v825, 5
      %v828 = vsel %vm588, %v823, %v827
      %v830 = vshrl.u32 %v568, 16
      %v832 = vrot.slane %v830, 4
      %v833 = vshll.u32 %v568, 16
      %v835 = vrot.slane %v833, 5
      %v836 = vor.u32 %v832, %v835
      %v837 = vrot.slane %v836, 4
      %v839 = vshll.u32 %v569, 16
      %v841 = vrot.slane %v839, 5
      %v842 = vsel %vm588, %v837, %v841
      %v843 = vshrl.u32 %v569, 16
      %v845 = vrot.slane %v843, 4
      %v846 = vor.u32 %v845, %v841
      %v847 = vrot.slane %v846, 4
      %v849 = vshll.u32 %v570, 16
      %v851 = vrot.slane %v849, 5
      %v852 = vsel %vm588, %v847, %v851
      %v854 = vshrl.u32 %v571, 16
      %v856 = vrot.slane %v854, 4
      %v857 = vshll.u32 %v571, 16
      %v859 = vrot.slane %v857, 5
      %v860 = vor.u32 %v856, %v859
      %v861 = vrot.slane %v860, 4
      %v863 = vshll.u32 %v572, 16
      %v865 = vrot.slane %v863, 5
      %v866 = vsel %vm588, %v861, %v865
      %v867 = vshrl.u32 %v572, 16
      %v869 = vrot.slane %v867, 4
      %v870 = vor.u32 %v869, %v865
      %v871 = vrot.slane %v870, 4
      %v873 = vshll.u32 %v573, 16
      %v875 = vrot.slane %v873, 5
      %v876 = vsel %vm588, %v871, %v875
      %v878 = vshrl.u32 %v574, 16
      %v880 = vrot.slane %v878, 4
      %v881 = vshll.u32 %v574, 16
      %v883 = vrot.slane %v881, 5
      %v884 = vor.u32 %v880, %v883
      %v885 = vrot.slane %v884, 4
      %v887 = vshll.u32 %v575, 16
      %v889 = vrot.slane %v887, 5
      %v890 = vsel %vm588, %v885, %v889
      %v891 = vshrl.u32 %v575, 16
      %v893 = vrot.slane %v891, 4
      %v894 = vor.u32 %v893, %v889
      %v895 = vrot.slane %v894, 4
      %v897 = vshll.u32 %v576, 16
      %v899 = vrot.slane %v897, 5
      %v900 = vsel %vm588, %v895, %v899
      %v902 = vshrl.u32 %v577, 16
      %v904 = vrot.slane %v902, 4
      %v905 = vshll.u32 %v577, 16
      %v907 = vrot.slane %v905, 5
      %v908 = vor.u32 %v904, %v907
      %v909 = vrot.slane %v908, 4
      %v911 = vshll.u32 %v578, 16
      %v913 = vrot.slane %v911, 5
      %v914 = vsel %vm588, %v909, %v913
      %v915 = vshrl.u32 %v578, 16
      %v917 = vrot.slane %v915, 4
      %v918 = vor.u32 %v917, %v913
      %v919 = vrot.slane %v918, 4
      %v921 = vshll.u32 %v579, 16
      %v923 = vrot.slane %v921, 5
      %v924 = vsel %vm588, %v919, %v923
      %v926 = vshrl.u32 %v580, 16
      %v928 = vrot.slane %v926, 4
      %v929 = vshll.u32 %v580, 16
      %v931 = vrot.slane %v929, 5
      %v932 = vor.u32 %v928, %v931
      %v933 = vrot.slane %v932, 4
      %v935 = vshll.u32 %v581, 16
      %v937 = vrot.slane %v935, 5
      %v938 = vsel %vm588, %v933, %v937
      %v939 = vshrl.u32 %v581, 16
      %v941 = vrot.slane %v939, 4
      %v942 = vor.u32 %v941, %v937
      %v943 = vrot.slane %v942, 4
      %v945 = vshll.u32 %v582, 16
      %v947 = vrot.slane %v945, 5
      %v948 = vsel %vm588, %v943, %v947
      %v950 = vshrl.u32 %v583, 16
      %v952 = vrot.slane %v950, 4
      %v953 = vshll.u32 %v583, 16
      %v955 = vrot.slane %v953, 5
      %v956 = vor.u32 %v952, %v955
      %v957 = vrot.slane %v956, 4
      %v959 = vshll.u32 %v584, 16
      %v961 = vrot.slane %v959, 5
      %v962 = vsel %vm588, %v957, %v961
      %v963 = vshrl.u32 %v584, 16
      %v965 = vrot.slane %v963, 4
      %v966 = vor.u32 %v965, %v961
      %v967 = vrot.slane %v966, 4
      %v969 = vshll.u32 %v585, 16
      %v971 = vrot.slane %v969, 5
      %v972 = vsel %vm588, %v967, %v971
      %1005 = vst [vmem:[%s170] sm:$0xf] %v602
      %1006 = vst [vmem:[%s170 + $0x4] sm:$0xf] %v612
      %1007 = vst [vmem:[%s170 + $0x8] sm:$0xf] %v626
      %1008 = vst [vmem:[%s170 + $0xc] sm:$0xf] %v636
      %1009 = vst [vmem:[%s170 + $0x10] sm:$0xf] %v650
      %1010 = vst [vmem:[%s170 + $0x14] sm:$0xf] %v660
      %1011 = vst [vmem:[%s170 + $0x18] sm:$0xf] %v674
      %1012 = vst [vmem:[%s170 + $0x1c] sm:$0xf] %v684
      %1013 = vst [vmem:[%s170 + $0x20] sm:$0xf] %v698
      %1014 = vst [vmem:[%s170 + $0x24] sm:$0xf] %v708
      %1015 = vst [vmem:[%s170 + $0x28] sm:$0xf] %v722
      %1016 = vst [vmem:[%s170 + $0x2c] sm:$0xf] %v732
      %1017 = vst [vmem:[%s170 + $0x30] sm:$0xf] %v746
      %1018 = vst [vmem:[%s170 + $0x34] sm:$0xf] %v756
      %1019 = vst [vmem:[%s170 + $0x38] sm:$0xf] %v770
      %1020 = vst [vmem:[%s170 + $0x3c] sm:$0xf] %v780
      %1021 = vst [vmem:[%s170 + $0x40] sm:$0xf] %v794
      %1022 = vst [vmem:[%s170 + $0x44] sm:$0xf] %v804
      %1023 = vst [vmem:[%s170 + $0x48] sm:$0xf] %v818
      %1024 = vst [vmem:[%s170 + $0x4c] sm:$0xf] %v828
      %1025 = vst [vmem:[%s170 + $0x50] sm:$0xf] %v842
      %1026 = vst [vmem:[%s170 + $0x54] sm:$0xf] %v852
      %1027 = vst [vmem:[%s170 + $0x58] sm:$0xf] %v866
      %1028 = vst [vmem:[%s170 + $0x5c] sm:$0xf] %v876
      %1029 = vst [vmem:[%s170 + $0x60] sm:$0xf] %v890
      %1030 = vst [vmem:[%s170 + $0x64] sm:$0xf] %v900
      %1031 = vst [vmem:[%s170 + $0x68] sm:$0xf] %v914
      %1032 = vst [vmem:[%s170 + $0x6c] sm:$0xf] %v924
      %1033 = vst [vmem:[%s170 + $0x70] sm:$0xf] %v938
      %1034 = vst [vmem:[%s170 + $0x74] sm:$0xf] %v948
      %1035 = vst [vmem:[%s170 + $0x78] sm:$0xf] %v962
      %1036 = vst [vmem:[%s170 + $0x7c] sm:$0xf] %v972
      %p1037 = scmp.lt.s32.totalorder %s14, 1
      %s1038 = scalar_select %p1037, %s14, 1
      %s1039 = smul.addr %s1038, 32
      %s1040 = smul.addr %s1039, 4
      %s1041 = scalar_lea.vmem %s3, %s1040
      // Predicated region
      $region33: #{conv_block_forward.5} parent=31 // pred_check
        %p1042 = pneg %p100
      $region34: #{conv_block_forward.5} parent=31 // pred_check_branch
        %1044 = sbr.rel (%p1042) target = $region36
      $region35: #{conv_block_forward.5} parent=31 // pred_region
        _
      $region36: #{conv_block_forward.5} parent=31 // pred_fallthru
        _
    $region32: #{conv_block_forward.5} parent=5 // pred_fallthru
      _
    %p1045 = scmp.le.s32.totalorder 2, %s9
    // Predicated region
    $region37: #{conv_block_forward.5} parent=5 // pred_check
      %p1046 = pneg %p1045
    $region38: #{conv_block_forward.5} parent=5 // pred_check_branch
      %1048 = sbr.rel (%p1046) target = $region40
    $region39: #{conv_block_forward.5} parent=5 // pred_region
      %s1049 = ssub.s32 %s9, 2
      // Predicated region
      $region41: #{conv_block_forward.5} parent=39 // pred_check
        %p1050 = pneg %p106
      $region42: #{conv_block_forward.5} parent=39 // pred_check_branch
        %1052 = sbr.rel (%p1050) target = $region44
      $region43: #{conv_block_forward.5} parent=39 // pred_region
        %p1053 = scmp.lt.s32.totalorder %s15, 1
        %s1054 = scalar_select %p1053, %s15, 1
        %s1055 = smul.addr %s1054, 32
        %s1056 = smul.addr %s1055, 4
        %s1057 = scalar_lea.vmem %s3, %s1056
      $region44: #{conv_block_forward.5} parent=39 // pred_fallthru
        _
    $region40: #{conv_block_forward.5} parent=5 // pred_fallthru
      _
  $region6: #{conv_block_forward.5} parent=0 // loop_footer
    %s13 = sadd.s32 1, %s9
  $region7: #{conv_block_forward.5} parent=0 // loop_footer_branch
    %8 = sbr.rel target = $region3
  $region8: #{conv_block_forward.5} parent=0 // loop_exit
    _

// kernel: conv_block_forward.4
$region0: #{conv_block_forward.4}
  #allocation0 [shape = 'u32[]', space=smem, size = 0x4, offset = 0x4, fixed_abs, tag = 'smem constant byte address 0x4 - core index']
  #allocation1 [shape = 'u32[144,128]{1,0:T(1,128)}', space=vmem, size = 0x12000, scoped, tag = 'internal scratch']
  %s0 = inlined_call_operand.vmem [shape: bf16[2,18,24,128], index: 0, kind: input, shape index: {}]
  %s1 = inlined_call_operand.vmem [shape: bf16[9,128,128], index: 1, kind: input, shape index: {}]
  %s2 = inlined_call_operand.vmem [shape: f32[1,128], index: 2, kind: input, shape index: {}]
  %s3 = inlined_call_operand.vmem [shape: f32[1,128], index: 3, kind: input, shape index: {}]
  %s4 = inlined_call_operand.vmem [shape: bf16[2,18,24,128], index: 4, kind: output, shape index: {0}]
  %s5 = inlined_call_operand.vmem [shape: f32[2,8,128], index: 5, kind: output, shape index: {1}]
  %6 = xla_tuple %s4, %s5
  %s7 = sld [smem:[#allocation0]]
  $region57: #{conv_block_forward.4} parent=0
    _
  %s9 = ssub.s32 1, %s7
  %s10 = scalar_select 0, %s9, %s7
  loop: start=0, step=1, limit=4
  $region2: #{conv_block_forward.4} parent=0 // loop_pre_header
    _
  $region3: #{conv_block_forward.4} parent=0 // loop_header
    %s12 = sphi 0, %s16
    %p13 = scmp.ge.s32.totalorder %s12, 4
    %s22 = sphi 0, %s24
    %s25 = sphi 0, %s22
    %s26 = sphi 0, %s25
    %s42 = sphi 0, %s26
    %s46 = sphi 0, %s46
    %s48 = sphi 0, %s46
    %s49 = sphi 0, %s48
    %s63 = sphi 0, %s49
    %s67 = sphi 0, %s67
    %s69 = sphi 0, %s67
    %s70 = sphi 0, %s69
    %s84 = sphi 0, %s70
    %s88 = sphi 0, %s88
    %s90 = sphi 0, %s88
    %s91 = sphi 0, %s90
    %s105 = sphi 0, %s91
    %s111 = sphi 0, %s113
    %s114 = sphi 0, %s111
    %s115 = sphi 0, %s114
    %s131 = sphi 0, %s115
    %s137 = sphi 0, %s139
    %s140 = sphi 0, %s137
    %s141 = sphi 0, %s140
    %s157 = sphi 0, %s141
  $region4: #{conv_block_forward.4} parent=0 // loop_header_branch
    %15 = sbr.rel (%p13) target = $region8
  $region5: #{conv_block_forward.4} parent=0 // loop_body
    %s17 = ssub.s32 %s12, 1
    %s18 = ssub.s32 %s12, 2
    %s19 = sadd.s32 %s12, 1
    %s20 = ssub.s32 %s12, %s19
    %p21 = scmp.eq.s32.totalorder %s20, 0
    %s23 = sadd.s32 %s22, 1
    %s24 = scalar_select %p21, %s22, %s23
    %p27 = pneg %p21
    %p28 = scmp.eq.s32.totalorder %s12, 1
    %p29 = por %p27, %p28
    %p30 = scmp.ne.s32.totalorder %s22, %s25
    %p31 = scmp.eq.s32.totalorder %s12, 0
    %p32 = por %p30, %p31
    %p33 = scmp.ne.s32.totalorder %s22, %s25
    %p34 = scmp.eq.s32.totalorder %s17, 1
    %p35 = por %p33, %p34
    %p36 = scmp.ne.s32.totalorder %s25, %s26
    %p37 = scmp.eq.s32.totalorder %s17, 0
    %p38 = por %p36, %p37
    %p39 = scmp.ne.s32.totalorder %s25, %s26
    %p40 = scmp.eq.s32.totalorder %s18, 1
    %p41 = por %p39, %p40
    %p43 = scmp.ne.s32.totalorder %s26, %s42
    %p44 = scmp.eq.s32.totalorder %s18, 0
    %p45 = por %p43, %p44
    %s47 = sadd.s32 %s46, 1
    %p50 = scmp.eq.s32.totalorder %s12, 1
    %p51 = scmp.ne.s32.totalorder %s46, %s48
    %p52 = scmp.eq.s32.totalorder %s12, 0
    %p53 = por %p51, %p52
    %p54 = scmp.ne.s32.totalorder %s46, %s48
    %p55 = scmp.eq.s32.totalorder %s17, 1
    %p56 = por %p54, %p55
    %p57 = scmp.ne.s32.totalorder %s48, %s49
    %p58 = scmp.eq.s32.totalorder %s17, 0
    %p59 = por %p57, %p58
    %p60 = scmp.ne.s32.totalorder %s48, %s49
    %p61 = scmp.eq.s32.totalorder %s18, 1
    %p62 = por %p60, %p61
    %p64 = scmp.ne.s32.totalorder %s49, %s63
    %p65 = scmp.eq.s32.totalorder %s18, 0
    %p66 = por %p64, %p65
    %s68 = sadd.s32 %s67, 1
    %p71 = scmp.eq.s32.totalorder %s12, 1
    %p72 = scmp.ne.s32.totalorder %s67, %s69
    %p73 = scmp.eq.s32.totalorder %s12, 0
    %p74 = por %p72, %p73
    %p75 = scmp.ne.s32.totalorder %s67, %s69
    %p76 = scmp.eq.s32.totalorder %s17, 1
    %p77 = por %p75, %p76
    %p78 = scmp.ne.s32.totalorder %s69, %s70
    %p79 = scmp.eq.s32.totalorder %s17, 0
    %p80 = por %p78, %p79
    %p81 = scmp.ne.s32.totalorder %s69, %s70
    %p82 = scmp.eq.s32.totalorder %s18, 1
    %p83 = por %p81, %p82
    %p85 = scmp.ne.s32.totalorder %s70, %s84
    %p86 = scmp.eq.s32.totalorder %s18, 0
    %p87 = por %p85, %p86
    %s89 = sadd.s32 %s88, 1
    %p92 = scmp.eq.s32.totalorder %s12, 1
    %p93 = scmp.ne.s32.totalorder %s88, %s90
    %p94 = scmp.eq.s32.totalorder %s12, 0
    %p95 = por %p93, %p94
    %p96 = scmp.ne.s32.totalorder %s88, %s90
    %p97 = scmp.eq.s32.totalorder %s17, 1
    %p98 = por %p96, %p97
    %p99 = scmp.ne.s32.totalorder %s90, %s91
    %p100 = scmp.eq.s32.totalorder %s17, 0
    %p101 = por %p99, %p100
    %p102 = scmp.ne.s32.totalorder %s90, %s91
    %p103 = scmp.eq.s32.totalorder %s18, 1
    %p104 = por %p102, %p103
    %p106 = scmp.ne.s32.totalorder %s91, %s105
    %p107 = scmp.eq.s32.totalorder %s18, 0
    %p108 = por %p106, %p107
    %s109 = ssub.s32 %s12, %s19
    %p110 = scmp.eq.s32.totalorder %s109, 0
    %s112 = sadd.s32 %s111, 1
    %s113 = scalar_select %p110, %s111, %s112
    %p116 = pneg %p110
    %p117 = scmp.eq.s32.totalorder %s12, 1
    %p118 = por %p116, %p117
    %p119 = scmp.ne.s32.totalorder %s111, %s114
    %p120 = scmp.eq.s32.totalorder %s12, 0
    %p121 = por %p119, %p120
    %p122 = scmp.ne.s32.totalorder %s111, %s114
    %p123 = scmp.eq.s32.totalorder %s17, 1
    %p124 = por %p122, %p123
    %p125 = scmp.ne.s32.totalorder %s114, %s115
    %p126 = scmp.eq.s32.totalorder %s17, 0
    %p127 = por %p125, %p126
    %p128 = scmp.ne.s32.totalorder %s114, %s115
    %p129 = scmp.eq.s32.totalorder %s18, 1
    %p130 = por %p128, %p129
    %p132 = scmp.ne.s32.totalorder %s115, %s131
    %p133 = scmp.eq.s32.totalorder %s18, 0
    %p134 = por %p132, %p133
    %s135 = ssub.s32 %s12, %s19
    %p136 = scmp.eq.s32.totalorder %s135, 0
    %s138 = sadd.s32 %s137, 1
    %s139 = scalar_select %p136, %s137, %s138
    %p142 = pneg %p136
    %p143 = scmp.eq.s32.totalorder %s12, 1
    %p144 = por %p142, %p143
    %p145 = scmp.ne.s32.totalorder %s137, %s140
    %p146 = scmp.eq.s32.totalorder %s12, 0
    %p147 = por %p145, %p146
    %p148 = scmp.ne.s32.totalorder %s137, %s140
    %p149 = scmp.eq.s32.totalorder %s17, 1
    %p150 = por %p148, %p149
    %p151 = scmp.ne.s32.totalorder %s140, %s141
    %p152 = scmp.eq.s32.totalorder %s17, 0
    %p153 = por %p151, %p152
    %p154 = scmp.ne.s32.totalorder %s140, %s141
    %p155 = scmp.eq.s32.totalorder %s18, 1
    %p156 = por %p154, %p155
    %p158 = scmp.ne.s32.totalorder %s141, %s157
    %p159 = scmp.eq.s32.totalorder %s18, 0
    %p160 = por %p158, %p159
    %p161 = scmp.le.s32.totalorder 1, %s12
    %p162 = scmp.lt.s32.totalorder %s12, 3
    %p163 = pnand %p161, %p162
    %p164 = pneg %p163
    // Predicated region
    $region9: #{conv_block_forward.4} parent=5 // pred_check
      _
    $region10: #{conv_block_forward.4} parent=5 // pred_check_branch
      %166 = sbr.rel (%p163) target = $region12
    $region11: #{conv_block_forward.4} parent=5 // pred_region
      %s167 = ssub.s32 %s12, 1
      // Predicated region
      $region13: #{conv_block_forward.4} parent=11 // pred_check
        %p168 = pneg %p59
      $region14: #{conv_block_forward.4} parent=11 // pred_check_branch
        %170 = sbr.rel (%p168) target = $region16
      $region15: #{conv_block_forward.4} parent=11 // pred_region
        _
      $region16: #{conv_block_forward.4} parent=11 // pred_fallthru
        _
      // Predicated region
      $region17: #{conv_block_forward.4} parent=11 // pred_check
        %p171 = pneg %p80
      $region18: #{conv_block_forward.4} parent=11 // pred_check_branch
        %173 = sbr.rel (%p171) target = $region20
      $region19: #{conv_block_forward.4} parent=11 // pred_region
        _
      $region20: #{conv_block_forward.4} parent=11 // pred_fallthru
        _
      // Predicated region
      $region21: #{conv_block_forward.4} parent=11 // pred_check
        %p174 = pneg %p101
      $region22: #{conv_block_forward.4} parent=11 // pred_check_branch
        %176 = sbr.rel (%p174) target = $region24
      $region23: #{conv_block_forward.4} parent=11 // pred_region
        _
      $region24: #{conv_block_forward.4} parent=11 // pred_fallthru
        _
    $region12: #{conv_block_forward.4} parent=5 // pred_fallthru
      _
    %p177 = scmp.lt.s32.totalorder %s12, 2
    // Predicated region
    $region25: #{conv_block_forward.4} parent=5 // pred_check
      %p178 = pneg %p177
    $region26: #{conv_block_forward.4} parent=5 // pred_check_branch
      %180 = sbr.rel (%p178) target = $region28
    $region27: #{conv_block_forward.4} parent=5 // pred_region
      // Predicated region
      $region29: #{conv_block_forward.4} parent=27 // pred_check
        %p181 = pneg %p32
      $region30: #{conv_block_forward.4} parent=27 // pred_check_branch
        %183 = sbr.rel (%p181) target = $region32
      $region31: #{conv_block_forward.4} parent=27 // pred_region
        %p184 = scmp.lt.s32.totalorder %s12, 1
        %s185 = scalar_select %p184, %s12, 1
        %s186 = smul.addr %s185, 54
        %s187 = smul.addr %s186, 4
        %s188 = scalar_lea.vmem %s0, %s187
      $region32: #{conv_block_forward.4} parent=27 // pred_fallthru
        _
    $region28: #{conv_block_forward.4} parent=5 // pred_fallthru
      _
    %p189 = scmp.le.s32.totalorder 1, %s12
    %p190 = scmp.lt.s32.totalorder %s12, 3
    %p191 = pnand %p189, %p190
    %p192 = pneg %p191
    // Predicated region
    $region33: #{conv_block_forward.4} parent=5 // pred_check
      _
    $region34: #{conv_block_forward.4} parent=5 // pred_check_branch
      %194 = sbr.rel (%p191) target = $region36
    $region35: #{conv_block_forward.4} parent=5 // pred_region
      %s195 = ssub.s32 %s12, 1
      %p196 = scmp.lt.s32.totalorder %s17, 1
      %s197 = scalar_select %p196, %s17, 1
      %s198 = smul.addr %s197, 54
      %s199 = smul.addr %s198, 4
      %s200 = scalar_lea.vmem %s0, %s199
      %p201 = pneg %p38
      %p202 = pneg %p35
      %p203 = pneg %p59
      %p204 = pneg %p56
      %p205 = pneg %p80
      %p206 = pneg %p77
      %p207 = pneg %p101
      %p208 = pneg %p98
      %p209 = pneg %p127
      %p210 = pneg %p124
      %p211 = scmp.lt.s32.totalorder %s17, 1
      %s212 = scalar_select %p211, %s17, 1
      %s213 = smul.addr %s212, 54
      %s214 = smul.addr %s213, 4
      %s215 = scalar_lea.vmem %s4, %s214
      %p216 = pneg %p153
      %p217 = pneg %p150
      %p218 = scmp.lt.s32.totalorder %s17, 1
      %s219 = scalar_select %p218, %s17, 1
      %s220 = smul.addr %s219, 8
      %s221 = scalar_lea.vmem %s5, %s220
      %p222 = scmp.lt.s32.totalorder %s17, 1
      %s223 = scalar_select %p222, %s17, 1
      %s224 = smul.addr %s223, 54
      %s225 = smul.addr %s224, 4
      %s226 = scalar_lea.vmem %s0, %s225
      %p227 = scmp.lt.s32.totalorder %s17, 1
      %s228 = scalar_select %p227, %s17, 1
      %s229 = smul.addr %s228, 54
      %s230 = smul.addr %s229, 4
      %s231 = scalar_lea.vmem %s4, %s230
      %p232 = scmp.lt.s32.totalorder %s17, 1
      %s233 = scalar_select %p232, %s17, 1
      %s234 = smul.addr %s233, 8
      %s235 = scalar_lea.vmem %s5, %s234
      %v237 = vld [vmem:[%s226] sm:$0xf]
      %v238 = vld [vmem:[%s226 + $0x4] sm:$0xf]
      %v239 = vld [vmem:[%s226 + $0x8] sm:$0xf]
      %v240 = vld [vmem:[%s226 + $0xc] sm:$0xf]
      %v241 = vld [vmem:[%s226 + $0x10] sm:$0xf]
      %v242 = vld [vmem:[%s226 + $0x14] sm:$0xf]
      %v243 = vld [vmem:[%s226 + $0x18] sm:$0xf]
      %v244 = vld [vmem:[%s226 + $0x1c] sm:$0xf]
      %v245 = vld [vmem:[%s226 + $0x20] sm:$0xf]
      %v246 = vld [vmem:[%s226 + $0x24] sm:$0xf]
      %v247 = vld [vmem:[%s226 + $0x28] sm:$0xf]
      %v248 = vld [vmem:[%s226 + $0x2c] sm:$0xf]
      %v249 = vld [vmem:[%s226 + $0x30] sm:$0xf]
      %v250 = vld [vmem:[%s226 + $0x34] sm:$0xf]
      %v251 = vld [vmem:[%s226 + $0x38] sm:$0xf]
      %v252 = vld [vmem:[%s226 + $0x3c] sm:$0xf]
      %v253 = vld [vmem:[%s226 + $0x40] sm:$0xf]
      %v254 = vld [vmem:[%s226 + $0x44] sm:$0xf]
      %v255 = vld [vmem:[%s226 + $0x48] sm:$0xf]
      %v256 = vld [vmem:[%s226 + $0x4c] sm:$0xf]
      %v257 = vld [vmem:[%s226 + $0x50] sm:$0xf]
      %v258 = vld [vmem:[%s226 + $0x54] sm:$0xf]
      %v259 = vld [vmem:[%s226 + $0x58] sm:$0xf]
      %v260 = vld [vmem:[%s226 + $0x5c] sm:$0xf]
      %v261 = vld [vmem:[%s226 + $0x60] sm:$0xf]
      %v262 = vld [vmem:[%s226 + $0x64] sm:$0xf]
      %v263 = vld [vmem:[%s226 + $0x68] sm:$0xf]
      %v264 = vld [vmem:[%s226 + $0x6c] sm:$0xf]
      %v265 = vld [vmem:[%s226 + $0x70] sm:$0xf]
      %v266 = vld [vmem:[%s226 + $0x74] sm:$0xf]
      %v267 = vld [vmem:[%s226 + $0x78] sm:$0xf]
      %v268 = vld [vmem:[%s226 + $0x7c] sm:$0xf]
      %v269 = vld [vmem:[%s226 + $0x80] sm:$0xf]
      %v270 = vld [vmem:[%s226 + $0x84] sm:$0xf]
      %v271 = vld [vmem:[%s226 + $0x88] sm:$0xf]
      %v272 = vld [vmem:[%s226 + $0x8c] sm:$0xf]
      %v273 = vld [vmem:[%s226 + $0x90] sm:$0xf]
      %v274 = vld [vmem:[%s226 + $0x94] sm:$0xf]
      %v275 = vld [vmem:[%s226 + $0x98] sm:$0xf]
      %v276 = vld [vmem:[%s226 + $0x9c] sm:$0xf]
      %v277 = vld [vmem:[%s226 + $0xa0] sm:$0xf]
      %v278 = vld [vmem:[%s226 + $0xa4] sm:$0xf]
      %v279 = vld [vmem:[%s226 + $0xa8] sm:$0xf]
      %v280 = vld [vmem:[%s226 + $0xac] sm:$0xf]
      %v281 = vld [vmem:[%s226 + $0xb0] sm:$0xf]
      %v282 = vld [vmem:[%s226 + $0xb4] sm:$0xf]
      %v283 = vld [vmem:[%s226 + $0xb8] sm:$0xf]
      %v284 = vld [vmem:[%s226 + $0xbc] sm:$0xf]
      %v285 = vld [vmem:[%s226 + $0xc0] sm:$0xf]
      %v286 = vld [vmem:[%s226 + $0xc4] sm:$0xf]
      %v287 = vld [vmem:[%s226 + $0xc8] sm:$0xf]
      %v288 = vld [vmem:[%s226 + $0xcc] sm:$0xf]
      %v289 = vld [vmem:[%s226 + $0xd0] sm:$0xf]
      %v290 = vld [vmem:[%s226 + $0xd4] sm:$0xf]
      %v291 = vlaneseq
      %v292 = vshrl.u32 %v291, 7
      %v293 = vadd.s32 %v292, 8
      %v294 = vadd.s32 %v292, 16
      %vm295 = vcmp.ge.s32.totalorder %v292, 1
      %vm296 = vcmp.ge.s32.totalorder %v293, 1
      %vm297 = vcmp.ge.s32.totalorder %v294, 1
      %vm298 = vmand 0, %vm295
      %vm299 = vmand 0, %vm296
      %vm300 = vmand 0, %vm297
      %vm301 = vmand 1, %vm295
      %vm302 = vmand 1, %vm296
      %vm303 = vmand 1, %vm297
      %vm304 = vcmp.le.s32.totalorder %v292, 16
      %vm305 = vcmp.le.s32.totalorder %v293, 16
      %vm306 = vcmp.le.s32.totalorder %v294, 16
      %vm307 = vmand %vm298, %vm304
      %vm308 = vmand %vm299, %vm305
      %vm309 = vmand %vm300, %vm306
      %vm310 = vmand %vm301, %vm304
      %vm311 = vmand %vm302, %vm305
      %vm312 = vmand %vm303, %vm306
      %v313 = vld [vmem:[%s2] sm:$0x1]
      %v314 = vld [vmem:[%s3] sm:$0x1]
      %v315 = vunpack.c.l.bf16 %v237
      %v316 = vunpack.c.l.bf16 %v238
      %v317 = vunpack.c.l.bf16 %v239
      %v318 = vunpack.c.l.bf16 %v240
      %v319 = vunpack.c.l.bf16 %v241
      %v320 = vunpack.c.l.bf16 %v242
      %v321 = vunpack.c.l.bf16 %v243
      %v322 = vunpack.c.l.bf16 %v244
      %v323 = vunpack.c.l.bf16 %v245
      %v324 = vunpack.c.l.bf16 %v246
      %v325 = vunpack.c.l.bf16 %v247
      %v326 = vunpack.c.l.bf16 %v248
      %v327 = vunpack.c.l.bf16 %v249
      %v328 = vunpack.c.l.bf16 %v250
      %v329 = vunpack.c.l.bf16 %v251
      %v330 = vunpack.c.l.bf16 %v252
      %v331 = vunpack.c.l.bf16 %v253
      %v332 = vunpack.c.l.bf16 %v254
      %v333 = vunpack.c.l.bf16 %v255
      %v334 = vunpack.c.l.bf16 %v256
      %v335 = vunpack.c.l.bf16 %v257
      %v336 = vunpack.c.l.bf16 %v258
      %v337 = vunpack.c.l.bf16 %v259
      %v338 = vunpack.c.l.bf16 %v260
      %v339 = vunpack.c.l.bf16 %v261
      %v340 = vunpack.c.l.bf16 %v262
      %v341 = vunpack.c.l.bf16 %v263
      %v342 = vunpack.c.l.bf16 %v264
      %v343 = vunpack.c.l.bf16 %v265
      %v344 = vunpack.c.l.bf16 %v266
      %v345 = vunpack.c.l.bf16 %v267
      %v346 = vunpack.c.l.bf16 %v268
      %v347 = vunpack.c.l.bf16 %v269
      %v348 = vunpack.c.l.bf16 %v270
      %v349 = vunpack.c.l.bf16 %v271
      %v350 = vunpack.c.l.bf16 %v272
      %v351 = vunpack.c.l.bf16 %v273
      %v352 = vunpack.c.l.bf16 %v274
      %v353 = vunpack.c.l.bf16 %v275
      %v354 = vunpack.c.l.bf16 %v276
      %v355 = vunpack.c.l.bf16 %v277
      %v356 = vunpack.c.l.bf16 %v278
      %v357 = vunpack.c.l.bf16 %v279
      %v358 = vunpack.c.l.bf16 %v280
      %v359 = vunpack.c.l.bf16 %v281
      %v360 = vunpack.c.l.bf16 %v282
      %v361 = vunpack.c.l.bf16 %v283
      %v362 = vunpack.c.l.bf16 %v284
      %v363 = vunpack.c.l.bf16 %v285
      %v364 = vunpack.c.l.bf16 %v286
      %v365 = vunpack.c.l.bf16 %v287
      %v366 = vunpack.c.l.bf16 %v288
      %v367 = vunpack.c.l.bf16 %v289
      %v368 = vunpack.c.l.bf16 %v290
      %v370 = vlaneseq
      %v371 = vshrl.u32 %v370, 7
      %v372 = vsub.s32 0, %v371
      %v373 = vrot.slane %v313, %v372
      %v375 = vmul.f32 %v315, %v373
      %v376 = vmul.f32 %v316, %v373
      %v377 = vmul.f32 %v317, %v373
      %v378 = vmul.f32 %v318, %v373
      %v379 = vmul.f32 %v319, %v373
      %v380 = vmul.f32 %v320, %v373
      %v381 = vmul.f32 %v321, %v373
      %v382 = vmul.f32 %v322, %v373
      %v383 = vmul.f32 %v323, %v373
      %v384 = vmul.f32 %v324, %v373
      %v385 = vmul.f32 %v325, %v373
      %v386 = vmul.f32 %v326, %v373
      %v387 = vmul.f32 %v327, %v373
      %v388 = vmul.f32 %v328, %v373
      %v389 = vmul.f32 %v329, %v373
      %v390 = vmul.f32 %v330, %v373
      %v391 = vmul.f32 %v331, %v373
      %v392 = vmul.f32 %v332, %v373
      %v393 = vmul.f32 %v333, %v373
      %v394 = vmul.f32 %v334, %v373
      %v395 = vmul.f32 %v335, %v373
      %v396 = vmul.f32 %v336, %v373
      %v397 = vmul.f32 %v337, %v373
      %v398 = vmul.f32 %v338, %v373
      %v399 = vmul.f32 %v339, %v373
      %v400 = vmul.f32 %v340, %v373
      %v401 = vmul.f32 %v341, %v373
      %v402 = vmul.f32 %v342, %v373
      %v403 = vmul.f32 %v343, %v373
      %v404 = vmul.f32 %v344, %v373
      %v405 = vmul.f32 %v345, %v373
      %v406 = vmul.f32 %v346, %v373
      %v407 = vmul.f32 %v347, %v373
      %v408 = vmul.f32 %v348, %v373
      %v409 = vmul.f32 %v349, %v373
      %v410 = vmul.f32 %v350, %v373
      %v411 = vmul.f32 %v351, %v373
      %v412 = vmul.f32 %v352, %v373
      %v413 = vmul.f32 %v353, %v373
      %v414 = vmul.f32 %v354, %v373
      %v415 = vmul.f32 %v355, %v373
      %v416 = vmul.f32 %v356, %v373
      %v417 = vmul.f32 %v357, %v373
      %v418 = vmul.f32 %v358, %v373
      %v419 = vmul.f32 %v359, %v373
      %v420 = vmul.f32 %v360, %v373
      %v421 = vmul.f32 %v361, %v373
      %v422 = vmul.f32 %v362, %v373
      %v423 = vmul.f32 %v363, %v373
      %v424 = vmul.f32 %v364, %v373
      %v425 = vmul.f32 %v365, %v373
      %v426 = vmul.f32 %v366, %v373
      %v427 = vmul.f32 %v367, %v373
      %v428 = vmul.f32 %v368, %v373
      %v430 = vlaneseq
      %v431 = vshrl.u32 %v430, 7
      %v432 = vsub.s32 0, %v431
      %v433 = vrot.slane %v314, %v432
      %v435 = vadd.f32 %v375, %v433
      %v436 = vadd.f32 %v376, %v433
      %v437 = vadd.f32 %v377, %v433
      %v438 = vadd.f32 %v378, %v433
      %v439 = vadd.f32 %v379, %v433
      %v440 = vadd.f32 %v380, %v433
      %v441 = vadd.f32 %v381, %v433
      %v442 = vadd.f32 %v382, %v433
      %v443 = vadd.f32 %v383, %v433
      %v444 = vadd.f32 %v384, %v433
      %v445 = vadd.f32 %v385, %v433
      %v446 = vadd.f32 %v386, %v433
      %v447 = vadd.f32 %v387, %v433
      %v448 = vadd.f32 %v388, %v433
      %v449 = vadd.f32 %v389, %v433
      %v450 = vadd.f32 %v390, %v433
      %v451 = vadd.f32 %v391, %v433
      %v452 = vadd.f32 %v392, %v433
      %v453 = vadd.f32 %v393, %v433
      %v454 = vadd.f32 %v394, %v433
      %v455 = vadd.f32 %v395, %v433
      %v456 = vadd.f32 %v396, %v433
      %v457 = vadd.f32 %v397, %v433
      %v458 = vadd.f32 %v398, %v433
      %v459 = vadd.f32 %v399, %v433
      %v460 = vadd.f32 %v400, %v433
      %v461 = vadd.f32 %v401, %v433
      %v462 = vadd.f32 %v402, %v433
      %v463 = vadd.f32 %v403, %v433
      %v464 = vadd.f32 %v404, %v433
      %v465 = vadd.f32 %v405, %v433
      %v466 = vadd.f32 %v406, %v433
      %v467 = vadd.f32 %v407, %v433
      %v468 = vadd.f32 %v408, %v433
      %v469 = vadd.f32 %v409, %v433
      %v470 = vadd.f32 %v410, %v433
      %v471 = vadd.f32 %v411, %v433
      %v472 = vadd.f32 %v412, %v433
      %v473 = vadd.f32 %v413, %v433
      %v474 = vadd.f32 %v414, %v433
      %v475 = vadd.f32 %v415, %v433
      %v476 = vadd.f32 %v416, %v433
      %v477 = vadd.f32 %v417, %v433
      %v478 = vadd.f32 %v418, %v433
      %v479 = vadd.f32 %v419, %v433
      %v480 = vadd.f32 %v420, %v433
      %v481 = vadd.f32 %v421, %v433
      %v482 = vadd.f32 %v422, %v433
      %v483 = vadd.f32 %v423, %v433
      %v484 = vadd.f32 %v424, %v433
      %v485 = vadd.f32 %v425, %v433
      %v486 = vadd.f32 %v426, %v433
      %v487 = vadd.f32 %v427, %v433
      %v488 = vadd.f32 %v428, %v433
      %v489 = vmax.f32 %v435, 0.0
      %v490 = vmax.f32 %v436, 0.0
      %v491 = vmax.f32 %v437, 0.0
      %v492 = vmax.f32 %v438, 0.0
      %v493 = vmax.f32 %v439, 0.0
      %v494 = vmax.f32 %v440, 0.0
      %v495 = vmax.f32 %v441, 0.0
      %v496 = vmax.f32 %v442, 0.0
      %v497 = vmax.f32 %v443, 0.0
      %v498 = vmax.f32 %v444, 0.0
      %v499 = vmax.f32 %v445, 0.0
      %v500 = vmax.f32 %v446, 0.0
      %v501 = vmax.f32 %v447, 0.0
      %v502 = vmax.f32 %v448, 0.0
      %v503 = vmax.f32 %v449, 0.0
      %v504 = vmax.f32 %v450, 0.0
      %v505 = vmax.f32 %v451, 0.0
      %v506 = vmax.f32 %v452, 0.0
      %v507 = vmax.f32 %v453, 0.0
      %v508 = vmax.f32 %v454, 0.0
      %v509 = vmax.f32 %v455, 0.0
      %v510 = vmax.f32 %v456, 0.0
      %v511 = vmax.f32 %v457, 0.0
      %v512 = vmax.f32 %v458, 0.0
      %v513 = vmax.f32 %v459, 0.0
      %v514 = vmax.f32 %v460, 0.0
      %v515 = vmax.f32 %v461, 0.0
      %v516 = vmax.f32 %v462, 0.0
      %v517 = vmax.f32 %v463, 0.0
      %v518 = vmax.f32 %v464, 0.0
      %v519 = vmax.f32 %v465, 0.0
      %v520 = vmax.f32 %v466, 0.0
      %v521 = vmax.f32 %v467, 0.0
      %v522 = vmax.f32 %v468, 0.0
      %v523 = vmax.f32 %v469, 0.0
      %v524 = vmax.f32 %v470, 0.0
      %v525 = vmax.f32 %v471, 0.0
      %v526 = vmax.f32 %v472, 0.0
      %v527 = vmax.f32 %v473, 0.0
      %v528 = vmax.f32 %v474, 0.0
      %v529 = vmax.f32 %v475, 0.0
      %v530 = vmax.f32 %v476, 0.0
      %v531 = vmax.f32 %v477, 0.0
      %v532 = vmax.f32 %v478, 0.0
      %v533 = vmax.f32 %v479, 0.0
      %v534 = vmax.f32 %v480, 0.0
      %v535 = vmax.f32 %v481, 0.0
      %v536 = vmax.f32 %v482, 0.0
      %v537 = vmax.f32 %v483, 0.0
      %v538 = vmax.f32 %v484, 0.0
      %v539 = vmax.f32 %v485, 0.0
      %v540 = vmax.f32 %v486, 0.0
      %v541 = vmax.f32 %v487, 0.0
      %v542 = vmax.f32 %v488, 0.0
      %v543 = vsel %vm307, %v489, 0.0
      %v544 = vsel %vm308, %v490, 0.0
      %v545 = vsel %vm309, %v491, 0.0
      %v546 = vsel %vm310, %v492, 0.0
      %v547 = vsel %vm311, %v493, 0.0
      %v548 = vsel %vm312, %v494, 0.0
      %v549 = vsel %vm310, %v495, 0.0
      %v550 = vsel %vm311, %v496, 0.0
      %v551 = vsel %vm312, %v497, 0.0
      %v552 = vsel %vm310, %v498, 0.0
      %v553 = vsel %vm311, %v499, 0.0
      %v554 = vsel %vm312, %v500, 0.0
      %v555 = vsel %vm310, %v501, 0.0
      %v556 = vsel %vm311, %v502, 0.0
      %v557 = vsel %vm312, %v503, 0.0
      %v558 = vsel %vm310, %v504, 0.0
      %v559 = vsel %vm311, %v505, 0.0
      %v560 = vsel %vm312, %v506, 0.0
      %v561 = vsel %vm310, %v507, 0.0
      %v562 = vsel %vm311, %v508, 0.0
      %v563 = vsel %vm312, %v509, 0.0
      %v564 = vsel %vm310, %v510, 0.0
      %v565 = vsel %vm311, %v511, 0.0
      %v566 = vsel %vm312, %v512, 0.0
      %v567 = vsel %vm310, %v513, 0.0
      %v568 = vsel %vm311, %v514, 0.0
      %v569 = vsel %vm312, %v515, 0.0
      %v570 = vsel %vm310, %v516, 0.0
      %v571 = vsel %vm311, %v517, 0.0
      %v572 = vsel %vm312, %v518, 0.0
      %v573 = vsel %vm310, %v519, 0.0
      %v574 = vsel %vm311, %v520, 0.0
      %v575 = vsel %vm312, %v521, 0.0
      %v576 = vsel %vm310, %v522, 0.0
      %v577 = vsel %vm311, %v523, 0.0
      %v578 = vsel %vm312, %v524, 0.0
      %v579 = vsel %vm310, %v525, 0.0
      %v580 = vsel %vm311, %v526, 0.0
      %v581 = vsel %vm312, %v527, 0.0
      %v582 = vsel %vm310, %v528, 0.0
      %v583 = vsel %vm311, %v529, 0.0
      %v584 = vsel %vm312, %v530, 0.0
      %v585 = vsel %vm310, %v531, 0.0
      %v586 = vsel %vm311, %v532, 0.0
      %v587 = vsel %vm312, %v533, 0.0
      %v588 = vsel %vm310, %v534, 0.0
      %v589 = vsel %vm311, %v535, 0.0
      %v590 = vsel %vm312, %v536, 0.0
      %v591 = vsel %vm310, %v537, 0.0
      %v592 = vsel %vm311, %v538, 0.0
      %v593 = vsel %vm312, %v539, 0.0
      %v594 = vsel %vm307, %v540, 0.0
      %v595 = vsel %vm308, %v541, 0.0
      %v596 = vsel %vm309, %v542, 0.0
      %v597 = vpack.c.bf16 %v544, %v543
      %v598 = vpack.c.bf16 %v545, %v545
      %v599 = vpack.c.bf16 %v547, %v546
      %v600 = vpack.c.bf16 %v548, %v548
      %v601 = vpack.c.bf16 %v550, %v549
      %v602 = vpack.c.bf16 %v551, %v551
      %v603 = vpack.c.bf16 %v553, %v552
      %v604 = vpack.c.bf16 %v554, %v554
      %v605 = vpack.c.bf16 %v556, %v555
      %v606 = vpack.c.bf16 %v557, %v557
      %v607 = vpack.c.bf16 %v559, %v558
      %v608 = vpack.c.bf16 %v560, %v560
      %v609 = vpack.c.bf16 %v562, %v561
      %v610 = vpack.c.bf16 %v563, %v563
      %v611 = vpack.c.bf16 %v565, %v564
      %v612 = vpack.c.bf16 %v566, %v566
      %v613 = vpack.c.bf16 %v568, %v567
      %v614 = vpack.c.bf16 %v569, %v569
      %v615 = vpack.c.bf16 %v571, %v570
      %v616 = vpack.c.bf16 %v572, %v572
      %v617 = vpack.c.bf16 %v574, %v573
      %v618 = vpack.c.bf16 %v575, %v575
      %v619 = vpack.c.bf16 %v577, %v576
      %v620 = vpack.c.bf16 %v578, %v578
      %v621 = vpack.c.bf16 %v580, %v579
      %v622 = vpack.c.bf16 %v581, %v581
      %v623 = vpack.c.bf16 %v583, %v582
      %v624 = vpack.c.bf16 %v584, %v584
      %v625 = vpack.c.bf16 %v586, %v585
      %v626 = vpack.c.bf16 %v587, %v587
      %v627 = vpack.c.bf16 %v589, %v588
      %v628 = vpack.c.bf16 %v590, %v590
      %v629 = vpack.c.bf16 %v592, %v591
      %v630 = vpack.c.bf16 %v593, %v593
      %v631 = vpack.c.bf16 %v595, %v594
      %v632 = vpack.c.bf16 %v596, %v596
      %v633 = vld [vmem:[%s1] sm:$0xf]
      %v634 = vld [vmem:[%s1 + $0x4] sm:$0xf]
      %v635 = vld [vmem:[%s1 + $0x8] sm:$0xf]
      %v636 = vld [vmem:[%s1 + $0xc] sm:$0xf]
      %v637 = vld [vmem:[%s1 + $0x10] sm:$0xf]
      %v638 = vld [vmem:[%s1 + $0x14] sm:$0xf]
      %v639 = vld [vmem:[%s1 + $0x18] sm:$0xf]
      %v640 = vld [vmem:[%s1 + $0x1c] sm:$0xf]
      %v641 = vld [vmem:[%s1 + $0x20] sm:$0xf]
      %v642 = vld [vmem:[%s1 + $0x24] sm:$0xf]
      %v643 = vld [vmem:[%s1 + $0x28] sm:$0xf]
      %v644 = vld [vmem:[%s1 + $0x2c] sm:$0xf]
      %v645 = vld [vmem:[%s1 + $0x30] sm:$0xf]
      %v646 = vld [vmem:[%s1 + $0x34] sm:$0xf]
      %v647 = vld [vmem:[%s1 + $0x38] sm:$0xf]
      %v648 = vld [vmem:[%s1 + $0x3c] sm:$0xf]
      %vm649 = vsmask.f32 7424
      %v651 = vshrl.u32 %v597, 16
      %v653 = vshll.u32 %v597, 16
      %v655 = vrot.slane %v653, 1
      %v656 = vor.u32 %v651, %v655
      %v658 = vshll.u32 %v598, 16
      %v660 = vrot.slane %v658, 1
      %v661 = vsel %vm649, %v656, %v660
      %v663 = vshrl.u32 %v599, 16
      %v665 = vshll.u32 %v599, 16
      %v667 = vrot.slane %v665, 1
      %v668 = vor.u32 %v663, %v667
      %v670 = vshll.u32 %v600, 16
      %v672 = vrot.slane %v670, 1
      %v673 = vsel %vm649, %v668, %v672
      %v675 = vshrl.u32 %v601, 16
      %v677 = vshll.u32 %v601, 16
      %v679 = vrot.slane %v677, 1
      %v680 = vor.u32 %v675, %v679
      %v682 = vshll.u32 %v602, 16
      %v684 = vrot.slane %v682, 1
      %v685 = vsel %vm649, %v680, %v684
      %v687 = vshrl.u32 %v603, 16
      %v689 = vshll.u32 %v603, 16
      %v691 = vrot.slane %v689, 1
      %v692 = vor.u32 %v687, %v691
      %v694 = vshll.u32 %v604, 16
      %v696 = vrot.slane %v694, 1
      %v697 = vsel %vm649, %v692, %v696
      %v699 = vshrl.u32 %v605, 16
      %v701 = vshll.u32 %v605, 16
      %v703 = vrot.slane %v701, 1
      %v704 = vor.u32 %v699, %v703
      %v706 = vshll.u32 %v606, 16
      %v708 = vrot.slane %v706, 1
      %v709 = vsel %vm649, %v704, %v708
      %v711 = vshrl.u32 %v607, 16
      %v713 = vshll.u32 %v607, 16
      %v715 = vrot.slane %v713, 1
      %v716 = vor.u32 %v711, %v715
      %v718 = vshll.u32 %v608, 16
      %v720 = vrot.slane %v718, 1
      %v721 = vsel %vm649, %v716, %v720
      %v723 = vshrl.u32 %v609, 16
      %v725 = vshll.u32 %v609, 16
      %v727 = vrot.slane %v725, 1
      %v728 = vor.u32 %v723, %v727
      %v730 = vshll.u32 %v610, 16
      %v732 = vrot.slane %v730, 1
      %v733 = vsel %vm649, %v728, %v732
      %v735 = vshrl.u32 %v611, 16
      %v737 = vshll.u32 %v611, 16
      %v739 = vrot.slane %v737, 1
      %v740 = vor.u32 %v735, %v739
      %v742 = vshll.u32 %v612, 16
      %v744 = vrot.slane %v742, 1
      %v745 = vsel %vm649, %v740, %v744
      %v747 = vshrl.u32 %v613, 16
      %v749 = vshll.u32 %v613, 16
      %v751 = vrot.slane %v749, 1
      %v752 = vor.u32 %v747, %v751
      %v754 = vshll.u32 %v614, 16
      %v756 = vrot.slane %v754, 1
      %v757 = vsel %vm649, %v752, %v756
      %v759 = vshrl.u32 %v615, 16
      %v761 = vshll.u32 %v615, 16
      %v763 = vrot.slane %v761, 1
      %v764 = vor.u32 %v759, %v763
      %v766 = vshll.u32 %v616, 16
      %v768 = vrot.slane %v766, 1
      %v769 = vsel %vm649, %v764, %v768
      %v771 = vshrl.u32 %v617, 16
      %v773 = vshll.u32 %v617, 16
      %v775 = vrot.slane %v773, 1
      %v776 = vor.u32 %v771, %v775
      %v778 = vshll.u32 %v618, 16
      %v780 = vrot.slane %v778, 1
      %v781 = vsel %vm649, %v776, %v780
      %v783 = vshrl.u32 %v619, 16
      %v785 = vshll.u32 %v619, 16
      %v787 = vrot.slane %v785, 1
      %v788 = vor.u32 %v783, %v787
      %v790 = vshll.u32 %v620, 16
      %v792 = vrot.slane %v790, 1
      %v793 = vsel %vm649, %v788, %v792
      %v795 = vshrl.u32 %v621, 16
      %v797 = vshll.u32 %v621, 16
      %v799 = vrot.slane %v797, 1
      %v800 = vor.u32 %v795, %v799
      %v802 = vshll.u32 %v622, 16
      %v804 = vrot.slane %v802, 1
      %v805 = vsel %vm649, %v800, %v804
      %v807 = vshrl.u32 %v623, 16
      %v809 = vshll.u32 %v623, 16
      %v811 = vrot.slane %v809, 1
      %v812 = vor.u32 %v807, %v811
      %v814 = vshll.u32 %v624, 16
      %v816 = vrot.slane %v814, 1
      %v817 = vsel %vm649, %v812, %v816
      %v819 = vshrl.u32 %v625, 16
      %v821 = vshll.u32 %v625, 16
      %v823 = vrot.slane %v821, 1
      %v824 = vor.u32 %v819, %v823
      %v826 = vshll.u32 %v626, 16
      %v828 = vrot.slane %v826, 1
      %v829 = vsel %vm649, %v824, %v828
      %v831 = vshrl.u32 %v627, 16
      %v833 = vshll.u32 %v627, 16
      %v835 = vrot.slane %v833, 1
      %v836 = vor.u32 %v831, %v835
      %v838 = vshll.u32 %v628, 16
      %v840 = vrot.slane %v838, 1
      %v841 = vsel %vm649, %v836, %v840
      %s858 = scalar_lea.vmem %s1, 64
      %v859 = vld [vmem:[%s858] sm:$0xf]
      %v860 = vld [vmem:[%s858 + $0x4] sm:$0xf]
      %v861 = vld [vmem:[%s858 + $0x8] sm:$0xf]
      %v862 = vld [vmem:[%s858 + $0xc] sm:$0xf]
      %v863 = vld [vmem:[%s858 + $0x10] sm:$0xf]
      %v864 = vld [vmem:[%s858 + $0x14] sm:$0xf]
      %v865 = vld [vmem:[%s858 + $0x18] sm:$0xf]
      %v866 = vld [vmem:[%s858 + $0x1c] sm:$0xf]
      %v867 = vld [vmem:[%s858 + $0x20] sm:$0xf]
      %v868 = vld [vmem:[%s858 + $0x24] sm:$0xf]
      %v869 = vld [vmem:[%s858 + $0x28] sm:$0xf]
      %v870 = vld [vmem:[%s858 + $0x2c] sm:$0xf]
      %v871 = vld [vmem:[%s858 + $0x30] sm:$0xf]
      %v872 = vld [vmem:[%s858 + $0x34] sm:$0xf]
      %v873 = vld [vmem:[%s858 + $0x38] sm:$0xf]
      %v874 = vld [vmem:[%s858 + $0x3c] sm:$0xf]
      %v891 = vunpack.c.l.b16 %v859
      %v892 = vunpack.c.l.b16 %v860
      %v893 = vunpack.c.l.b16 %v861
      %v894 = vunpack.c.l.b16 %v862
      %v895 = vunpack.c.l.b16 %v863
      %v896 = vunpack.c.l.b16 %v864
      %v897 = vunpack.c.l.b16 %v865
      %v898 = vunpack.c.l.b16 %v866
      %v899 = vunpack.c.l.b16 %v867
      %v900 = vunpack.c.l.b16 %v868
      %v901 = vunpack.c.l.b16 %v869
      %v902 = vunpack.c.l.b16 %v870
      %v903 = vunpack.c.l.b16 %v871
      %v904 = vunpack.c.l.b16 %v872
      %v905 = vunpack.c.l.b16 %v873
      %v906 = vunpack.c.l.b16 %v874
      %v907 = vpack.c.b16 %v892, %v891
      %v908 = vpack.c.b16 %v894, %v893
      %v909 = vpack.c.b16 %v896, %v895
      %v910 = vpack.c.b16 %v898, %v897
      %v911 = vpack.c.b16 %v900, %v899
      %v912 = vpack.c.b16 %v902, %v901
      %v913 = vpack.c.b16 %v904, %v903
      %v914 = vpack.c.b16 %v906, %v905
      %923 = vmatprep.subr.bf16.mxu0 0
      %924 = vmatpush1.bf16.msra.mxu0 %v914
      %925 = vmatprep.subr.bf16.mxu0 0
      %926 = vmatpush1.bf16.msra.mxu0 %v913
      %927 = vmatprep.subr.bf16.mxu0 0
      %928 = vmatpush1.bf16.msra.mxu0 %v912
      %929 = vmatprep.subr.bf16.mxu0 0
      %930 = vmatpush1.bf16.msra.mxu0 %v911
      %931 = vmatprep.subr.bf16.mxu0 0
      %932 = vmatpush1.bf16.msra.mxu0 %v910
      %933 = vmatprep.subr.bf16.mxu0 0
      %934 = vmatpush1.bf16.msra.mxu0 %v909
      %935 = vmatprep.subr.bf16.mxu0 0
      %936 = vmatpush1.bf16.msra.mxu0 %v908
      %937 = vmatprep.subr.bf16.mxu0 0
      %938 = vmatpush1.bf16.msra.mxu0 %v907
      %939 = vmatprep.subr.bf16.mxu0 0
      %940 = vmatpush2.bf16.msra.mxu0 0
      %941 = vmatprep.subr.bf16.mxu0 0
      %942 = vmatpush2.bf16.msra.mxu0 0
      %943 = vmatprep.subr.bf16.mxu0 0
      %944 = vmatpush2.bf16.msra.mxu0 0
      %945 = vmatprep.subr.bf16.mxu0 0
      %946 = vmatpush2.bf16.msra.mxu0 0
      %947 = vmatprep.subr.bf16.mxu0 0
      %948 = vmatpush2.bf16.msra.mxu0 0
      %949 = vmatprep.subr.bf16.mxu0 0
      %950 = vmatpush2.bf16.msra.mxu0 0
      %951 = vmatprep.subr.bf16.mxu0 0
      %952 = vmatpush2.bf16.msra.mxu0 0
      %953 = vmatprep.subr.bf16.mxu0 0
      %954 = vmatpush2.bf16.msra.mxu0 0
      %955 = vmatprep.mubr.bf16.mxu0 0
      %956 = vmatmul.mubr.bf16.gmra.mxu0 %v661
      %v957 = vpop.f32.mrf.mxu0
      %v958 = vadd.f32 0.0, %v957
      %v959 = vpop.f32.mrf.mxu0
      %v960 = vpop.f32.mrf.mxu0
      %v961 = vadd.f32 0.0, %v960
      %v962 = vpop.f32.mrf.mxu0
      %963 = vmatprep.mubr.bf16.mxu0 0
      %964 = vmatmul.mubr.bf16.gmra.mxu0 %v673
      %v965 = vpop.f32.mrf.mxu0
      %v966 = vadd.f32 0.0, %v965
      %v967 = vpop.f32.mrf.mxu0
      %v968 = vpop.f32.mrf.mxu0
      %v969 = vadd.f32 0.0, %v968
      %v970 = vpop.f32.mrf.mxu0
      %971 = vmatprep.mubr.bf16.mxu0 0
      %972 = vmatmul.mubr.bf16.gmra.mxu0 %v685
      %v973 = vpop.f32.mrf.mxu0
      %v974 = vadd.f32 0.0, %v973
      %v975 = vpop.f32.mrf.mxu0
      %v976 = vpop.f32.mrf.mxu0
      %v977 = vadd.f32 0.0, %v976
      %v978 = vpop.f32.mrf.mxu0
      %979 = vmatprep.mubr.bf16.mxu0 0
      %980 = vmatmul.mubr.bf16.gmra.mxu0 %v697
      %v981 = vpop.f32.mrf.mxu0
      %v982 = vadd.f32 0.0, %v981
      %v983 = vpop.f32.mrf.mxu0
      %v984 = vpop.f32.mrf.mxu0
      %v985 = vadd.f32 0.0, %v984
      %v986 = vpop.f32.mrf.mxu0
      %987 = vmatprep.mubr.bf16.mxu0 0
      %988 = vmatmul.mubr.bf16.gmra.mxu0 %v709
      %v989 = vpop.f32.mrf.mxu0
      %v990 = vadd.f32 0.0, %v989
      %v991 = vpop.f32.mrf.mxu0
      %v992 = vpop.f32.mrf.mxu0
      %v993 = vadd.f32 0.0, %v992
      %v994 = vpop.f32.mrf.mxu0
      %995 = vmatprep.mubr.bf16.mxu0 0
      %996 = vmatmul.mubr.bf16.gmra.mxu0 %v721
      %v997 = vpop.f32.mrf.mxu0
      %v998 = vadd.f32 0.0, %v997
      %v999 = vpop.f32.mrf.mxu0
      %v1000 = vpop.f32.mrf.mxu0
      %v1001 = vadd.f32 0.0, %v1000
      %v1002 = vpop.f32.mrf.mxu0
      %1003 = vmatprep.mubr.bf16.mxu0 0
      %1004 = vmatmul.mubr.bf16.gmra.mxu0 %v733
      %v1005 = vpop.f32.mrf.mxu0
      %v1006 = vadd.f32 0.0, %v1005
      %v1007 = vpop.f32.mrf.mxu0
      %v1008 = vpop.f32.mrf.mxu0
      %v1009 = vadd.f32 0.0, %v1008
      %v1010 = vpop.f32.mrf.mxu0
      %1011 = vmatprep.mubr.bf16.mxu0 0
      %1012 = vmatmul.mubr.bf16.gmra.mxu0 %v745
      %v1013 = vpop.f32.mrf.mxu0
      %v1014 = vadd.f32 0.0, %v1013
      %v1015 = vpop.f32.mrf.mxu0
      %v1016 = vpop.f32.mrf.mxu0
      %v1017 = vadd.f32 0.0, %v1016
      %v1018 = vpop.f32.mrf.mxu0
      %1019 = vmatprep.mubr.bf16.mxu0 0
      %1020 = vmatmul.mubr.bf16.gmra.mxu0 %v757
      %v1021 = vpop.f32.mrf.mxu0
      %v1022 = vadd.f32 0.0, %v1021
      %v1023 = vpop.f32.mrf.mxu0
      %v1024 = vpop.f32.mrf.mxu0
      %v1025 = vadd.f32 0.0, %v1024
      %v1026 = vpop.f32.mrf.mxu0
      %1027 = vmatprep.mubr.bf16.mxu0 0
      %1028 = vmatmul.mubr.bf16.gmra.mxu0 %v769
      %v1029 = vpop.f32.mrf.mxu0
      %v1030 = vadd.f32 0.0, %v1029
      %v1031 = vpop.f32.mrf.mxu0
      %v1032 = vpop.f32.mrf.mxu0
      %v1033 = vadd.f32 0.0, %v1032
      %v1034 = vpop.f32.mrf.mxu0
      %1035 = vmatprep.mubr.bf16.mxu0 0
      %1036 = vmatmul.mubr.bf16.gmra.mxu0 %v781
      %v1037 = vpop.f32.mrf.mxu0
      %v1038 = vadd.f32 0.0, %v1037
      %v1039 = vpop.f32.mrf.mxu0
      %v1040 = vpop.f32.mrf.mxu0
      %v1041 = vadd.f32 0.0, %v1040
      %v1042 = vpop.f32.mrf.mxu0
      %1043 = vmatprep.mubr.bf16.mxu0 0
      %1044 = vmatmul.mubr.bf16.gmra.mxu0 %v793
      %v1045 = vpop.f32.mrf.mxu0
      %v1046 = vadd.f32 0.0, %v1045
      %v1047 = vpop.f32.mrf.mxu0
      %v1048 = vpop.f32.mrf.mxu0
      %v1049 = vadd.f32 0.0, %v1048
      %v1050 = vpop.f32.mrf.mxu0
      %1051 = vmatprep.mubr.bf16.mxu0 0
      %1052 = vmatmul.mubr.bf16.gmra.mxu0 %v805
      %v1053 = vpop.f32.mrf.mxu0
      %v1054 = vadd.f32 0.0, %v1053
      %v1055 = vpop.f32.mrf.mxu0
      %v1056 = vpop.f32.mrf.mxu0
      %v1057 = vadd.f32 0.0, %v1056
      %v1058 = vpop.f32.mrf.mxu0
      %1059 = vmatprep.mubr.bf16.mxu0 0
      %1060 = vmatmul.mubr.bf16.gmra.mxu0 %v817
      %v1061 = vpop.f32.mrf.mxu0
      %v1062 = vadd.f32 0.0, %v1061
      %v1063 = vpop.f32.mrf.mxu0
      %v1064 = vpop.f32.mrf.mxu0
      %v1065 = vadd.f32 0.0, %v1064
      %v1066 = vpop.f32.mrf.mxu0
      %1067 = vmatprep.mubr.bf16.mxu0 0
      %1068 = vmatmul.mubr.bf16.gmra.mxu0 %v829
      %v1069 = vpop.f32.mrf.mxu0
      %v1070 = vadd.f32 0.0, %v1069
      %v1071 = vpop.f32.mrf.mxu0
      %v1072 = vpop.f32.mrf.mxu0
      %v1073 = vadd.f32 0.0, %v1072
      %v1074 = vpop.f32.mrf.mxu0
      %1075 = vmatprep.mubr.bf16.mxu0 0
      %1076 = vmatmul.mubr.bf16.gmra.mxu0 %v841
      %v1077 = vpop.f32.mrf.mxu0
      %v1078 = vadd.f32 0.0, %v1077
      %v1079 = vpop.f32.mrf.mxu0
      %v1080 = vpop.f32.mrf.mxu0
      %v1081 = vadd.f32 0.0, %v1080
      %v1082 = vpop.f32.mrf.mxu0
      %1083 = vdwg.mxu0
      %v1100 = vunpack.c.l.b16 %v633
      %v1101 = vunpack.c.l.b16 %v634
      %v1102 = vunpack.c.l.b16 %v635
      %v1103 = vunpack.c.l.b16 %v636
      %v1104 = vunpack.c.l.b16 %v637
      %v1105 = vunpack.c.l.b16 %v638
      %v1106 = vunpack.c.l.b16 %v639
      %v1107 = vunpack.c.l.b16 %v640
      %v1108 = vunpack.c.l.b16 %v641
      %v1109 = vunpack.c.l.b16 %v642
      %v1110 = vunpack.c.l.b16 %v643
      %v1111 = vunpack.c.l.b16 %v644
      %v1112 = vunpack.c.l.b16 %v645
      %v1113 = vunpack.c.l.b16 %v646
      %v1114 = vunpack.c.l.b16 %v647
      %v1115 = vunpack.c.l.b16 %v648
      %v1116 = vpack.c.b16 %v1101, %v1100
      %v1117 = vpack.c.b16 %v1103, %v1102
      %v1118 = vpack.c.b16 %v1105, %v1104
      %v1119 = vpack.c.b16 %v1107, %v1106
      %v1120 = vpack.c.b16 %v1109, %v1108
      %v1121 = vpack.c.b16 %v1111, %v1110
      %v1122 = vpack.c.b16 %v1113, %v1112
      %v1123 = vpack.c.b16 %v1115, %v1114
      %1132 = vmatprep.subr.bf16.mxu0 0
      %1133 = vmatpush1.bf16.msra.mxu0 %v1123
      %1134 = vmatprep.subr.bf16.mxu0 0
      %1135 = vmatpush1.bf16.msra.mxu0 %v1122
      %1136 = vmatprep.subr.bf16.mxu0 0
      %1137 = vmatpush1.bf16.msra.mxu0 %v1121
      %1138 = vmatprep.subr.bf16.mxu0 0
      %1139 = vmatpush1.bf16.msra.mxu0 %v1120
      %1140 = vmatprep.subr.bf16.mxu0 0
      %1141 = vmatpush1.bf16.msra.mxu0 %v1119
      %1142 = vmatprep.subr.bf16.mxu0 0
      %1143 = vmatpush1.bf16.msra.mxu0 %v1118
      %1144 = vmatprep.subr.bf16.mxu0 0
      %1145 = vmatpush1.bf16.msra.mxu0 %v1117
      %1146 = vmatprep.subr.bf16.mxu0 0
      %1147 = vmatpush1.bf16.msra.mxu0 %v1116
      %1148 = vmatprep.subr.bf16.mxu0 0
      %1149 = vmatpush2.bf16.msra.mxu0 0
      %1150 = vmatprep.subr.bf16.mxu0 0
      %1151 = vmatpush2.bf16.msra.mxu0 0
      %1152 = vmatprep.subr.bf16.mxu0 0
      %1153 = vmatpush2.bf16.msra.mxu0 0
      %1154 = vmatprep.subr.bf16.mxu0 0
      %1155 = vmatpush2.bf16.msra.mxu0 0
      %1156 = vmatprep.subr.bf16.mxu0 0
      %1157 = vmatpush2.bf16.msra.mxu0 0
      %1158 = vmatprep.subr.bf16.mxu0 0
      %1159 = vmatpush2.bf16.msra.mxu0 0
      %1160 = vmatprep.subr.bf16.mxu0 0
      %1161 = vmatpush2.bf16.msra.mxu0 0
      %1162 = vmatprep.subr.bf16.mxu0 0
      %1163 = vmatpush2.bf16.msra.mxu0 0
      %1164 = vmatprep.mubr.bf16.mxu0 0
      %1165 = vmatmul.mubr.bf16.gmra.mxu0 %v597
      %v1166 = vpop.f32.mrf.mxu0
      %v1167 = vadd.f32 %v958, %v1166
      %v1168 = vpop.f32.mrf.mxu0
      %v1169 = vpop.f32.mrf.mxu0
      %v1170 = vadd.f32 %v961, %v1169
      %v1171 = vpop.f32.mrf.mxu0
      %1172 = vmatprep.mubr.bf16.mxu0 0
      %1173 = vmatmul.mubr.bf16.gmra.mxu0 %v599
      %v1174 = vpop.f32.mrf.mxu0
      %v1175 = vadd.f32 %v966, %v1174
      %v1176 = vpop.f32.mrf.mxu0
      %v1177 = vpop.f32.mrf.mxu0
      %v1178 = vadd.f32 %v969, %v1177
      %v1179 = vpop.f32.mrf.mxu0
      %1180 = vmatprep.mubr.bf16.mxu0 0
      %1181 = vmatmul.mubr.bf16.gmra.mxu0 %v601
      %v1182 = vpop.f32.mrf.mxu0
      %v1183 = vadd.f32 %v974, %v1182
      %v1184 = vpop.f32.mrf.mxu0
      %v1185 = vpop.f32.mrf.mxu0
      %v1186 = vadd.f32 %v977, %v1185
      %v1187 = vpop.f32.mrf.mxu0
      %1188 = vmatprep.mubr.bf16.mxu0 0
      %1189 = vmatmul.mubr.bf16.gmra.mxu0 %v603
      %v1190 = vpop.f32.mrf.mxu0
      %v1191 = vadd.f32 %v982, %v1190
      %v1192 = vpop.f32.mrf.mxu0
      %v1193 = vpop.f32.mrf.mxu0
      %v1194 = vadd.f32 %v985, %v1193
      %v1195 = vpop.f32.mrf.mxu0
      %1196 = vmatprep.mubr.bf16.mxu0 0
      %1197 = vmatmul.mubr.bf16.gmra.mxu0 %v605
      %v1198 = vpop.f32.mrf.mxu0
      %v1199 = vadd.f32 %v990, %v1198
      %v1200 = vpop.f32.mrf.mxu0
      %v1201 = vpop.f32.mrf.mxu0
      %v1202 = vadd.f32 %v993, %v1201
      %v1203 = vpop.f32.mrf.mxu0
      %1204 = vmatprep.mubr.bf16.mxu0 0
      %1205 = vmatmul.mubr.bf16.gmra.mxu0 %v607
      %v1206 = vpop.f32.mrf.mxu0
      %v1207 = vadd.f32 %v998, %v1206
      %v1208 = vpop.f32.mrf.mxu0
      %v1209 = vpop.f32.mrf.mxu0
      %v1210 = vadd.f32 %v1001, %v1209
      %v1211 = vpop.f32.mrf.mxu0
      %1212 = vmatprep.mubr.bf16.mxu0 0
      %1213 = vmatmul.mubr.bf16.gmra.mxu0 %v609
      %v1214 = vpop.f32.mrf.mxu0
      %v1215 = vadd.f32 %v1006, %v1214
      %v1216 = vpop.f32.mrf.mxu0
      %v1217 = vpop.f32.mrf.mxu0
      %v1218 = vadd.f32 %v1009, %v1217
      %v1219 = vpop.f32.mrf.mxu0
      %1220 = vmatprep.mubr.bf16.mxu0 0
      %1221 = vmatmul.mubr.bf16.gmra.mxu0 %v611
      %v1222 = vpop.f32.mrf.mxu0
      %v1223 = vadd.f32 %v1014, %v1222
      %v1224 = vpop.f32.mrf.mxu0
      %v1225 = vpop.f32.mrf.mxu0
      %v1226 = vadd.f32 %v1017, %v1225
      %v1227 = vpop.f32.mrf.mxu0
      %1228 = vmatprep.mubr.bf16.mxu0 0
      %1229 = vmatmul.mubr.bf16.gmra.mxu0 %v613
      %v1230 = vpop.f32.mrf.mxu0
      %v1231 = vadd.f32 %v1022, %v1230
      %v1232 = vpop.f32.mrf.mxu0
      %v1233 = vpop.f32.mrf.mxu0
      %v1234 = vadd.f32 %v1025, %v1233
      %v1235 = vpop.f32.mrf.mxu0
      %1236 = vmatprep.mubr.bf16.mxu0 0
      %1237 = vmatmul.mubr.bf16.gmra.mxu0 %v615
      %v1238 = vpop.f32.mrf.mxu0
      %v1239 = vadd.f32 %v1030, %v1238
      %v1240 = vpop.f32.mrf.mxu0
      %v1241 = vpop.f32.mrf.mxu0
      %v1242 = vadd.f32 %v1033, %v1241
      %v1243 = vpop.f32.mrf.mxu0
      %1244 = vmatprep.mubr.bf16.mxu0 0
      %1245 = vmatmul.mubr.bf16.gmra.mxu0 %v617
      %v1246 = vpop.f32.mrf.mxu0
      %v1247 = vadd.f32 %v1038, %v1246
      %v1248 = vpop.f32.mrf.mxu0
      %v1249 = vpop.f32.mrf.mxu0
      %v1250 = vadd.f32 %v1041, %v1249
      %v1251 = vpop.f32.mrf.mxu0
      %1252 = vmatprep.mubr.bf16.mxu0 0
      %1253 = vmatmul.mubr.bf16.gmra.mxu0 %v619
      %v1254 = vpop.f32.mrf.mxu0
      %v1255 = vadd.f32 %v1046, %v1254
      %v1256 = vpop.f32.mrf.mxu0
      %v1257 = vpop.f32.mrf.mxu0
      %v1258 = vadd.f32 %v1049, %v1257
      %v1259 = vpop.f32.mrf.mxu0
      %1260 = vmatprep.mubr.bf16.mxu0 0
      %1261 = vmatmul.mubr.bf16.gmra.mxu0 %v621
      %v1262 = vpop.f32.mrf.mxu0
      %v1263 = vadd.f32 %v1054, %v1262
      %v1264 = vpop.f32.mrf.mxu0
      %v1265 = vpop.f32.mrf.mxu0
      %v1266 = vadd.f32 %v1057, %v1265
      %v1267 = vpop.f32.mrf.mxu0
      %1268 = vmatprep.mubr.bf16.mxu0 0
      %1269 = vmatmul.mubr.bf16.gmra.mxu0 %v623
      %v1270 = vpop.f32.mrf.mxu0
      %v1271 = vadd.f32 %v1062, %v1270
      %v1272 = vpop.f32.mrf.mxu0
      %v1273 = vpop.f32.mrf.mxu0
      %v1274 = vadd.f32 %v1065, %v1273
      %v1275 = vpop.f32.mrf.mxu0
      %1276 = vmatprep.mubr.bf16.mxu0 0
      %1277 = vmatmul.mubr.bf16.gmra.mxu0 %v625
      %v1278 = vpop.f32.mrf.mxu0
      %v1279 = vadd.f32 %v1070, %v1278
      %v1280 = vpop.f32.mrf.mxu0
      %v1281 = vpop.f32.mrf.mxu0
      %v1282 = vadd.f32 %v1073, %v1281
      %v1283 = vpop.f32.mrf.mxu0
      %1284 = vmatprep.mubr.bf16.mxu0 0
      %1285 = vmatmul.mubr.bf16.gmra.mxu0 %v627
      %v1286 = vpop.f32.mrf.mxu0
      %v1287 = vadd.f32 %v1078, %v1286
      %v1288 = vpop.f32.mrf.mxu0
      %v1289 = vpop.f32.mrf.mxu0
      %v1290 = vadd.f32 %v1081, %v1289
      %v1291 = vpop.f32.mrf.mxu0
      %1292 = vdwg.mxu0
      %vm1325 = vcmask 1046528
      %v1326 = vrot.slane %v597, 1
      %v1327 = vrot.slane %v598, 1
      %v1328 = vsel %vm1325, %v1326, %v1327
      %v1329 = vrot.slane %v599, 1
      %v1330 = vrot.slane %v600, 1
      %v1331 = vsel %vm1325, %v1329, %v1330
      %v1332 = vrot.slane %v601, 1
      %v1333 = vrot.slane %v602, 1
      %v1334 = vsel %vm1325, %v1332, %v1333
      %v1335 = vrot.slane %v603, 1
      %v1336 = vrot.slane %v604, 1
      %v1337 = vsel %vm1325, %v1335, %v1336
      %v1338 = vrot.slane %v605, 1
      %v1339 = vrot.slane %v606, 1
      %v1340 = vsel %vm1325, %v1338, %v1339
      %v1341 = vrot.slane %v607, 1
      %v1342 = vrot.slane %v608, 1
      %v1343 = vsel %vm1325, %v1341, %v1342
      %v1344 = vrot.slane %v609, 1
      %v1345 = vrot.slane %v610, 1
      %v1346 = vsel %vm1325, %v1344, %v1345
      %v1347 = vrot.slane %v611, 1
      %v1348 = vrot.slane %v612, 1
      %v1349 = vsel %vm1325, %v1347, %v1348
      %v1350 = vrot.slane %v613, 1
      %v1351 = vrot.slane %v614, 1
      %v1352 = vsel %vm1325, %v1350, %v1351
      %v1353 = vrot.slane %v615, 1
      %v1354 = vrot.slane %v616, 1
      %v1355 = vsel %vm1325, %v1353, %v1354
      %v1356 = vrot.slane %v617, 1
      %v1357 = vrot.slane %v618, 1
      %v1358 = vsel %vm1325, %v1356, %v1357
      %v1359 = vrot.slane %v619, 1
      %v1360 = vrot.slane %v620, 1
      %v1361 = vsel %vm1325, %v1359, %v1360
      %v1362 = vrot.slane %v621, 1
      %v1363 = vrot.slane %v622, 1
      %v1364 = vsel %vm1325, %v1362, %v1363
      %v1365 = vrot.slane %v623, 1
      %v1366 = vrot.slane %v624, 1
      %v1367 = vsel %vm1325, %v1365, %v1366
      %v1368 = vrot.slane %v625, 1
      %v1369 = vrot.slane %v626, 1
      %v1370 = vsel %vm1325, %v1368, %v1369
      %v1371 = vrot.slane %v627, 1
      %v1372 = vrot.slane %v628, 1
      %v1373 = vsel %vm1325, %v1371, %v1372
      %s1390 = scalar_lea.vmem %s1, 128
      %v1391 = vld [vmem:[%s1390] sm:$0xf]
      %v1392 = vld [vmem:[%s1390 + $0x4] sm:$0xf]
      %v1393 = vld [vmem:[%s1390 + $0x8] sm:$0xf]
      %v1394 = vld [vmem:[%s1390 + $0xc] sm:$0xf]
      %v1395 = vld [vmem:[%s1390 + $0x10] sm:$0xf]
      %v1396 = vld [vmem:[%s1390 + $0x14] sm:$0xf]
      %v1397 = vld [vmem:[%s1390 + $0x18] sm:$0xf]
      %v1398 = vld [vmem:[%s1390 + $0x1c] sm:$0xf]
      %v1399 = vld [vmem:[%s1390 + $0x20] sm:$0xf]
      %v1400 = vld [vmem:[%s1390 + $0x24] sm:$0xf]
      %v1401 = vld [vmem:[%s1390 + $0x28] sm:$0xf]
      %v1402 = vld [vmem:[%s1390 + $0x2c] sm:$0xf]
      %v1403 = vld [vmem:[%s1390 + $0x30] sm:$0xf]
      %v1404 = vld [vmem:[%s1390 + $0x34] sm:$0xf]
      %v1405 = vld [vmem:[%s1390 + $0x38] sm:$0xf]
      %v1406 = vld [vmem:[%s1390 + $0x3c] sm:$0xf]
      %v1423 = vunpack.c.l.b16 %v1391
      %v1424 = vunpack.c.l.b16 %v1392
      %v1425 = vunpack.c.l.b16 %v1393
      %v1426 = vunpack.c.l.b16 %v1394
      %v1427 = vunpack.c.l.b16 %v1395
      %v1428 = vunpack.c.l.b16 %v1396
      %v1429 = vunpack.c.l.b16 %v1397
      %v1430 = vunpack.c.l.b16 %v1398
      %v1431 = vunpack.c.l.b16 %v1399
      %v1432 = vunpack.c.l.b16 %v1400
      %v1433 = vunpack.c.l.b16 %v1401
      %v1434 = vunpack.c.l.b16 %v1402
      %v1435 = vunpack.c.l.b16 %v1403
      %v1436 = vunpack.c.l.b16 %v1404
      %v1437 = vunpack.c.l.b16 %v1405
      %v1438 = vunpack.c.l.b16 %v1406
      %v1439 = vpack.c.b16 %v1424, %v1423
      %v1440 = vpack.c.b16 %v1426, %v1425
      %v1441 = vpack.c.b16 %v1428, %v1427
      %v1442 = vpack.c.b16 %v1430, %v1429
      %v1443 = vpack.c.b16 %v1432, %v1431
      %v1444 = vpack.c.b16 %v1434, %v1433
      %v1445 = vpack.c.b16 %v1436, %v1435
      %v1446 = vpack.c.b16 %v1438, %v1437
      %1455 = vmatprep.subr.bf16.mxu0 0
      %1456 = vmatpush1.bf16.msra.mxu0 %v1446
      %1457 = vmatprep.subr.bf16.mxu0 0
      %1458 = vmatpush1.bf16.msra.mxu0 %v1445
      %1459 = vmatprep.subr.bf16.mxu0 0
      %1460 = vmatpush1.bf16.msra.mxu0 %v1444
      %1461 = vmatprep.subr.bf16.mxu0 0
      %1462 = vmatpush1.bf16.msra.mxu0 %v1443
      %1463 = vmatprep.subr.bf16.mxu0 0
      %1464 = vmatpush1.bf16.msra.mxu0 %v1442
      %1465 = vmatprep.subr.bf16.mxu0 0
      %1466 = vmatpush1.bf16.msra.mxu0 %v1441
      %1467 = vmatprep.subr.bf16.mxu0 0
      %1468 = vmatpush1.bf16.msra.mxu0 %v1440
      %1469 = vmatprep.subr.bf16.mxu0 0
      %1470 = vmatpush1.bf16.msra.mxu0 %v1439
      %1471 = vmatprep.subr.bf16.mxu0 0
      %1472 = vmatpush2.bf16.msra.mxu0 0
      %1473 = vmatprep.subr.bf16.mxu0 0
      %1474 = vmatpush2.bf16.msra.mxu0 0
      %1475 = vmatprep.subr.bf16.mxu0 0
      %1476 = vmatpush2.bf16.msra.mxu0 0
      %1477 = vmatprep.subr.bf16.mxu0 0
      %1478 = vmatpush2.bf16.msra.mxu0 0
      %1479 = vmatprep.subr.bf16.mxu0 0
      %1480 = vmatpush2.bf16.msra.mxu0 0
      %1481 = vmatprep.subr.bf16.mxu0 0
      %1482 = vmatpush2.bf16.msra.mxu0 0
      %1483 = vmatprep.subr.bf16.mxu0 0
      %1484 = vmatpush2.bf16.msra.mxu0 0
      %1485 = vmatprep.subr.bf16.mxu0 0
      %1486 = vmatpush2.bf16.msra.mxu0 0
      %1487 = vmatprep.mubr.bf16.mxu0 0
      %1488 = vmatmul.mubr.bf16.gmra.mxu0 %v1328
      %v1489 = vpop.f32.mrf.mxu0
      %v1490 = vadd.f32 0.0, %v1489
      %v1491 = vpop.f32.mrf.mxu0
      %v1492 = vpop.f32.mrf.mxu0
      %v1493 = vadd.f32 0.0, %v1492
      %v1494 = vpop.f32.mrf.mxu0
      %1495 = vmatprep.mubr.bf16.mxu0 0
      %1496 = vmatmul.mubr.bf16.gmra.mxu0 %v1331
      %v1497 = vpop.f32.mrf.mxu0
      %v1498 = vadd.f32 0.0, %v1497
      %v1499 = vpop.f32.mrf.mxu0
      %v1500 = vpop.f32.mrf.mxu0
      %v1501 = vadd.f32 0.0, %v1500
      %v1502 = vpop.f32.mrf.mxu0
      %1503 = vmatprep.mubr.bf16.mxu0 0
      %1504 = vmatmul.mubr.bf16.gmra.mxu0 %v1334
      %v1505 = vpop.f32.mrf.mxu0
      %v1506 = vadd.f32 0.0, %v1505
      %v1507 = vpop.f32.mrf.mxu0
      %v1508 = vpop.f32.mrf.mxu0
      %v1509 = vadd.f32 0.0, %v1508
      %v1510 = vpop.f32.mrf.mxu0
      %1511 = vmatprep.mubr.bf16.mxu0 0
      %1512 = vmatmul.mubr.bf16.gmra.mxu0 %v1337
      %v1513 = vpop.f32.mrf.mxu0
      %v1514 = vadd.f32 0.0, %v1513
      %v1515 = vpop.f32.mrf.mxu0
      %v1516 = vpop.f32.mrf.mxu0
      %v1517 = vadd.f32 0.0, %v1516
      %v1518 = vpop.f32.mrf.mxu0
      %1519 = vmatprep.mubr.bf16.mxu0 0
      %1520 = vmatmul.mubr.bf16.gmra.mxu0 %v1340
      %v1521 = vpop.f32.mrf.mxu0
      %v1522 = vadd.f32 0.0, %v1521
      %v1523 = vpop.f32.mrf.mxu0
      %v1524 = vpop.f32.mrf.mxu0
      %v1525 = vadd.f32 0.0, %v1524
      %v1526 = vpop.f32.mrf.mxu0
      %1527 = vmatprep.mubr.bf16.mxu0 0
      %1528 = vmatmul.mubr.bf16.gmra.mxu0 %v1343
      %v1529 = vpop.f32.mrf.mxu0
      %v1530 = vadd.f32 0.0, %v1529
      %v1531 = vpop.f32.mrf.mxu0
      %v1532 = vpop.f32.mrf.mxu0
      %v1533 = vadd.f32 0.0, %v1532
      %v1534 = vpop.f32.mrf.mxu0
      %1535 = vmatprep.mubr.bf16.mxu0 0
      %1536 = vmatmul.mubr.bf16.gmra.mxu0 %v1346
      %v1537 = vpop.f32.mrf.mxu0
      %v1538 = vadd.f32 0.0, %v1537
      %v1539 = vpop.f32.mrf.mxu0
      %v1540 = vpop.f32.mrf.mxu0
      %v1541 = vadd.f32 0.0, %v1540
      %v1542 = vpop.f32.mrf.mxu0
      %1543 = vmatprep.mubr.bf16.mxu0 0
      %1544 = vmatmul.mubr.bf16.gmra.mxu0 %v1349
      %v1545 = vpop.f32.mrf.mxu0
      %v1546 = vadd.f32 0.0, %v1545
      %v1547 = vpop.f32.mrf.mxu0
      %v1548 = vpop.f32.mrf.mxu0
      %v1549 = vadd.f32 0.0, %v1548
      %v1550 = vpop.f32.mrf.mxu0
      %1551 = vmatprep.mubr.bf16.mxu0 0
      %1552 = vmatmul.mubr.bf16.gmra.mxu0 %v1352
      %v1553 = vpop.f32.mrf.mxu0
      %v1554 = vadd.f32 0.0, %v1553
      %v1555 = vpop.f32.mrf.mxu0
      %v1556 = vpop.f32.mrf.mxu0
      %v1557 = vadd.f32 0.0, %v1556
      %v1558 = vpop.f32.mrf.mxu0
      %1559 = vmatprep.mubr.bf16.mxu0 0
      %1560 = vmatmul.mubr.bf16.gmra.mxu0 %v1355
      %v1561 = vpop.f32.mrf.mxu0
      %v1562 = vadd.f32 0.0, %v1561
      %v1563 = vpop.f32.mrf.mxu0
      %v1564 = vpop.f32.mrf.mxu0
      %v1565 = vadd.f32 0.0, %v1564
      %v1566 = vpop.f32.mrf.mxu0
      %1567 = vmatprep.mubr.bf16.mxu0 0
      %1568 = vmatmul.mubr.bf16.gmra.mxu0 %v1358
      %v1569 = vpop.f32.mrf.mxu0
      %v1570 = vadd.f32 0.0, %v1569
      %v1571 = vpop.f32.mrf.mxu0
      %v1572 = vpop.f32.mrf.mxu0
      %v1573 = vadd.f32 0.0, %v1572
      %v1574 = vpop.f32.mrf.mxu0
      %1575 = vmatprep.mubr.bf16.mxu0 0
      %1576 = vmatmul.mubr.bf16.gmra.mxu0 %v1361
      %v1577 = vpop.f32.mrf.mxu0
      %v1578 = vadd.f32 0.0, %v1577
      %v1579 = vpop.f32.mrf.mxu0
      %v1580 = vpop.f32.mrf.mxu0
      %v1581 = vadd.f32 0.0, %v1580
      %v1582 = vpop.f32.mrf.mxu0
      %1583 = vmatprep.mubr.bf16.mxu0 0
      %1584 = vmatmul.mubr.bf16.gmra.mxu0 %v1364
      %v1585 = vpop.f32.mrf.mxu0
      %v1586 = vadd.f32 0.0, %v1585
      %v1587 = vpop.f32.mrf.mxu0
      %v1588 = vpop.f32.mrf.mxu0
      %v1589 = vadd.f32 0.0, %v1588
      %v1590 = vpop.f32.mrf.mxu0
      %1591 = vmatprep.mubr.bf16.mxu0 0
      %1592 = vmatmul.mubr.bf16.gmra.mxu0 %v1367
      %v1593 = vpop.f32.mrf.mxu0
      %v1594 = vadd.f32 0.0, %v1593
      %v1595 = vpop.f32.mrf.mxu0
      %v1596 = vpop.f32.mrf.mxu0
      %v1597 = vadd.f32 0.0, %v1596
      %v1598 = vpop.f32.mrf.mxu0
      %1599 = vmatprep.mubr.bf16.mxu0 0
      %1600 = vmatmul.mubr.bf16.gmra.mxu0 %v1370
      %v1601 = vpop.f32.mrf.mxu0
      %v1602 = vadd.f32 0.0, %v1601
      %v1603 = vpop.f32.mrf.mxu0
      %v1604 = vpop.f32.mrf.mxu0
      %v1605 = vadd.f32 0.0, %v1604
      %v1606 = vpop.f32.mrf.mxu0
      %1607 = vmatprep.mubr.bf16.mxu0 0
      %1608 = vmatmul.mubr.bf16.gmra.mxu0 %v1373
      %v1609 = vpop.f32.mrf.mxu0
      %v1610 = vadd.f32 0.0, %v1609
      %v1611 = vpop.f32.mrf.mxu0
      %v1612 = vpop.f32.mrf.mxu0
      %v1613 = vadd.f32 0.0, %v1612
      %v1614 = vpop.f32.mrf.mxu0
      %1615 = vdwg.mxu0
      %v1616 = vadd.f32 %v1167, %v1490
      %v1617 = vadd.f32 %v1170, %v1493
      %v1618 = vadd.f32 %v1175, %v1498
      %v1619 = vadd.f32 %v1178, %v1501
      %v1620 = vadd.f32 %v1183, %v1506
      %v1621 = vadd.f32 %v1186, %v1509
      %v1622 = vadd.f32 %v1191, %v1514
      %v1623 = vadd.f32 %v1194, %v1517
      %v1624 = vadd.f32 %v1199, %v1522
      %v1625 = vadd.f32 %v1202, %v1525
      %v1626 = vadd.f32 %v1207, %v1530
      %v1627 = vadd.f32 %v1210, %v1533
      %v1628 = vadd.f32 %v1215, %v1538
      %v1629 = vadd.f32 %v1218, %v1541
      %v1630 = vadd.f32 %v1223, %v1546
      %v1631 = vadd.f32 %v1226, %v1549
      %v1632 = vadd.f32 %v1231, %v1554
      %v1633 = vadd.f32 %v1234, %v1557
      %v1634 = vadd.f32 %v1239, %v1562
      %v1635 = vadd.f32 %v1242, %v1565
      %v1636 = vadd.f32 %v1247, %v1570
      %v1637 = vadd.f32 %v1250, %v1573
      %v1638 = vadd.f32 %v1255, %v1578
      %v1639 = vadd.f32 %v1258, %v1581
      %v1640 = vadd.f32 %v1263, %v1586
      %v1641 = vadd.f32 %v1266, %v1589
      %v1642 = vadd.f32 %v1271, %v1594
      %v1643 = vadd.f32 %v1274, %v1597
      %v1644 = vadd.f32 %v1279, %v1602
      %v1645 = vadd.f32 %v1282, %v1605
      %v1646 = vadd.f32 %v1287, %v1610
      %v1647 = vadd.f32 %v1290, %v1613
      %s1648 = scalar_lea.vmem %s1, 192
      %v1649 = vld [vmem:[%s1648] sm:$0xf]
      %v1650 = vld [vmem:[%s1648 + $0x4] sm:$0xf]
      %v1651 = vld [vmem:[%s1648 + $0x8] sm:$0xf]
      %v1652 = vld [vmem:[%s1648 + $0xc] sm:$0xf]
      %v1653 = vld [vmem:[%s1648 + $0x10] sm:$0xf]
      %v1654 = vld [vmem:[%s1648 + $0x14] sm:$0xf]
      %v1655 = vld [vmem:[%s1648 + $0x18] sm:$0xf]
      %v1656 = vld [vmem:[%s1648 + $0x1c] sm:$0xf]
      %v1657 = vld [vmem:[%s1648 + $0x20] sm:$0xf]
      %v1658 = vld [vmem:[%s1648 + $0x24] sm:$0xf]
      %v1659 = vld [vmem:[%s1648 + $0x28] sm:$0xf]
      %v1660 = vld [vmem:[%s1648 + $0x2c] sm:$0xf]
      %v1661 = vld [vmem:[%s1648 + $0x30] sm:$0xf]
      %v1662 = vld [vmem:[%s1648 + $0x34] sm:$0xf]
      %v1663 = vld [vmem:[%s1648 + $0x38] sm:$0xf]
      %v1664 = vld [vmem:[%s1648 + $0x3c] sm:$0xf]
      %v1681 = vunpack.c.l.b16 %v1649
      %v1682 = vunpack.c.l.b16 %v1650
      %v1683 = vunpack.c.l.b16 %v1651
      %v1684 = vunpack.c.l.b16 %v1652
      %v1685 = vunpack.c.l.b16 %v1653
      %v1686 = vunpack.c.l.b16 %v1654
      %v1687 = vunpack.c.l.b16 %v1655
      %v1688 = vunpack.c.l.b16 %v1656
      %v1689 = vunpack.c.l.b16 %v1657
      %v1690 = vunpack.c.l.b16 %v1658
      %v1691 = vunpack.c.l.b16 %v1659
      %v1692 = vunpack.c.l.b16 %v1660
      %v1693 = vunpack.c.l.b16 %v1661
      %v1694 = vunpack.c.l.b16 %v1662
      %v1695 = vunpack.c.l.b16 %v1663
      %v1696 = vunpack.c.l.b16 %v1664
      %v1697 = vpack.c.b16 %v1682, %v1681
      %v1698 = vpack.c.b16 %v1684, %v1683
      %v1699 = vpack.c.b16 %v1686, %v1685
      %v1700 = vpack.c.b16 %v1688, %v1687
      %v1701 = vpack.c.b16 %v1690, %v1689
      %v1702 = vpack.c.b16 %v1692, %v1691
      %v1703 = vpack.c.b16 %v1694, %v1693
      %v1704 = vpack.c.b16 %v1696, %v1695
      %1713 = vmatprep.subr.bf16.mxu0 0
      %1714 = vmatpush1.bf16.msra.mxu0 %v1704
      %1715 = vmatprep.subr.bf16.mxu0 0
      %1716 = vmatpush1.bf16.msra.mxu0 %v1703
      %1717 = vmatprep.subr.bf16.mxu0 0
      %1718 = vmatpush1.bf16.msra.mxu0 %v1702
      %1719 = vmatprep.subr.bf16.mxu0 0
      %1720 = vmatpush1.bf16.msra.mxu0 %v1701
      %1721 = vmatprep.subr.bf16.mxu0 0
      %1722 = vmatpush1.bf16.msra.mxu0 %v1700
      %1723 = vmatprep.subr.bf16.mxu0 0
      %1724 = vmatpush1.bf16.msra.mxu0 %v1699
      %1725 = vmatprep.subr.bf16.mxu0 0
      %1726 = vmatpush1.bf16.msra.mxu0 %v1698
      %1727 = vmatprep.subr.bf16.mxu0 0
      %1728 = vmatpush1.bf16.msra.mxu0 %v1697
      %1729 = vmatprep.subr.bf16.mxu0 0
      %1730 = vmatpush2.bf16.msra.mxu0 0
      %1731 = vmatprep.subr.bf16.mxu0 0
      %1732 = vmatpush2.bf16.msra.mxu0 0
      %1733 = vmatprep.subr.bf16.mxu0 0
      %1734 = vmatpush2.bf16.msra.mxu0 0
      %1735 = vmatprep.subr.bf16.mxu0 0
      %1736 = vmatpush2.bf16.msra.mxu0 0
      %1737 = vmatprep.subr.bf16.mxu0 0
      %1738 = vmatpush2.bf16.msra.mxu0 0
      %1739 = vmatprep.subr.bf16.mxu0 0
      %1740 = vmatpush2.bf16.msra.mxu0 0
      %1741 = vmatprep.subr.bf16.mxu0 0
      %1742 = vmatpush2.bf16.msra.mxu0 0
      %1743 = vmatprep.subr.bf16.mxu0 0
      %1744 = vmatpush2.bf16.msra.mxu0 0
      %1745 = vmatprep.mubr.bf16.mxu0 0
      %1746 = vmatmul.mubr.bf16.gmra.mxu0 %v599
      %v1747 = vpop.f32.mrf.mxu0
      %v1748 = vadd.f32 0.0, %v1747
      %v1749 = vpop.f32.mrf.mxu0
      %v1750 = vpop.f32.mrf.mxu0
      %v1751 = vadd.f32 0.0, %v1750
      %v1752 = vpop.f32.mrf.mxu0
      %1753 = vmatprep.mubr.bf16.mxu0 0
      %1754 = vmatmul.mubr.bf16.gmra.mxu0 %v601
      %v1755 = vpop.f32.mrf.mxu0
      %v1756 = vadd.f32 0.0, %v1755
      %v1757 = vpop.f32.mrf.mxu0
      %v1758 = vpop.f32.mrf.mxu0
      %v1759 = vadd.f32 0.0, %v1758
      %v1760 = vpop.f32.mrf.mxu0
      %1761 = vmatprep.mubr.bf16.mxu0 0
      %1762 = vmatmul.mubr.bf16.gmra.mxu0 %v603
      %v1763 = vpop.f32.mrf.mxu0
      %v1764 = vadd.f32 0.0, %v1763
      %v1765 = vpop.f32.mrf.mxu0
      %v1766 = vpop.f32.mrf.mxu0
      %v1767 = vadd.f32 0.0, %v1766
      %v1768 = vpop.f32.mrf.mxu0
      %1769 = vmatprep.mubr.bf16.mxu0 0
      %1770 = vmatmul.mubr.bf16.gmra.mxu0 %v605
      %v1771 = vpop.f32.mrf.mxu0
      %v1772 = vadd.f32 0.0, %v1771
      %v1773 = vpop.f32.mrf.mxu0
      %v1774 = vpop.f32.mrf.mxu0
      %v1775 = vadd.f32 0.0, %v1774
      %v1776 = vpop.f32.mrf.mxu0
      %1777 = vmatprep.mubr.bf16.mxu0 0
      %1778 = vmatmul.mubr.bf16.gmra.mxu0 %v607
      %v1779 = vpop.f32.mrf.mxu0
      %v1780 = vadd.f32 0.0, %v1779
      %v1781 = vpop.f32.mrf.mxu0
      %v1782 = vpop.f32.mrf.mxu0
      %v1783 = vadd.f32 0.0, %v1782
      %v1784 = vpop.f32.mrf.mxu0
      %1785 = vmatprep.mubr.bf16.mxu0 0
      %1786 = vmatmul.mubr.bf16.gmra.mxu0 %v609
      %v1787 = vpop.f32.mrf.mxu0
      %v1788 = vadd.f32 0.0, %v1787
      %v1789 = vpop.f32.mrf.mxu0
      %v1790 = vpop.f32.mrf.mxu0
      %v1791 = vadd.f32 0.0, %v1790
      %v1792 = vpop.f32.mrf.mxu0
      %1793 = vmatprep.mubr.bf16.mxu0 0
      %1794 = vmatmul.mubr.bf16.gmra.mxu0 %v611
      %v1795 = vpop.f32.mrf.mxu0
      %v1796 = vadd.f32 0.0, %v1795
      %v1797 = vpop.f32.mrf.mxu0
      %v1798 = vpop.f32.mrf.mxu0
      %v1799 = vadd.f32 0.0, %v1798
      %v1800 = vpop.f32.mrf.mxu0
      %1801 = vmatprep.mubr.bf16.mxu0 0
      %1802 = vmatmul.mubr.bf16.gmra.mxu0 %v613
      %v1803 = vpop.f32.mrf.mxu0
      %v1804 = vadd.f32 0.0, %v1803
      %v1805 = vpop.f32.mrf.mxu0
      %v1806 = vpop.f32.mrf.mxu0
      %v1807 = vadd.f32 0.0, %v1806
      %v1808 = vpop.f32.mrf.mxu0
      %1809 = vmatprep.mubr.bf16.mxu0 0
      %1810 = vmatmul.mubr.bf16.gmra.mxu0 %v615
      %v1811 = vpop.f32.mrf.mxu0
      %v1812 = vadd.f32 0.0, %v1811
      %v1813 = vpop.f32.mrf.mxu0
      %v1814 = vpop.f32.mrf.mxu0
      %v1815 = vadd.f32 0.0, %v1814
      %v1816 = vpop.f32.mrf.mxu0
      %1817 = vmatprep.mubr.bf16.mxu0 0
      %1818 = vmatmul.mubr.bf16.gmra.mxu0 %v617
      %v1819 = vpop.f32.mrf.mxu0
      %v1820 = vadd.f32 0.0, %v1819
      %v1821 = vpop.f32.mrf.mxu0
      %v1822 = vpop.f32.mrf.mxu0
      %v1823 = vadd.f32 0.0, %v1822
      %v1824 = vpop.f32.mrf.mxu0
      %1825 = vmatprep.mubr.bf16.mxu0 0
      %1826 = vmatmul.mubr.bf16.gmra.mxu0 %v619
      %v1827 = vpop.f32.mrf.mxu0
      %v1828 = vadd.f32 0.0, %v1827
      %v1829 = vpop.f32.mrf.mxu0
      %v1830 = vpop.f32.mrf.mxu0
      %v1831 = vadd.f32 0.0, %v1830
      %v1832 = vpop.f32.mrf.mxu0
      %1833 = vmatprep.mubr.bf16.mxu0 0
      %1834 = vmatmul.mubr.bf16.gmra.mxu0 %v621
      %v1835 = vpop.f32.mrf.mxu0
      %v1836 = vadd.f32 0.0, %v1835
      %v1837 = vpop.f32.mrf.mxu0
      %v1838 = vpop.f32.mrf.mxu0
      %v1839 = vadd.f32 0.0, %v1838
      %v1840 = vpop.f32.mrf.mxu0
      %1841 = vmatprep.mubr.bf16.mxu0 0
      %1842 = vmatmul.mubr.bf16.gmra.mxu0 %v623
      %v1843 = vpop.f32.mrf.mxu0
      %v1844 = vadd.f32 0.0, %v1843
      %v1845 = vpop.f32.mrf.mxu0
      %v1846 = vpop.f32.mrf.mxu0
      %v1847 = vadd.f32 0.0, %v1846
      %v1848 = vpop.f32.mrf.mxu0
      %1849 = vmatprep.mubr.bf16.mxu0 0
      %1850 = vmatmul.mubr.bf16.gmra.mxu0 %v625
      %v1851 = vpop.f32.mrf.mxu0
      %v1852 = vadd.f32 0.0, %v1851
      %v1853 = vpop.f32.mrf.mxu0
      %v1854 = vpop.f32.mrf.mxu0
      %v1855 = vadd.f32 0.0, %v1854
      %v1856 = vpop.f32.mrf.mxu0
      %1857 = vmatprep.mubr.bf16.mxu0 0
      %1858 = vmatmul.mubr.bf16.gmra.mxu0 %v627
      %v1859 = vpop.f32.mrf.mxu0
      %v1860 = vadd.f32 0.0, %v1859
      %v1861 = vpop.f32.mrf.mxu0
      %v1862 = vpop.f32.mrf.mxu0
      %v1863 = vadd.f32 0.0, %v1862
      %v1864 = vpop.f32.mrf.mxu0
      %1865 = vmatprep.mubr.bf16.mxu0 0
      %1866 = vmatmul.mubr.bf16.gmra.mxu0 %v629
      %v1867 = vpop.f32.mrf.mxu0
      %v1868 = vadd.f32 0.0, %v1867
      %v1869 = vpop.f32.mrf.mxu0
      %v1870 = vpop.f32.mrf.mxu0
      %v1871 = vadd.f32 0.0, %v1870
      %v1872 = vpop.f32.mrf.mxu0
      %1873 = vdwg.mxu0
      %v1874 = vadd.f32 %v1616, %v1748
      %v1875 = vadd.f32 %v1617, %v1751
      %v1876 = vadd.f32 %v1618, %v1756
      %v1877 = vadd.f32 %v1619, %v1759
      %v1878 = vadd.f32 %v1620, %v1764
      %v1879 = vadd.f32 %v1621, %v1767
      %v1880 = vadd.f32 %v1622, %v1772
      %v1881 = vadd.f32 %v1623, %v1775
      %v1882 = vadd.f32 %v1624, %v1780
      %v1883 = vadd.f32 %v1625, %v1783
      %v1884 = vadd.f32 %v1626, %v1788
      %v1885 = vadd.f32 %v1627, %v1791
      %v1886 = vadd.f32 %v1628, %v1796
      %v1887 = vadd.f32 %v1629, %v1799
      %v1888 = vadd.f32 %v1630, %v1804
      %v1889 = vadd.f32 %v1631, %v1807
      %v1890 = vadd.f32 %v1632, %v1812
      %v1891 = vadd.f32 %v1633, %v1815
      %v1892 = vadd.f32 %v1634, %v1820
      %v1893 = vadd.f32 %v1635, %v1823
      %v1894 = vadd.f32 %v1636, %v1828
      %v1895 = vadd.f32 %v1637, %v1831
      %v1896 = vadd.f32 %v1638, %v1836
      %v1897 = vadd.f32 %v1639, %v1839
      %v1898 = vadd.f32 %v1640, %v1844
      %v1899 = vadd.f32 %v1641, %v1847
      %v1900 = vadd.f32 %v1642, %v1852
      %v1901 = vadd.f32 %v1643, %v1855
      %v1902 = vadd.f32 %v1644, %v1860
      %v1903 = vadd.f32 %v1645, %v1863
      %v1904 = vadd.f32 %v1646, %v1868
      %v1905 = vadd.f32 %v1647, %v1871
      %v1907 = vshrl.u32 %v629, 16
      %v1909 = vshll.u32 %v629, 16
      %v1911 = vrot.slane %v1909, 1
      %v1912 = vor.u32 %v1907, %v1911
      %v1914 = vshll.u32 %v630, 16
      %v1916 = vrot.slane %v1914, 1
      %v1917 = vsel %vm649, %v1912, %v1916
      %s1919 = scalar_lea.vmem %s1, 256
      %v1920 = vld [vmem:[%s1919] sm:$0xf]
      %v1921 = vld [vmem:[%s1919 + $0x4] sm:$0xf]
      %v1922 = vld [vmem:[%s1919 + $0x8] sm:$0xf]
      %v1923 = vld [vmem:[%s1919 + $0xc] sm:$0xf]
      %v1924 = vld [vmem:[%s1919 + $0x10] sm:$0xf]
      %v1925 = vld [vmem:[%s1919 + $0x14] sm:$0xf]
      %v1926 = vld [vmem:[%s1919 + $0x18] sm:$0xf]
      %v1927 = vld [vmem:[%s1919 + $0x1c] sm:$0xf]
      %v1928 = vld [vmem:[%s1919 + $0x20] sm:$0xf]
      %v1929 = vld [vmem:[%s1919 + $0x24] sm:$0xf]
      %v1930 = vld [vmem:[%s1919 + $0x28] sm:$0xf]
      %v1931 = vld [vmem:[%s1919 + $0x2c] sm:$0xf]
      %v1932 = vld [vmem:[%s1919 + $0x30] sm:$0xf]
      %v1933 = vld [vmem:[%s1919 + $0x34] sm:$0xf]
      %v1934 = vld [vmem:[%s1919 + $0x38] sm:$0xf]
      %v1935 = vld [vmem:[%s1919 + $0x3c] sm:$0xf]
      %v1952 = vunpack.c.l.b16 %v1920
      %v1953 = vunpack.c.l.b16 %v1921
      %v1954 = vunpack.c.l.b16 %v1922
      %v1955 = vunpack.c.l.b16 %v1923
      %v1956 = vunpack.c.l.b16 %v1924
      %v1957 = vunpack.c.l.b16 %v1925
      %v1958 = vunpack.c.l.b16 %v1926
      %v1959 = vunpack.c.l.b16 %v1927
      %v1960 = vunpack.c.l.b16 %v1928
      %v1961 = vunpack.c.l.b16 %v1929
      %v1962 = vunpack.c.l.b16 %v1930
      %v1963 = vunpack.c.l.b16 %v1931
      %v1964 = vunpack.c.l.b16 %v1932
      %v1965 = vunpack.c.l.b16 %v1933
      %v1966 = vunpack.c.l.b16 %v1934
      %v1967 = vunpack.c.l.b16 %v1935
      %v1968 = vpack.c.b16 %v1953, %v1952
      %v1969 = vpack.c.b16 %v1955, %v1954
      %v1970 = vpack.c.b16 %v1957, %v1956
      %v1971 = vpack.c.b16 %v1959, %v1958
      %v1972 = vpack.c.b16 %v1961, %v1960
      %v1973 = vpack.c.b16 %v1963, %v1962
      %v1974 = vpack.c.b16 %v1965, %v1964
      %v1975 = vpack.c.b16 %v1967, %v1966
      %1984 = vmatprep.subr.bf16.mxu0 0
      %1985 = vmatpush1.bf16.msra.mxu0 %v1975
      %1986 = vmatprep.subr.bf16.mxu0 0
      %1987 = vmatpush1.bf16.msra.mxu0 %v1974
      %1988 = vmatprep.subr.bf16.mxu0 0
      %1989 = vmatpush1.bf16.msra.mxu0 %v1973
      %1990 = vmatprep.subr.bf16.mxu0 0
      %1991 = vmatpush1.bf16.msra.mxu0 %v1972
      %1992 = vmatprep.subr.bf16.mxu0 0
      %1993 = vmatpush1.bf16.msra.mxu0 %v1971
      %1994 = vmatprep.subr.bf16.mxu0 0
      %1995 = vmatpush1.bf16.msra.mxu0 %v1970
      %1996 = vmatprep.subr.bf16.mxu0 0
      %1997 = vmatpush1.bf16.msra.mxu0 %v1969
      %1998 = vmatprep.subr.bf16.mxu0 0
      %1999 = vmatpush1.bf16.msra.mxu0 %v1968
      %2000 = vmatprep.subr.bf16.mxu0 0
      %2001 = vmatpush2.bf16.msra.mxu0 0
      %2002 = vmatprep.subr.bf16.mxu0 0
      %2003 = vmatpush2.bf16.msra.mxu0 0
      %2004 = vmatprep.subr.bf16.mxu0 0
      %2005 = vmatpush2.bf16.msra.mxu0 0
      %2006 = vmatprep.subr.bf16.mxu0 0
      %2007 = vmatpush2.bf16.msra.mxu0 0
      %2008 = vmatprep.subr.bf16.mxu0 0
      %2009 = vmatpush2.bf16.msra.mxu0 0
      %2010 = vmatprep.subr.bf16.mxu0 0
      %2011 = vmatpush2.bf16.msra.mxu0 0
      %2012 = vmatprep.subr.bf16.mxu0 0
      %2013 = vmatpush2.bf16.msra.mxu0 0
      %2014 = vmatprep.subr.bf16.mxu0 0
      %2015 = vmatpush2.bf16.msra.mxu0 0
      %2016 = vmatprep.mubr.bf16.mxu0 0
      %2017 = vmatmul.mubr.bf16.gmra.mxu0 %v673
      %v2018 = vpop.f32.mrf.mxu0
      %v2019 = vadd.f32 0.0, %v2018
      %v2020 = vpop.f32.mrf.mxu0
      %v2021 = vpop.f32.mrf.mxu0
      %v2022 = vadd.f32 0.0, %v2021
      %v2023 = vpop.f32.mrf.mxu0
      %2024 = vmatprep.mubr.bf16.mxu0 0
      %2025 = vmatmul.mubr.bf16.gmra.mxu0 %v685
      %v2026 = vpop.f32.mrf.mxu0
      %v2027 = vadd.f32 0.0, %v2026
      %v2028 = vpop.f32.mrf.mxu0
      %v2029 = vpop.f32.mrf.mxu0
      %v2030 = vadd.f32 0.0, %v2029
      %v2031 = vpop.f32.mrf.mxu0
      %2032 = vmatprep.mubr.bf16.mxu0 0
      %2033 = vmatmul.mubr.bf16.gmra.mxu0 %v697
      %v2034 = vpop.f32.mrf.mxu0
      %v2035 = vadd.f32 0.0, %v2034
      %v2036 = vpop.f32.mrf.mxu0
      %v2037 = vpop.f32.mrf.mxu0
      %v2038 = vadd.f32 0.0, %v2037
      %v2039 = vpop.f32.mrf.mxu0
      %2040 = vmatprep.mubr.bf16.mxu0 0
      %2041 = vmatmul.mubr.bf16.gmra.mxu0 %v709
      %v2042 = vpop.f32.mrf.mxu0
      %v2043 = vadd.f32 0.0, %v2042
      %v2044 = vpop.f32.mrf.mxu0
      %v2045 = vpop.f32.mrf.mxu0
      %v2046 = vadd.f32 0.0, %v2045
      %v2047 = vpop.f32.mrf.mxu0
      %2048 = vmatprep.mubr.bf16.mxu0 0
      %2049 = vmatmul.mubr.bf16.gmra.mxu0 %v721
      %v2050 = vpop.f32.mrf.mxu0
      %v2051 = vadd.f32 0.0, %v2050
      %v2052 = vpop.f32.mrf.mxu0
      %v2053 = vpop.f32.mrf.mxu0
      %v2054 = vadd.f32 0.0, %v2053
      %v2055 = vpop.f32.mrf.mxu0
      %2056 = vmatprep.mubr.bf16.mxu0 0
      %2057 = vmatmul.mubr.bf16.gmra.mxu0 %v733
      %v2058 = vpop.f32.mrf.mxu0
      %v2059 = vadd.f32 0.0, %v2058
      %v2060 = vpop.f32.mrf.mxu0
      %v2061 = vpop.f32.mrf.mxu0
      %v2062 = vadd.f32 0.0, %v2061
      %v2063 = vpop.f32.mrf.mxu0
      %2064 = vmatprep.mubr.bf16.mxu0 0
      %2065 = vmatmul.mubr.bf16.gmra.mxu0 %v745
      %v2066 = vpop.f32.mrf.mxu0
      %v2067 = vadd.f32 0.0, %v2066
      %v2068 = vpop.f32.mrf.mxu0
      %v2069 = vpop.f32.mrf.mxu0
      %v2070 = vadd.f32 0.0, %v2069
      %v2071 = vpop.f32.mrf.mxu0
      %2072 = vmatprep.mubr.bf16.mxu0 0
      %2073 = vmatmul.mubr.bf16.gmra.mxu0 %v757
      %v2074 = vpop.f32.mrf.mxu0
      %v2075 = vadd.f32 0.0, %v2074
      %v2076 = vpop.f32.mrf.mxu0
      %v2077 = vpop.f32.mrf.mxu0
      %v2078 = vadd.f32 0.0, %v2077
      %v2079 = vpop.f32.mrf.mxu0
      %2080 = vmatprep.mubr.bf16.mxu0 0
      %2081 = vmatmul.mubr.bf16.gmra.mxu0 %v769
      %v2082 = vpop.f32.mrf.mxu0
      %v2083 = vadd.f32 0.0, %v2082
      %v2084 = vpop.f32.mrf.mxu0
      %v2085 = vpop.f32.mrf.mxu0
      %v2086 = vadd.f32 0.0, %v2085
      %v2087 = vpop.f32.mrf.mxu0
      %2088 = vmatprep.mubr.bf16.mxu0 0
      %2089 = vmatmul.mubr.bf16.gmra.mxu0 %v781
      %v2090 = vpop.f32.mrf.mxu0
      %v2091 = vadd.f32 0.0, %v2090
      %v2092 = vpop.f32.mrf.mxu0
      %v2093 = vpop.f32.mrf.mxu0
      %v2094 = vadd.f32 0.0, %v2093
      %v2095 = vpop.f32.mrf.mxu0
      %2096 = vmatprep.mubr.bf16.mxu0 0
      %2097 = vmatmul.mubr.bf16.gmra.mxu0 %v793
      %v2098 = vpop.f32.mrf.mxu0
      %v2099 = vadd.f32 0.0, %v2098
      %v2100 = vpop.f32.mrf.mxu0
      %v2101 = vpop.f32.mrf.mxu0
      %v2102 = vadd.f32 0.0, %v2101
      %v2103 = vpop.f32.mrf.mxu0
      %2104 = vmatprep.mubr.bf16.mxu0 0
      %2105 = vmatmul.mubr.bf16.gmra.mxu0 %v805
      %v2106 = vpop.f32.mrf.mxu0
      %v2107 = vadd.f32 0.0, %v2106
      %v2108 = vpop.f32.mrf.mxu0
      %v2109 = vpop.f32.mrf.mxu0
      %v2110 = vadd.f32 0.0, %v2109
      %v2111 = vpop.f32.mrf.mxu0
      %2112 = vmatprep.mubr.bf16.mxu0 0
      %2113 = vmatmul.mubr.bf16.gmra.mxu0 %v817
      %v2114 = vpop.f32.mrf.mxu0
      %v2115 = vadd.f32 0.0, %v2114
      %v2116 = vpop.f32.mrf.mxu0
      %v2117 = vpop.f32.mrf.mxu0
      %v2118 = vadd.f32 0.0, %v2117
      %v2119 = vpop.f32.mrf.mxu0
      %2120 = vmatprep.mubr.bf16.mxu0 0
      %2121 = vmatmul.mubr.bf16.gmra.mxu0 %v829
      %v2122 = vpop.f32.mrf.mxu0
      %v2123 = vadd.f32 0.0, %v2122
      %v2124 = vpop.f32.mrf.mxu0
      %v2125 = vpop.f32.mrf.mxu0
      %v2126 = vadd.f32 0.0, %v2125
      %v2127 = vpop.f32.mrf.mxu0
      %2128 = vmatprep.mubr.bf16.mxu0 0
      %2129 = vmatmul.mubr.bf16.gmra.mxu0 %v841
      %v2130 = vpop.f32.mrf.mxu0
      %v2131 = vadd.f32 0.0, %v2130
      %v2132 = vpop.f32.mrf.mxu0
      %v2133 = vpop.f32.mrf.mxu0
      %v2134 = vadd.f32 0.0, %v2133
      %v2135 = vpop.f32.mrf.mxu0
      %2136 = vmatprep.mubr.bf16.mxu0 0
      %2137 = vmatmul.mubr.bf16.gmra.mxu0 %v1917
      %v2138 = vpop.f32.mrf.mxu0
      %v2139 = vadd.f32 0.0, %v2138
      %v2140 = vpop.f32.mrf.mxu0
      %v2141 = vpop.f32.mrf.mxu0
      %v2142 = vadd.f32 0.0, %v2141
      %v2143 = vpop.f32.mrf.mxu0
      %2144 = vdwg.mxu0
      %v2145 = vadd.f32 %v1874, %v2019
      %v2146 = vadd.f32 %v1875, %v2022
      %v2147 = vadd.f32 %v1876, %v2027
      %v2148 = vadd.f32 %v1877, %v2030
      %v2149 = vadd.f32 %v1878, %v2035
      %v2150 = vadd.f32 %v1879, %v2038
      %v2151 = vadd.f32 %v1880, %v2043
      %v2152 = vadd.f32 %v1881, %v2046
      %v2153 = vadd.f32 %v1882, %v2051
      %v2154 = vadd.f32 %v1883, %v2054
      %v2155 = vadd.f32 %v1884, %v2059
      %v2156 = vadd.f32 %v1885, %v2062
      %v2157 = vadd.f32 %v1886, %v2067
      %v2158 = vadd.f32 %v1887, %v2070
      %v2159 = vadd.f32 %v1888, %v2075
      %v2160 = vadd.f32 %v1889, %v2078
      %v2161 = vadd.f32 %v1890, %v2083
      %v2162 = vadd.f32 %v1891, %v2086
      %v2163 = vadd.f32 %v1892, %v2091
      %v2164 = vadd.f32 %v1893, %v2094
      %v2165 = vadd.f32 %v1894, %v2099
      %v2166 = vadd.f32 %v1895, %v2102
      %v2167 = vadd.f32 %v1896, %v2107
      %v2168 = vadd.f32 %v1897, %v2110
      %v2169 = vadd.f32 %v1898, %v2115
      %v2170 = vadd.f32 %v1899, %v2118
      %v2171 = vadd.f32 %v1900, %v2123
      %v2172 = vadd.f32 %v1901, %v2126
      %v2173 = vadd.f32 %v1902, %v2131
      %v2174 = vadd.f32 %v1903, %v2134
      %v2175 = vadd.f32 %v1904, %v2139
      %v2176 = vadd.f32 %v1905, %v2142
      %v2179 = vrot.slane %v629, 1
      %v2180 = vrot.slane %v630, 1
      %v2181 = vsel %vm1325, %v2179, %v2180
      %s2183 = scalar_lea.vmem %s1, 320
      %v2184 = vld [vmem:[%s2183] sm:$0xf]
      %v2185 = vld [vmem:[%s2183 + $0x4] sm:$0xf]
      %v2186 = vld [vmem:[%s2183 + $0x8] sm:$0xf]
      %v2187 = vld [vmem:[%s2183 + $0xc] sm:$0xf]
      %v2188 = vld [vmem:[%s2183 + $0x10] sm:$0xf]
      %v2189 = vld [vmem:[%s2183 + $0x14] sm:$0xf]
      %v2190 = vld [vmem:[%s2183 + $0x18] sm:$0xf]
      %v2191 = vld [vmem:[%s2183 + $0x1c] sm:$0xf]
      %v2192 = vld [vmem:[%s2183 + $0x20] sm:$0xf]
      %v2193 = vld [vmem:[%s2183 + $0x24] sm:$0xf]
      %v2194 = vld [vmem:[%s2183 + $0x28] sm:$0xf]
      %v2195 = vld [vmem:[%s2183 + $0x2c] sm:$0xf]
      %v2196 = vld [vmem:[%s2183 + $0x30] sm:$0xf]
      %v2197 = vld [vmem:[%s2183 + $0x34] sm:$0xf]
      %v2198 = vld [vmem:[%s2183 + $0x38] sm:$0xf]
      %v2199 = vld [vmem:[%s2183 + $0x3c] sm:$0xf]
      %v2216 = vunpack.c.l.b16 %v2184
      %v2217 = vunpack.c.l.b16 %v2185
      %v2218 = vunpack.c.l.b16 %v2186
      %v2219 = vunpack.c.l.b16 %v2187
      %v2220 = vunpack.c.l.b16 %v2188
      %v2221 = vunpack.c.l.b16 %v2189
      %v2222 = vunpack.c.l.b16 %v2190
      %v2223 = vunpack.c.l.b16 %v2191
      %v2224 = vunpack.c.l.b16 %v2192
      %v2225 = vunpack.c.l.b16 %v2193
      %v2226 = vunpack.c.l.b16 %v2194
      %v2227 = vunpack.c.l.b16 %v2195
      %v2228 = vunpack.c.l.b16 %v2196
      %v2229 = vunpack.c.l.b16 %v2197
      %v2230 = vunpack.c.l.b16 %v2198
      %v2231 = vunpack.c.l.b16 %v2199
      %v2232 = vpack.c.b16 %v2217, %v2216
      %v2233 = vpack.c.b16 %v2219, %v2218
      %v2234 = vpack.c.b16 %v2221, %v2220
      %v2235 = vpack.c.b16 %v2223, %v2222
      %v2236 = vpack.c.b16 %v2225, %v2224
      %v2237 = vpack.c.b16 %v2227, %v2226
      %v2238 = vpack.c.b16 %v2229, %v2228
      %v2239 = vpack.c.b16 %v2231, %v2230
      %2248 = vmatprep.subr.bf16.mxu0 0
      %2249 = vmatpush1.bf16.msra.mxu0 %v2239
      %2250 = vmatprep.subr.bf16.mxu0 0
      %2251 = vmatpush1.bf16.msra.mxu0 %v2238
      %2252 = vmatprep.subr.bf16.mxu0 0
      %2253 = vmatpush1.bf16.msra.mxu0 %v2237
      %2254 = vmatprep.subr.bf16.mxu0 0
      %2255 = vmatpush1.bf16.msra.mxu0 %v2236
      %2256 = vmatprep.subr.bf16.mxu0 0
      %2257 = vmatpush1.bf16.msra.mxu0 %v2235
      %2258 = vmatprep.subr.bf16.mxu0 0
      %2259 = vmatpush1.bf16.msra.mxu0 %v2234
      %2260 = vmatprep.subr.bf16.mxu0 0
      %2261 = vmatpush1.bf16.msra.mxu0 %v2233
      %2262 = vmatprep.subr.bf16.mxu0 0
      %2263 = vmatpush1.bf16.msra.mxu0 %v2232
      %2264 = vmatprep.subr.bf16.mxu0 0
      %2265 = vmatpush2.bf16.msra.mxu0 0
      %2266 = vmatprep.subr.bf16.mxu0 0
      %2267 = vmatpush2.bf16.msra.mxu0 0
      %2268 = vmatprep.subr.bf16.mxu0 0
      %2269 = vmatpush2.bf16.msra.mxu0 0
      %2270 = vmatprep.subr.bf16.mxu0 0
      %2271 = vmatpush2.bf16.msra.mxu0 0
      %2272 = vmatprep.subr.bf16.mxu0 0
      %2273 = vmatpush2.bf16.msra.mxu0 0
      %2274 = vmatprep.subr.bf16.mxu0 0
      %2275 = vmatpush2.bf16.msra.mxu0 0
      %2276 = vmatprep.subr.bf16.mxu0 0
      %2277 = vmatpush2.bf16.msra.mxu0 0
      %2278 = vmatprep.subr.bf16.mxu0 0
      %2279 = vmatpush2.bf16.msra.mxu0 0
      %2280 = vmatprep.mubr.bf16.mxu0 0
      %2281 = vmatmul.mubr.bf16.gmra.mxu0 %v1331
      %v2282 = vpop.f32.mrf.mxu0
      %v2283 = vadd.f32 0.0, %v2282
      %v2284 = vpop.f32.mrf.mxu0
      %v2285 = vpop.f32.mrf.mxu0
      %v2286 = vadd.f32 0.0, %v2285
      %v2287 = vpop.f32.mrf.mxu0
      %2288 = vmatprep.mubr.bf16.mxu0 0
      %2289 = vmatmul.mubr.bf16.gmra.mxu0 %v1334
      %v2290 = vpop.f32.mrf.mxu0
      %v2291 = vadd.f32 0.0, %v2290
      %v2292 = vpop.f32.mrf.mxu0
      %v2293 = vpop.f32.mrf.mxu0
      %v2294 = vadd.f32 0.0, %v2293
      %v2295 = vpop.f32.mrf.mxu0
      %2296 = vmatprep.mubr.bf16.mxu0 0
      %2297 = vmatmul.mubr.bf16.gmra.mxu0 %v1337
      %v2298 = vpop.f32.mrf.mxu0
      %v2299 = vadd.f32 0.0, %v2298
      %v2300 = vpop.f32.mrf.mxu0
      %v2301 = vpop.f32.mrf.mxu0
      %v2302 = vadd.f32 0.0, %v2301
      %v2303 = vpop.f32.mrf.mxu0
      %2304 = vmatprep.mubr.bf16.mxu0 0
      %2305 = vmatmul.mubr.bf16.gmra.mxu0 %v1340
      %v2306 = vpop.f32.mrf.mxu0
      %v2307 = vadd.f32 0.0, %v2306
      %v2308 = vpop.f32.mrf.mxu0
      %v2309 = vpop.f32.mrf.mxu0
      %v2310 = vadd.f32 0.0, %v2309
      %v2311 = vpop.f32.mrf.mxu0
      %2312 = vmatprep.mubr.bf16.mxu0 0
      %2313 = vmatmul.mubr.bf16.gmra.mxu0 %v1343
      %v2314 = vpop.f32.mrf.mxu0
      %v2315 = vadd.f32 0.0, %v2314
      %v2316 = vpop.f32.mrf.mxu0
      %v2317 = vpop.f32.mrf.mxu0
      %v2318 = vadd.f32 0.0, %v2317
      %v2319 = vpop.f32.mrf.mxu0
      %2320 = vmatprep.mubr.bf16.mxu0 0
      %2321 = vmatmul.mubr.bf16.gmra.mxu0 %v1346
      %v2322 = vpop.f32.mrf.mxu0
      %v2323 = vadd.f32 0.0, %v2322
      %v2324 = vpop.f32.mrf.mxu0
      %v2325 = vpop.f32.mrf.mxu0
      %v2326 = vadd.f32 0.0, %v2325
      %v2327 = vpop.f32.mrf.mxu0
      %2328 = vmatprep.mubr.bf16.mxu0 0
      %2329 = vmatmul.mubr.bf16.gmra.mxu0 %v1349
      %v2330 = vpop.f32.mrf.mxu0
      %v2331 = vadd.f32 0.0, %v2330
      %v2332 = vpop.f32.mrf.mxu0
      %v2333 = vpop.f32.mrf.mxu0
      %v2334 = vadd.f32 0.0, %v2333
      %v2335 = vpop.f32.mrf.mxu0
      %2336 = vmatprep.mubr.bf16.mxu0 0
      %2337 = vmatmul.mubr.bf16.gmra.mxu0 %v1352
      %v2338 = vpop.f32.mrf.mxu0
      %v2339 = vadd.f32 0.0, %v2338
      %v2340 = vpop.f32.mrf.mxu0
      %v2341 = vpop.f32.mrf.mxu0
      %v2342 = vadd.f32 0.0, %v2341
      %v2343 = vpop.f32.mrf.mxu0
      %2344 = vmatprep.mubr.bf16.mxu0 0
      %2345 = vmatmul.mubr.bf16.gmra.mxu0 %v1355
      %v2346 = vpop.f32.mrf.mxu0
      %v2347 = vadd.f32 0.0, %v2346
      %v2348 = vpop.f32.mrf.mxu0
      %v2349 = vpop.f32.mrf.mxu0
      %v2350 = vadd.f32 0.0, %v2349
      %v2351 = vpop.f32.mrf.mxu0
      %2352 = vmatprep.mubr.bf16.mxu0 0
      %2353 = vmatmul.mubr.bf16.gmra.mxu0 %v1358
      %v2354 = vpop.f32.mrf.mxu0
      %v2355 = vadd.f32 0.0, %v2354
      %v2356 = vpop.f32.mrf.mxu0
      %v2357 = vpop.f32.mrf.mxu0
      %v2358 = vadd.f32 0.0, %v2357
      %v2359 = vpop.f32.mrf.mxu0
      %2360 = vmatprep.mubr.bf16.mxu0 0
      %2361 = vmatmul.mubr.bf16.gmra.mxu0 %v1361
      %v2362 = vpop.f32.mrf.mxu0
      %v2363 = vadd.f32 0.0, %v2362
      %v2364 = vpop.f32.mrf.mxu0
      %v2365 = vpop.f32.mrf.mxu0
      %v2366 = vadd.f32 0.0, %v2365
      %v2367 = vpop.f32.mrf.mxu0
      %2368 = vmatprep.mubr.bf16.mxu0 0
      %2369 = vmatmul.mubr.bf16.gmra.mxu0 %v1364
      %v2370 = vpop.f32.mrf.mxu0
      %v2371 = vadd.f32 0.0, %v2370
      %v2372 = vpop.f32.mrf.mxu0
      %v2373 = vpop.f32.mrf.mxu0
      %v2374 = vadd.f32 0.0, %v2373
      %v2375 = vpop.f32.mrf.mxu0
      %2376 = vmatprep.mubr.bf16.mxu0 0
      %2377 = vmatmul.mubr.bf16.gmra.mxu0 %v1367
      %v2378 = vpop.f32.mrf.mxu0
      %v2379 = vadd.f32 0.0, %v2378
      %v2380 = vpop.f32.mrf.mxu0
      %v2381 = vpop.f32.mrf.mxu0
      %v2382 = vadd.f32 0.0, %v2381
      %v2383 = vpop.f32.mrf.mxu0
      %2384 = vmatprep.mubr.bf16.mxu0 0
      %2385 = vmatmul.mubr.bf16.gmra.mxu0 %v1370
      %v2386 = vpop.f32.mrf.mxu0
      %v2387 = vadd.f32 0.0, %v2386
      %v2388 = vpop.f32.mrf.mxu0
      %v2389 = vpop.f32.mrf.mxu0
      %v2390 = vadd.f32 0.0, %v2389
      %v2391 = vpop.f32.mrf.mxu0
      %2392 = vmatprep.mubr.bf16.mxu0 0
      %2393 = vmatmul.mubr.bf16.gmra.mxu0 %v1373
      %v2394 = vpop.f32.mrf.mxu0
      %v2395 = vadd.f32 0.0, %v2394
      %v2396 = vpop.f32.mrf.mxu0
      %v2397 = vpop.f32.mrf.mxu0
      %v2398 = vadd.f32 0.0, %v2397
      %v2399 = vpop.f32.mrf.mxu0
      %2400 = vmatprep.mubr.bf16.mxu0 0
      %2401 = vmatmul.mubr.bf16.gmra.mxu0 %v2181
      %v2402 = vpop.f32.mrf.mxu0
      %v2403 = vadd.f32 0.0, %v2402
      %v2404 = vpop.f32.mrf.mxu0
      %v2405 = vpop.f32.mrf.mxu0
      %v2406 = vadd.f32 0.0, %v2405
      %v2407 = vpop.f32.mrf.mxu0
      %2408 = vdwg.mxu0
      %v2409 = vadd.f32 %v2145, %v2283
      %v2410 = vadd.f32 %v2146, %v2286
      %v2411 = vadd.f32 %v2147, %v2291
      %v2412 = vadd.f32 %v2148, %v2294
      %v2413 = vadd.f32 %v2149, %v2299
      %v2414 = vadd.f32 %v2150, %v2302
      %v2415 = vadd.f32 %v2151, %v2307
      %v2416 = vadd.f32 %v2152, %v2310
      %v2417 = vadd.f32 %v2153, %v2315
      %v2418 = vadd.f32 %v2154, %v2318
      %v2419 = vadd.f32 %v2155, %v2323
      %v2420 = vadd.f32 %v2156, %v2326
      %v2421 = vadd.f32 %v2157, %v2331
      %v2422 = vadd.f32 %v2158, %v2334
      %v2423 = vadd.f32 %v2159, %v2339
      %v2424 = vadd.f32 %v2160, %v2342
      %v2425 = vadd.f32 %v2161, %v2347
      %v2426 = vadd.f32 %v2162, %v2350
      %v2427 = vadd.f32 %v2163, %v2355
      %v2428 = vadd.f32 %v2164, %v2358
      %v2429 = vadd.f32 %v2165, %v2363
      %v2430 = vadd.f32 %v2166, %v2366
      %v2431 = vadd.f32 %v2167, %v2371
      %v2432 = vadd.f32 %v2168, %v2374
      %v2433 = vadd.f32 %v2169, %v2379
      %v2434 = vadd.f32 %v2170, %v2382
      %v2435 = vadd.f32 %v2171, %v2387
      %v2436 = vadd.f32 %v2172, %v2390
      %v2437 = vadd.f32 %v2173, %v2395
      %v2438 = vadd.f32 %v2174, %v2398
      %v2439 = vadd.f32 %v2175, %v2403
      %v2440 = vadd.f32 %v2176, %v2406
      %s2441 = scalar_lea.vmem %s1, 384
      %v2442 = vld [vmem:[%s2441] sm:$0xf]
      %v2443 = vld [vmem:[%s2441 + $0x4] sm:$0xf]
      %v2444 = vld [vmem:[%s2441 + $0x8] sm:$0xf]
      %v2445 = vld [vmem:[%s2441 + $0xc] sm:$0xf]
      %v2446 = vld [vmem:[%s2441 + $0x10] sm:$0xf]
      %v2447 = vld [vmem:[%s2441 + $0x14] sm:$0xf]
      %v2448 = vld [vmem:[%s2441 + $0x18] sm:$0xf]
      %v2449 = vld [vmem:[%s2441 + $0x1c] sm:$0xf]
      %v2450 = vld [vmem:[%s2441 + $0x20] sm:$0xf]
      %v2451 = vld [vmem:[%s2441 + $0x24] sm:$0xf]
      %v2452 = vld [vmem:[%s2441 + $0x28] sm:$0xf]
      %v2453 = vld [vmem:[%s2441 + $0x2c] sm:$0xf]
      %v2454 = vld [vmem:[%s2441 + $0x30] sm:$0xf]
      %v2455 = vld [vmem:[%s2441 + $0x34] sm:$0xf]
      %v2456 = vld [vmem:[%s2441 + $0x38] sm:$0xf]
      %v2457 = vld [vmem:[%s2441 + $0x3c] sm:$0xf]
      %v2474 = vunpack.c.l.b16 %v2442
      %v2475 = vunpack.c.l.b16 %v2443
      %v2476 = vunpack.c.l.b16 %v2444
      %v2477 = vunpack.c.l.b16 %v2445
      %v2478 = vunpack.c.l.b16 %v2446
      %v2479 = vunpack.c.l.b16 %v2447
      %v2480 = vunpack.c.l.b16 %v2448
      %v2481 = vunpack.c.l.b16 %v2449
      %v2482 = vunpack.c.l.b16 %v2450
      %v2483 = vunpack.c.l.b16 %v2451
      %v2484 = vunpack.c.l.b16 %v2452
      %v2485 = vunpack.c.l.b16 %v2453
      %v2486 = vunpack.c.l.b16 %v2454
      %v2487 = vunpack.c.l.b16 %v2455
      %v2488 = vunpack.c.l.b16 %v2456
      %v2489 = vunpack.c.l.b16 %v2457
      %v2490 = vpack.c.b16 %v2475, %v2474
      %v2491 = vpack.c.b16 %v2477, %v2476
      %v2492 = vpack.c.b16 %v2479, %v2478
      %v2493 = vpack.c.b16 %v2481, %v2480
      %v2494 = vpack.c.b16 %v2483, %v2482
      %v2495 = vpack.c.b16 %v2485, %v2484
      %v2496 = vpack.c.b16 %v2487, %v2486
      %v2497 = vpack.c.b16 %v2489, %v2488
      %2506 = vmatprep.subr.bf16.mxu0 0
      %2507 = vmatpush1.bf16.msra.mxu0 %v2497
      %2508 = vmatprep.subr.bf16.mxu0 0
      %2509 = vmatpush1.bf16.msra.mxu0 %v2496
      %2510 = vmatprep.subr.bf16.mxu0 0
      %2511 = vmatpush1.bf16.msra.mxu0 %v2495
      %2512 = vmatprep.subr.bf16.mxu0 0
      %2513 = vmatpush1.bf16.msra.mxu0 %v2494
      %2514 = vmatprep.subr.bf16.mxu0 0
      %2515 = vmatpush1.bf16.msra.mxu0 %v2493
      %2516 = vmatprep.subr.bf16.mxu0 0
      %2517 = vmatpush1.bf16.msra.mxu0 %v2492
      %2518 = vmatprep.subr.bf16.mxu0 0
      %2519 = vmatpush1.bf16.msra.mxu0 %v2491
      %2520 = vmatprep.subr.bf16.mxu0 0
      %2521 = vmatpush1.bf16.msra.mxu0 %v2490
      %2522 = vmatprep.subr.bf16.mxu0 0
      %2523 = vmatpush2.bf16.msra.mxu0 0
      %2524 = vmatprep.subr.bf16.mxu0 0
      %2525 = vmatpush2.bf16.msra.mxu0 0
      %2526 = vmatprep.subr.bf16.mxu0 0
      %2527 = vmatpush2.bf16.msra.mxu0 0
      %2528 = vmatprep.subr.bf16.mxu0 0
      %2529 = vmatpush2.bf16.msra.mxu0 0
      %2530 = vmatprep.subr.bf16.mxu0 0
      %2531 = vmatpush2.bf16.msra.mxu0 0
      %2532 = vmatprep.subr.bf16.mxu0 0
      %2533 = vmatpush2.bf16.msra.mxu0 0
      %2534 = vmatprep.subr.bf16.mxu0 0
      %2535 = vmatpush2.bf16.msra.mxu0 0
      %2536 = vmatprep.subr.bf16.mxu0 0
      %2537 = vmatpush2.bf16.msra.mxu0 0
      %2538 = vmatprep.mubr.bf16.mxu0 0
      %2539 = vmatmul.mubr.bf16.gmra.mxu0 %v601
      %v2540 = vpop.f32.mrf.mxu0
      %v2541 = vadd.f32 0.0, %v2540
      %v2542 = vpop.f32.mrf.mxu0
      %v2543 = vpop.f32.mrf.mxu0
      %v2544 = vadd.f32 0.0, %v2543
      %v2545 = vpop.f32.mrf.mxu0
      %2546 = vmatprep.mubr.bf16.mxu0 0
      %2547 = vmatmul.mubr.bf16.gmra.mxu0 %v603
      %v2548 = vpop.f32.mrf.mxu0
      %v2549 = vadd.f32 0.0, %v2548
      %v2550 = vpop.f32.mrf.mxu0
      %v2551 = vpop.f32.mrf.mxu0
      %v2552 = vadd.f32 0.0, %v2551
      %v2553 = vpop.f32.mrf.mxu0
      %2554 = vmatprep.mubr.bf16.mxu0 0
      %2555 = vmatmul.mubr.bf16.gmra.mxu0 %v605
      %v2556 = vpop.f32.mrf.mxu0
      %v2557 = vadd.f32 0.0, %v2556
      %v2558 = vpop.f32.mrf.mxu0
      %v2559 = vpop.f32.mrf.mxu0
      %v2560 = vadd.f32 0.0, %v2559
      %v2561 = vpop.f32.mrf.mxu0
      %2562 = vmatprep.mubr.bf16.mxu0 0
      %2563 = vmatmul.mubr.bf16.gmra.mxu0 %v607
      %v2564 = vpop.f32.mrf.mxu0
      %v2565 = vadd.f32 0.0, %v2564
      %v2566 = vpop.f32.mrf.mxu0
      %v2567 = vpop.f32.mrf.mxu0
      %v2568 = vadd.f32 0.0, %v2567
      %v2569 = vpop.f32.mrf.mxu0
      %2570 = vmatprep.mubr.bf16.mxu0 0
      %2571 = vmatmul.mubr.bf16.gmra.mxu0 %v609
      %v2572 = vpop.f32.mrf.mxu0
      %v2573 = vadd.f32 0.0, %v2572
      %v2574 = vpop.f32.mrf.mxu0
      %v2575 = vpop.f32.mrf.mxu0
      %v2576 = vadd.f32 0.0, %v2575
      %v2577 = vpop.f32.mrf.mxu0
      %2578 = vmatprep.mubr.bf16.mxu0 0
      %2579 = vmatmul.mubr.bf16.gmra.mxu0 %v611
      %v2580 = vpop.f32.mrf.mxu0
      %v2581 = vadd.f32 0.0, %v2580
      %v2582 = vpop.f32.mrf.mxu0
      %v2583 = vpop.f32.mrf.mxu0
      %v2584 = vadd.f32 0.0, %v2583
      %v2585 = vpop.f32.mrf.mxu0
      %2586 = vmatprep.mubr.bf16.mxu0 0
      %2587 = vmatmul.mubr.bf16.gmra.mxu0 %v613
      %v2588 = vpop.f32.mrf.mxu0
      %v2589 = vadd.f32 0.0, %v2588
      %v2590 = vpop.f32.mrf.mxu0
      %v2591 = vpop.f32.mrf.mxu0
      %v2592 = vadd.f32 0.0, %v2591
      %v2593 = vpop.f32.mrf.mxu0
      %2594 = vmatprep.mubr.bf16.mxu0 0
      %2595 = vmatmul.mubr.bf16.gmra.mxu0 %v615
      %v2596 = vpop.f32.mrf.mxu0
      %v2597 = vadd.f32 0.0, %v2596
      %v2598 = vpop.f32.mrf.mxu0
      %v2599 = vpop.f32.mrf.mxu0
      %v2600 = vadd.f32 0.0, %v2599
      %v2601 = vpop.f32.mrf.mxu0
      %2602 = vmatprep.mubr.bf16.mxu0 0
      %2603 = vmatmul.mubr.bf16.gmra.mxu0 %v617
      %v2604 = vpop.f32.mrf.mxu0
      %v2605 = vadd.f32 0.0, %v2604
      %v2606 = vpop.f32.mrf.mxu0
      %v2607 = vpop.f32.mrf.mxu0
      %v2608 = vadd.f32 0.0, %v2607
      %v2609 = vpop.f32.mrf.mxu0
      %2610 = vmatprep.mubr.bf16.mxu0 0
      %2611 = vmatmul.mubr.bf16.gmra.mxu0 %v619
      %v2612 = vpop.f32.mrf.mxu0
      %v2613 = vadd.f32 0.0, %v2612
      %v2614 = vpop.f32.mrf.mxu0
      %v2615 = vpop.f32.mrf.mxu0
      %v2616 = vadd.f32 0.0, %v2615
      %v2617 = vpop.f32.mrf.mxu0
      %2618 = vmatprep.mubr.bf16.mxu0 0
      %2619 = vmatmul.mubr.bf16.gmra.mxu0 %v621
      %v2620 = vpop.f32.mrf.mxu0
      %v2621 = vadd.f32 0.0, %v2620
      %v2622 = vpop.f32.mrf.mxu0
      %v2623 = vpop.f32.mrf.mxu0
      %v2624 = vadd.f32 0.0, %v2623
      %v2625 = vpop.f32.mrf.mxu0
      %2626 = vmatprep.mubr.bf16.mxu0 0
      %2627 = vmatmul.mubr.bf16.gmra.mxu0 %v623
      %v2628 = vpop.f32.mrf.mxu0
      %v2629 = vadd.f32 0.0, %v2628
      %v2630 = vpop.f32.mrf.mxu0
      %v2631 = vpop.f32.mrf.mxu0
      %v2632 = vadd.f32 0.0, %v2631
      %v2633 = vpop.f32.mrf.mxu0
      %2634 = vmatprep.mubr.bf16.mxu0 0
      %2635 = vmatmul.mubr.bf16.gmra.mxu0 %v625
      %v2636 = vpop.f32.mrf.mxu0
      %v2637 = vadd.f32 0.0, %v2636
      %v2638 = vpop.f32.mrf.mxu0
      %v2639 = vpop.f32.mrf.mxu0
      %v2640 = vadd.f32 0.0, %v2639
      %v2641 = vpop.f32.mrf.mxu0
      %2642 = vmatprep.mubr.bf16.mxu0 0
      %2643 = vmatmul.mubr.bf16.gmra.mxu0 %v627
      %v2644 = vpop.f32.mrf.mxu0
      %v2645 = vadd.f32 0.0, %v2644
      %v2646 = vpop.f32.mrf.mxu0
      %v2647 = vpop.f32.mrf.mxu0
      %v2648 = vadd.f32 0.0, %v2647
      %v2649 = vpop.f32.mrf.mxu0
      %2650 = vmatprep.mubr.bf16.mxu0 0
      %2651 = vmatmul.mubr.bf16.gmra.mxu0 %v629
      %v2652 = vpop.f32.mrf.mxu0
      %v2653 = vadd.f32 0.0, %v2652
      %v2654 = vpop.f32.mrf.mxu0
      %v2655 = vpop.f32.mrf.mxu0
      %v2656 = vadd.f32 0.0, %v2655
      %v2657 = vpop.f32.mrf.mxu0
      %2658 = vmatprep.mubr.bf16.mxu0 0
      %2659 = vmatmul.mubr.bf16.gmra.mxu0 %v631
      %v2660 = vpop.f32.mrf.mxu0
      %v2661 = vadd.f32 0.0, %v2660
      %v2662 = vpop.f32.mrf.mxu0
      %v2663 = vpop.f32.mrf.mxu0
      %v2664 = vadd.f32 0.0, %v2663
      %v2665 = vpop.f32.mrf.mxu0
      %2666 = vdwg.mxu0
      %v2667 = vadd.f32 %v2409, %v2541
      %v2668 = vadd.f32 %v2410, %v2544
      %v2669 = vadd.f32 %v2411, %v2549
      %v2670 = vadd.f32 %v2412, %v2552
      %v2671 = vadd.f32 %v2413, %v2557
      %v2672 = vadd.f32 %v2414, %v2560
      %v2673 = vadd.f32 %v2415, %v2565
      %v2674 = vadd.f32 %v2416, %v2568
      %v2675 = vadd.f32 %v2417, %v2573
      %v2676 = vadd.f32 %v2418, %v2576
      %v2677 = vadd.f32 %v2419, %v2581
      %v2678 = vadd.f32 %v2420, %v2584
      %v2679 = vadd.f32 %v2421, %v2589
      %v2680 = vadd.f32 %v2422, %v2592
      %v2681 = vadd.f32 %v2423, %v2597
      %v2682 = vadd.f32 %v2424, %v2600
      %v2683 = vadd.f32 %v2425, %v2605
      %v2684 = vadd.f32 %v2426, %v2608
      %v2685 = vadd.f32 %v2427, %v2613
      %v2686 = vadd.f32 %v2428, %v2616
      %v2687 = vadd.f32 %v2429, %v2621
      %v2688 = vadd.f32 %v2430, %v2624
      %v2689 = vadd.f32 %v2431, %v2629
      %v2690 = vadd.f32 %v2432, %v2632
      %v2691 = vadd.f32 %v2433, %v2637
      %v2692 = vadd.f32 %v2434, %v2640
      %v2693 = vadd.f32 %v2435, %v2645
      %v2694 = vadd.f32 %v2436, %v2648
      %v2695 = vadd.f32 %v2437, %v2653
      %v2696 = vadd.f32 %v2438, %v2656
      %v2697 = vadd.f32 %v2439, %v2661
      %v2698 = vadd.f32 %v2440, %v2664
      %v2700 = vshrl.u32 %v631, 16
      %v2702 = vshll.u32 %v631, 16
      %v2704 = vrot.slane %v2702, 1
      %v2705 = vor.u32 %v2700, %v2704
      %v2707 = vshll.u32 %v632, 16
      %v2709 = vrot.slane %v2707, 1
      %v2710 = vsel %vm649, %v2705, %v2709
      %s2712 = scalar_lea.vmem %s1, 448
      %v2713 = vld [vmem:[%s2712] sm:$0xf]
      %v2714 = vld [vmem:[%s2712 + $0x4] sm:$0xf]
      %v2715 = vld [vmem:[%s2712 + $0x8] sm:$0xf]
      %v2716 = vld [vmem:[%s2712 + $0xc] sm:$0xf]
      %v2717 = vld [vmem:[%s2712 + $0x10] sm:$0xf]
      %v2718 = vld [vmem:[%s2712 + $0x14] sm:$0xf]
      %v2719 = vld [vmem:[%s2712 + $0x18] sm:$0xf]
      %v2720 = vld [vmem:[%s2712 + $0x1c] sm:$0xf]
      %v2721 = vld [vmem:[%s2712 + $0x20] sm:$0xf]
      %v2722 = vld [vmem:[%s2712 + $0x24] sm:$0xf]
      %v2723 = vld [vmem:[%s2712 + $0x28] sm:$0xf]
      %v2724 = vld [vmem:[%s2712 + $0x2c] sm:$0xf]
      %v2725 = vld [vmem:[%s2712 + $0x30] sm:$0xf]
      %v2726 = vld [vmem:[%s2712 + $0x34] sm:$0xf]
      %v2727 = vld [vmem:[%s2712 + $0x38] sm:$0xf]
      %v2728 = vld [vmem:[%s2712 + $0x3c] sm:$0xf]
      %v2745 = vunpack.c.l.b16 %v2713
      %v2746 = vunpack.c.l.b16 %v2714
      %v2747 = vunpack.c.l.b16 %v2715
      %v2748 = vunpack.c.l.b16 %v2716
      %v2749 = vunpack.c.l.b16 %v2717
      %v2750 = vunpack.c.l.b16 %v2718
      %v2751 = vunpack.c.l.b16 %v2719
      %v2752 = vunpack.c.l.b16 %v2720
      %v2753 = vunpack.c.l.b16 %v2721
      %v2754 = vunpack.c.l.b16 %v2722
      %v2755 = vunpack.c.l.b16 %v2723
      %v2756 = vunpack.c.l.b16 %v2724
      %v2757 = vunpack.c.l.b16 %v2725
      %v2758 = vunpack.c.l.b16 %v2726
      %v2759 = vunpack.c.l.b16 %v2727
      %v2760 = vunpack.c.l.b16 %v2728
      %v2761 = vpack.c.b16 %v2746, %v2745
      %v2762 = vpack.c.b16 %v2748, %v2747
      %v2763 = vpack.c.b16 %v2750, %v2749
      %v2764 = vpack.c.b16 %v2752, %v2751
      %v2765 = vpack.c.b16 %v2754, %v2753
      %v2766 = vpack.c.b16 %v2756, %v2755
      %v2767 = vpack.c.b16 %v2758, %v2757
      %v2768 = vpack.c.b16 %v2760, %v2759
      %2777 = vmatprep.subr.bf16.mxu0 0
      %2778 = vmatpush1.bf16.msra.mxu0 %v2768
      %2779 = vmatprep.subr.bf16.mxu0 0
      %2780 = vmatpush1.bf16.msra.mxu0 %v2767
      %2781 = vmatprep.subr.bf16.mxu0 0
      %2782 = vmatpush1.bf16.msra.mxu0 %v2766
      %2783 = vmatprep.subr.bf16.mxu0 0
      %2784 = vmatpush1.bf16.msra.mxu0 %v2765
      %2785 = vmatprep.subr.bf16.mxu0 0
      %2786 = vmatpush1.bf16.msra.mxu0 %v2764
      %2787 = vmatprep.subr.bf16.mxu0 0
      %2788 = vmatpush1.bf16.msra.mxu0 %v2763
      %2789 = vmatprep.subr.bf16.mxu0 0
      %2790 = vmatpush1.bf16.msra.mxu0 %v2762
      %2791 = vmatprep.subr.bf16.mxu0 0
      %2792 = vmatpush1.bf16.msra.mxu0 %v2761
      %2793 = vmatprep.subr.bf16.mxu0 0
      %2794 = vmatpush2.bf16.msra.mxu0 0
      %2795 = vmatprep.subr.bf16.mxu0 0
      %2796 = vmatpush2.bf16.msra.mxu0 0
      %2797 = vmatprep.subr.bf16.mxu0 0
      %2798 = vmatpush2.bf16.msra.mxu0 0
      %2799 = vmatprep.subr.bf16.mxu0 0
      %2800 = vmatpush2.bf16.msra.mxu0 0
      %2801 = vmatprep.subr.bf16.mxu0 0
      %2802 = vmatpush2.bf16.msra.mxu0 0
      %2803 = vmatprep.subr.bf16.mxu0 0
      %2804 = vmatpush2.bf16.msra.mxu0 0
      %2805 = vmatprep.subr.bf16.mxu0 0
      %2806 = vmatpush2.bf16.msra.mxu0 0
      %2807 = vmatprep.subr.bf16.mxu0 0
      %2808 = vmatpush2.bf16.msra.mxu0 0
      %2809 = vmatprep.mubr.bf16.mxu0 0
      %2810 = vmatmul.mubr.bf16.gmra.mxu0 %v685
      %v2811 = vpop.f32.mrf.mxu0
      %v2812 = vadd.f32 0.0, %v2811
      %v2813 = vpop.f32.mrf.mxu0
      %v2814 = vpop.f32.mrf.mxu0
      %v2815 = vadd.f32 0.0, %v2814
      %v2816 = vpop.f32.mrf.mxu0
      %2817 = vmatprep.mubr.bf16.mxu0 0
      %2818 = vmatmul.mubr.bf16.gmra.mxu0 %v697
      %v2819 = vpop.f32.mrf.mxu0
      %v2820 = vadd.f32 0.0, %v2819
      %v2821 = vpop.f32.mrf.mxu0
      %v2822 = vpop.f32.mrf.mxu0
      %v2823 = vadd.f32 0.0, %v2822
      %v2824 = vpop.f32.mrf.mxu0
      %2825 = vmatprep.mubr.bf16.mxu0 0
      %2826 = vmatmul.mubr.bf16.gmra.mxu0 %v709
      %v2827 = vpop.f32.mrf.mxu0
      %v2828 = vadd.f32 0.0, %v2827
      %v2829 = vpop.f32.mrf.mxu0
      %v2830 = vpop.f32.mrf.mxu0
      %v2831 = vadd.f32 0.0, %v2830
      %v2832 = vpop.f32.mrf.mxu0
      %2833 = vmatprep.mubr.bf16.mxu0 0
      %2834 = vmatmul.mubr.bf16.gmra.mxu0 %v721
      %v2835 = vpop.f32.mrf.mxu0
      %v2836 = vadd.f32 0.0, %v2835
      %v2837 = vpop.f32.mrf.mxu0
      %v2838 = vpop.f32.mrf.mxu0
      %v2839 = vadd.f32 0.0, %v2838
      %v2840 = vpop.f32.mrf.mxu0
      %2841 = vmatprep.mubr.bf16.mxu0 0
      %2842 = vmatmul.mubr.bf16.gmra.mxu0 %v733
      %v2843 = vpop.f32.mrf.mxu0
      %v2844 = vadd.f32 0.0, %v2843
      %v2845 = vpop.f32.mrf.mxu0
      %v2846 = vpop.f32.mrf.mxu0
      %v2847 = vadd.f32 0.0, %v2846
      %v2848 = vpop.f32.mrf.mxu0
      %2849 = vmatprep.mubr.bf16.mxu0 0
      %2850 = vmatmul.mubr.bf16.gmra.mxu0 %v745
      %v2851 = vpop.f32.mrf.mxu0
      %v2852 = vadd.f32 0.0, %v2851
      %v2853 = vpop.f32.mrf.mxu0
      %v2854 = vpop.f32.mrf.mxu0
      %v2855 = vadd.f32 0.0, %v2854
      %v2856 = vpop.f32.mrf.mxu0
      %2857 = vmatprep.mubr.bf16.mxu0 0
      %2858 = vmatmul.mubr.bf16.gmra.mxu0 %v757
      %v2859 = vpop.f32.mrf.mxu0
      %v2860 = vadd.f32 0.0, %v2859
      %v2861 = vpop.f32.mrf.mxu0
      %v2862 = vpop.f32.mrf.mxu0
      %v2863 = vadd.f32 0.0, %v2862
      %v2864 = vpop.f32.mrf.mxu0
      %2865 = vmatprep.mubr.bf16.mxu0 0
      %2866 = vmatmul.mubr.bf16.gmra.mxu0 %v769
      %v2867 = vpop.f32.mrf.mxu0
      %v2868 = vadd.f32 0.0, %v2867
      %v2869 = vpop.f32.mrf.mxu0
      %v2870 = vpop.f32.mrf.mxu0
      %v2871 = vadd.f32 0.0, %v2870
      %v2872 = vpop.f32.mrf.mxu0
      %2873 = vmatprep.mubr.bf16.mxu0 0
      %2874 = vmatmul.mubr.bf16.gmra.mxu0 %v781
      %v2875 = vpop.f32.mrf.mxu0
      %v2876 = vadd.f32 0.0, %v2875
      %v2877 = vpop.f32.mrf.mxu0
      %v2878 = vpop.f32.mrf.mxu0
      %v2879 = vadd.f32 0.0, %v2878
      %v2880 = vpop.f32.mrf.mxu0
      %2881 = vmatprep.mubr.bf16.mxu0 0
      %2882 = vmatmul.mubr.bf16.gmra.mxu0 %v793
      %v2883 = vpop.f32.mrf.mxu0
      %v2884 = vadd.f32 0.0, %v2883
      %v2885 = vpop.f32.mrf.mxu0
      %v2886 = vpop.f32.mrf.mxu0
      %v2887 = vadd.f32 0.0, %v2886
      %v2888 = vpop.f32.mrf.mxu0
      %2889 = vmatprep.mubr.bf16.mxu0 0
      %2890 = vmatmul.mubr.bf16.gmra.mxu0 %v805
      %v2891 = vpop.f32.mrf.mxu0
      %v2892 = vadd.f32 0.0, %v2891
      %v2893 = vpop.f32.mrf.mxu0
      %v2894 = vpop.f32.mrf.mxu0
      %v2895 = vadd.f32 0.0, %v2894
      %v2896 = vpop.f32.mrf.mxu0
      %2897 = vmatprep.mubr.bf16.mxu0 0
      %2898 = vmatmul.mubr.bf16.gmra.mxu0 %v817
      %v2899 = vpop.f32.mrf.mxu0
      %v2900 = vadd.f32 0.0, %v2899
      %v2901 = vpop.f32.mrf.mxu0
      %v2902 = vpop.f32.mrf.mxu0
      %v2903 = vadd.f32 0.0, %v2902
      %v2904 = vpop.f32.mrf.mxu0
      %2905 = vmatprep.mubr.bf16.mxu0 0
      %2906 = vmatmul.mubr.bf16.gmra.mxu0 %v829
      %v2907 = vpop.f32.mrf.mxu0
      %v2908 = vadd.f32 0.0, %v2907
      %v2909 = vpop.f32.mrf.mxu0
      %v2910 = vpop.f32.mrf.mxu0
      %v2911 = vadd.f32 0.0, %v2910
      %v2912 = vpop.f32.mrf.mxu0
      %2913 = vmatprep.mubr.bf16.mxu0 0
      %2914 = vmatmul.mubr.bf16.gmra.mxu0 %v841
      %v2915 = vpop.f32.mrf.mxu0
      %v2916 = vadd.f32 0.0, %v2915
      %v2917 = vpop.f32.mrf.mxu0
      %v2918 = vpop.f32.mrf.mxu0
      %v2919 = vadd.f32 0.0, %v2918
      %v2920 = vpop.f32.mrf.mxu0
      %2921 = vmatprep.mubr.bf16.mxu0 0
      %2922 = vmatmul.mubr.bf16.gmra.mxu0 %v1917
      %v2923 = vpop.f32.mrf.mxu0
      %v2924 = vadd.f32 0.0, %v2923
      %v2925 = vpop.f32.mrf.mxu0
      %v2926 = vpop.f32.mrf.mxu0
      %v2927 = vadd.f32 0.0, %v2926
      %v2928 = vpop.f32.mrf.mxu0
      %2929 = vmatprep.mubr.bf16.mxu0 0
      %2930 = vmatmul.mubr.bf16.gmra.mxu0 %v2710
      %v2931 = vpop.f32.mrf.mxu0
      %v2932 = vadd.f32 0.0, %v2931
      %v2933 = vpop.f32.mrf.mxu0
      %v2934 = vpop.f32.mrf.mxu0
      %v2935 = vadd.f32 0.0, %v2934
      %v2936 = vpop.f32.mrf.mxu0
      %2937 = vdwg.mxu0
      %v2938 = vadd.f32 %v2667, %v2812
      %v2939 = vadd.f32 %v2668, %v2815
      %v2940 = vadd.f32 %v2669, %v2820
      %v2941 = vadd.f32 %v2670, %v2823
      %v2942 = vadd.f32 %v2671, %v2828
      %v2943 = vadd.f32 %v2672, %v2831
      %v2944 = vadd.f32 %v2673, %v2836
      %v2945 = vadd.f32 %v2674, %v2839
      %v2946 = vadd.f32 %v2675, %v2844
      %v2947 = vadd.f32 %v2676, %v2847
      %v2948 = vadd.f32 %v2677, %v2852
      %v2949 = vadd.f32 %v2678, %v2855
      %v2950 = vadd.f32 %v2679, %v2860
      %v2951 = vadd.f32 %v2680, %v2863
      %v2952 = vadd.f32 %v2681, %v2868
      %v2953 = vadd.f32 %v2682, %v2871
      %v2954 = vadd.f32 %v2683, %v2876
      %v2955 = vadd.f32 %v2684, %v2879
      %v2956 = vadd.f32 %v2685, %v2884
      %v2957 = vadd.f32 %v2686, %v2887
      %v2958 = vadd.f32 %v2687, %v2892
      %v2959 = vadd.f32 %v2688, %v2895
      %v2960 = vadd.f32 %v2689, %v2900
      %v2961 = vadd.f32 %v2690, %v2903
      %v2962 = vadd.f32 %v2691, %v2908
      %v2963 = vadd.f32 %v2692, %v2911
      %v2964 = vadd.f32 %v2693, %v2916
      %v2965 = vadd.f32 %v2694, %v2919
      %v2966 = vadd.f32 %v2695, %v2924
      %v2967 = vadd.f32 %v2696, %v2927
      %v2968 = vadd.f32 %v2697, %v2932
      %v2969 = vadd.f32 %v2698, %v2935
      %v2972 = vrot.slane %v631, 1
      %v2973 = vrot.slane %v632, 1
      %v2974 = vsel %vm1325, %v2972, %v2973
      %s2976 = scalar_lea.vmem %s1, 512
      %v2977 = vld [vmem:[%s2976] sm:$0xf]
      %v2978 = vld [vmem:[%s2976 + $0x4] sm:$0xf]
      %v2979 = vld [vmem:[%s2976 + $0x8] sm:$0xf]
      %v2980 = vld [vmem:[%s2976 + $0xc] sm:$0xf]
      %v2981 = vld [vmem:[%s2976 + $0x10] sm:$0xf]
      %v2982 = vld [vmem:[%s2976 + $0x14] sm:$0xf]
      %v2983 = vld [vmem:[%s2976 + $0x18] sm:$0xf]
      %v2984 = vld [vmem:[%s2976 + $0x1c] sm:$0xf]
      %v2985 = vld [vmem:[%s2976 + $0x20] sm:$0xf]
      %v2986 = vld [vmem:[%s2976 + $0x24] sm:$0xf]
      %v2987 = vld [vmem:[%s2976 + $0x28] sm:$0xf]
      %v2988 = vld [vmem:[%s2976 + $0x2c] sm:$0xf]
      %v2989 = vld [vmem:[%s2976 + $0x30] sm:$0xf]
      %v2990 = vld [vmem:[%s2976 + $0x34] sm:$0xf]
      %v2991 = vld [vmem:[%s2976 + $0x38] sm:$0xf]
      %v2992 = vld [vmem:[%s2976 + $0x3c] sm:$0xf]
      %v3009 = vunpack.c.l.b16 %v2977
      %v3010 = vunpack.c.l.b16 %v2978
      %v3011 = vunpack.c.l.b16 %v2979
      %v3012 = vunpack.c.l.b16 %v2980
      %v3013 = vunpack.c.l.b16 %v2981
      %v3014 = vunpack.c.l.b16 %v2982
      %v3015 = vunpack.c.l.b16 %v2983
      %v3016 = vunpack.c.l.b16 %v2984
      %v3017 = vunpack.c.l.b16 %v2985
      %v3018 = vunpack.c.l.b16 %v2986
      %v3019 = vunpack.c.l.b16 %v2987
      %v3020 = vunpack.c.l.b16 %v2988
      %v3021 = vunpack.c.l.b16 %v2989
      %v3022 = vunpack.c.l.b16 %v2990
      %v3023 = vunpack.c.l.b16 %v2991
      %v3024 = vunpack.c.l.b16 %v2992
      %v3025 = vpack.c.b16 %v3010, %v3009
      %v3026 = vpack.c.b16 %v3012, %v3011
      %v3027 = vpack.c.b16 %v3014, %v3013
      %v3028 = vpack.c.b16 %v3016, %v3015
      %v3029 = vpack.c.b16 %v3018, %v3017
      %v3030 = vpack.c.b16 %v3020, %v3019
      %v3031 = vpack.c.b16 %v3022, %v3021
      %v3032 = vpack.c.b16 %v3024, %v3023
      %3041 = vmatprep.subr.bf16.mxu0 0
      %3042 = vmatpush1.bf16.msra.mxu0 %v3032
      %3043 = vmatprep.subr.bf16.mxu0 0
      %3044 = vmatpush1.bf16.msra.mxu0 %v3031
      %3045 = vmatprep.subr.bf16.mxu0 0
      %3046 = vmatpush1.bf16.msra.mxu0 %v3030
      %3047 = vmatprep.subr.bf16.mxu0 0
      %3048 = vmatpush1.bf16.msra.mxu0 %v3029
      %3049 = vmatprep.subr.bf16.mxu0 0
      %3050 = vmatpush1.bf16.msra.mxu0 %v3028
      %3051 = vmatprep.subr.bf16.mxu0 0
      %3052 = vmatpush1.bf16.msra.mxu0 %v3027
      %3053 = vmatprep.subr.bf16.mxu0 0
      %3054 = vmatpush1.bf16.msra.mxu0 %v3026
      %3055 = vmatprep.subr.bf16.mxu0 0
      %3056 = vmatpush1.bf16.msra.mxu0 %v3025
      %3057 = vmatprep.subr.bf16.mxu0 0
      %3058 = vmatpush2.bf16.msra.mxu0 0
      %3059 = vmatprep.subr.bf16.mxu0 0
      %3060 = vmatpush2.bf16.msra.mxu0 0
      %3061 = vmatprep.subr.bf16.mxu0 0
      %3062 = vmatpush2.bf16.msra.mxu0 0
      %3063 = vmatprep.subr.bf16.mxu0 0
      %3064 = vmatpush2.bf16.msra.mxu0 0
      %3065 = vmatprep.subr.bf16.mxu0 0
      %3066 = vmatpush2.bf16.msra.mxu0 0
      %3067 = vmatprep.subr.bf16.mxu0 0
      %3068 = vmatpush2.bf16.msra.mxu0 0
      %3069 = vmatprep.subr.bf16.mxu0 0
      %3070 = vmatpush2.bf16.msra.mxu0 0
      %3071 = vmatprep.subr.bf16.mxu0 0
      %3072 = vmatpush2.bf16.msra.mxu0 0
      %3073 = vmatprep.mubr.bf16.mxu0 0
      %3074 = vmatmul.mubr.bf16.gmra.mxu0 %v1334
      %v3075 = vpop.f32.mrf.mxu0
      %v3076 = vadd.f32 0.0, %v3075
      %v3077 = vpop.f32.mrf.mxu0
      %v3078 = vpop.f32.mrf.mxu0
      %v3079 = vadd.f32 0.0, %v3078
      %v3080 = vpop.f32.mrf.mxu0
      %3081 = vmatprep.mubr.bf16.mxu0 0
      %3082 = vmatmul.mubr.bf16.gmra.mxu0 %v1337
      %v3083 = vpop.f32.mrf.mxu0
      %v3084 = vadd.f32 0.0, %v3083
      %v3085 = vpop.f32.mrf.mxu0
      %v3086 = vpop.f32.mrf.mxu0
      %v3087 = vadd.f32 0.0, %v3086
      %v3088 = vpop.f32.mrf.mxu0
      %3089 = vmatprep.mubr.bf16.mxu0 0
      %3090 = vmatmul.mubr.bf16.gmra.mxu0 %v1340
      %v3091 = vpop.f32.mrf.mxu0
      %v3092 = vadd.f32 0.0, %v3091
      %v3093 = vpop.f32.mrf.mxu0
      %v3094 = vpop.f32.mrf.mxu0
      %v3095 = vadd.f32 0.0, %v3094
      %v3096 = vpop.f32.mrf.mxu0
      %3097 = vmatprep.mubr.bf16.mxu0 0
      %3098 = vmatmul.mubr.bf16.gmra.mxu0 %v1343
      %v3099 = vpop.f32.mrf.mxu0
      %v3100 = vadd.f32 0.0, %v3099
      %v3101 = vpop.f32.mrf.mxu0
      %v3102 = vpop.f32.mrf.mxu0
      %v3103 = vadd.f32 0.0, %v3102
      %v3104 = vpop.f32.mrf.mxu0
      %3105 = vmatprep.mubr.bf16.mxu0 0
      %3106 = vmatmul.mubr.bf16.gmra.mxu0 %v1346
      %v3107 = vpop.f32.mrf.mxu0
      %v3108 = vadd.f32 0.0, %v3107
      %v3109 = vpop.f32.mrf.mxu0
      %v3110 = vpop.f32.mrf.mxu0
      %v3111 = vadd.f32 0.0, %v3110
      %v3112 = vpop.f32.mrf.mxu0
      %3113 = vmatprep.mubr.bf16.mxu0 0
      %3114 = vmatmul.mubr.bf16.gmra.mxu0 %v1349
      %v3115 = vpop.f32.mrf.mxu0
      %v3116 = vadd.f32 0.0, %v3115
      %v3117 = vpop.f32.mrf.mxu0
      %v3118 = vpop.f32.mrf.mxu0
      %v3119 = vadd.f32 0.0, %v3118
      %v3120 = vpop.f32.mrf.mxu0
      %3121 = vmatprep.mubr.bf16.mxu0 0
      %3122 = vmatmul.mubr.bf16.gmra.mxu0 %v1352
      %v3123 = vpop.f32.mrf.mxu0
      %v3124 = vadd.f32 0.0, %v3123
      %v3125 = vpop.f32.mrf.mxu0
      %v3126 = vpop.f32.mrf.mxu0
      %v3127 = vadd.f32 0.0, %v3126
      %v3128 = vpop.f32.mrf.mxu0
      %3129 = vmatprep.mubr.bf16.mxu0 0
      %3130 = vmatmul.mubr.bf16.gmra.mxu0 %v1355
      %v3131 = vpop.f32.mrf.mxu0
      %v3132 = vadd.f32 0.0, %v3131
      %v3133 = vpop.f32.mrf.mxu0
      %v3134 = vpop.f32.mrf.mxu0
      %v3135 = vadd.f32 0.0, %v3134
      %v3136 = vpop.f32.mrf.mxu0
      %3137 = vmatprep.mubr.bf16.mxu0 0
      %3138 = vmatmul.mubr.bf16.gmra.mxu0 %v1358
      %v3139 = vpop.f32.mrf.mxu0
      %v3140 = vadd.f32 0.0, %v3139
      %v3141 = vpop.f32.mrf.mxu0
      %v3142 = vpop.f32.mrf.mxu0
      %v3143 = vadd.f32 0.0, %v3142
      %v3144 = vpop.f32.mrf.mxu0
      %3145 = vmatprep.mubr.bf16.mxu0 0
      %3146 = vmatmul.mubr.bf16.gmra.mxu0 %v1361
      %v3147 = vpop.f32.mrf.mxu0
      %v3148 = vadd.f32 0.0, %v3147
      %v3149 = vpop.f32.mrf.mxu0
      %v3150 = vpop.f32.mrf.mxu0
      %v3151 = vadd.f32 0.0, %v3150
      %v3152 = vpop.f32.mrf.mxu0
      %3153 = vmatprep.mubr.bf16.mxu0 0
      %3154 = vmatmul.mubr.bf16.gmra.mxu0 %v1364
      %v3155 = vpop.f32.mrf.mxu0
      %v3156 = vadd.f32 0.0, %v3155
      %v3157 = vpop.f32.mrf.mxu0
      %v3158 = vpop.f32.mrf.mxu0
      %v3159 = vadd.f32 0.0, %v3158
      %v3160 = vpop.f32.mrf.mxu0
      %3161 = vmatprep.mubr.bf16.mxu0 0
      %3162 = vmatmul.mubr.bf16.gmra.mxu0 %v1367
      %v3163 = vpop.f32.mrf.mxu0
      %v3164 = vadd.f32 0.0, %v3163
      %v3165 = vpop.f32.mrf.mxu0
      %v3166 = vpop.f32.mrf.mxu0
      %v3167 = vadd.f32 0.0, %v3166
      %v3168 = vpop.f32.mrf.mxu0
      %3169 = vmatprep.mubr.bf16.mxu0 0
      %3170 = vmatmul.mubr.bf16.gmra.mxu0 %v1370
      %v3171 = vpop.f32.mrf.mxu0
      %v3172 = vadd.f32 0.0, %v3171
      %v3173 = vpop.f32.mrf.mxu0
      %v3174 = vpop.f32.mrf.mxu0
      %v3175 = vadd.f32 0.0, %v3174
      %v3176 = vpop.f32.mrf.mxu0
      %3177 = vmatprep.mubr.bf16.mxu0 0
      %3178 = vmatmul.mubr.bf16.gmra.mxu0 %v1373
      %v3179 = vpop.f32.mrf.mxu0
      %v3180 = vadd.f32 0.0, %v3179
      %v3181 = vpop.f32.mrf.mxu0
      %v3182 = vpop.f32.mrf.mxu0
      %v3183 = vadd.f32 0.0, %v3182
      %v3184 = vpop.f32.mrf.mxu0
      %3185 = vmatprep.mubr.bf16.mxu0 0
      %3186 = vmatmul.mubr.bf16.gmra.mxu0 %v2181
      %v3187 = vpop.f32.mrf.mxu0
      %v3188 = vadd.f32 0.0, %v3187
      %v3189 = vpop.f32.mrf.mxu0
      %v3190 = vpop.f32.mrf.mxu0
      %v3191 = vadd.f32 0.0, %v3190
      %v3192 = vpop.f32.mrf.mxu0
      %3193 = vmatprep.mubr.bf16.mxu0 0
      %3194 = vmatmul.mubr.bf16.gmra.mxu0 %v2974
      %v3195 = vpop.f32.mrf.mxu0
      %v3196 = vadd.f32 0.0, %v3195
      %v3197 = vpop.f32.mrf.mxu0
      %v3198 = vpop.f32.mrf.mxu0
      %v3199 = vadd.f32 0.0, %v3198
      %v3200 = vpop.f32.mrf.mxu0
      %3201 = vdwg.mxu0
      %v3202 = vadd.f32 %v2938, %v3076
      %v3203 = vadd.f32 %v2939, %v3079
      %v3204 = vadd.f32 %v2940, %v3084
      %v3205 = vadd.f32 %v2941, %v3087
      %v3206 = vadd.f32 %v2942, %v3092
      %v3207 = vadd.f32 %v2943, %v3095
      %v3208 = vadd.f32 %v2944, %v3100
      %v3209 = vadd.f32 %v2945, %v3103
      %v3210 = vadd.f32 %v2946, %v3108
      %v3211 = vadd.f32 %v2947, %v3111
      %v3212 = vadd.f32 %v2948, %v3116
      %v3213 = vadd.f32 %v2949, %v3119
      %v3214 = vadd.f32 %v2950, %v3124
      %v3215 = vadd.f32 %v2951, %v3127
      %v3216 = vadd.f32 %v2952, %v3132
      %v3217 = vadd.f32 %v2953, %v3135
      %v3218 = vadd.f32 %v2954, %v3140
      %v3219 = vadd.f32 %v2955, %v3143
      %v3220 = vadd.f32 %v2956, %v3148
      %v3221 = vadd.f32 %v2957, %v3151
      %v3222 = vadd.f32 %v2958, %v3156
      %v3223 = vadd.f32 %v2959, %v3159
      %v3224 = vadd.f32 %v2960, %v3164
      %v3225 = vadd.f32 %v2961, %v3167
      %v3226 = vadd.f32 %v2962, %v3172
      %v3227 = vadd.f32 %v2963, %v3175
      %v3228 = vadd.f32 %v2964, %v3180
      %v3229 = vadd.f32 %v2965, %v3183
      %v3230 = vadd.f32 %v2966, %v3188
      %v3231 = vadd.f32 %v2967, %v3191
      %v3232 = vadd.f32 %v2968, %v3196
      %v3233 = vadd.f32 %v2969, %v3199
      %v3234 = vadd.f32 %v3202, %v3203
      %v3235 = vadd.f32 %v3234, %v3204
      %v3236 = vadd.f32 %v3235, %v3205
      %v3237 = vadd.f32 %v3236, %v3206
      %v3238 = vadd.f32 %v3237, %v3207
      %v3239 = vadd.f32 %v3238, %v3208
      %v3240 = vadd.f32 %v3239, %v3209
      %v3241 = vadd.f32 %v3240, %v3210
      %v3242 = vadd.f32 %v3241, %v3211
      %v3243 = vadd.f32 %v3242, %v3212
      %v3244 = vadd.f32 %v3243, %v3213
      %v3245 = vadd.f32 %v3244, %v3214
      %v3246 = vadd.f32 %v3245, %v3215
      %v3247 = vadd.f32 %v3246, %v3216
      %v3248 = vadd.f32 %v3247, %v3217
      %v3249 = vadd.f32 %v3248, %v3218
      %v3250 = vadd.f32 %v3249, %v3219
      %v3251 = vadd.f32 %v3250, %v3220
      %v3252 = vadd.f32 %v3251, %v3221
      %v3253 = vadd.f32 %v3252, %v3222
      %v3254 = vadd.f32 %v3253, %v3223
      %v3255 = vadd.f32 %v3254, %v3224
      %v3256 = vadd.f32 %v3255, %v3225
      %v3257 = vadd.f32 %v3256, %v3226
      %v3258 = vadd.f32 %v3257, %v3227
      %v3259 = vadd.f32 %v3258, %v3228
      %v3260 = vadd.f32 %v3259, %v3229
      %v3261 = vadd.f32 %v3260, %v3230
      %v3262 = vadd.f32 %v3261, %v3231
      %v3263 = vadd.f32 %v3262, %v3232
      %v3264 = vadd.f32 %v3263, %v3233
      %v3265 = vrot.slane %v3264, 4
      %v3266 = vadd.f32 %v3264, %v3265
      %v3267 = vrot.slane %v3266, 2
      %v3268 = vadd.f32 %v3266, %v3267
      %v3269 = vrot.slane %v3268, 1
      %v3270 = vadd.f32 %v3268, %v3269
      %3271 = vst [vmem:[%s235] sm:$0x1] %v3270
      %v3272 = vmul.f32 %v3202, %v3202
      %v3273 = vmul.f32 %v3203, %v3203
      %v3274 = vmul.f32 %v3204, %v3204
      %v3275 = vmul.f32 %v3205, %v3205
      %v3276 = vmul.f32 %v3206, %v3206
      %v3277 = vmul.f32 %v3207, %v3207
      %v3278 = vmul.f32 %v3208, %v3208
      %v3279 = vmul.f32 %v3209, %v3209
      %v3280 = vmul.f32 %v3210, %v3210
      %v3281 = vmul.f32 %v3211, %v3211
      %v3282 = vmul.f32 %v3212, %v3212
      %v3283 = vmul.f32 %v3213, %v3213
      %v3284 = vmul.f32 %v3214, %v3214
      %v3285 = vmul.f32 %v3215, %v3215
      %v3286 = vmul.f32 %v3216, %v3216
      %v3287 = vmul.f32 %v3217, %v3217
      %v3288 = vmul.f32 %v3218, %v3218
      %v3289 = vmul.f32 %v3219, %v3219
      %v3290 = vmul.f32 %v3220, %v3220
      %v3291 = vmul.f32 %v3221, %v3221
      %v3292 = vmul.f32 %v3222, %v3222
      %v3293 = vmul.f32 %v3223, %v3223
      %v3294 = vmul.f32 %v3224, %v3224
      %v3295 = vmul.f32 %v3225, %v3225
      %v3296 = vmul.f32 %v3226, %v3226
      %v3297 = vmul.f32 %v3227, %v3227
      %v3298 = vmul.f32 %v3228, %v3228
      %v3299 = vmul.f32 %v3229, %v3229
      %v3300 = vmul.f32 %v3230, %v3230
      %v3301 = vmul.f32 %v3231, %v3231
      %v3302 = vmul.f32 %v3232, %v3232
      %v3303 = vmul.f32 %v3233, %v3233
      %v3304 = vadd.f32 %v3272, %v3273
      %v3305 = vadd.f32 %v3304, %v3274
      %v3306 = vadd.f32 %v3305, %v3275
      %v3307 = vadd.f32 %v3306, %v3276
      %v3308 = vadd.f32 %v3307, %v3277
      %v3309 = vadd.f32 %v3308, %v3278
      %v3310 = vadd.f32 %v3309, %v3279
      %v3311 = vadd.f32 %v3310, %v3280
      %v3312 = vadd.f32 %v3311, %v3281
      %v3313 = vadd.f32 %v3312, %v3282
      %v3314 = vadd.f32 %v3313, %v3283
      %v3315 = vadd.f32 %v3314, %v3284
      %v3316 = vadd.f32 %v3315, %v3285
      %v3317 = vadd.f32 %v3316, %v3286
      %v3318 = vadd.f32 %v3317, %v3287
      %v3319 = vadd.f32 %v3318, %v3288
      %v3320 = vadd.f32 %v3319, %v3289
      %v3321 = vadd.f32 %v3320, %v3290
      %v3322 = vadd.f32 %v3321, %v3291
      %v3323 = vadd.f32 %v3322, %v3292
      %v3324 = vadd.f32 %v3323, %v3293
      %v3325 = vadd.f32 %v3324, %v3294
      %v3326 = vadd.f32 %v3325, %v3295
      %v3327 = vadd.f32 %v3326, %v3296
      %v3328 = vadd.f32 %v3327, %v3297
      %v3329 = vadd.f32 %v3328, %v3298
      %v3330 = vadd.f32 %v3329, %v3299
      %v3331 = vadd.f32 %v3330, %v3300
      %v3332 = vadd.f32 %v3331, %v3301
      %v3333 = vadd.f32 %v3332, %v3302
      %v3334 = vadd.f32 %v3333, %v3303
      %v3335 = vrot.slane %v3334, 4
      %v3336 = vadd.f32 %v3334, %v3335
      %v3337 = vrot.slane %v3336, 2
      %v3338 = vadd.f32 %v3336, %v3337
      %v3339 = vrot.slane %v3338, 1
      %v3340 = vadd.f32 %v3338, %v3339
      %3341 = vst [vmem:[%s235 + $0x1] sm:$0x1] %v3340
      %v3342 = vpack.c.bf16 %v3203, %v3202
      %v3343 = vpack.c.bf16 %v3205, %v3204
      %v3344 = vpack.c.bf16 %v3207, %v3206
      %v3345 = vpack.c.bf16 %v3209, %v3208
      %v3346 = vpack.c.bf16 %v3211, %v3210
      %v3347 = vpack.c.bf16 %v3213, %v3212
      %v3348 = vpack.c.bf16 %v3215, %v3214
      %v3349 = vpack.c.bf16 %v3217, %v3216
      %v3350 = vpack.c.bf16 %v3219, %v3218
      %v3351 = vpack.c.bf16 %v3221, %v3220
      %v3352 = vpack.c.bf16 %v3223, %v3222
      %v3353 = vpack.c.bf16 %v3225, %v3224
      %v3354 = vpack.c.bf16 %v3227, %v3226
      %v3355 = vpack.c.bf16 %v3229, %v3228
      %v3356 = vpack.c.bf16 %v3231, %v3230
      %v3357 = vpack.c.bf16 %v3233, %v3232
      %v3374 = vunpack.c.l.b16 %v3342
      %v3375 = vunpack.c.h.b16 %v3342
      %v3376 = vunpack.c.l.b16 %v3343
      %v3377 = vunpack.c.h.b16 %v3343
      %v3378 = vunpack.c.l.b16 %v3344
      %v3379 = vunpack.c.h.b16 %v3344
      %v3380 = vunpack.c.l.b16 %v3345
      %v3381 = vunpack.c.h.b16 %v3345
      %v3382 = vunpack.c.l.b16 %v3346
      %v3383 = vunpack.c.h.b16 %v3346
      %v3384 = vunpack.c.l.b16 %v3347
      %v3385 = vunpack.c.h.b16 %v3347
      %v3386 = vunpack.c.l.b16 %v3348
      %v3387 = vunpack.c.h.b16 %v3348
      %v3388 = vunpack.c.l.b16 %v3349
      %v3389 = vunpack.c.h.b16 %v3349
      %v3390 = vunpack.c.l.b16 %v3350
      %v3391 = vunpack.c.h.b16 %v3350
      %v3392 = vunpack.c.l.b16 %v3351
      %v3393 = vunpack.c.h.b16 %v3351
      %v3394 = vunpack.c.l.b16 %v3352
      %v3395 = vunpack.c.h.b16 %v3352
      %v3396 = vunpack.c.l.b16 %v3353
      %v3397 = vunpack.c.h.b16 %v3353
      %v3398 = vunpack.c.l.b16 %v3354
      %v3399 = vunpack.c.h.b16 %v3354
      %v3400 = vunpack.c.l.b16 %v3355
      %v3401 = vunpack.c.h.b16 %v3355
      %v3402 = vunpack.c.l.b16 %v3356
      %v3403 = vunpack.c.h.b16 %v3356
      %v3404 = vunpack.c.l.b16 %v3357
      %v3405 = vunpack.c.h.b16 %v3357
      %v3406 = vpack.c.b16 %v3374, %v3374
      %v3407 = vpack.c.b16 %v3375, %v3375
      %v3408 = vpack.c.b16 %v3376, %v3376
      %v3409 = vpack.c.b16 %v3377, %v3377
      %v3410 = vpack.c.b16 %v3378, %v3378
      %v3411 = vpack.c.b16 %v3379, %v3379
      %v3412 = vpack.c.b16 %v3380, %v3380
      %v3413 = vpack.c.b16 %v3381, %v3381
      %v3414 = vpack.c.b16 %v3382, %v3382
      %v3415 = vpack.c.b16 %v3383, %v3383
      %v3416 = vpack.c.b16 %v3384, %v3384
      %v3417 = vpack.c.b16 %v3385, %v3385
      %v3418 = vpack.c.b16 %v3386, %v3386
      %v3419 = vpack.c.b16 %v3387, %v3387
      %v3420 = vpack.c.b16 %v3388, %v3388
      %v3421 = vpack.c.b16 %v3389, %v3389
      %v3422 = vpack.c.b16 %v3390, %v3390
      %v3423 = vpack.c.b16 %v3391, %v3391
      %v3424 = vpack.c.b16 %v3392, %v3392
      %v3425 = vpack.c.b16 %v3393, %v3393
      %v3426 = vpack.c.b16 %v3394, %v3394
      %v3427 = vpack.c.b16 %v3395, %v3395
      %v3428 = vpack.c.b16 %v3396, %v3396
      %v3429 = vpack.c.b16 %v3397, %v3397
      %v3430 = vpack.c.b16 %v3398, %v3398
      %v3431 = vpack.c.b16 %v3399, %v3399
      %v3432 = vpack.c.b16 %v3400, %v3400
      %v3433 = vpack.c.b16 %v3401, %v3401
      %v3434 = vpack.c.b16 %v3402, %v3402
      %v3435 = vpack.c.b16 %v3403, %v3403
      %v3436 = vpack.c.b16 %v3404, %v3404
      %v3437 = vpack.c.b16 %v3405, %v3405
      %vm3438 = vsmask.f32 256
      %vm3439 = vsmask.f32 4368
      %vm3440 = vmor %vm3438, %vm3439
      %v3442 = vshrl.u32 %v3406, 16
      %v3444 = vrot.slane %v3442, 7
      %v3445 = vshll.u32 %v3406, 16
      %v3447 = vor.u32 %v3444, %v3445
      %v3448 = vrot.slane %v3444, 4
      %v3450 = vshrl.u32 %v3407, 16
      %v3452 = vrot.slane %v3450, 7
      %v3453 = vshll.u32 %v3407, 16
      %v3455 = vor.u32 %v3452, %v3453
      %v3456 = vsel %vm3440, %v3448, %v3455
      %v3457 = vrot.slane %v3452, 4
      %v3459 = vshrl.u32 %v3408, 16
      %v3461 = vrot.slane %v3459, 7
      %v3462 = vshll.u32 %v3408, 16
      %v3464 = vor.u32 %v3461, %v3462
      %v3465 = vrot.slane %v3461, 4
      %v3467 = vshrl.u32 %v3409, 16
      %v3469 = vrot.slane %v3467, 7
      %v3470 = vshll.u32 %v3409, 16
      %v3472 = vor.u32 %v3469, %v3470
      %v3473 = vsel %vm3440, %v3465, %v3472
      %v3474 = vrot.slane %v3469, 4
      %v3476 = vshrl.u32 %v3410, 16
      %v3478 = vrot.slane %v3476, 7
      %v3479 = vshll.u32 %v3410, 16
      %v3481 = vor.u32 %v3478, %v3479
      %v3482 = vrot.slane %v3478, 4
      %v3484 = vshrl.u32 %v3411, 16
      %v3486 = vrot.slane %v3484, 7
      %v3487 = vshll.u32 %v3411, 16
      %v3489 = vor.u32 %v3486, %v3487
      %v3490 = vsel %vm3440, %v3482, %v3489
      %v3491 = vrot.slane %v3486, 4
      %v3493 = vshrl.u32 %v3412, 16
      %v3495 = vrot.slane %v3493, 7
      %v3496 = vshll.u32 %v3412, 16
      %v3498 = vor.u32 %v3495, %v3496
      %v3499 = vrot.slane %v3495, 4
      %v3501 = vshrl.u32 %v3413, 16
      %v3503 = vrot.slane %v3501, 7
      %v3504 = vshll.u32 %v3413, 16
      %v3506 = vor.u32 %v3503, %v3504
      %v3507 = vsel %vm3440, %v3499, %v3506
      %v3508 = vrot.slane %v3503, 4
      %v3510 = vshrl.u32 %v3414, 16
      %v3512 = vrot.slane %v3510, 7
      %v3513 = vshll.u32 %v3414, 16
      %v3515 = vor.u32 %v3512, %v3513
      %v3516 = vrot.slane %v3512, 4
      %v3518 = vshrl.u32 %v3415, 16
      %v3520 = vrot.slane %v3518, 7
      %v3521 = vshll.u32 %v3415, 16
      %v3523 = vor.u32 %v3520, %v3521
      %v3524 = vsel %vm3440, %v3516, %v3523
      %v3525 = vrot.slane %v3520, 4
      %v3527 = vshrl.u32 %v3416, 16
      %v3529 = vrot.slane %v3527, 7
      %v3530 = vshll.u32 %v3416, 16
      %v3532 = vor.u32 %v3529, %v3530
      %v3533 = vrot.slane %v3529, 4
      %v3535 = vshrl.u32 %v3417, 16
      %v3537 = vrot.slane %v3535, 7
      %v3538 = vshll.u32 %v3417, 16
      %v3540 = vor.u32 %v3537, %v3538
      %v3541 = vsel %vm3440, %v3533, %v3540
      %v3542 = vrot.slane %v3537, 4
      %v3544 = vshrl.u32 %v3418, 16
      %v3546 = vrot.slane %v3544, 7
      %v3547 = vshll.u32 %v3418, 16
      %v3549 = vor.u32 %v3546, %v3547
      %v3550 = vrot.slane %v3546, 4
      %v3552 = vshrl.u32 %v3419, 16
      %v3554 = vrot.slane %v3552, 7
      %v3555 = vshll.u32 %v3419, 16
      %v3557 = vor.u32 %v3554, %v3555
      %v3558 = vsel %vm3440, %v3550, %v3557
      %v3559 = vrot.slane %v3554, 4
      %v3561 = vshrl.u32 %v3420, 16
      %v3563 = vrot.slane %v3561, 7
      %v3564 = vshll.u32 %v3420, 16
      %v3566 = vor.u32 %v3563, %v3564
      %v3567 = vrot.slane %v3563, 4
      %v3569 = vshrl.u32 %v3421, 16
      %v3571 = vrot.slane %v3569, 7
      %v3572 = vshll.u32 %v3421, 16
      %v3574 = vor.u32 %v3571, %v3572
      %v3575 = vsel %vm3440, %v3567, %v3574
      %v3576 = vrot.slane %v3571, 4
      %v3578 = vshrl.u32 %v3422, 16
      %v3580 = vrot.slane %v3578, 7
      %v3581 = vshll.u32 %v3422, 16
      %v3583 = vor.u32 %v3580, %v3581
      %v3584 = vrot.slane %v3580, 4
      %v3586 = vshrl.u32 %v3423, 16
      %v3588 = vrot.slane %v3586, 7
      %v3589 = vshll.u32 %v3423, 16
      %v3591 = vor.u32 %v3588, %v3589
      %v3592 = vsel %vm3440, %v3584, %v3591
      %v3593 = vrot.slane %v3588, 4
      %v3595 = vshrl.u32 %v3424, 16
      %v3597 = vrot.slane %v3595, 7
      %v3598 = vshll.u32 %v3424, 16
      %v3600 = vor.u32 %v3597, %v3598
      %v3601 = vrot.slane %v3597, 4
      %v3603 = vshrl.u32 %v3425, 16
      %v3605 = vrot.slane %v3603, 7
      %v3606 = vshll.u32 %v3425, 16
      %v3608 = vor.u32 %v3605, %v3606
      %v3609 = vsel %vm3440, %v3601, %v3608
      %v3610 = vrot.slane %v3605, 4
      %v3612 = vshrl.u32 %v3426, 16
      %v3614 = vrot.slane %v3612, 7
      %v3615 = vshll.u32 %v3426, 16
      %v3617 = vor.u32 %v3614, %v3615
      %v3618 = vrot.slane %v3614, 4
      %v3620 = vshrl.u32 %v3427, 16
      %v3622 = vrot.slane %v3620, 7
      %v3623 = vshll.u32 %v3427, 16
      %v3625 = vor.u32 %v3622, %v3623
      %v3626 = vsel %vm3440, %v3618, %v3625
      %v3627 = vrot.slane %v3622, 4
      %v3629 = vshrl.u32 %v3428, 16
      %v3631 = vrot.slane %v3629, 7
      %v3632 = vshll.u32 %v3428, 16
      %v3634 = vor.u32 %v3631, %v3632
      %v3635 = vrot.slane %v3631, 4
      %v3637 = vshrl.u32 %v3429, 16
      %v3639 = vrot.slane %v3637, 7
      %v3640 = vshll.u32 %v3429, 16
      %v3642 = vor.u32 %v3639, %v3640
      %v3643 = vsel %vm3440, %v3635, %v3642
      %v3644 = vrot.slane %v3639, 4
      %v3646 = vshrl.u32 %v3430, 16
      %v3648 = vrot.slane %v3646, 7
      %v3649 = vshll.u32 %v3430, 16
      %v3651 = vor.u32 %v3648, %v3649
      %v3652 = vrot.slane %v3648, 4
      %v3654 = vshrl.u32 %v3431, 16
      %v3656 = vrot.slane %v3654, 7
      %v3657 = vshll.u32 %v3431, 16
      %v3659 = vor.u32 %v3656, %v3657
      %v3660 = vsel %vm3440, %v3652, %v3659
      %v3661 = vrot.slane %v3656, 4
      %v3663 = vshrl.u32 %v3432, 16
      %v3665 = vrot.slane %v3663, 7
      %v3666 = vshll.u32 %v3432, 16
      %v3668 = vor.u32 %v3665, %v3666
      %v3669 = vrot.slane %v3665, 4
      %v3671 = vshrl.u32 %v3433, 16
      %v3673 = vrot.slane %v3671, 7
      %v3674 = vshll.u32 %v3433, 16
      %v3676 = vor.u32 %v3673, %v3674
      %v3677 = vsel %vm3440, %v3669, %v3676
      %v3678 = vrot.slane %v3673, 4
      %v3680 = vshrl.u32 %v3434, 16
      %v3682 = vrot.slane %v3680, 7
      %v3683 = vshll.u32 %v3434, 16
      %v3685 = vor.u32 %v3682, %v3683
      %v3686 = vrot.slane %v3682, 4
      %v3688 = vshrl.u32 %v3435, 16
      %v3690 = vrot.slane %v3688, 7
      %v3691 = vshll.u32 %v3435, 16
      %v3693 = vor.u32 %v3690, %v3691
      %v3694 = vsel %vm3440, %v3686, %v3693
      %v3695 = vrot.slane %v3690, 4
      %v3697 = vshrl.u32 %v3436, 16
      %v3699 = vrot.slane %v3697, 7
      %v3700 = vshll.u32 %v3436, 16
      %v3702 = vor.u32 %v3699, %v3700
      %v3703 = vrot.slane %v3699, 4
      %v3705 = vshrl.u32 %v3437, 16
      %v3707 = vrot.slane %v3705, 7
      %v3708 = vshll.u32 %v3437, 16
      %v3710 = vor.u32 %v3707, %v3708
      %v3711 = vsel %vm3440, %v3703, %v3710
      %v3712 = vrot.slane %v3707, 4
      %s3761 = scalar_lea.vmem %s231, 12
      %vm3762 = vcmask 1043456
      %vm3763 = vsmask.f32 7938
      %vm3764 = vmand %vm3762, %vm3763
      %v3765 = vld [vmem:[%s3761] sm:$0xf]
      %v3766 = vsel %vm3764, %v3447, %v3765
      %3767 = vst [vmem:[%s3761] sm:$0xf] %v3766
      %3768 = vst [vmem:[%s3761 + $0x4] sm:$0xf] %v3456
      %vm3769 = vcmask 1040384
      %vm3770 = vmand %vm3769, %vm3438
      %v3771 = vld [vmem:[%s3761 + $0x8] sm:$0x1]
      %v3772 = vsel %vm3770, %v3457, %v3771
      %3773 = vst [vmem:[%s3761 + $0x8] sm:$0x1] %v3772
      %v3774 = vld [vmem:[%s3761 + $0xc] sm:$0xf]
      %v3775 = vsel %vm3764, %v3464, %v3774
      %3776 = vst [vmem:[%s3761 + $0xc] sm:$0xf] %v3775
      %3777 = vst [vmem:[%s3761 + $0x10] sm:$0xf] %v3473
      %v3778 = vld [vmem:[%s3761 + $0x14] sm:$0x1]
      %v3779 = vsel %vm3770, %v3474, %v3778
      %3780 = vst [vmem:[%s3761 + $0x14] sm:$0x1] %v3779
      %v3781 = vld [vmem:[%s3761 + $0x18] sm:$0xf]
      %v3782 = vsel %vm3764, %v3481, %v3781
      %3783 = vst [vmem:[%s3761 + $0x18] sm:$0xf] %v3782
      %3784 = vst [vmem:[%s3761 + $0x1c] sm:$0xf] %v3490
      %v3785 = vld [vmem:[%s3761 + $0x20] sm:$0x1]
      %v3786 = vsel %vm3770, %v3491, %v3785
      %3787 = vst [vmem:[%s3761 + $0x20] sm:$0x1] %v3786
      %v3788 = vld [vmem:[%s3761 + $0x24] sm:$0xf]
      %v3789 = vsel %vm3764, %v3498, %v3788
      %3790 = vst [vmem:[%s3761 + $0x24] sm:$0xf] %v3789
      %3791 = vst [vmem:[%s3761 + $0x28] sm:$0xf] %v3507
      %v3792 = vld [vmem:[%s3761 + $0x2c] sm:$0x1]
      %v3793 = vsel %vm3770, %v3508, %v3792
      %3794 = vst [vmem:[%s3761 + $0x2c] sm:$0x1] %v3793
      %v3795 = vld [vmem:[%s3761 + $0x30] sm:$0xf]
      %v3796 = vsel %vm3764, %v3515, %v3795
      %3797 = vst [vmem:[%s3761 + $0x30] sm:$0xf] %v3796
      %3798 = vst [vmem:[%s3761 + $0x34] sm:$0xf] %v3524
      %v3799 = vld [vmem:[%s3761 + $0x38] sm:$0x1]
      %v3800 = vsel %vm3770, %v3525, %v3799
      %3801 = vst [vmem:[%s3761 + $0x38] sm:$0x1] %v3800
      %v3802 = vld [vmem:[%s3761 + $0x3c] sm:$0xf]
      %v3803 = vsel %vm3764, %v3532, %v3802
      %3804 = vst [vmem:[%s3761 + $0x3c] sm:$0xf] %v3803
      %3805 = vst [vmem:[%s3761 + $0x40] sm:$0xf] %v3541
      %v3806 = vld [vmem:[%s3761 + $0x44] sm:$0x1]
      %v3807 = vsel %vm3770, %v3542, %v3806
      %3808 = vst [vmem:[%s3761 + $0x44] sm:$0x1] %v3807
      %v3809 = vld [vmem:[%s3761 + $0x48] sm:$0xf]
      %v3810 = vsel %vm3764, %v3549, %v3809
      %3811 = vst [vmem:[%s3761 + $0x48] sm:$0xf] %v3810
      %3812 = vst [vmem:[%s3761 + $0x4c] sm:$0xf] %v3558
      %v3813 = vld [vmem:[%s3761 + $0x50] sm:$0x1]
      %v3814 = vsel %vm3770, %v3559, %v3813
      %3815 = vst [vmem:[%s3761 + $0x50] sm:$0x1] %v3814
      %v3816 = vld [vmem:[%s3761 + $0x54] sm:$0xf]
      %v3817 = vsel %vm3764, %v3566, %v3816
      %3818 = vst [vmem:[%s3761 + $0x54] sm:$0xf] %v3817
      %3819 = vst [vmem:[%s3761 + $0x58] sm:$0xf] %v3575
      %v3820 = vld [vmem:[%s3761 + $0x5c] sm:$0x1]
      %v3821 = vsel %vm3770, %v3576, %v3820
      %3822 = vst [vmem:[%s3761 + $0x5c] sm:$0x1] %v3821
      %v3823 = vld [vmem:[%s3761 + $0x60] sm:$0xf]
      %v3824 = vsel %vm3764, %v3583, %v3823
      %3825 = vst [vmem:[%s3761 + $0x60] sm:$0xf] %v3824
      %3826 = vst [vmem:[%s3761 + $0x64] sm:$0xf] %v3592
      %v3827 = vld [vmem:[%s3761 + $0x68] sm:$0x1]
      %v3828 = vsel %vm3770, %v3593, %v3827
      %3829 = vst [vmem:[%s3761 + $0x68] sm:$0x1] %v3828
      %v3830 = vld [vmem:[%s3761 + $0x6c] sm:$0xf]
      %v3831 = vsel %vm3764, %v3600, %v3830
      %3832 = vst [vmem:[%s3761 + $0x6c] sm:$0xf] %v3831
      %3833 = vst [vmem:[%s3761 + $0x70] sm:$0xf] %v3609
      %v3834 = vld [vmem:[%s3761 + $0x74] sm:$0x1]
      %v3835 = vsel %vm3770, %v3610, %v3834
      %3836 = vst [vmem:[%s3761 + $0x74] sm:$0x1] %v3835
      %v3837 = vld [vmem:[%s3761 + $0x78] sm:$0xf]
      %v3838 = vsel %vm3764, %v3617, %v3837
      %3839 = vst [vmem:[%s3761 + $0x78] sm:$0xf] %v3838
      %3840 = vst [vmem:[%s3761 + $0x7c] sm:$0xf] %v3626
      %v3841 = vld [vmem:[%s3761 + $0x80] sm:$0x1]
      %v3842 = vsel %vm3770, %v3627, %v3841
      %3843 = vst [vmem:[%s3761 + $0x80] sm:$0x1] %v3842
      %v3844 = vld [vmem:[%s3761 + $0x84] sm:$0xf]
      %v3845 = vsel %vm3764, %v3634, %v3844
      %3846 = vst [vmem:[%s3761 + $0x84] sm:$0xf] %v3845
      %3847 = vst [vmem:[%s3761 + $0x88] sm:$0xf] %v3643
      %v3848 = vld [vmem:[%s3761 + $0x8c] sm:$0x1]
      %v3849 = vsel %vm3770, %v3644, %v3848
      %3850 = vst [vmem:[%s3761 + $0x8c] sm:$0x1] %v3849
      %v3851 = vld [vmem:[%s3761 + $0x90] sm:$0xf]
      %v3852 = vsel %vm3764, %v3651, %v3851
      %3853 = vst [vmem:[%s3761 + $0x90] sm:$0xf] %v3852
      %3854 = vst [vmem:[%s3761 + $0x94] sm:$0xf] %v3660
      %v3855 = vld [vmem:[%s3761 + $0x98] sm:$0x1]
      %v3856 = vsel %vm3770, %v3661, %v3855
      %3857 = vst [vmem:[%s3761 + $0x98] sm:$0x1] %v3856
      %v3858 = vld [vmem:[%s3761 + $0x9c] sm:$0xf]
      %v3859 = vsel %vm3764, %v3668, %v3858
      %3860 = vst [vmem:[%s3761 + $0x9c] sm:$0xf] %v3859
      %3861 = vst [vmem:[%s3761 + $0xa0] sm:$0xf] %v3677
      %v3862 = vld [vmem:[%s3761 + $0xa4] sm:$0x1]
      %v3863 = vsel %vm3770, %v3678, %v3862
      %3864 = vst [vmem:[%s3761 + $0xa4] sm:$0x1] %v3863
      %v3865 = vld [vmem:[%s3761 + $0xa8] sm:$0xf]
      %v3866 = vsel %vm3764, %v3685, %v3865
      %3867 = vst [vmem:[%s3761 + $0xa8] sm:$0xf] %v3866
      %3868 = vst [vmem:[%s3761 + $0xac] sm:$0xf] %v3694
      %v3869 = vld [vmem:[%s3761 + $0xb0] sm:$0x1]
      %v3870 = vsel %vm3770, %v3695, %v3869
      %3871 = vst [vmem:[%s3761 + $0xb0] sm:$0x1] %v3870
      %v3872 = vld [vmem:[%s3761 + $0xb4] sm:$0xf]
      %v3873 = vsel %vm3764, %v3702, %v3872
      %3874 = vst [vmem:[%s3761 + $0xb4] sm:$0xf] %v3873
      %3875 = vst [vmem:[%s3761 + $0xb8] sm:$0xf] %v3711
      %v3876 = vld [vmem:[%s3761 + $0xbc] sm:$0x1]
      %v3877 = vsel %vm3770, %v3712, %v3876
      %3878 = vst [vmem:[%s3761 + $0xbc] sm:$0x1] %v3877
      %p3879 = scmp.lt.s32.totalorder %s17, 1
      %s3880 = scalar_select %p3879, %s17, 1
      %s3881 = smul.addr %s3880, 54
      %s3882 = smul.addr %s3881, 4
      %s3883 = scalar_lea.vmem %s4, %s3882
      %p3884 = scmp.lt.s32.totalorder %s17, 1
      %s3885 = scalar_select %p3884, %s17, 1
      %s3886 = smul.addr %s3885, 8
      %s3887 = scalar_lea.vmem %s5, %s3886
      // Predicated region
      $region37: #{conv_block_forward.4} parent=35 // pred_check
        %p3888 = pneg %p124
      $region38: #{conv_block_forward.4} parent=35 // pred_check_branch
        %3890 = sbr.rel (%p3888) target = $region40
      $region39: #{conv_block_forward.4} parent=35 // pred_region
        _
      $region40: #{conv_block_forward.4} parent=35 // pred_fallthru
        _
      // Predicated region
      $region41: #{conv_block_forward.4} parent=35 // pred_check
        %p3891 = pneg %p150
      $region42: #{conv_block_forward.4} parent=35 // pred_check_branch
        %3893 = sbr.rel (%p3891) target = $region44
      $region43: #{conv_block_forward.4} parent=35 // pred_region
        _
      $region44: #{conv_block_forward.4} parent=35 // pred_fallthru
        _
    $region36: #{conv_block_forward.4} parent=5 // pred_fallthru
      _
    %p3894 = scmp.le.s32.totalorder 2, %s12
    // Predicated region
    $region45: #{conv_block_forward.4} parent=5 // pred_check
      %p3895 = pneg %p3894
    $region46: #{conv_block_forward.4} parent=5 // pred_check_branch
      %3897 = sbr.rel (%p3895) target = $region48
    $region47: #{conv_block_forward.4} parent=5 // pred_region
      %s3898 = ssub.s32 %s12, 2
      // Predicated region
      $region49: #{conv_block_forward.4} parent=47 // pred_check
        %p3899 = pneg %p130
      $region50: #{conv_block_forward.4} parent=47 // pred_check_branch
        %3901 = sbr.rel (%p3899) target = $region52
      $region51: #{conv_block_forward.4} parent=47 // pred_region
        %p3902 = scmp.lt.s32.totalorder %s18, 1
        %s3903 = scalar_select %p3902, %s18, 1
        %s3904 = smul.addr %s3903, 54
        %s3905 = smul.addr %s3904, 4
        %s3906 = scalar_lea.vmem %s4, %s3905
      $region52: #{conv_block_forward.4} parent=47 // pred_fallthru
        _
      // Predicated region
      $region53: #{conv_block_forward.4} parent=47 // pred_check
        %p3907 = pneg %p156
      $region54: #{conv_block_forward.4} parent=47 // pred_check_branch
        %3909 = sbr.rel (%p3907) target = $region56
      $region55: #{conv_block_forward.4} parent=47 // pred_region
        %p3910 = scmp.lt.s32.totalorder %s18, 1
        %s3911 = scalar_select %p3910, %s18, 1
        %s3912 = smul.addr %s3911, 8
        %s3913 = scalar_lea.vmem %s5, %s3912
      $region56: #{conv_block_forward.4} parent=47 // pred_fallthru
        _
    $region48: #{conv_block_forward.4} parent=5 // pred_fallthru
      _
  $region6: #{conv_block_forward.4} parent=0 // loop_footer
    %s16 = sadd.s32 1, %s12
  $region7: #{conv_block_forward.4} parent=0 // loop_footer_branch
    %11 = sbr.rel target = $region3
  $region8: #{conv_block_forward.4} parent=0 // loop_exit
    _

// kernel: conv_block_forward.3
$region0: #{conv_block_forward.3}
  #allocation0 [shape = 'u32[]', space=smem, size = 0x4, offset = 0x4, fixed_abs, tag = 'smem constant byte address 0x4 - core index']
  #allocation1 [shape = 'u32[144,128]{1,0:T(1,128)}', space=vmem, size = 0x12000, scoped, tag = 'internal scratch']
  %s0 = inlined_call_operand.vmem [shape: bf16[2,18,24,128], index: 0, kind: input, shape index: {}]
  %s1 = inlined_call_operand.vmem [shape: bf16[9,128,128], index: 1, kind: input, shape index: {}]
  %s2 = inlined_call_operand.vmem [shape: f32[1,128], index: 2, kind: input, shape index: {}]
  %s3 = inlined_call_operand.vmem [shape: f32[1,128], index: 3, kind: input, shape index: {}]
  %s4 = inlined_call_operand.vmem [shape: bf16[2,18,24,128], index: 4, kind: output, shape index: {0}]
  %s5 = inlined_call_operand.vmem [shape: f32[2,8,128], index: 5, kind: output, shape index: {1}]
  %6 = xla_tuple %s4, %s5
  %s7 = sld [smem:[#allocation0]]
  $region57: #{conv_block_forward.3} parent=0
    _
  %s9 = ssub.s32 1, %s7
  %s10 = scalar_select 0, %s9, %s7
  loop: start=0, step=1, limit=4
  $region2: #{conv_block_forward.3} parent=0 // loop_pre_header
    _
  $region3: #{conv_block_forward.3} parent=0 // loop_header
    %s12 = sphi 0, %s16
    %p13 = scmp.ge.s32.totalorder %s12, 4
    %s22 = sphi 0, %s24
    %s25 = sphi 0, %s22
    %s26 = sphi 0, %s25
    %s42 = sphi 0, %s26
    %s46 = sphi 0, %s46
    %s48 = sphi 0, %s46
    %s49 = sphi 0, %s48
    %s63 = sphi 0, %s49
    %s67 = sphi 0, %s67
    %s69 = sphi 0, %s67
    %s70 = sphi 0, %s69
    %s84 = sphi 0, %s70
    %s88 = sphi 0, %s88
    %s90 = sphi 0, %s88
    %s91 = sphi 0, %s90
    %s105 = sphi 0, %s91
    %s111 = sphi 0, %s113
    %s114 = sphi 0, %s111
    %s115 = sphi 0, %s114
    %s131 = sphi 0, %s115
    %s137 = sphi 0, %s139
    %s140 = sphi 0, %s137
    %s141 = sphi 0, %s140
    %s157 = sphi 0, %s141
  $region4: #{conv_block_forward.3} parent=0 // loop_header_branch
    %15 = sbr.rel (%p13) target = $region8
  $region5: #{conv_block_forward.3} parent=0 // loop_body
    %s17 = ssub.s32 %s12, 1
    %s18 = ssub.s32 %s12, 2
    %s19 = sadd.s32 %s12, 1
    %s20 = ssub.s32 %s12, %s19
    %p21 = scmp.eq.s32.totalorder %s20, 0
    %s23 = sadd.s32 %s22, 1
    %s24 = scalar_select %p21, %s22, %s23
    %p27 = pneg %p21
    %p28 = scmp.eq.s32.totalorder %s12, 1
    %p29 = por %p27, %p28
    %p30 = scmp.ne.s32.totalorder %s22, %s25
    %p31 = scmp.eq.s32.totalorder %s12, 0
    %p32 = por %p30, %p31
    %p33 = scmp.ne.s32.totalorder %s22, %s25
    %p34 = scmp.eq.s32.totalorder %s17, 1
    %p35 = por %p33, %p34
    %p36 = scmp.ne.s32.totalorder %s25, %s26
    %p37 = scmp.eq.s32.totalorder %s17, 0
    %p38 = por %p36, %p37
    %p39 = scmp.ne.s32.totalorder %s25, %s26
    %p40 = scmp.eq.s32.totalorder %s18, 1
    %p41 = por %p39, %p40
    %p43 = scmp.ne.s32.totalorder %s26, %s42
    %p44 = scmp.eq.s32.totalorder %s18, 0
    %p45 = por %p43, %p44
    %s47 = sadd.s32 %s46, 1
    %p50 = scmp.eq.s32.totalorder %s12, 1
    %p51 = scmp.ne.s32.totalorder %s46, %s48
    %p52 = scmp.eq.s32.totalorder %s12, 0
    %p53 = por %p51, %p52
    %p54 = scmp.ne.s32.totalorder %s46, %s48
    %p55 = scmp.eq.s32.totalorder %s17, 1
    %p56 = por %p54, %p55
    %p57 = scmp.ne.s32.totalorder %s48, %s49
    %p58 = scmp.eq.s32.totalorder %s17, 0
    %p59 = por %p57, %p58
    %p60 = scmp.ne.s32.totalorder %s48, %s49
    %p61 = scmp.eq.s32.totalorder %s18, 1
    %p62 = por %p60, %p61
    %p64 = scmp.ne.s32.totalorder %s49, %s63
    %p65 = scmp.eq.s32.totalorder %s18, 0
    %p66 = por %p64, %p65
    %s68 = sadd.s32 %s67, 1
    %p71 = scmp.eq.s32.totalorder %s12, 1
    %p72 = scmp.ne.s32.totalorder %s67, %s69
    %p73 = scmp.eq.s32.totalorder %s12, 0
    %p74 = por %p72, %p73
    %p75 = scmp.ne.s32.totalorder %s67, %s69
    %p76 = scmp.eq.s32.totalorder %s17, 1
    %p77 = por %p75, %p76
    %p78 = scmp.ne.s32.totalorder %s69, %s70
    %p79 = scmp.eq.s32.totalorder %s17, 0
    %p80 = por %p78, %p79
    %p81 = scmp.ne.s32.totalorder %s69, %s70
    %p82 = scmp.eq.s32.totalorder %s18, 1
    %p83 = por %p81, %p82
    %p85 = scmp.ne.s32.totalorder %s70, %s84
    %p86 = scmp.eq.s32.totalorder %s18, 0
    %p87 = por %p85, %p86
    %s89 = sadd.s32 %s88, 1
    %p92 = scmp.eq.s32.totalorder %s12, 1
    %p93 = scmp.ne.s32.totalorder %s88, %s90
    %p94 = scmp.eq.s32.totalorder %s12, 0
    %p95 = por %p93, %p94
    %p96 = scmp.ne.s32.totalorder %s88, %s90
    %p97 = scmp.eq.s32.totalorder %s17, 1
    %p98 = por %p96, %p97
    %p99 = scmp.ne.s32.totalorder %s90, %s91
    %p100 = scmp.eq.s32.totalorder %s17, 0
    %p101 = por %p99, %p100
    %p102 = scmp.ne.s32.totalorder %s90, %s91
    %p103 = scmp.eq.s32.totalorder %s18, 1
    %p104 = por %p102, %p103
    %p106 = scmp.ne.s32.totalorder %s91, %s105
    %p107 = scmp.eq.s32.totalorder %s18, 0
    %p108 = por %p106, %p107
    %s109 = ssub.s32 %s12, %s19
    %p110 = scmp.eq.s32.totalorder %s109, 0
    %s112 = sadd.s32 %s111, 1
    %s113 = scalar_select %p110, %s111, %s112
    %p116 = pneg %p110
    %p117 = scmp.eq.s32.totalorder %s12, 1
    %p118 = por %p116, %p117
    %p119 = scmp.ne.s32.totalorder %s111, %s114
    %p120 = scmp.eq.s32.totalorder %s12, 0
    %p121 = por %p119, %p120
    %p122 = scmp.ne.s32.totalorder %s111, %s114
    %p123 = scmp.eq.s32.totalorder %s17, 1
    %p124 = por %p122, %p123
    %p125 = scmp.ne.s32.totalorder %s114, %s115
    %p126 = scmp.eq.s32.totalorder %s17, 0
    %p127 = por %p125, %p126
    %p128 = scmp.ne.s32.totalorder %s114, %s115
    %p129 = scmp.eq.s32.totalorder %s18, 1
    %p130 = por %p128, %p129
    %p132 = scmp.ne.s32.totalorder %s115, %s131
    %p133 = scmp.eq.s32.totalorder %s18, 0
    %p134 = por %p132, %p133
    %s135 = ssub.s32 %s12, %s19
    %p136 = scmp.eq.s32.totalorder %s135, 0
    %s138 = sadd.s32 %s137, 1
    %s139 = scalar_select %p136, %s137, %s138
    %p142 = pneg %p136
    %p143 = scmp.eq.s32.totalorder %s12, 1
    %p144 = por %p142, %p143
    %p145 = scmp.ne.s32.totalorder %s137, %s140
    %p146 = scmp.eq.s32.totalorder %s12, 0
    %p147 = por %p145, %p146
    %p148 = scmp.ne.s32.totalorder %s137, %s140
    %p149 = scmp.eq.s32.totalorder %s17, 1
    %p150 = por %p148, %p149
    %p151 = scmp.ne.s32.totalorder %s140, %s141
    %p152 = scmp.eq.s32.totalorder %s17, 0
    %p153 = por %p151, %p152
    %p154 = scmp.ne.s32.totalorder %s140, %s141
    %p155 = scmp.eq.s32.totalorder %s18, 1
    %p156 = por %p154, %p155
    %p158 = scmp.ne.s32.totalorder %s141, %s157
    %p159 = scmp.eq.s32.totalorder %s18, 0
    %p160 = por %p158, %p159
    %p161 = scmp.le.s32.totalorder 1, %s12
    %p162 = scmp.lt.s32.totalorder %s12, 3
    %p163 = pnand %p161, %p162
    %p164 = pneg %p163
    // Predicated region
    $region9: #{conv_block_forward.3} parent=5 // pred_check
      _
    $region10: #{conv_block_forward.3} parent=5 // pred_check_branch
      %166 = sbr.rel (%p163) target = $region12
    $region11: #{conv_block_forward.3} parent=5 // pred_region
      %s167 = ssub.s32 %s12, 1
      // Predicated region
      $region13: #{conv_block_forward.3} parent=11 // pred_check
        %p168 = pneg %p59
      $region14: #{conv_block_forward.3} parent=11 // pred_check_branch
        %170 = sbr.rel (%p168) target = $region16
      $region15: #{conv_block_forward.3} parent=11 // pred_region
        _
      $region16: #{conv_block_forward.3} parent=11 // pred_fallthru
        _
      // Predicated region
      $region17: #{conv_block_forward.3} parent=11 // pred_check
        %p171 = pneg %p80
      $region18: #{conv_block_forward.3} parent=11 // pred_check_branch
        %173 = sbr.rel (%p171) target = $region20
      $region19: #{conv_block_forward.3} parent=11 // pred_region
        _
      $region20: #{conv_block_forward.3} parent=11 // pred_fallthru
        _
      // Predicated region
      $region21: #{conv_block_forward.3} parent=11 // pred_check
        %p174 = pneg %p101
      $region22: #{conv_block_forward.3} parent=11 // pred_check_branch
        %176 = sbr.rel (%p174) target = $region24
      $region23: #{conv_block_forward.3} parent=11 // pred_region
        _
      $region24: #{conv_block_forward.3} parent=11 // pred_fallthru
        _
    $region12: #{conv_block_forward.3} parent=5 // pred_fallthru
      _
    %p177 = scmp.lt.s32.totalorder %s12, 2
    // Predicated region
    $region25: #{conv_block_forward.3} parent=5 // pred_check
      %p178 = pneg %p177
    $region26: #{conv_block_forward.3} parent=5 // pred_check_branch
      %180 = sbr.rel (%p178) target = $region28
    $region27: #{conv_block_forward.3} parent=5 // pred_region
      // Predicated region
      $region29: #{conv_block_forward.3} parent=27 // pred_check
        %p181 = pneg %p32
      $region30: #{conv_block_forward.3} parent=27 // pred_check_branch
        %183 = sbr.rel (%p181) target = $region32
      $region31: #{conv_block_forward.3} parent=27 // pred_region
        %p184 = scmp.lt.s32.totalorder %s12, 1
        %s185 = scalar_select %p184, %s12, 1
        %s186 = smul.addr %s185, 54
        %s187 = smul.addr %s186, 4
        %s188 = scalar_lea.vmem %s0, %s187
      $region32: #{conv_block_forward.3} parent=27 // pred_fallthru
        _
    $region28: #{conv_block_forward.3} parent=5 // pred_fallthru
      _
    %p189 = scmp.le.s32.totalorder 1, %s12
    %p190 = scmp.lt.s32.totalorder %s12, 3
    %p191 = pnand %p189, %p190
    %p192 = pneg %p191
    // Predicated region
    $region33: #{conv_block_forward.3} parent=5 // pred_check
      _
    $region34: #{conv_block_forward.3} parent=5 // pred_check_branch
      %194 = sbr.rel (%p191) target = $region36
    $region35: #{conv_block_forward.3} parent=5 // pred_region
      %s195 = ssub.s32 %s12, 1
      %p196 = scmp.lt.s32.totalorder %s17, 1
      %s197 = scalar_select %p196, %s17, 1
      %s198 = smul.addr %s197, 54
      %s199 = smul.addr %s198, 4
      %s200 = scalar_lea.vmem %s0, %s199
      %p201 = pneg %p38
      %p202 = pneg %p35
      %p203 = pneg %p59
      %p204 = pneg %p56
      %p205 = pneg %p80
      %p206 = pneg %p77
      %p207 = pneg %p101
      %p208 = pneg %p98
      %p209 = pneg %p127
      %p210 = pneg %p124
      %p211 = scmp.lt.s32.totalorder %s17, 1
      %s212 = scalar_select %p211, %s17, 1
      %s213 = smul.addr %s212, 54
      %s214 = smul.addr %s213, 4
      %s215 = scalar_lea.vmem %s4, %s214
      %p216 = pneg %p153
      %p217 = pneg %p150
      %p218 = scmp.lt.s32.totalorder %s17, 1
      %s219 = scalar_select %p218, %s17, 1
      %s220 = smul.addr %s219, 8
      %s221 = scalar_lea.vmem %s5, %s220
      %p222 = scmp.lt.s32.totalorder %s17, 1
      %s223 = scalar_select %p222, %s17, 1
      %s224 = smul.addr %s223, 54
      %s225 = smul.addr %s224, 4
      %s226 = scalar_lea.vmem %s0, %s225
      %p227 = scmp.lt.s32.totalorder %s17, 1
      %s228 = scalar_select %p227, %s17, 1
      %s229 = smul.addr %s228, 54
      %s230 = smul.addr %s229, 4
      %s231 = scalar_lea.vmem %s4, %s230
      %p232 = scmp.lt.s32.totalorder %s17, 1
      %s233 = scalar_select %p232, %s17, 1
      %s234 = smul.addr %s233, 8
      %s235 = scalar_lea.vmem %s5, %s234
      %v237 = vld [vmem:[%s226] sm:$0xf]
      %v238 = vld [vmem:[%s226 + $0x4] sm:$0xf]
      %v239 = vld [vmem:[%s226 + $0x8] sm:$0xf]
      %v240 = vld [vmem:[%s226 + $0xc] sm:$0xf]
      %v241 = vld [vmem:[%s226 + $0x10] sm:$0xf]
      %v242 = vld [vmem:[%s226 + $0x14] sm:$0xf]
      %v243 = vld [vmem:[%s226 + $0x18] sm:$0xf]
      %v244 = vld [vmem:[%s226 + $0x1c] sm:$0xf]
      %v245 = vld [vmem:[%s226 + $0x20] sm:$0xf]
      %v246 = vld [vmem:[%s226 + $0x24] sm:$0xf]
      %v247 = vld [vmem:[%s226 + $0x28] sm:$0xf]
      %v248 = vld [vmem:[%s226 + $0x2c] sm:$0xf]
      %v249 = vld [vmem:[%s226 + $0x30] sm:$0xf]
      %v250 = vld [vmem:[%s226 + $0x34] sm:$0xf]
      %v251 = vld [vmem:[%s226 + $0x38] sm:$0xf]
      %v252 = vld [vmem:[%s226 + $0x3c] sm:$0xf]
      %v253 = vld [vmem:[%s226 + $0x40] sm:$0xf]
      %v254 = vld [vmem:[%s226 + $0x44] sm:$0xf]
      %v255 = vld [vmem:[%s226 + $0x48] sm:$0xf]
      %v256 = vld [vmem:[%s226 + $0x4c] sm:$0xf]
      %v257 = vld [vmem:[%s226 + $0x50] sm:$0xf]
      %v258 = vld [vmem:[%s226 + $0x54] sm:$0xf]
      %v259 = vld [vmem:[%s226 + $0x58] sm:$0xf]
      %v260 = vld [vmem:[%s226 + $0x5c] sm:$0xf]
      %v261 = vld [vmem:[%s226 + $0x60] sm:$0xf]
      %v262 = vld [vmem:[%s226 + $0x64] sm:$0xf]
      %v263 = vld [vmem:[%s226 + $0x68] sm:$0xf]
      %v264 = vld [vmem:[%s226 + $0x6c] sm:$0xf]
      %v265 = vld [vmem:[%s226 + $0x70] sm:$0xf]
      %v266 = vld [vmem:[%s226 + $0x74] sm:$0xf]
      %v267 = vld [vmem:[%s226 + $0x78] sm:$0xf]
      %v268 = vld [vmem:[%s226 + $0x7c] sm:$0xf]
      %v269 = vld [vmem:[%s226 + $0x80] sm:$0xf]
      %v270 = vld [vmem:[%s226 + $0x84] sm:$0xf]
      %v271 = vld [vmem:[%s226 + $0x88] sm:$0xf]
      %v272 = vld [vmem:[%s226 + $0x8c] sm:$0xf]
      %v273 = vld [vmem:[%s226 + $0x90] sm:$0xf]
      %v274 = vld [vmem:[%s226 + $0x94] sm:$0xf]
      %v275 = vld [vmem:[%s226 + $0x98] sm:$0xf]
      %v276 = vld [vmem:[%s226 + $0x9c] sm:$0xf]
      %v277 = vld [vmem:[%s226 + $0xa0] sm:$0xf]
      %v278 = vld [vmem:[%s226 + $0xa4] sm:$0xf]
      %v279 = vld [vmem:[%s226 + $0xa8] sm:$0xf]
      %v280 = vld [vmem:[%s226 + $0xac] sm:$0xf]
      %v281 = vld [vmem:[%s226 + $0xb0] sm:$0xf]
      %v282 = vld [vmem:[%s226 + $0xb4] sm:$0xf]
      %v283 = vld [vmem:[%s226 + $0xb8] sm:$0xf]
      %v284 = vld [vmem:[%s226 + $0xbc] sm:$0xf]
      %v285 = vld [vmem:[%s226 + $0xc0] sm:$0xf]
      %v286 = vld [vmem:[%s226 + $0xc4] sm:$0xf]
      %v287 = vld [vmem:[%s226 + $0xc8] sm:$0xf]
      %v288 = vld [vmem:[%s226 + $0xcc] sm:$0xf]
      %v289 = vld [vmem:[%s226 + $0xd0] sm:$0xf]
      %v290 = vld [vmem:[%s226 + $0xd4] sm:$0xf]
      %v291 = vld [vmem:[%s1] sm:$0xf]
      %v292 = vld [vmem:[%s1 + $0x4] sm:$0xf]
      %v293 = vld [vmem:[%s1 + $0x8] sm:$0xf]
      %v294 = vld [vmem:[%s1 + $0xc] sm:$0xf]
      %v295 = vld [vmem:[%s1 + $0x10] sm:$0xf]
      %v296 = vld [vmem:[%s1 + $0x14] sm:$0xf]
      %v297 = vld [vmem:[%s1 + $0x18] sm:$0xf]
      %v298 = vld [vmem:[%s1 + $0x1c] sm:$0xf]
      %v299 = vld [vmem:[%s1 + $0x20] sm:$0xf]
      %v300 = vld [vmem:[%s1 + $0x24] sm:$0xf]
      %v301 = vld [vmem:[%s1 + $0x28] sm:$0xf]
      %v302 = vld [vmem:[%s1 + $0x2c] sm:$0xf]
      %v303 = vld [vmem:[%s1 + $0x30] sm:$0xf]
      %v304 = vld [vmem:[%s1 + $0x34] sm:$0xf]
      %v305 = vld [vmem:[%s1 + $0x38] sm:$0xf]
      %v306 = vld [vmem:[%s1 + $0x3c] sm:$0xf]
      %vm307 = vsmask.f32 3328
      %vm308 = vsmask.f32 7440
      %vm309 = vmor %vm307, %vm308
      %v311 = vshrl.u32 %v237, 16
      %v313 = vrot.slane %v311, 4
      %v314 = vshll.u32 %v237, 16
      %v316 = vrot.slane %v314, 5
      %v317 = vor.u32 %v313, %v316
      %v318 = vrot.slane %v317, 4
      %v320 = vshll.u32 %v238, 16
      %v322 = vrot.slane %v320, 5
      %v323 = vsel %vm309, %v318, %v322
      %v324 = vshrl.u32 %v238, 16
      %v326 = vrot.slane %v324, 4
      %v327 = vor.u32 %v326, %v322
      %v328 = vrot.slane %v327, 4
      %v330 = vshll.u32 %v239, 16
      %v332 = vrot.slane %v330, 5
      %v333 = vsel %vm309, %v328, %v332
      %v335 = vshrl.u32 %v240, 16
      %v337 = vrot.slane %v335, 4
      %v338 = vshll.u32 %v240, 16
      %v340 = vrot.slane %v338, 5
      %v341 = vor.u32 %v337, %v340
      %v342 = vrot.slane %v341, 4
      %v344 = vshll.u32 %v241, 16
      %v346 = vrot.slane %v344, 5
      %v347 = vsel %vm309, %v342, %v346
      %v348 = vshrl.u32 %v241, 16
      %v350 = vrot.slane %v348, 4
      %v351 = vor.u32 %v350, %v346
      %v352 = vrot.slane %v351, 4
      %v354 = vshll.u32 %v242, 16
      %v356 = vrot.slane %v354, 5
      %v357 = vsel %vm309, %v352, %v356
      %v359 = vshrl.u32 %v243, 16
      %v361 = vrot.slane %v359, 4
      %v362 = vshll.u32 %v243, 16
      %v364 = vrot.slane %v362, 5
      %v365 = vor.u32 %v361, %v364
      %v366 = vrot.slane %v365, 4
      %v368 = vshll.u32 %v244, 16
      %v370 = vrot.slane %v368, 5
      %v371 = vsel %vm309, %v366, %v370
      %v372 = vshrl.u32 %v244, 16
      %v374 = vrot.slane %v372, 4
      %v375 = vor.u32 %v374, %v370
      %v376 = vrot.slane %v375, 4
      %v378 = vshll.u32 %v245, 16
      %v380 = vrot.slane %v378, 5
      %v381 = vsel %vm309, %v376, %v380
      %v383 = vshrl.u32 %v246, 16
      %v385 = vrot.slane %v383, 4
      %v386 = vshll.u32 %v246, 16
      %v388 = vrot.slane %v386, 5
      %v389 = vor.u32 %v385, %v388
      %v390 = vrot.slane %v389, 4
      %v392 = vshll.u32 %v247, 16
      %v394 = vrot.slane %v392, 5
      %v395 = vsel %vm309, %v390, %v394
      %v396 = vshrl.u32 %v247, 16
      %v398 = vrot.slane %v396, 4
      %v399 = vor.u32 %v398, %v394
      %v400 = vrot.slane %v399, 4
      %v402 = vshll.u32 %v248, 16
      %v404 = vrot.slane %v402, 5
      %v405 = vsel %vm309, %v400, %v404
      %v407 = vshrl.u32 %v249, 16
      %v409 = vrot.slane %v407, 4
      %v410 = vshll.u32 %v249, 16
      %v412 = vrot.slane %v410, 5
      %v413 = vor.u32 %v409, %v412
      %v414 = vrot.slane %v413, 4
      %v416 = vshll.u32 %v250, 16
      %v418 = vrot.slane %v416, 5
      %v419 = vsel %vm309, %v414, %v418
      %v420 = vshrl.u32 %v250, 16
      %v422 = vrot.slane %v420, 4
      %v423 = vor.u32 %v422, %v418
      %v424 = vrot.slane %v423, 4
      %v426 = vshll.u32 %v251, 16
      %v428 = vrot.slane %v426, 5
      %v429 = vsel %vm309, %v424, %v428
      %v431 = vshrl.u32 %v252, 16
      %v433 = vrot.slane %v431, 4
      %v434 = vshll.u32 %v252, 16
      %v436 = vrot.slane %v434, 5
      %v437 = vor.u32 %v433, %v436
      %v438 = vrot.slane %v437, 4
      %v440 = vshll.u32 %v253, 16
      %v442 = vrot.slane %v440, 5
      %v443 = vsel %vm309, %v438, %v442
      %v444 = vshrl.u32 %v253, 16
      %v446 = vrot.slane %v444, 4
      %v447 = vor.u32 %v446, %v442
      %v448 = vrot.slane %v447, 4
      %v450 = vshll.u32 %v254, 16
      %v452 = vrot.slane %v450, 5
      %v453 = vsel %vm309, %v448, %v452
      %v455 = vshrl.u32 %v255, 16
      %v457 = vrot.slane %v455, 4
      %v458 = vshll.u32 %v255, 16
      %v460 = vrot.slane %v458, 5
      %v461 = vor.u32 %v457, %v460
      %v462 = vrot.slane %v461, 4
      %v464 = vshll.u32 %v256, 16
      %v466 = vrot.slane %v464, 5
      %v467 = vsel %vm309, %v462, %v466
      %v468 = vshrl.u32 %v256, 16
      %v470 = vrot.slane %v468, 4
      %v471 = vor.u32 %v470, %v466
      %v472 = vrot.slane %v471, 4
      %v474 = vshll.u32 %v257, 16
      %v476 = vrot.slane %v474, 5
      %v477 = vsel %vm309, %v472, %v476
      %v479 = vshrl.u32 %v258, 16
      %v481 = vrot.slane %v479, 4
      %v482 = vshll.u32 %v258, 16
      %v484 = vrot.slane %v482, 5
      %v485 = vor.u32 %v481, %v484
      %v486 = vrot.slane %v485, 4
      %v488 = vshll.u32 %v259, 16
      %v490 = vrot.slane %v488, 5
      %v491 = vsel %vm309, %v486, %v490
      %v492 = vshrl.u32 %v259, 16
      %v494 = vrot.slane %v492, 4
      %v495 = vor.u32 %v494, %v490
      %v496 = vrot.slane %v495, 4
      %v498 = vshll.u32 %v260, 16
      %v500 = vrot.slane %v498, 5
      %v501 = vsel %vm309, %v496, %v500
      %v503 = vshrl.u32 %v261, 16
      %v505 = vrot.slane %v503, 4
      %v506 = vshll.u32 %v261, 16
      %v508 = vrot.slane %v506, 5
      %v509 = vor.u32 %v505, %v508
      %v510 = vrot.slane %v509, 4
      %v512 = vshll.u32 %v262, 16
      %v514 = vrot.slane %v512, 5
      %v515 = vsel %vm309, %v510, %v514
      %v516 = vshrl.u32 %v262, 16
      %v518 = vrot.slane %v516, 4
      %v519 = vor.u32 %v518, %v514
      %v520 = vrot.slane %v519, 4
      %v522 = vshll.u32 %v263, 16
      %v524 = vrot.slane %v522, 5
      %v525 = vsel %vm309, %v520, %v524
      %v527 = vshrl.u32 %v264, 16
      %v529 = vrot.slane %v527, 4
      %v530 = vshll.u32 %v264, 16
      %v532 = vrot.slane %v530, 5
      %v533 = vor.u32 %v529, %v532
      %v534 = vrot.slane %v533, 4
      %v536 = vshll.u32 %v265, 16
      %v538 = vrot.slane %v536, 5
      %v539 = vsel %vm309, %v534, %v538
      %v540 = vshrl.u32 %v265, 16
      %v542 = vrot.slane %v540, 4
      %v543 = vor.u32 %v542, %v538
      %v544 = vrot.slane %v543, 4
      %v546 = vshll.u32 %v266, 16
      %v548 = vrot.slane %v546, 5
      %v549 = vsel %vm309, %v544, %v548
      %v551 = vshrl.u32 %v267, 16
      %v553 = vrot.slane %v551, 4
      %v554 = vshll.u32 %v267, 16
      %v556 = vrot.slane %v554, 5
      %v557 = vor.u32 %v553, %v556
      %v558 = vrot.slane %v557, 4
      %v560 = vshll.u32 %v268, 16
      %v562 = vrot.slane %v560, 5
      %v563 = vsel %vm309, %v558, %v562
      %v564 = vshrl.u32 %v268, 16
      %v566 = vrot.slane %v564, 4
      %v567 = vor.u32 %v566, %v562
      %v568 = vrot.slane %v567, 4
      %v570 = vshll.u32 %v269, 16
      %v572 = vrot.slane %v570, 5
      %v573 = vsel %vm309, %v568, %v572
      %v575 = vshrl.u32 %v270, 16
      %v577 = vrot.slane %v575, 4
      %v578 = vshll.u32 %v270, 16
      %v580 = vrot.slane %v578, 5
      %v581 = vor.u32 %v577, %v580
      %v582 = vrot.slane %v581, 4
      %v584 = vshll.u32 %v271, 16
      %v586 = vrot.slane %v584, 5
      %v587 = vsel %vm309, %v582, %v586
      %v588 = vshrl.u32 %v271, 16
      %v590 = vrot.slane %v588, 4
      %v591 = vor.u32 %v590, %v586
      %v592 = vrot.slane %v591, 4
      %v594 = vshll.u32 %v272, 16
      %v596 = vrot.slane %v594, 5
      %v597 = vsel %vm309, %v592, %v596
      %v599 = vshrl.u32 %v273, 16
      %v601 = vrot.slane %v599, 4
      %v602 = vshll.u32 %v273, 16
      %v604 = vrot.slane %v602, 5
      %v605 = vor.u32 %v601, %v604
      %v606 = vrot.slane %v605, 4
      %v608 = vshll.u32 %v274, 16
      %v610 = vrot.slane %v608, 5
      %v611 = vsel %vm309, %v606, %v610
      %v612 = vshrl.u32 %v274, 16
      %v614 = vrot.slane %v612, 4
      %v615 = vor.u32 %v614, %v610
      %v616 = vrot.slane %v615, 4
      %v618 = vshll.u32 %v275, 16
      %v620 = vrot.slane %v618, 5
      %v621 = vsel %vm309, %v616, %v620
      %v623 = vshrl.u32 %v276, 16
      %v625 = vrot.slane %v623, 4
      %v626 = vshll.u32 %v276, 16
      %v628 = vrot.slane %v626, 5
      %v629 = vor.u32 %v625, %v628
      %v630 = vrot.slane %v629, 4
      %v632 = vshll.u32 %v277, 16
      %v634 = vrot.slane %v632, 5
      %v635 = vsel %vm309, %v630, %v634
      %v636 = vshrl.u32 %v277, 16
      %v638 = vrot.slane %v636, 4
      %v639 = vor.u32 %v638, %v634
      %v640 = vrot.slane %v639, 4
      %v642 = vshll.u32 %v278, 16
      %v644 = vrot.slane %v642, 5
      %v645 = vsel %vm309, %v640, %v644
      %v647 = vshrl.u32 %v279, 16
      %v649 = vrot.slane %v647, 4
      %v650 = vshll.u32 %v279, 16
      %v652 = vrot.slane %v650, 5
      %v653 = vor.u32 %v649, %v652
      %v654 = vrot.slane %v653, 4
      %v656 = vshll.u32 %v280, 16
      %v658 = vrot.slane %v656, 5
      %v659 = vsel %vm309, %v654, %v658
      %v660 = vshrl.u32 %v280, 16
      %v662 = vrot.slane %v660, 4
      %v663 = vor.u32 %v662, %v658
      %v664 = vrot.slane %v663, 4
      %v666 = vshll.u32 %v281, 16
      %v668 = vrot.slane %v666, 5
      %v669 = vsel %vm309, %v664, %v668
      %v671 = vshrl.u32 %v282, 16
      %v673 = vrot.slane %v671, 4
      %v674 = vshll.u32 %v282, 16
      %v676 = vrot.slane %v674, 5
      %v677 = vor.u32 %v673, %v676
      %v678 = vrot.slane %v677, 4
      %v680 = vshll.u32 %v283, 16
      %v682 = vrot.slane %v680, 5
      %v683 = vsel %vm309, %v678, %v682
      %v684 = vshrl.u32 %v283, 16
      %v686 = vrot.slane %v684, 4
      %v687 = vor.u32 %v686, %v682
      %v688 = vrot.slane %v687, 4
      %v690 = vshll.u32 %v284, 16
      %v692 = vrot.slane %v690, 5
      %v693 = vsel %vm309, %v688, %v692
      %s694 = scalar_lea.vmem %s1, 64
      %v695 = vld [vmem:[%s694] sm:$0xf]
      %v696 = vld [vmem:[%s694 + $0x4] sm:$0xf]
      %v697 = vld [vmem:[%s694 + $0x8] sm:$0xf]
      %v698 = vld [vmem:[%s694 + $0xc] sm:$0xf]
      %v699 = vld [vmem:[%s694 + $0x10] sm:$0xf]
      %v700 = vld [vmem:[%s694 + $0x14] sm:$0xf]
      %v701 = vld [vmem:[%s694 + $0x18] sm:$0xf]
      %v702 = vld [vmem:[%s694 + $0x1c] sm:$0xf]
      %v703 = vld [vmem:[%s694 + $0x20] sm:$0xf]
      %v704 = vld [vmem:[%s694 + $0x24] sm:$0xf]
      %v705 = vld [vmem:[%s694 + $0x28] sm:$0xf]
      %v706 = vld [vmem:[%s694 + $0x2c] sm:$0xf]
      %v707 = vld [vmem:[%s694 + $0x30] sm:$0xf]
      %v708 = vld [vmem:[%s694 + $0x34] sm:$0xf]
      %v709 = vld [vmem:[%s694 + $0x38] sm:$0xf]
      %v710 = vld [vmem:[%s694 + $0x3c] sm:$0xf]
      %v711 = vunpack.c.l.b16 %v323
      %v712 = vunpack.c.l.b16 %v333
      %v713 = vunpack.c.l.b16 %v347
      %v714 = vunpack.c.l.b16 %v357
      %v715 = vunpack.c.l.b16 %v371
      %v716 = vunpack.c.l.b16 %v381
      %v717 = vunpack.c.l.b16 %v395
      %v718 = vunpack.c.l.b16 %v405
      %v719 = vunpack.c.l.b16 %v419
      %v720 = vunpack.c.l.b16 %v429
      %v721 = vunpack.c.l.b16 %v443
      %v722 = vunpack.c.l.b16 %v453
      %v723 = vunpack.c.l.b16 %v467
      %v724 = vunpack.c.l.b16 %v477
      %v725 = vunpack.c.l.b16 %v491
      %v726 = vunpack.c.l.b16 %v501
      %v727 = vunpack.c.l.b16 %v515
      %v728 = vunpack.c.l.b16 %v525
      %v729 = vunpack.c.l.b16 %v539
      %v730 = vunpack.c.l.b16 %v549
      %v731 = vunpack.c.l.b16 %v563
      %v732 = vunpack.c.l.b16 %v573
      %v733 = vunpack.c.l.b16 %v587
      %v734 = vunpack.c.l.b16 %v597
      %v735 = vunpack.c.l.b16 %v611
      %v736 = vunpack.c.l.b16 %v621
      %v737 = vunpack.c.l.b16 %v635
      %v738 = vunpack.c.l.b16 %v645
      %v739 = vunpack.c.l.b16 %v659
      %v740 = vunpack.c.l.b16 %v669
      %v741 = vunpack.c.l.b16 %v683
      %v742 = vunpack.c.l.b16 %v693
      %v743 = vpack.c.b16 %v712, %v711
      %v744 = vpack.c.b16 %v714, %v713
      %v745 = vpack.c.b16 %v716, %v715
      %v746 = vpack.c.b16 %v718, %v717
      %v747 = vpack.c.b16 %v720, %v719
      %v748 = vpack.c.b16 %v722, %v721
      %v749 = vpack.c.b16 %v724, %v723
      %v750 = vpack.c.b16 %v726, %v725
      %v751 = vpack.c.b16 %v728, %v727
      %v752 = vpack.c.b16 %v730, %v729
      %v753 = vpack.c.b16 %v732, %v731
      %v754 = vpack.c.b16 %v734, %v733
      %v755 = vpack.c.b16 %v736, %v735
      %v756 = vpack.c.b16 %v738, %v737
      %v757 = vpack.c.b16 %v740, %v739
      %v758 = vpack.c.b16 %v742, %v741
      %v791 = vunpack.c.l.b16 %v695
      %v792 = vunpack.c.l.b16 %v696
      %v793 = vunpack.c.l.b16 %v697
      %v794 = vunpack.c.l.b16 %v698
      %v795 = vunpack.c.l.b16 %v699
      %v796 = vunpack.c.l.b16 %v700
      %v797 = vunpack.c.l.b16 %v701
      %v798 = vunpack.c.l.b16 %v702
      %v799 = vunpack.c.l.b16 %v703
      %v800 = vunpack.c.l.b16 %v704
      %v801 = vunpack.c.l.b16 %v705
      %v802 = vunpack.c.l.b16 %v706
      %v803 = vunpack.c.l.b16 %v707
      %v804 = vunpack.c.l.b16 %v708
      %v805 = vunpack.c.l.b16 %v709
      %v806 = vunpack.c.l.b16 %v710
      %v807 = vpack.c.b16 %v792, %v791
      %v808 = vpack.c.b16 %v794, %v793
      %v809 = vpack.c.b16 %v796, %v795
      %v810 = vpack.c.b16 %v798, %v797
      %v811 = vpack.c.b16 %v800, %v799
      %v812 = vpack.c.b16 %v802, %v801
      %v813 = vpack.c.b16 %v804, %v803
      %v814 = vpack.c.b16 %v806, %v805
      %823 = vmatprep.subr.bf16.mxu0 0
      %824 = vmatpush1.bf16.msra.mxu0 %v814
      %825 = vmatprep.subr.bf16.mxu0 0
      %826 = vmatpush1.bf16.msra.mxu0 %v813
      %827 = vmatprep.subr.bf16.mxu0 0
      %828 = vmatpush1.bf16.msra.mxu0 %v812
      %829 = vmatprep.subr.bf16.mxu0 0
      %830 = vmatpush1.bf16.msra.mxu0 %v811
      %831 = vmatprep.subr.bf16.mxu0 0
      %832 = vmatpush1.bf16.msra.mxu0 %v810
      %833 = vmatprep.subr.bf16.mxu0 0
      %834 = vmatpush1.bf16.msra.mxu0 %v809
      %835 = vmatprep.subr.bf16.mxu0 0
      %836 = vmatpush1.bf16.msra.mxu0 %v808
      %837 = vmatprep.subr.bf16.mxu0 0
      %838 = vmatpush1.bf16.msra.mxu0 %v807
      %839 = vmatprep.subr.bf16.mxu0 0
      %840 = vmatpush2.bf16.msra.mxu0 0
      %841 = vmatprep.subr.bf16.mxu0 0
      %842 = vmatpush2.bf16.msra.mxu0 0
      %843 = vmatprep.subr.bf16.mxu0 0
      %844 = vmatpush2.bf16.msra.mxu0 0
      %845 = vmatprep.subr.bf16.mxu0 0
      %846 = vmatpush2.bf16.msra.mxu0 0
      %847 = vmatprep.subr.bf16.mxu0 0
      %848 = vmatpush2.bf16.msra.mxu0 0
      %849 = vmatprep.subr.bf16.mxu0 0
      %850 = vmatpush2.bf16.msra.mxu0 0
      %851 = vmatprep.subr.bf16.mxu0 0
      %852 = vmatpush2.bf16.msra.mxu0 0
      %853 = vmatprep.subr.bf16.mxu0 0
      %854 = vmatpush2.bf16.msra.mxu0 0
      %855 = vmatprep.mubr.bf16.mxu0 0
      %856 = vmatmul.mubr.bf16.gmra.mxu0 %v743
      %v857 = vpop.f32.mrf.mxu0
      %v858 = vadd.f32 0.0, %v857
      %v859 = vpop.f32.mrf.mxu0
      %v860 = vpop.f32.mrf.mxu0
      %v861 = vadd.f32 0.0, %v860
      %v862 = vpop.f32.mrf.mxu0
      %863 = vmatprep.mubr.bf16.mxu0 0
      %864 = vmatmul.mubr.bf16.gmra.mxu0 %v744
      %v865 = vpop.f32.mrf.mxu0
      %v866 = vadd.f32 0.0, %v865
      %v867 = vpop.f32.mrf.mxu0
      %v868 = vpop.f32.mrf.mxu0
      %v869 = vadd.f32 0.0, %v868
      %v870 = vpop.f32.mrf.mxu0
      %871 = vmatprep.mubr.bf16.mxu0 0
      %872 = vmatmul.mubr.bf16.gmra.mxu0 %v745
      %v873 = vpop.f32.mrf.mxu0
      %v874 = vadd.f32 0.0, %v873
      %v875 = vpop.f32.mrf.mxu0
      %v876 = vpop.f32.mrf.mxu0
      %v877 = vadd.f32 0.0, %v876
      %v878 = vpop.f32.mrf.mxu0
      %879 = vmatprep.mubr.bf16.mxu0 0
      %880 = vmatmul.mubr.bf16.gmra.mxu0 %v746
      %v881 = vpop.f32.mrf.mxu0
      %v882 = vadd.f32 0.0, %v881
      %v883 = vpop.f32.mrf.mxu0
      %v884 = vpop.f32.mrf.mxu0
      %v885 = vadd.f32 0.0, %v884
      %v886 = vpop.f32.mrf.mxu0
      %887 = vmatprep.mubr.bf16.mxu0 0
      %888 = vmatmul.mubr.bf16.gmra.mxu0 %v747
      %v889 = vpop.f32.mrf.mxu0
      %v890 = vadd.f32 0.0, %v889
      %v891 = vpop.f32.mrf.mxu0
      %v892 = vpop.f32.mrf.mxu0
      %v893 = vadd.f32 0.0, %v892
      %v894 = vpop.f32.mrf.mxu0
      %895 = vmatprep.mubr.bf16.mxu0 0
      %896 = vmatmul.mubr.bf16.gmra.mxu0 %v748
      %v897 = vpop.f32.mrf.mxu0
      %v898 = vadd.f32 0.0, %v897
      %v899 = vpop.f32.mrf.mxu0
      %v900 = vpop.f32.mrf.mxu0
      %v901 = vadd.f32 0.0, %v900
      %v902 = vpop.f32.mrf.mxu0
      %903 = vmatprep.mubr.bf16.mxu0 0
      %904 = vmatmul.mubr.bf16.gmra.mxu0 %v749
      %v905 = vpop.f32.mrf.mxu0
      %v906 = vadd.f32 0.0, %v905
      %v907 = vpop.f32.mrf.mxu0
      %v908 = vpop.f32.mrf.mxu0
      %v909 = vadd.f32 0.0, %v908
      %v910 = vpop.f32.mrf.mxu0
      %911 = vmatprep.mubr.bf16.mxu0 0
      %912 = vmatmul.mubr.bf16.gmra.mxu0 %v750
      %v913 = vpop.f32.mrf.mxu0
      %v914 = vadd.f32 0.0, %v913
      %v915 = vpop.f32.mrf.mxu0
      %v916 = vpop.f32.mrf.mxu0
      %v917 = vadd.f32 0.0, %v916
      %v918 = vpop.f32.mrf.mxu0
      %919 = vmatprep.mubr.bf16.mxu0 0
      %920 = vmatmul.mubr.bf16.gmra.mxu0 %v751
      %v921 = vpop.f32.mrf.mxu0
      %v922 = vadd.f32 0.0, %v921
      %v923 = vpop.f32.mrf.mxu0
      %v924 = vpop.f32.mrf.mxu0
      %v925 = vadd.f32 0.0, %v924
      %v926 = vpop.f32.mrf.mxu0
      %927 = vmatprep.mubr.bf16.mxu0 0
      %928 = vmatmul.mubr.bf16.gmra.mxu0 %v752
      %v929 = vpop.f32.mrf.mxu0
      %v930 = vadd.f32 0.0, %v929
      %v931 = vpop.f32.mrf.mxu0
      %v932 = vpop.f32.mrf.mxu0
      %v933 = vadd.f32 0.0, %v932
      %v934 = vpop.f32.mrf.mxu0
      %935 = vmatprep.mubr.bf16.mxu0 0
      %936 = vmatmul.mubr.bf16.gmra.mxu0 %v753
      %v937 = vpop.f32.mrf.mxu0
      %v938 = vadd.f32 0.0, %v937
      %v939 = vpop.f32.mrf.mxu0
      %v940 = vpop.f32.mrf.mxu0
      %v941 = vadd.f32 0.0, %v940
      %v942 = vpop.f32.mrf.mxu0
      %943 = vmatprep.mubr.bf16.mxu0 0
      %944 = vmatmul.mubr.bf16.gmra.mxu0 %v754
      %v945 = vpop.f32.mrf.mxu0
      %v946 = vadd.f32 0.0, %v945
      %v947 = vpop.f32.mrf.mxu0
      %v948 = vpop.f32.mrf.mxu0
      %v949 = vadd.f32 0.0, %v948
      %v950 = vpop.f32.mrf.mxu0
      %951 = vmatprep.mubr.bf16.mxu0 0
      %952 = vmatmul.mubr.bf16.gmra.mxu0 %v755
      %v953 = vpop.f32.mrf.mxu0
      %v954 = vadd.f32 0.0, %v953
      %v955 = vpop.f32.mrf.mxu0
      %v956 = vpop.f32.mrf.mxu0
      %v957 = vadd.f32 0.0, %v956
      %v958 = vpop.f32.mrf.mxu0
      %959 = vmatprep.mubr.bf16.mxu0 0
      %960 = vmatmul.mubr.bf16.gmra.mxu0 %v756
      %v961 = vpop.f32.mrf.mxu0
      %v962 = vadd.f32 0.0, %v961
      %v963 = vpop.f32.mrf.mxu0
      %v964 = vpop.f32.mrf.mxu0
      %v965 = vadd.f32 0.0, %v964
      %v966 = vpop.f32.mrf.mxu0
      %967 = vmatprep.mubr.bf16.mxu0 0
      %968 = vmatmul.mubr.bf16.gmra.mxu0 %v757
      %v969 = vpop.f32.mrf.mxu0
      %v970 = vadd.f32 0.0, %v969
      %v971 = vpop.f32.mrf.mxu0
      %v972 = vpop.f32.mrf.mxu0
      %v973 = vadd.f32 0.0, %v972
      %v974 = vpop.f32.mrf.mxu0
      %975 = vmatprep.mubr.bf16.mxu0 0
      %976 = vmatmul.mubr.bf16.gmra.mxu0 %v758
      %v977 = vpop.f32.mrf.mxu0
      %v978 = vadd.f32 0.0, %v977
      %v979 = vpop.f32.mrf.mxu0
      %v980 = vpop.f32.mrf.mxu0
      %v981 = vadd.f32 0.0, %v980
      %v982 = vpop.f32.mrf.mxu0
      %983 = vdwg.mxu0
      %v1016 = vunpack.c.l.b16 %v237
      %v1017 = vunpack.c.l.b16 %v238
      %v1018 = vunpack.c.l.b16 %v240
      %v1019 = vunpack.c.l.b16 %v241
      %v1020 = vunpack.c.l.b16 %v243
      %v1021 = vunpack.c.l.b16 %v244
      %v1022 = vunpack.c.l.b16 %v246
      %v1023 = vunpack.c.l.b16 %v247
      %v1024 = vunpack.c.l.b16 %v249
      %v1025 = vunpack.c.l.b16 %v250
      %v1026 = vunpack.c.l.b16 %v252
      %v1027 = vunpack.c.l.b16 %v253
      %v1028 = vunpack.c.l.b16 %v255
      %v1029 = vunpack.c.l.b16 %v256
      %v1030 = vunpack.c.l.b16 %v258
      %v1031 = vunpack.c.l.b16 %v259
      %v1032 = vunpack.c.l.b16 %v261
      %v1033 = vunpack.c.l.b16 %v262
      %v1034 = vunpack.c.l.b16 %v264
      %v1035 = vunpack.c.l.b16 %v265
      %v1036 = vunpack.c.l.b16 %v267
      %v1037 = vunpack.c.l.b16 %v268
      %v1038 = vunpack.c.l.b16 %v270
      %v1039 = vunpack.c.l.b16 %v271
      %v1040 = vunpack.c.l.b16 %v273
      %v1041 = vunpack.c.l.b16 %v274
      %v1042 = vunpack.c.l.b16 %v276
      %v1043 = vunpack.c.l.b16 %v277
      %v1044 = vunpack.c.l.b16 %v279
      %v1045 = vunpack.c.l.b16 %v280
      %v1046 = vunpack.c.l.b16 %v282
      %v1047 = vunpack.c.l.b16 %v283
      %v1048 = vpack.c.b16 %v1017, %v1016
      %v1049 = vpack.c.b16 %v1019, %v1018
      %v1050 = vpack.c.b16 %v1021, %v1020
      %v1051 = vpack.c.b16 %v1023, %v1022
      %v1052 = vpack.c.b16 %v1025, %v1024
      %v1053 = vpack.c.b16 %v1027, %v1026
      %v1054 = vpack.c.b16 %v1029, %v1028
      %v1055 = vpack.c.b16 %v1031, %v1030
      %v1056 = vpack.c.b16 %v1033, %v1032
      %v1057 = vpack.c.b16 %v1035, %v1034
      %v1058 = vpack.c.b16 %v1037, %v1036
      %v1059 = vpack.c.b16 %v1039, %v1038
      %v1060 = vpack.c.b16 %v1041, %v1040
      %v1061 = vpack.c.b16 %v1043, %v1042
      %v1062 = vpack.c.b16 %v1045, %v1044
      %v1063 = vpack.c.b16 %v1047, %v1046
      %v1096 = vunpack.c.l.b16 %v291
      %v1097 = vunpack.c.l.b16 %v292
      %v1098 = vunpack.c.l.b16 %v293
      %v1099 = vunpack.c.l.b16 %v294
      %v1100 = vunpack.c.l.b16 %v295
      %v1101 = vunpack.c.l.b16 %v296
      %v1102 = vunpack.c.l.b16 %v297
      %v1103 = vunpack.c.l.b16 %v298
      %v1104 = vunpack.c.l.b16 %v299
      %v1105 = vunpack.c.l.b16 %v300
      %v1106 = vunpack.c.l.b16 %v301
      %v1107 = vunpack.c.l.b16 %v302
      %v1108 = vunpack.c.l.b16 %v303
      %v1109 = vunpack.c.l.b16 %v304
      %v1110 = vunpack.c.l.b16 %v305
      %v1111 = vunpack.c.l.b16 %v306
      %v1112 = vpack.c.b16 %v1097, %v1096
      %v1113 = vpack.c.b16 %v1099, %v1098
      %v1114 = vpack.c.b16 %v1101, %v1100
      %v1115 = vpack.c.b16 %v1103, %v1102
      %v1116 = vpack.c.b16 %v1105, %v1104
      %v1117 = vpack.c.b16 %v1107, %v1106
      %v1118 = vpack.c.b16 %v1109, %v1108
      %v1119 = vpack.c.b16 %v1111, %v1110
      %1128 = vmatprep.subr.bf16.mxu0 0
      %1129 = vmatpush1.bf16.msra.mxu0 %v1119
      %1130 = vmatprep.subr.bf16.mxu0 0
      %1131 = vmatpush1.bf16.msra.mxu0 %v1118
      %1132 = vmatprep.subr.bf16.mxu0 0
      %1133 = vmatpush1.bf16.msra.mxu0 %v1117
      %1134 = vmatprep.subr.bf16.mxu0 0
      %1135 = vmatpush1.bf16.msra.mxu0 %v1116
      %1136 = vmatprep.subr.bf16.mxu0 0
      %1137 = vmatpush1.bf16.msra.mxu0 %v1115
      %1138 = vmatprep.subr.bf16.mxu0 0
      %1139 = vmatpush1.bf16.msra.mxu0 %v1114
      %1140 = vmatprep.subr.bf16.mxu0 0
      %1141 = vmatpush1.bf16.msra.mxu0 %v1113
      %1142 = vmatprep.subr.bf16.mxu0 0
      %1143 = vmatpush1.bf16.msra.mxu0 %v1112
      %1144 = vmatprep.subr.bf16.mxu0 0
      %1145 = vmatpush2.bf16.msra.mxu0 0
      %1146 = vmatprep.subr.bf16.mxu0 0
      %1147 = vmatpush2.bf16.msra.mxu0 0
      %1148 = vmatprep.subr.bf16.mxu0 0
      %1149 = vmatpush2.bf16.msra.mxu0 0
      %1150 = vmatprep.subr.bf16.mxu0 0
      %1151 = vmatpush2.bf16.msra.mxu0 0
      %1152 = vmatprep.subr.bf16.mxu0 0
      %1153 = vmatpush2.bf16.msra.mxu0 0
      %1154 = vmatprep.subr.bf16.mxu0 0
      %1155 = vmatpush2.bf16.msra.mxu0 0
      %1156 = vmatprep.subr.bf16.mxu0 0
      %1157 = vmatpush2.bf16.msra.mxu0 0
      %1158 = vmatprep.subr.bf16.mxu0 0
      %1159 = vmatpush2.bf16.msra.mxu0 0
      %1160 = vmatprep.mubr.bf16.mxu0 0
      %1161 = vmatmul.mubr.bf16.gmra.mxu0 %v1048
      %v1162 = vpop.f32.mrf.mxu0
      %v1163 = vadd.f32 %v858, %v1162
      %v1164 = vpop.f32.mrf.mxu0
      %v1165 = vpop.f32.mrf.mxu0
      %v1166 = vadd.f32 %v861, %v1165
      %v1167 = vpop.f32.mrf.mxu0
      %1168 = vmatprep.mubr.bf16.mxu0 0
      %1169 = vmatmul.mubr.bf16.gmra.mxu0 %v1049
      %v1170 = vpop.f32.mrf.mxu0
      %v1171 = vadd.f32 %v866, %v1170
      %v1172 = vpop.f32.mrf.mxu0
      %v1173 = vpop.f32.mrf.mxu0
      %v1174 = vadd.f32 %v869, %v1173
      %v1175 = vpop.f32.mrf.mxu0
      %1176 = vmatprep.mubr.bf16.mxu0 0
      %1177 = vmatmul.mubr.bf16.gmra.mxu0 %v1050
      %v1178 = vpop.f32.mrf.mxu0
      %v1179 = vadd.f32 %v874, %v1178
      %v1180 = vpop.f32.mrf.mxu0
      %v1181 = vpop.f32.mrf.mxu0
      %v1182 = vadd.f32 %v877, %v1181
      %v1183 = vpop.f32.mrf.mxu0
      %1184 = vmatprep.mubr.bf16.mxu0 0
      %1185 = vmatmul.mubr.bf16.gmra.mxu0 %v1051
      %v1186 = vpop.f32.mrf.mxu0
      %v1187 = vadd.f32 %v882, %v1186
      %v1188 = vpop.f32.mrf.mxu0
      %v1189 = vpop.f32.mrf.mxu0
      %v1190 = vadd.f32 %v885, %v1189
      %v1191 = vpop.f32.mrf.mxu0
      %1192 = vmatprep.mubr.bf16.mxu0 0
      %1193 = vmatmul.mubr.bf16.gmra.mxu0 %v1052
      %v1194 = vpop.f32.mrf.mxu0
      %v1195 = vadd.f32 %v890, %v1194
      %v1196 = vpop.f32.mrf.mxu0
      %v1197 = vpop.f32.mrf.mxu0
      %v1198 = vadd.f32 %v893, %v1197
      %v1199 = vpop.f32.mrf.mxu0
      %1200 = vmatprep.mubr.bf16.mxu0 0
      %1201 = vmatmul.mubr.bf16.gmra.mxu0 %v1053
      %v1202 = vpop.f32.mrf.mxu0
      %v1203 = vadd.f32 %v898, %v1202
      %v1204 = vpop.f32.mrf.mxu0
      %v1205 = vpop.f32.mrf.mxu0
      %v1206 = vadd.f32 %v901, %v1205
      %v1207 = vpop.f32.mrf.mxu0
      %1208 = vmatprep.mubr.bf16.mxu0 0
      %1209 = vmatmul.mubr.bf16.gmra.mxu0 %v1054
      %v1210 = vpop.f32.mrf.mxu0
      %v1211 = vadd.f32 %v906, %v1210
      %v1212 = vpop.f32.mrf.mxu0
      %v1213 = vpop.f32.mrf.mxu0
      %v1214 = vadd.f32 %v909, %v1213
      %v1215 = vpop.f32.mrf.mxu0
      %1216 = vmatprep.mubr.bf16.mxu0 0
      %1217 = vmatmul.mubr.bf16.gmra.mxu0 %v1055
      %v1218 = vpop.f32.mrf.mxu0
      %v1219 = vadd.f32 %v914, %v1218
      %v1220 = vpop.f32.mrf.mxu0
      %v1221 = vpop.f32.mrf.mxu0
      %v1222 = vadd.f32 %v917, %v1221
      %v1223 = vpop.f32.mrf.mxu0
      %1224 = vmatprep.mubr.bf16.mxu0 0
      %1225 = vmatmul.mubr.bf16.gmra.mxu0 %v1056
      %v1226 = vpop.f32.mrf.mxu0
      %v1227 = vadd.f32 %v922, %v1226
      %v1228 = vpop.f32.mrf.mxu0
      %v1229 = vpop.f32.mrf.mxu0
      %v1230 = vadd.f32 %v925, %v1229
      %v1231 = vpop.f32.mrf.mxu0
      %1232 = vmatprep.mubr.bf16.mxu0 0
      %1233 = vmatmul.mubr.bf16.gmra.mxu0 %v1057
      %v1234 = vpop.f32.mrf.mxu0
      %v1235 = vadd.f32 %v930, %v1234
      %v1236 = vpop.f32.mrf.mxu0
      %v1237 = vpop.f32.mrf.mxu0
      %v1238 = vadd.f32 %v933, %v1237
      %v1239 = vpop.f32.mrf.mxu0
      %1240 = vmatprep.mubr.bf16.mxu0 0
      %1241 = vmatmul.mubr.bf16.gmra.mxu0 %v1058
      %v1242 = vpop.f32.mrf.mxu0
      %v1243 = vadd.f32 %v938, %v1242
      %v1244 = vpop.f32.mrf.mxu0
      %v1245 = vpop.f32.mrf.mxu0
      %v1246 = vadd.f32 %v941, %v1245
      %v1247 = vpop.f32.mrf.mxu0
      %1248 = vmatprep.mubr.bf16.mxu0 0
      %1249 = vmatmul.mubr.bf16.gmra.mxu0 %v1059
      %v1250 = vpop.f32.mrf.mxu0
      %v1251 = vadd.f32 %v946, %v1250
      %v1252 = vpop.f32.mrf.mxu0
      %v1253 = vpop.f32.mrf.mxu0
      %v1254 = vadd.f32 %v949, %v1253
      %v1255 = vpop.f32.mrf.mxu0
      %1256 = vmatprep.mubr.bf16.mxu0 0
      %1257 = vmatmul.mubr.bf16.gmra.mxu0 %v1060
      %v1258 = vpop.f32.mrf.mxu0
      %v1259 = vadd.f32 %v954, %v1258
      %v1260 = vpop.f32.mrf.mxu0
      %v1261 = vpop.f32.mrf.mxu0
      %v1262 = vadd.f32 %v957, %v1261
      %v1263 = vpop.f32.mrf.mxu0
      %1264 = vmatprep.mubr.bf16.mxu0 0
      %1265 = vmatmul.mubr.bf16.gmra.mxu0 %v1061
      %v1266 = vpop.f32.mrf.mxu0
      %v1267 = vadd.f32 %v962, %v1266
      %v1268 = vpop.f32.mrf.mxu0
      %v1269 = vpop.f32.mrf.mxu0
      %v1270 = vadd.f32 %v965, %v1269
      %v1271 = vpop.f32.mrf.mxu0
      %1272 = vmatprep.mubr.bf16.mxu0 0
      %1273 = vmatmul.mubr.bf16.gmra.mxu0 %v1062
      %v1274 = vpop.f32.mrf.mxu0
      %v1275 = vadd.f32 %v970, %v1274
      %v1276 = vpop.f32.mrf.mxu0
      %v1277 = vpop.f32.mrf.mxu0
      %v1278 = vadd.f32 %v973, %v1277
      %v1279 = vpop.f32.mrf.mxu0
      %1280 = vmatprep.mubr.bf16.mxu0 0
      %1281 = vmatmul.mubr.bf16.gmra.mxu0 %v1063
      %v1282 = vpop.f32.mrf.mxu0
      %v1283 = vadd.f32 %v978, %v1282
      %v1284 = vpop.f32.mrf.mxu0
      %v1285 = vpop.f32.mrf.mxu0
      %v1286 = vadd.f32 %v981, %v1285
      %v1287 = vpop.f32.mrf.mxu0
      %1288 = vdwg.mxu0
      %vm1305 = vcmask 1042432
      %vm1306 = vcmask 1046532
      %vm1307 = vmor %vm1305, %vm1306
      %v1308 = vrot.slane %v237, 5
      %v1309 = vrot.slane %v1308, 4
      %v1310 = vrot.slane %v238, 5
      %v1311 = vsel %vm1307, %v1309, %v1310
      %v1312 = vrot.slane %v1310, 4
      %v1313 = vrot.slane %v239, 5
      %v1314 = vsel %vm1307, %v1312, %v1313
      %v1315 = vrot.slane %v240, 5
      %v1316 = vrot.slane %v1315, 4
      %v1317 = vrot.slane %v241, 5
      %v1318 = vsel %vm1307, %v1316, %v1317
      %v1319 = vrot.slane %v1317, 4
      %v1320 = vrot.slane %v242, 5
      %v1321 = vsel %vm1307, %v1319, %v1320
      %v1322 = vrot.slane %v243, 5
      %v1323 = vrot.slane %v1322, 4
      %v1324 = vrot.slane %v244, 5
      %v1325 = vsel %vm1307, %v1323, %v1324
      %v1326 = vrot.slane %v1324, 4
      %v1327 = vrot.slane %v245, 5
      %v1328 = vsel %vm1307, %v1326, %v1327
      %v1329 = vrot.slane %v246, 5
      %v1330 = vrot.slane %v1329, 4
      %v1331 = vrot.slane %v247, 5
      %v1332 = vsel %vm1307, %v1330, %v1331
      %v1333 = vrot.slane %v1331, 4
      %v1334 = vrot.slane %v248, 5
      %v1335 = vsel %vm1307, %v1333, %v1334
      %v1336 = vrot.slane %v249, 5
      %v1337 = vrot.slane %v1336, 4
      %v1338 = vrot.slane %v250, 5
      %v1339 = vsel %vm1307, %v1337, %v1338
      %v1340 = vrot.slane %v1338, 4
      %v1341 = vrot.slane %v251, 5
      %v1342 = vsel %vm1307, %v1340, %v1341
      %v1343 = vrot.slane %v252, 5
      %v1344 = vrot.slane %v1343, 4
      %v1345 = vrot.slane %v253, 5
      %v1346 = vsel %vm1307, %v1344, %v1345
      %v1347 = vrot.slane %v1345, 4
      %v1348 = vrot.slane %v254, 5
      %v1349 = vsel %vm1307, %v1347, %v1348
      %v1350 = vrot.slane %v255, 5
      %v1351 = vrot.slane %v1350, 4
      %v1352 = vrot.slane %v256, 5
      %v1353 = vsel %vm1307, %v1351, %v1352
      %v1354 = vrot.slane %v1352, 4
      %v1355 = vrot.slane %v257, 5
      %v1356 = vsel %vm1307, %v1354, %v1355
      %v1357 = vrot.slane %v258, 5
      %v1358 = vrot.slane %v1357, 4
      %v1359 = vrot.slane %v259, 5
      %v1360 = vsel %vm1307, %v1358, %v1359
      %v1361 = vrot.slane %v1359, 4
      %v1362 = vrot.slane %v260, 5
      %v1363 = vsel %vm1307, %v1361, %v1362
      %v1364 = vrot.slane %v261, 5
      %v1365 = vrot.slane %v1364, 4
      %v1366 = vrot.slane %v262, 5
      %v1367 = vsel %vm1307, %v1365, %v1366
      %v1368 = vrot.slane %v1366, 4
      %v1369 = vrot.slane %v263, 5
      %v1370 = vsel %vm1307, %v1368, %v1369
      %v1371 = vrot.slane %v264, 5
      %v1372 = vrot.slane %v1371, 4
      %v1373 = vrot.slane %v265, 5
      %v1374 = vsel %vm1307, %v1372, %v1373
      %v1375 = vrot.slane %v1373, 4
      %v1376 = vrot.slane %v266, 5
      %v1377 = vsel %vm1307, %v1375, %v1376
      %v1378 = vrot.slane %v267, 5
      %v1379 = vrot.slane %v1378, 4
      %v1380 = vrot.slane %v268, 5
      %v1381 = vsel %vm1307, %v1379, %v1380
      %v1382 = vrot.slane %v1380, 4
      %v1383 = vrot.slane %v269, 5
      %v1384 = vsel %vm1307, %v1382, %v1383
      %v1385 = vrot.slane %v270, 5
      %v1386 = vrot.slane %v1385, 4
      %v1387 = vrot.slane %v271, 5
      %v1388 = vsel %vm1307, %v1386, %v1387
      %v1389 = vrot.slane %v1387, 4
      %v1390 = vrot.slane %v272, 5
      %v1391 = vsel %vm1307, %v1389, %v1390
      %v1392 = vrot.slane %v273, 5
      %v1393 = vrot.slane %v1392, 4
      %v1394 = vrot.slane %v274, 5
      %v1395 = vsel %vm1307, %v1393, %v1394
      %v1396 = vrot.slane %v1394, 4
      %v1397 = vrot.slane %v275, 5
      %v1398 = vsel %vm1307, %v1396, %v1397
      %v1399 = vrot.slane %v276, 5
      %v1400 = vrot.slane %v1399, 4
      %v1401 = vrot.slane %v277, 5
      %v1402 = vsel %vm1307, %v1400, %v1401
      %v1403 = vrot.slane %v1401, 4
      %v1404 = vrot.slane %v278, 5
      %v1405 = vsel %vm1307, %v1403, %v1404
      %v1406 = vrot.slane %v279, 5
      %v1407 = vrot.slane %v1406, 4
      %v1408 = vrot.slane %v280, 5
      %v1409 = vsel %vm1307, %v1407, %v1408
      %v1410 = vrot.slane %v1408, 4
      %v1411 = vrot.slane %v281, 5
      %v1412 = vsel %vm1307, %v1410, %v1411
      %v1413 = vrot.slane %v282, 5
      %v1414 = vrot.slane %v1413, 4
      %v1415 = vrot.slane %v283, 5
      %v1416 = vsel %vm1307, %v1414, %v1415
      %v1417 = vrot.slane %v1415, 4
      %v1418 = vrot.slane %v284, 5
      %v1419 = vsel %vm1307, %v1417, %v1418
      %s1420 = scalar_lea.vmem %s1, 128
      %v1421 = vld [vmem:[%s1420] sm:$0xf]
      %v1422 = vld [vmem:[%s1420 + $0x4] sm:$0xf]
      %v1423 = vld [vmem:[%s1420 + $0x8] sm:$0xf]
      %v1424 = vld [vmem:[%s1420 + $0xc] sm:$0xf]
      %v1425 = vld [vmem:[%s1420 + $0x10] sm:$0xf]
      %v1426 = vld [vmem:[%s1420 + $0x14] sm:$0xf]
      %v1427 = vld [vmem:[%s1420 + $0x18] sm:$0xf]
      %v1428 = vld [vmem:[%s1420 + $0x1c] sm:$0xf]
      %v1429 = vld [vmem:[%s1420 + $0x20] sm:$0xf]
      %v1430 = vld [vmem:[%s1420 + $0x24] sm:$0xf]
      %v1431 = vld [vmem:[%s1420 + $0x28] sm:$0xf]
      %v1432 = vld [vmem:[%s1420 + $0x2c] sm:$0xf]
      %v1433 = vld [vmem:[%s1420 + $0x30] sm:$0xf]
      %v1434 = vld [vmem:[%s1420 + $0x34] sm:$0xf]
      %v1435 = vld [vmem:[%s1420 + $0x38] sm:$0xf]
      %v1436 = vld [vmem:[%s1420 + $0x3c] sm:$0xf]
      %v1437 = vunpack.c.l.b16 %v1311
      %v1438 = vunpack.c.l.b16 %v1314
      %v1439 = vunpack.c.l.b16 %v1318
      %v1440 = vunpack.c.l.b16 %v1321
      %v1441 = vunpack.c.l.b16 %v1325
      %v1442 = vunpack.c.l.b16 %v1328
      %v1443 = vunpack.c.l.b16 %v1332
      %v1444 = vunpack.c.l.b16 %v1335
      %v1445 = vunpack.c.l.b16 %v1339
      %v1446 = vunpack.c.l.b16 %v1342
      %v1447 = vunpack.c.l.b16 %v1346
      %v1448 = vunpack.c.l.b16 %v1349
      %v1449 = vunpack.c.l.b16 %v1353
      %v1450 = vunpack.c.l.b16 %v1356
      %v1451 = vunpack.c.l.b16 %v1360
      %v1452 = vunpack.c.l.b16 %v1363
      %v1453 = vunpack.c.l.b16 %v1367
      %v1454 = vunpack.c.l.b16 %v1370
      %v1455 = vunpack.c.l.b16 %v1374
      %v1456 = vunpack.c.l.b16 %v1377
      %v1457 = vunpack.c.l.b16 %v1381
      %v1458 = vunpack.c.l.b16 %v1384
      %v1459 = vunpack.c.l.b16 %v1388
      %v1460 = vunpack.c.l.b16 %v1391
      %v1461 = vunpack.c.l.b16 %v1395
      %v1462 = vunpack.c.l.b16 %v1398
      %v1463 = vunpack.c.l.b16 %v1402
      %v1464 = vunpack.c.l.b16 %v1405
      %v1465 = vunpack.c.l.b16 %v1409
      %v1466 = vunpack.c.l.b16 %v1412
      %v1467 = vunpack.c.l.b16 %v1416
      %v1468 = vunpack.c.l.b16 %v1419
      %v1469 = vpack.c.b16 %v1438, %v1437
      %v1470 = vpack.c.b16 %v1440, %v1439
      %v1471 = vpack.c.b16 %v1442, %v1441
      %v1472 = vpack.c.b16 %v1444, %v1443
      %v1473 = vpack.c.b16 %v1446, %v1445
      %v1474 = vpack.c.b16 %v1448, %v1447
      %v1475 = vpack.c.b16 %v1450, %v1449
      %v1476 = vpack.c.b16 %v1452, %v1451
      %v1477 = vpack.c.b16 %v1454, %v1453
      %v1478 = vpack.c.b16 %v1456, %v1455
      %v1479 = vpack.c.b16 %v1458, %v1457
      %v1480 = vpack.c.b16 %v1460, %v1459
      %v1481 = vpack.c.b16 %v1462, %v1461
      %v1482 = vpack.c.b16 %v1464, %v1463
      %v1483 = vpack.c.b16 %v1466, %v1465
      %v1484 = vpack.c.b16 %v1468, %v1467
      %v1517 = vunpack.c.l.b16 %v1421
      %v1518 = vunpack.c.l.b16 %v1422
      %v1519 = vunpack.c.l.b16 %v1423
      %v1520 = vunpack.c.l.b16 %v1424
      %v1521 = vunpack.c.l.b16 %v1425
      %v1522 = vunpack.c.l.b16 %v1426
      %v1523 = vunpack.c.l.b16 %v1427
      %v1524 = vunpack.c.l.b16 %v1428
      %v1525 = vunpack.c.l.b16 %v1429
      %v1526 = vunpack.c.l.b16 %v1430
      %v1527 = vunpack.c.l.b16 %v1431
      %v1528 = vunpack.c.l.b16 %v1432
      %v1529 = vunpack.c.l.b16 %v1433
      %v1530 = vunpack.c.l.b16 %v1434
      %v1531 = vunpack.c.l.b16 %v1435
      %v1532 = vunpack.c.l.b16 %v1436
      %v1533 = vpack.c.b16 %v1518, %v1517
      %v1534 = vpack.c.b16 %v1520, %v1519
      %v1535 = vpack.c.b16 %v1522, %v1521
      %v1536 = vpack.c.b16 %v1524, %v1523
      %v1537 = vpack.c.b16 %v1526, %v1525
      %v1538 = vpack.c.b16 %v1528, %v1527
      %v1539 = vpack.c.b16 %v1530, %v1529
      %v1540 = vpack.c.b16 %v1532, %v1531
      %1549 = vmatprep.subr.bf16.mxu0 0
      %1550 = vmatpush1.bf16.msra.mxu0 %v1540
      %1551 = vmatprep.subr.bf16.mxu0 0
      %1552 = vmatpush1.bf16.msra.mxu0 %v1539
      %1553 = vmatprep.subr.bf16.mxu0 0
      %1554 = vmatpush1.bf16.msra.mxu0 %v1538
      %1555 = vmatprep.subr.bf16.mxu0 0
      %1556 = vmatpush1.bf16.msra.mxu0 %v1537
      %1557 = vmatprep.subr.bf16.mxu0 0
      %1558 = vmatpush1.bf16.msra.mxu0 %v1536
      %1559 = vmatprep.subr.bf16.mxu0 0
      %1560 = vmatpush1.bf16.msra.mxu0 %v1535
      %1561 = vmatprep.subr.bf16.mxu0 0
      %1562 = vmatpush1.bf16.msra.mxu0 %v1534
      %1563 = vmatprep.subr.bf16.mxu0 0
      %1564 = vmatpush1.bf16.msra.mxu0 %v1533
      %1565 = vmatprep.subr.bf16.mxu0 0
      %1566 = vmatpush2.bf16.msra.mxu0 0
      %1567 = vmatprep.subr.bf16.mxu0 0
      %1568 = vmatpush2.bf16.msra.mxu0 0
      %1569 = vmatprep.subr.bf16.mxu0 0
      %1570 = vmatpush2.bf16.msra.mxu0 0
      %1571 = vmatprep.subr.bf16.mxu0 0
      %1572 = vmatpush2.bf16.msra.mxu0 0
      %1573 = vmatprep.subr.bf16.mxu0 0
      %1574 = vmatpush2.bf16.msra.mxu0 0
      %1575 = vmatprep.subr.bf16.mxu0 0
      %1576 = vmatpush2.bf16.msra.mxu0 0
      %1577 = vmatprep.subr.bf16.mxu0 0
      %1578 = vmatpush2.bf16.msra.mxu0 0
      %1579 = vmatprep.subr.bf16.mxu0 0
      %1580 = vmatpush2.bf16.msra.mxu0 0
      %1581 = vmatprep.mubr.bf16.mxu0 0
      %1582 = vmatmul.mubr.bf16.gmra.mxu0 %v1469
      %v1583 = vpop.f32.mrf.mxu0
      %v1584 = vadd.f32 0.0, %v1583
      %v1585 = vpop.f32.mrf.mxu0
      %v1586 = vpop.f32.mrf.mxu0
      %v1587 = vadd.f32 0.0, %v1586
      %v1588 = vpop.f32.mrf.mxu0
      %1589 = vmatprep.mubr.bf16.mxu0 0
      %1590 = vmatmul.mubr.bf16.gmra.mxu0 %v1470
      %v1591 = vpop.f32.mrf.mxu0
      %v1592 = vadd.f32 0.0, %v1591
      %v1593 = vpop.f32.mrf.mxu0
      %v1594 = vpop.f32.mrf.mxu0
      %v1595 = vadd.f32 0.0, %v1594
      %v1596 = vpop.f32.mrf.mxu0
      %1597 = vmatprep.mubr.bf16.mxu0 0
      %1598 = vmatmul.mubr.bf16.gmra.mxu0 %v1471
      %v1599 = vpop.f32.mrf.mxu0
      %v1600 = vadd.f32 0.0, %v1599
      %v1601 = vpop.f32.mrf.mxu0
      %v1602 = vpop.f32.mrf.mxu0
      %v1603 = vadd.f32 0.0, %v1602
      %v1604 = vpop.f32.mrf.mxu0
      %1605 = vmatprep.mubr.bf16.mxu0 0
      %1606 = vmatmul.mubr.bf16.gmra.mxu0 %v1472
      %v1607 = vpop.f32.mrf.mxu0
      %v1608 = vadd.f32 0.0, %v1607
      %v1609 = vpop.f32.mrf.mxu0
      %v1610 = vpop.f32.mrf.mxu0
      %v1611 = vadd.f32 0.0, %v1610
      %v1612 = vpop.f32.mrf.mxu0
      %1613 = vmatprep.mubr.bf16.mxu0 0
      %1614 = vmatmul.mubr.bf16.gmra.mxu0 %v1473
      %v1615 = vpop.f32.mrf.mxu0
      %v1616 = vadd.f32 0.0, %v1615
      %v1617 = vpop.f32.mrf.mxu0
      %v1618 = vpop.f32.mrf.mxu0
      %v1619 = vadd.f32 0.0, %v1618
      %v1620 = vpop.f32.mrf.mxu0
      %1621 = vmatprep.mubr.bf16.mxu0 0
      %1622 = vmatmul.mubr.bf16.gmra.mxu0 %v1474
      %v1623 = vpop.f32.mrf.mxu0
      %v1624 = vadd.f32 0.0, %v1623
      %v1625 = vpop.f32.mrf.mxu0
      %v1626 = vpop.f32.mrf.mxu0
      %v1627 = vadd.f32 0.0, %v1626
      %v1628 = vpop.f32.mrf.mxu0
      %1629 = vmatprep.mubr.bf16.mxu0 0
      %1630 = vmatmul.mubr.bf16.gmra.mxu0 %v1475
      %v1631 = vpop.f32.mrf.mxu0
      %v1632 = vadd.f32 0.0, %v1631
      %v1633 = vpop.f32.mrf.mxu0
      %v1634 = vpop.f32.mrf.mxu0
      %v1635 = vadd.f32 0.0, %v1634
      %v1636 = vpop.f32.mrf.mxu0
      %1637 = vmatprep.mubr.bf16.mxu0 0
      %1638 = vmatmul.mubr.bf16.gmra.mxu0 %v1476
      %v1639 = vpop.f32.mrf.mxu0
      %v1640 = vadd.f32 0.0, %v1639
      %v1641 = vpop.f32.mrf.mxu0
      %v1642 = vpop.f32.mrf.mxu0
      %v1643 = vadd.f32 0.0, %v1642
      %v1644 = vpop.f32.mrf.mxu0
      %1645 = vmatprep.mubr.bf16.mxu0 0
      %1646 = vmatmul.mubr.bf16.gmra.mxu0 %v1477
      %v1647 = vpop.f32.mrf.mxu0
      %v1648 = vadd.f32 0.0, %v1647
      %v1649 = vpop.f32.mrf.mxu0
      %v1650 = vpop.f32.mrf.mxu0
      %v1651 = vadd.f32 0.0, %v1650
      %v1652 = vpop.f32.mrf.mxu0
      %1653 = vmatprep.mubr.bf16.mxu0 0
      %1654 = vmatmul.mubr.bf16.gmra.mxu0 %v1478
      %v1655 = vpop.f32.mrf.mxu0
      %v1656 = vadd.f32 0.0, %v1655
      %v1657 = vpop.f32.mrf.mxu0
      %v1658 = vpop.f32.mrf.mxu0
      %v1659 = vadd.f32 0.0, %v1658
      %v1660 = vpop.f32.mrf.mxu0
      %1661 = vmatprep.mubr.bf16.mxu0 0
      %1662 = vmatmul.mubr.bf16.gmra.mxu0 %v1479
      %v1663 = vpop.f32.mrf.mxu0
      %v1664 = vadd.f32 0.0, %v1663
      %v1665 = vpop.f32.mrf.mxu0
      %v1666 = vpop.f32.mrf.mxu0
      %v1667 = vadd.f32 0.0, %v1666
      %v1668 = vpop.f32.mrf.mxu0
      %1669 = vmatprep.mubr.bf16.mxu0 0
      %1670 = vmatmul.mubr.bf16.gmra.mxu0 %v1480
      %v1671 = vpop.f32.mrf.mxu0
      %v1672 = vadd.f32 0.0, %v1671
      %v1673 = vpop.f32.mrf.mxu0
      %v1674 = vpop.f32.mrf.mxu0
      %v1675 = vadd.f32 0.0, %v1674
      %v1676 = vpop.f32.mrf.mxu0
      %1677 = vmatprep.mubr.bf16.mxu0 0
      %1678 = vmatmul.mubr.bf16.gmra.mxu0 %v1481
      %v1679 = vpop.f32.mrf.mxu0
      %v1680 = vadd.f32 0.0, %v1679
      %v1681 = vpop.f32.mrf.mxu0
      %v1682 = vpop.f32.mrf.mxu0
      %v1683 = vadd.f32 0.0, %v1682
      %v1684 = vpop.f32.mrf.mxu0
      %1685 = vmatprep.mubr.bf16.mxu0 0
      %1686 = vmatmul.mubr.bf16.gmra.mxu0 %v1482
      %v1687 = vpop.f32.mrf.mxu0
      %v1688 = vadd.f32 0.0, %v1687
      %v1689 = vpop.f32.mrf.mxu0
      %v1690 = vpop.f32.mrf.mxu0
      %v1691 = vadd.f32 0.0, %v1690
      %v1692 = vpop.f32.mrf.mxu0
      %1693 = vmatprep.mubr.bf16.mxu0 0
      %1694 = vmatmul.mubr.bf16.gmra.mxu0 %v1483
      %v1695 = vpop.f32.mrf.mxu0
      %v1696 = vadd.f32 0.0, %v1695
      %v1697 = vpop.f32.mrf.mxu0
      %v1698 = vpop.f32.mrf.mxu0
      %v1699 = vadd.f32 0.0, %v1698
      %v1700 = vpop.f32.mrf.mxu0
      %1701 = vmatprep.mubr.bf16.mxu0 0
      %1702 = vmatmul.mubr.bf16.gmra.mxu0 %v1484
      %v1703 = vpop.f32.mrf.mxu0
      %v1704 = vadd.f32 0.0, %v1703
      %v1705 = vpop.f32.mrf.mxu0
      %v1706 = vpop.f32.mrf.mxu0
      %v1707 = vadd.f32 0.0, %v1706
      %v1708 = vpop.f32.mrf.mxu0
      %1709 = vdwg.mxu0
      %v1710 = vadd.f32 %v1163, %v1584
      %v1711 = vadd.f32 %v1166, %v1587
      %v1712 = vadd.f32 %v1171, %v1592
      %v1713 = vadd.f32 %v1174, %v1595
      %v1714 = vadd.f32 %v1179, %v1600
      %v1715 = vadd.f32 %v1182, %v1603
      %v1716 = vadd.f32 %v1187, %v1608
      %v1717 = vadd.f32 %v1190, %v1611
      %v1718 = vadd.f32 %v1195, %v1616
      %v1719 = vadd.f32 %v1198, %v1619
      %v1720 = vadd.f32 %v1203, %v1624
      %v1721 = vadd.f32 %v1206, %v1627
      %v1722 = vadd.f32 %v1211, %v1632
      %v1723 = vadd.f32 %v1214, %v1635
      %v1724 = vadd.f32 %v1219, %v1640
      %v1725 = vadd.f32 %v1222, %v1643
      %v1726 = vadd.f32 %v1227, %v1648
      %v1727 = vadd.f32 %v1230, %v1651
      %v1728 = vadd.f32 %v1235, %v1656
      %v1729 = vadd.f32 %v1238, %v1659
      %v1730 = vadd.f32 %v1243, %v1664
      %v1731 = vadd.f32 %v1246, %v1667
      %v1732 = vadd.f32 %v1251, %v1672
      %v1733 = vadd.f32 %v1254, %v1675
      %v1734 = vadd.f32 %v1259, %v1680
      %v1735 = vadd.f32 %v1262, %v1683
      %v1736 = vadd.f32 %v1267, %v1688
      %v1737 = vadd.f32 %v1270, %v1691
      %v1738 = vadd.f32 %v1275, %v1696
      %v1739 = vadd.f32 %v1278, %v1699
      %v1740 = vadd.f32 %v1283, %v1704
      %v1741 = vadd.f32 %v1286, %v1707
      %s1742 = scalar_lea.vmem %s1, 192
      %v1743 = vld [vmem:[%s1742] sm:$0xf]
      %v1744 = vld [vmem:[%s1742 + $0x4] sm:$0xf]
      %v1745 = vld [vmem:[%s1742 + $0x8] sm:$0xf]
      %v1746 = vld [vmem:[%s1742 + $0xc] sm:$0xf]
      %v1747 = vld [vmem:[%s1742 + $0x10] sm:$0xf]
      %v1748 = vld [vmem:[%s1742 + $0x14] sm:$0xf]
      %v1749 = vld [vmem:[%s1742 + $0x18] sm:$0xf]
      %v1750 = vld [vmem:[%s1742 + $0x1c] sm:$0xf]
      %v1751 = vld [vmem:[%s1742 + $0x20] sm:$0xf]
      %v1752 = vld [vmem:[%s1742 + $0x24] sm:$0xf]
      %v1753 = vld [vmem:[%s1742 + $0x28] sm:$0xf]
      %v1754 = vld [vmem:[%s1742 + $0x2c] sm:$0xf]
      %v1755 = vld [vmem:[%s1742 + $0x30] sm:$0xf]
      %v1756 = vld [vmem:[%s1742 + $0x34] sm:$0xf]
      %v1757 = vld [vmem:[%s1742 + $0x38] sm:$0xf]
      %v1758 = vld [vmem:[%s1742 + $0x3c] sm:$0xf]
      %v1761 = vunpack.c.l.b16 %v285
      %v1762 = vunpack.c.l.b16 %v286
      %v1763 = vpack.c.b16 %v1762, %v1761
      %v1781 = vunpack.c.l.b16 %v1743
      %v1782 = vunpack.c.l.b16 %v1744
      %v1783 = vunpack.c.l.b16 %v1745
      %v1784 = vunpack.c.l.b16 %v1746
      %v1785 = vunpack.c.l.b16 %v1747
      %v1786 = vunpack.c.l.b16 %v1748
      %v1787 = vunpack.c.l.b16 %v1749
      %v1788 = vunpack.c.l.b16 %v1750
      %v1789 = vunpack.c.l.b16 %v1751
      %v1790 = vunpack.c.l.b16 %v1752
      %v1791 = vunpack.c.l.b16 %v1753
      %v1792 = vunpack.c.l.b16 %v1754
      %v1793 = vunpack.c.l.b16 %v1755
      %v1794 = vunpack.c.l.b16 %v1756
      %v1795 = vunpack.c.l.b16 %v1757
      %v1796 = vunpack.c.l.b16 %v1758
      %v1797 = vpack.c.b16 %v1782, %v1781
      %v1798 = vpack.c.b16 %v1784, %v1783
      %v1799 = vpack.c.b16 %v1786, %v1785
      %v1800 = vpack.c.b16 %v1788, %v1787
      %v1801 = vpack.c.b16 %v1790, %v1789
      %v1802 = vpack.c.b16 %v1792, %v1791
      %v1803 = vpack.c.b16 %v1794, %v1793
      %v1804 = vpack.c.b16 %v1796, %v1795
      %1813 = vmatprep.subr.bf16.mxu0 0
      %1814 = vmatpush1.bf16.msra.mxu0 %v1804
      %1815 = vmatprep.subr.bf16.mxu0 0
      %1816 = vmatpush1.bf16.msra.mxu0 %v1803
      %1817 = vmatprep.subr.bf16.mxu0 0
      %1818 = vmatpush1.bf16.msra.mxu0 %v1802
      %1819 = vmatprep.subr.bf16.mxu0 0
      %1820 = vmatpush1.bf16.msra.mxu0 %v1801
      %1821 = vmatprep.subr.bf16.mxu0 0
      %1822 = vmatpush1.bf16.msra.mxu0 %v1800
      %1823 = vmatprep.subr.bf16.mxu0 0
      %1824 = vmatpush1.bf16.msra.mxu0 %v1799
      %1825 = vmatprep.subr.bf16.mxu0 0
      %1826 = vmatpush1.bf16.msra.mxu0 %v1798
      %1827 = vmatprep.subr.bf16.mxu0 0
      %1828 = vmatpush1.bf16.msra.mxu0 %v1797
      %1829 = vmatprep.subr.bf16.mxu0 0
      %1830 = vmatpush2.bf16.msra.mxu0 0
      %1831 = vmatprep.subr.bf16.mxu0 0
      %1832 = vmatpush2.bf16.msra.mxu0 0
      %1833 = vmatprep.subr.bf16.mxu0 0
      %1834 = vmatpush2.bf16.msra.mxu0 0
      %1835 = vmatprep.subr.bf16.mxu0 0
      %1836 = vmatpush2.bf16.msra.mxu0 0
      %1837 = vmatprep.subr.bf16.mxu0 0
      %1838 = vmatpush2.bf16.msra.mxu0 0
      %1839 = vmatprep.subr.bf16.mxu0 0
      %1840 = vmatpush2.bf16.msra.mxu0 0
      %1841 = vmatprep.subr.bf16.mxu0 0
      %1842 = vmatpush2.bf16.msra.mxu0 0
      %1843 = vmatprep.subr.bf16.mxu0 0
      %1844 = vmatpush2.bf16.msra.mxu0 0
      %1845 = vmatprep.mubr.bf16.mxu0 0
      %1846 = vmatmul.mubr.bf16.gmra.mxu0 %v1049
      %v1847 = vpop.f32.mrf.mxu0
      %v1848 = vadd.f32 0.0, %v1847
      %v1849 = vpop.f32.mrf.mxu0
      %v1850 = vpop.f32.mrf.mxu0
      %v1851 = vadd.f32 0.0, %v1850
      %v1852 = vpop.f32.mrf.mxu0
      %1853 = vmatprep.mubr.bf16.mxu0 0
      %1854 = vmatmul.mubr.bf16.gmra.mxu0 %v1050
      %v1855 = vpop.f32.mrf.mxu0
      %v1856 = vadd.f32 0.0, %v1855
      %v1857 = vpop.f32.mrf.mxu0
      %v1858 = vpop.f32.mrf.mxu0
      %v1859 = vadd.f32 0.0, %v1858
      %v1860 = vpop.f32.mrf.mxu0
      %1861 = vmatprep.mubr.bf16.mxu0 0
      %1862 = vmatmul.mubr.bf16.gmra.mxu0 %v1051
      %v1863 = vpop.f32.mrf.mxu0
      %v1864 = vadd.f32 0.0, %v1863
      %v1865 = vpop.f32.mrf.mxu0
      %v1866 = vpop.f32.mrf.mxu0
      %v1867 = vadd.f32 0.0, %v1866
      %v1868 = vpop.f32.mrf.mxu0
      %1869 = vmatprep.mubr.bf16.mxu0 0
      %1870 = vmatmul.mubr.bf16.gmra.mxu0 %v1052
      %v1871 = vpop.f32.mrf.mxu0
      %v1872 = vadd.f32 0.0, %v1871
      %v1873 = vpop.f32.mrf.mxu0
      %v1874 = vpop.f32.mrf.mxu0
      %v1875 = vadd.f32 0.0, %v1874
      %v1876 = vpop.f32.mrf.mxu0
      %1877 = vmatprep.mubr.bf16.mxu0 0
      %1878 = vmatmul.mubr.bf16.gmra.mxu0 %v1053
      %v1879 = vpop.f32.mrf.mxu0
      %v1880 = vadd.f32 0.0, %v1879
      %v1881 = vpop.f32.mrf.mxu0
      %v1882 = vpop.f32.mrf.mxu0
      %v1883 = vadd.f32 0.0, %v1882
      %v1884 = vpop.f32.mrf.mxu0
      %1885 = vmatprep.mubr.bf16.mxu0 0
      %1886 = vmatmul.mubr.bf16.gmra.mxu0 %v1054
      %v1887 = vpop.f32.mrf.mxu0
      %v1888 = vadd.f32 0.0, %v1887
      %v1889 = vpop.f32.mrf.mxu0
      %v1890 = vpop.f32.mrf.mxu0
      %v1891 = vadd.f32 0.0, %v1890
      %v1892 = vpop.f32.mrf.mxu0
      %1893 = vmatprep.mubr.bf16.mxu0 0
      %1894 = vmatmul.mubr.bf16.gmra.mxu0 %v1055
      %v1895 = vpop.f32.mrf.mxu0
      %v1896 = vadd.f32 0.0, %v1895
      %v1897 = vpop.f32.mrf.mxu0
      %v1898 = vpop.f32.mrf.mxu0
      %v1899 = vadd.f32 0.0, %v1898
      %v1900 = vpop.f32.mrf.mxu0
      %1901 = vmatprep.mubr.bf16.mxu0 0
      %1902 = vmatmul.mubr.bf16.gmra.mxu0 %v1056
      %v1903 = vpop.f32.mrf.mxu0
      %v1904 = vadd.f32 0.0, %v1903
      %v1905 = vpop.f32.mrf.mxu0
      %v1906 = vpop.f32.mrf.mxu0
      %v1907 = vadd.f32 0.0, %v1906
      %v1908 = vpop.f32.mrf.mxu0
      %1909 = vmatprep.mubr.bf16.mxu0 0
      %1910 = vmatmul.mubr.bf16.gmra.mxu0 %v1057
      %v1911 = vpop.f32.mrf.mxu0
      %v1912 = vadd.f32 0.0, %v1911
      %v1913 = vpop.f32.mrf.mxu0
      %v1914 = vpop.f32.mrf.mxu0
      %v1915 = vadd.f32 0.0, %v1914
      %v1916 = vpop.f32.mrf.mxu0
      %1917 = vmatprep.mubr.bf16.mxu0 0
      %1918 = vmatmul.mubr.bf16.gmra.mxu0 %v1058
      %v1919 = vpop.f32.mrf.mxu0
      %v1920 = vadd.f32 0.0, %v1919
      %v1921 = vpop.f32.mrf.mxu0
      %v1922 = vpop.f32.mrf.mxu0
      %v1923 = vadd.f32 0.0, %v1922
      %v1924 = vpop.f32.mrf.mxu0
      %1925 = vmatprep.mubr.bf16.mxu0 0
      %1926 = vmatmul.mubr.bf16.gmra.mxu0 %v1059
      %v1927 = vpop.f32.mrf.mxu0
      %v1928 = vadd.f32 0.0, %v1927
      %v1929 = vpop.f32.mrf.mxu0
      %v1930 = vpop.f32.mrf.mxu0
      %v1931 = vadd.f32 0.0, %v1930
      %v1932 = vpop.f32.mrf.mxu0
      %1933 = vmatprep.mubr.bf16.mxu0 0
      %1934 = vmatmul.mubr.bf16.gmra.mxu0 %v1060
      %v1935 = vpop.f32.mrf.mxu0
      %v1936 = vadd.f32 0.0, %v1935
      %v1937 = vpop.f32.mrf.mxu0
      %v1938 = vpop.f32.mrf.mxu0
      %v1939 = vadd.f32 0.0, %v1938
      %v1940 = vpop.f32.mrf.mxu0
      %1941 = vmatprep.mubr.bf16.mxu0 0
      %1942 = vmatmul.mubr.bf16.gmra.mxu0 %v1061
      %v1943 = vpop.f32.mrf.mxu0
      %v1944 = vadd.f32 0.0, %v1943
      %v1945 = vpop.f32.mrf.mxu0
      %v1946 = vpop.f32.mrf.mxu0
      %v1947 = vadd.f32 0.0, %v1946
      %v1948 = vpop.f32.mrf.mxu0
      %1949 = vmatprep.mubr.bf16.mxu0 0
      %1950 = vmatmul.mubr.bf16.gmra.mxu0 %v1062
      %v1951 = vpop.f32.mrf.mxu0
      %v1952 = vadd.f32 0.0, %v1951
      %v1953 = vpop.f32.mrf.mxu0
      %v1954 = vpop.f32.mrf.mxu0
      %v1955 = vadd.f32 0.0, %v1954
      %v1956 = vpop.f32.mrf.mxu0
      %1957 = vmatprep.mubr.bf16.mxu0 0
      %1958 = vmatmul.mubr.bf16.gmra.mxu0 %v1063
      %v1959 = vpop.f32.mrf.mxu0
      %v1960 = vadd.f32 0.0, %v1959
      %v1961 = vpop.f32.mrf.mxu0
      %v1962 = vpop.f32.mrf.mxu0
      %v1963 = vadd.f32 0.0, %v1962
      %v1964 = vpop.f32.mrf.mxu0
      %1965 = vmatprep.mubr.bf16.mxu0 0
      %1966 = vmatmul.mubr.bf16.gmra.mxu0 %v1763
      %v1967 = vpop.f32.mrf.mxu0
      %v1968 = vadd.f32 0.0, %v1967
      %v1969 = vpop.f32.mrf.mxu0
      %v1970 = vpop.f32.mrf.mxu0
      %v1971 = vadd.f32 0.0, %v1970
      %v1972 = vpop.f32.mrf.mxu0
      %1973 = vdwg.mxu0
      %v1974 = vadd.f32 %v1710, %v1848
      %v1975 = vadd.f32 %v1711, %v1851
      %v1976 = vadd.f32 %v1712, %v1856
      %v1977 = vadd.f32 %v1713, %v1859
      %v1978 = vadd.f32 %v1714, %v1864
      %v1979 = vadd.f32 %v1715, %v1867
      %v1980 = vadd.f32 %v1716, %v1872
      %v1981 = vadd.f32 %v1717, %v1875
      %v1982 = vadd.f32 %v1718, %v1880
      %v1983 = vadd.f32 %v1719, %v1883
      %v1984 = vadd.f32 %v1720, %v1888
      %v1985 = vadd.f32 %v1721, %v1891
      %v1986 = vadd.f32 %v1722, %v1896
      %v1987 = vadd.f32 %v1723, %v1899
      %v1988 = vadd.f32 %v1724, %v1904
      %v1989 = vadd.f32 %v1725, %v1907
      %v1990 = vadd.f32 %v1726, %v1912
      %v1991 = vadd.f32 %v1727, %v1915
      %v1992 = vadd.f32 %v1728, %v1920
      %v1993 = vadd.f32 %v1729, %v1923
      %v1994 = vadd.f32 %v1730, %v1928
      %v1995 = vadd.f32 %v1731, %v1931
      %v1996 = vadd.f32 %v1732, %v1936
      %v1997 = vadd.f32 %v1733, %v1939
      %v1998 = vadd.f32 %v1734, %v1944
      %v1999 = vadd.f32 %v1735, %v1947
      %v2000 = vadd.f32 %v1736, %v1952
      %v2001 = vadd.f32 %v1737, %v1955
      %v2002 = vadd.f32 %v1738, %v1960
      %v2003 = vadd.f32 %v1739, %v1963
      %v2004 = vadd.f32 %v1740, %v1968
      %v2005 = vadd.f32 %v1741, %v1971
      %v2007 = vshrl.u32 %v285, 16
      %v2009 = vrot.slane %v2007, 4
      %v2010 = vshll.u32 %v285, 16
      %v2012 = vrot.slane %v2010, 5
      %v2013 = vor.u32 %v2009, %v2012
      %v2014 = vrot.slane %v2013, 4
      %v2016 = vshll.u32 %v286, 16
      %v2018 = vrot.slane %v2016, 5
      %v2019 = vsel %vm309, %v2014, %v2018
      %v2020 = vshrl.u32 %v286, 16
      %v2022 = vrot.slane %v2020, 4
      %v2023 = vor.u32 %v2022, %v2018
      %v2024 = vrot.slane %v2023, 4
      %v2026 = vshll.u32 %v287, 16
      %v2028 = vrot.slane %v2026, 5
      %v2029 = vsel %vm309, %v2024, %v2028
      %s2030 = scalar_lea.vmem %s1, 256
      %v2031 = vld [vmem:[%s2030] sm:$0xf]
      %v2032 = vld [vmem:[%s2030 + $0x4] sm:$0xf]
      %v2033 = vld [vmem:[%s2030 + $0x8] sm:$0xf]
      %v2034 = vld [vmem:[%s2030 + $0xc] sm:$0xf]
      %v2035 = vld [vmem:[%s2030 + $0x10] sm:$0xf]
      %v2036 = vld [vmem:[%s2030 + $0x14] sm:$0xf]
      %v2037 = vld [vmem:[%s2030 + $0x18] sm:$0xf]
      %v2038 = vld [vmem:[%s2030 + $0x1c] sm:$0xf]
      %v2039 = vld [vmem:[%s2030 + $0x20] sm:$0xf]
      %v2040 = vld [vmem:[%s2030 + $0x24] sm:$0xf]
      %v2041 = vld [vmem:[%s2030 + $0x28] sm:$0xf]
      %v2042 = vld [vmem:[%s2030 + $0x2c] sm:$0xf]
      %v2043 = vld [vmem:[%s2030 + $0x30] sm:$0xf]
      %v2044 = vld [vmem:[%s2030 + $0x34] sm:$0xf]
      %v2045 = vld [vmem:[%s2030 + $0x38] sm:$0xf]
      %v2046 = vld [vmem:[%s2030 + $0x3c] sm:$0xf]
      %v2047 = vunpack.c.l.b16 %v2019
      %v2048 = vunpack.c.l.b16 %v2029
      %v2049 = vpack.c.b16 %v2048, %v2047
      %v2067 = vunpack.c.l.b16 %v2031
      %v2068 = vunpack.c.l.b16 %v2032
      %v2069 = vunpack.c.l.b16 %v2033
      %v2070 = vunpack.c.l.b16 %v2034
      %v2071 = vunpack.c.l.b16 %v2035
      %v2072 = vunpack.c.l.b16 %v2036
      %v2073 = vunpack.c.l.b16 %v2037
      %v2074 = vunpack.c.l.b16 %v2038
      %v2075 = vunpack.c.l.b16 %v2039
      %v2076 = vunpack.c.l.b16 %v2040
      %v2077 = vunpack.c.l.b16 %v2041
      %v2078 = vunpack.c.l.b16 %v2042
      %v2079 = vunpack.c.l.b16 %v2043
      %v2080 = vunpack.c.l.b16 %v2044
      %v2081 = vunpack.c.l.b16 %v2045
      %v2082 = vunpack.c.l.b16 %v2046
      %v2083 = vpack.c.b16 %v2068, %v2067
      %v2084 = vpack.c.b16 %v2070, %v2069
      %v2085 = vpack.c.b16 %v2072, %v2071
      %v2086 = vpack.c.b16 %v2074, %v2073
      %v2087 = vpack.c.b16 %v2076, %v2075
      %v2088 = vpack.c.b16 %v2078, %v2077
      %v2089 = vpack.c.b16 %v2080, %v2079
      %v2090 = vpack.c.b16 %v2082, %v2081
      %2099 = vmatprep.subr.bf16.mxu0 0
      %2100 = vmatpush1.bf16.msra.mxu0 %v2090
      %2101 = vmatprep.subr.bf16.mxu0 0
      %2102 = vmatpush1.bf16.msra.mxu0 %v2089
      %2103 = vmatprep.subr.bf16.mxu0 0
      %2104 = vmatpush1.bf16.msra.mxu0 %v2088
      %2105 = vmatprep.subr.bf16.mxu0 0
      %2106 = vmatpush1.bf16.msra.mxu0 %v2087
      %2107 = vmatprep.subr.bf16.mxu0 0
      %2108 = vmatpush1.bf16.msra.mxu0 %v2086
      %2109 = vmatprep.subr.bf16.mxu0 0
      %2110 = vmatpush1.bf16.msra.mxu0 %v2085
      %2111 = vmatprep.subr.bf16.mxu0 0
      %2112 = vmatpush1.bf16.msra.mxu0 %v2084
      %2113 = vmatprep.subr.bf16.mxu0 0
      %2114 = vmatpush1.bf16.msra.mxu0 %v2083
      %2115 = vmatprep.subr.bf16.mxu0 0
      %2116 = vmatpush2.bf16.msra.mxu0 0
      %2117 = vmatprep.subr.bf16.mxu0 0
      %2118 = vmatpush2.bf16.msra.mxu0 0
      %2119 = vmatprep.subr.bf16.mxu0 0
      %2120 = vmatpush2.bf16.msra.mxu0 0
      %2121 = vmatprep.subr.bf16.mxu0 0
      %2122 = vmatpush2.bf16.msra.mxu0 0
      %2123 = vmatprep.subr.bf16.mxu0 0
      %2124 = vmatpush2.bf16.msra.mxu0 0
      %2125 = vmatprep.subr.bf16.mxu0 0
      %2126 = vmatpush2.bf16.msra.mxu0 0
      %2127 = vmatprep.subr.bf16.mxu0 0
      %2128 = vmatpush2.bf16.msra.mxu0 0
      %2129 = vmatprep.subr.bf16.mxu0 0
      %2130 = vmatpush2.bf16.msra.mxu0 0
      %2131 = vmatprep.mubr.bf16.mxu0 0
      %2132 = vmatmul.mubr.bf16.gmra.mxu0 %v744
      %v2133 = vpop.f32.mrf.mxu0
      %v2134 = vadd.f32 0.0, %v2133
      %v2135 = vpop.f32.mrf.mxu0
      %v2136 = vpop.f32.mrf.mxu0
      %v2137 = vadd.f32 0.0, %v2136
      %v2138 = vpop.f32.mrf.mxu0
      %2139 = vmatprep.mubr.bf16.mxu0 0
      %2140 = vmatmul.mubr.bf16.gmra.mxu0 %v745
      %v2141 = vpop.f32.mrf.mxu0
      %v2142 = vadd.f32 0.0, %v2141
      %v2143 = vpop.f32.mrf.mxu0
      %v2144 = vpop.f32.mrf.mxu0
      %v2145 = vadd.f32 0.0, %v2144
      %v2146 = vpop.f32.mrf.mxu0
      %2147 = vmatprep.mubr.bf16.mxu0 0
      %2148 = vmatmul.mubr.bf16.gmra.mxu0 %v746
      %v2149 = vpop.f32.mrf.mxu0
      %v2150 = vadd.f32 0.0, %v2149
      %v2151 = vpop.f32.mrf.mxu0
      %v2152 = vpop.f32.mrf.mxu0
      %v2153 = vadd.f32 0.0, %v2152
      %v2154 = vpop.f32.mrf.mxu0
      %2155 = vmatprep.mubr.bf16.mxu0 0
      %2156 = vmatmul.mubr.bf16.gmra.mxu0 %v747
      %v2157 = vpop.f32.mrf.mxu0
      %v2158 = vadd.f32 0.0, %v2157
      %v2159 = vpop.f32.mrf.mxu0
      %v2160 = vpop.f32.mrf.mxu0
      %v2161 = vadd.f32 0.0, %v2160
      %v2162 = vpop.f32.mrf.mxu0
      %2163 = vmatprep.mubr.bf16.mxu0 0
      %2164 = vmatmul.mubr.bf16.gmra.mxu0 %v748
      %v2165 = vpop.f32.mrf.mxu0
      %v2166 = vadd.f32 0.0, %v2165
      %v2167 = vpop.f32.mrf.mxu0
      %v2168 = vpop.f32.mrf.mxu0
      %v2169 = vadd.f32 0.0, %v2168
      %v2170 = vpop.f32.mrf.mxu0
      %2171 = vmatprep.mubr.bf16.mxu0 0
      %2172 = vmatmul.mubr.bf16.gmra.mxu0 %v749
      %v2173 = vpop.f32.mrf.mxu0
      %v2174 = vadd.f32 0.0, %v2173
      %v2175 = vpop.f32.mrf.mxu0
      %v2176 = vpop.f32.mrf.mxu0
      %v2177 = vadd.f32 0.0, %v2176
      %v2178 = vpop.f32.mrf.mxu0
      %2179 = vmatprep.mubr.bf16.mxu0 0
      %2180 = vmatmul.mubr.bf16.gmra.mxu0 %v750
      %v2181 = vpop.f32.mrf.mxu0
      %v2182 = vadd.f32 0.0, %v2181
      %v2183 = vpop.f32.mrf.mxu0
      %v2184 = vpop.f32.mrf.mxu0
      %v2185 = vadd.f32 0.0, %v2184
      %v2186 = vpop.f32.mrf.mxu0
      %2187 = vmatprep.mubr.bf16.mxu0 0
      %2188 = vmatmul.mubr.bf16.gmra.mxu0 %v751
      %v2189 = vpop.f32.mrf.mxu0
      %v2190 = vadd.f32 0.0, %v2189
      %v2191 = vpop.f32.mrf.mxu0
      %v2192 = vpop.f32.mrf.mxu0
      %v2193 = vadd.f32 0.0, %v2192
      %v2194 = vpop.f32.mrf.mxu0
      %2195 = vmatprep.mubr.bf16.mxu0 0
      %2196 = vmatmul.mubr.bf16.gmra.mxu0 %v752
      %v2197 = vpop.f32.mrf.mxu0
      %v2198 = vadd.f32 0.0, %v2197
      %v2199 = vpop.f32.mrf.mxu0
      %v2200 = vpop.f32.mrf.mxu0
      %v2201 = vadd.f32 0.0, %v2200
      %v2202 = vpop.f32.mrf.mxu0
      %2203 = vmatprep.mubr.bf16.mxu0 0
      %2204 = vmatmul.mubr.bf16.gmra.mxu0 %v753
      %v2205 = vpop.f32.mrf.mxu0
      %v2206 = vadd.f32 0.0, %v2205
      %v2207 = vpop.f32.mrf.mxu0
      %v2208 = vpop.f32.mrf.mxu0
      %v2209 = vadd.f32 0.0, %v2208
      %v2210 = vpop.f32.mrf.mxu0
      %2211 = vmatprep.mubr.bf16.mxu0 0
      %2212 = vmatmul.mubr.bf16.gmra.mxu0 %v754
      %v2213 = vpop.f32.mrf.mxu0
      %v2214 = vadd.f32 0.0, %v2213
      %v2215 = vpop.f32.mrf.mxu0
      %v2216 = vpop.f32.mrf.mxu0
      %v2217 = vadd.f32 0.0, %v2216
      %v2218 = vpop.f32.mrf.mxu0
      %2219 = vmatprep.mubr.bf16.mxu0 0
      %2220 = vmatmul.mubr.bf16.gmra.mxu0 %v755
      %v2221 = vpop.f32.mrf.mxu0
      %v2222 = vadd.f32 0.0, %v2221
      %v2223 = vpop.f32.mrf.mxu0
      %v2224 = vpop.f32.mrf.mxu0
      %v2225 = vadd.f32 0.0, %v2224
      %v2226 = vpop.f32.mrf.mxu0
      %2227 = vmatprep.mubr.bf16.mxu0 0
      %2228 = vmatmul.mubr.bf16.gmra.mxu0 %v756
      %v2229 = vpop.f32.mrf.mxu0
      %v2230 = vadd.f32 0.0, %v2229
      %v2231 = vpop.f32.mrf.mxu0
      %v2232 = vpop.f32.mrf.mxu0
      %v2233 = vadd.f32 0.0, %v2232
      %v2234 = vpop.f32.mrf.mxu0
      %2235 = vmatprep.mubr.bf16.mxu0 0
      %2236 = vmatmul.mubr.bf16.gmra.mxu0 %v757
      %v2237 = vpop.f32.mrf.mxu0
      %v2238 = vadd.f32 0.0, %v2237
      %v2239 = vpop.f32.mrf.mxu0
      %v2240 = vpop.f32.mrf.mxu0
      %v2241 = vadd.f32 0.0, %v2240
      %v2242 = vpop.f32.mrf.mxu0
      %2243 = vmatprep.mubr.bf16.mxu0 0
      %2244 = vmatmul.mubr.bf16.gmra.mxu0 %v758
      %v2245 = vpop.f32.mrf.mxu0
      %v2246 = vadd.f32 0.0, %v2245
      %v2247 = vpop.f32.mrf.mxu0
      %v2248 = vpop.f32.mrf.mxu0
      %v2249 = vadd.f32 0.0, %v2248
      %v2250 = vpop.f32.mrf.mxu0
      %2251 = vmatprep.mubr.bf16.mxu0 0
      %2252 = vmatmul.mubr.bf16.gmra.mxu0 %v2049
      %v2253 = vpop.f32.mrf.mxu0
      %v2254 = vadd.f32 0.0, %v2253
      %v2255 = vpop.f32.mrf.mxu0
      %v2256 = vpop.f32.mrf.mxu0
      %v2257 = vadd.f32 0.0, %v2256
      %v2258 = vpop.f32.mrf.mxu0
      %2259 = vdwg.mxu0
      %v2260 = vadd.f32 %v1974, %v2134
      %v2261 = vadd.f32 %v1975, %v2137
      %v2262 = vadd.f32 %v1976, %v2142
      %v2263 = vadd.f32 %v1977, %v2145
      %v2264 = vadd.f32 %v1978, %v2150
      %v2265 = vadd.f32 %v1979, %v2153
      %v2266 = vadd.f32 %v1980, %v2158
      %v2267 = vadd.f32 %v1981, %v2161
      %v2268 = vadd.f32 %v1982, %v2166
      %v2269 = vadd.f32 %v1983, %v2169
      %v2270 = vadd.f32 %v1984, %v2174
      %v2271 = vadd.f32 %v1985, %v2177
      %v2272 = vadd.f32 %v1986, %v2182
      %v2273 = vadd.f32 %v1987, %v2185
      %v2274 = vadd.f32 %v1988, %v2190
      %v2275 = vadd.f32 %v1989, %v2193
      %v2276 = vadd.f32 %v1990, %v2198
      %v2277 = vadd.f32 %v1991, %v2201
      %v2278 = vadd.f32 %v1992, %v2206
      %v2279 = vadd.f32 %v1993, %v2209
      %v2280 = vadd.f32 %v1994, %v2214
      %v2281 = vadd.f32 %v1995, %v2217
      %v2282 = vadd.f32 %v1996, %v2222
      %v2283 = vadd.f32 %v1997, %v2225
      %v2284 = vadd.f32 %v1998, %v2230
      %v2285 = vadd.f32 %v1999, %v2233
      %v2286 = vadd.f32 %v2000, %v2238
      %v2287 = vadd.f32 %v2001, %v2241
      %v2288 = vadd.f32 %v2002, %v2246
      %v2289 = vadd.f32 %v2003, %v2249
      %v2290 = vadd.f32 %v2004, %v2254
      %v2291 = vadd.f32 %v2005, %v2257
      %v2293 = vrot.slane %v285, 5
      %v2294 = vrot.slane %v2293, 4
      %v2295 = vrot.slane %v286, 5
      %v2296 = vsel %vm1307, %v2294, %v2295
      %v2297 = vrot.slane %v2295, 4
      %v2298 = vrot.slane %v287, 5
      %v2299 = vsel %vm1307, %v2297, %v2298
      %s2300 = scalar_lea.vmem %s1, 320
      %v2301 = vld [vmem:[%s2300] sm:$0xf]
      %v2302 = vld [vmem:[%s2300 + $0x4] sm:$0xf]
      %v2303 = vld [vmem:[%s2300 + $0x8] sm:$0xf]
      %v2304 = vld [vmem:[%s2300 + $0xc] sm:$0xf]
      %v2305 = vld [vmem:[%s2300 + $0x10] sm:$0xf]
      %v2306 = vld [vmem:[%s2300 + $0x14] sm:$0xf]
      %v2307 = vld [vmem:[%s2300 + $0x18] sm:$0xf]
      %v2308 = vld [vmem:[%s2300 + $0x1c] sm:$0xf]
      %v2309 = vld [vmem:[%s2300 + $0x20] sm:$0xf]
      %v2310 = vld [vmem:[%s2300 + $0x24] sm:$0xf]
      %v2311 = vld [vmem:[%s2300 + $0x28] sm:$0xf]
      %v2312 = vld [vmem:[%s2300 + $0x2c] sm:$0xf]
      %v2313 = vld [vmem:[%s2300 + $0x30] sm:$0xf]
      %v2314 = vld [vmem:[%s2300 + $0x34] sm:$0xf]
      %v2315 = vld [vmem:[%s2300 + $0x38] sm:$0xf]
      %v2316 = vld [vmem:[%s2300 + $0x3c] sm:$0xf]
      %v2317 = vunpack.c.l.b16 %v2296
      %v2318 = vunpack.c.l.b16 %v2299
      %v2319 = vpack.c.b16 %v2318, %v2317
      %v2337 = vunpack.c.l.b16 %v2301
      %v2338 = vunpack.c.l.b16 %v2302
      %v2339 = vunpack.c.l.b16 %v2303
      %v2340 = vunpack.c.l.b16 %v2304
      %v2341 = vunpack.c.l.b16 %v2305
      %v2342 = vunpack.c.l.b16 %v2306
      %v2343 = vunpack.c.l.b16 %v2307
      %v2344 = vunpack.c.l.b16 %v2308
      %v2345 = vunpack.c.l.b16 %v2309
      %v2346 = vunpack.c.l.b16 %v2310
      %v2347 = vunpack.c.l.b16 %v2311
      %v2348 = vunpack.c.l.b16 %v2312
      %v2349 = vunpack.c.l.b16 %v2313
      %v2350 = vunpack.c.l.b16 %v2314
      %v2351 = vunpack.c.l.b16 %v2315
      %v2352 = vunpack.c.l.b16 %v2316
      %v2353 = vpack.c.b16 %v2338, %v2337
      %v2354 = vpack.c.b16 %v2340, %v2339
      %v2355 = vpack.c.b16 %v2342, %v2341
      %v2356 = vpack.c.b16 %v2344, %v2343
      %v2357 = vpack.c.b16 %v2346, %v2345
      %v2358 = vpack.c.b16 %v2348, %v2347
      %v2359 = vpack.c.b16 %v2350, %v2349
      %v2360 = vpack.c.b16 %v2352, %v2351
      %2369 = vmatprep.subr.bf16.mxu0 0
      %2370 = vmatpush1.bf16.msra.mxu0 %v2360
      %2371 = vmatprep.subr.bf16.mxu0 0
      %2372 = vmatpush1.bf16.msra.mxu0 %v2359
      %2373 = vmatprep.subr.bf16.mxu0 0
      %2374 = vmatpush1.bf16.msra.mxu0 %v2358
      %2375 = vmatprep.subr.bf16.mxu0 0
      %2376 = vmatpush1.bf16.msra.mxu0 %v2357
      %2377 = vmatprep.subr.bf16.mxu0 0
      %2378 = vmatpush1.bf16.msra.mxu0 %v2356
      %2379 = vmatprep.subr.bf16.mxu0 0
      %2380 = vmatpush1.bf16.msra.mxu0 %v2355
      %2381 = vmatprep.subr.bf16.mxu0 0
      %2382 = vmatpush1.bf16.msra.mxu0 %v2354
      %2383 = vmatprep.subr.bf16.mxu0 0
      %2384 = vmatpush1.bf16.msra.mxu0 %v2353
      %2385 = vmatprep.subr.bf16.mxu0 0
      %2386 = vmatpush2.bf16.msra.mxu0 0
      %2387 = vmatprep.subr.bf16.mxu0 0
      %2388 = vmatpush2.bf16.msra.mxu0 0
      %2389 = vmatprep.subr.bf16.mxu0 0
      %2390 = vmatpush2.bf16.msra.mxu0 0
      %2391 = vmatprep.subr.bf16.mxu0 0
      %2392 = vmatpush2.bf16.msra.mxu0 0
      %2393 = vmatprep.subr.bf16.mxu0 0
      %2394 = vmatpush2.bf16.msra.mxu0 0
      %2395 = vmatprep.subr.bf16.mxu0 0
      %2396 = vmatpush2.bf16.msra.mxu0 0
      %2397 = vmatprep.subr.bf16.mxu0 0
      %2398 = vmatpush2.bf16.msra.mxu0 0
      %2399 = vmatprep.subr.bf16.mxu0 0
      %2400 = vmatpush2.bf16.msra.mxu0 0
      %2401 = vmatprep.mubr.bf16.mxu0 0
      %2402 = vmatmul.mubr.bf16.gmra.mxu0 %v1470
      %v2403 = vpop.f32.mrf.mxu0
      %v2404 = vadd.f32 0.0, %v2403
      %v2405 = vpop.f32.mrf.mxu0
      %v2406 = vpop.f32.mrf.mxu0
      %v2407 = vadd.f32 0.0, %v2406
      %v2408 = vpop.f32.mrf.mxu0
      %2409 = vmatprep.mubr.bf16.mxu0 0
      %2410 = vmatmul.mubr.bf16.gmra.mxu0 %v1471
      %v2411 = vpop.f32.mrf.mxu0
      %v2412 = vadd.f32 0.0, %v2411
      %v2413 = vpop.f32.mrf.mxu0
      %v2414 = vpop.f32.mrf.mxu0
      %v2415 = vadd.f32 0.0, %v2414
      %v2416 = vpop.f32.mrf.mxu0
      %2417 = vmatprep.mubr.bf16.mxu0 0
      %2418 = vmatmul.mubr.bf16.gmra.mxu0 %v1472
      %v2419 = vpop.f32.mrf.mxu0
      %v2420 = vadd.f32 0.0, %v2419
      %v2421 = vpop.f32.mrf.mxu0
      %v2422 = vpop.f32.mrf.mxu0
      %v2423 = vadd.f32 0.0, %v2422
      %v2424 = vpop.f32.mrf.mxu0
      %2425 = vmatprep.mubr.bf16.mxu0 0
      %2426 = vmatmul.mubr.bf16.gmra.mxu0 %v1473
      %v2427 = vpop.f32.mrf.mxu0
      %v2428 = vadd.f32 0.0, %v2427
      %v2429 = vpop.f32.mrf.mxu0
      %v2430 = vpop.f32.mrf.mxu0
      %v2431 = vadd.f32 0.0, %v2430
      %v2432 = vpop.f32.mrf.mxu0
      %2433 = vmatprep.mubr.bf16.mxu0 0
      %2434 = vmatmul.mubr.bf16.gmra.mxu0 %v1474
      %v2435 = vpop.f32.mrf.mxu0
      %v2436 = vadd.f32 0.0, %v2435
      %v2437 = vpop.f32.mrf.mxu0
      %v2438 = vpop.f32.mrf.mxu0
      %v2439 = vadd.f32 0.0, %v2438
      %v2440 = vpop.f32.mrf.mxu0
      %2441 = vmatprep.mubr.bf16.mxu0 0
      %2442 = vmatmul.mubr.bf16.gmra.mxu0 %v1475
      %v2443 = vpop.f32.mrf.mxu0
      %v2444 = vadd.f32 0.0, %v2443
      %v2445 = vpop.f32.mrf.mxu0
      %v2446 = vpop.f32.mrf.mxu0
      %v2447 = vadd.f32 0.0, %v2446
      %v2448 = vpop.f32.mrf.mxu0
      %2449 = vmatprep.mubr.bf16.mxu0 0
      %2450 = vmatmul.mubr.bf16.gmra.mxu0 %v1476
      %v2451 = vpop.f32.mrf.mxu0
      %v2452 = vadd.f32 0.0, %v2451
      %v2453 = vpop.f32.mrf.mxu0
      %v2454 = vpop.f32.mrf.mxu0
      %v2455 = vadd.f32 0.0, %v2454
      %v2456 = vpop.f32.mrf.mxu0
      %2457 = vmatprep.mubr.bf16.mxu0 0
      %2458 = vmatmul.mubr.bf16.gmra.mxu0 %v1477
      %v2459 = vpop.f32.mrf.mxu0
      %v2460 = vadd.f32 0.0, %v2459
      %v2461 = vpop.f32.mrf.mxu0
      %v2462 = vpop.f32.mrf.mxu0
      %v2463 = vadd.f32 0.0, %v2462
      %v2464 = vpop.f32.mrf.mxu0
      %2465 = vmatprep.mubr.bf16.mxu0 0
      %2466 = vmatmul.mubr.bf16.gmra.mxu0 %v1478
      %v2467 = vpop.f32.mrf.mxu0
      %v2468 = vadd.f32 0.0, %v2467
      %v2469 = vpop.f32.mrf.mxu0
      %v2470 = vpop.f32.mrf.mxu0
      %v2471 = vadd.f32 0.0, %v2470
      %v2472 = vpop.f32.mrf.mxu0
      %2473 = vmatprep.mubr.bf16.mxu0 0
      %2474 = vmatmul.mubr.bf16.gmra.mxu0 %v1479
      %v2475 = vpop.f32.mrf.mxu0
      %v2476 = vadd.f32 0.0, %v2475
      %v2477 = vpop.f32.mrf.mxu0
      %v2478 = vpop.f32.mrf.mxu0
      %v2479 = vadd.f32 0.0, %v2478
      %v2480 = vpop.f32.mrf.mxu0
      %2481 = vmatprep.mubr.bf16.mxu0 0
      %2482 = vmatmul.mubr.bf16.gmra.mxu0 %v1480
      %v2483 = vpop.f32.mrf.mxu0
      %v2484 = vadd.f32 0.0, %v2483
      %v2485 = vpop.f32.mrf.mxu0
      %v2486 = vpop.f32.mrf.mxu0
      %v2487 = vadd.f32 0.0, %v2486
      %v2488 = vpop.f32.mrf.mxu0
      %2489 = vmatprep.mubr.bf16.mxu0 0
      %2490 = vmatmul.mubr.bf16.gmra.mxu0 %v1481
      %v2491 = vpop.f32.mrf.mxu0
      %v2492 = vadd.f32 0.0, %v2491
      %v2493 = vpop.f32.mrf.mxu0
      %v2494 = vpop.f32.mrf.mxu0
      %v2495 = vadd.f32 0.0, %v2494
      %v2496 = vpop.f32.mrf.mxu0
      %2497 = vmatprep.mubr.bf16.mxu0 0
      %2498 = vmatmul.mubr.bf16.gmra.mxu0 %v1482
      %v2499 = vpop.f32.mrf.mxu0
      %v2500 = vadd.f32 0.0, %v2499
      %v2501 = vpop.f32.mrf.mxu0
      %v2502 = vpop.f32.mrf.mxu0
      %v2503 = vadd.f32 0.0, %v2502
      %v2504 = vpop.f32.mrf.mxu0
      %2505 = vmatprep.mubr.bf16.mxu0 0
      %2506 = vmatmul.mubr.bf16.gmra.mxu0 %v1483
      %v2507 = vpop.f32.mrf.mxu0
      %v2508 = vadd.f32 0.0, %v2507
      %v2509 = vpop.f32.mrf.mxu0
      %v2510 = vpop.f32.mrf.mxu0
      %v2511 = vadd.f32 0.0, %v2510
      %v2512 = vpop.f32.mrf.mxu0
      %2513 = vmatprep.mubr.bf16.mxu0 0
      %2514 = vmatmul.mubr.bf16.gmra.mxu0 %v1484
      %v2515 = vpop.f32.mrf.mxu0
      %v2516 = vadd.f32 0.0, %v2515
      %v2517 = vpop.f32.mrf.mxu0
      %v2518 = vpop.f32.mrf.mxu0
      %v2519 = vadd.f32 0.0, %v2518
      %v2520 = vpop.f32.mrf.mxu0
      %2521 = vmatprep.mubr.bf16.mxu0 0
      %2522 = vmatmul.mubr.bf16.gmra.mxu0 %v2319
      %v2523 = vpop.f32.mrf.mxu0
      %v2524 = vadd.f32 0.0, %v2523
      %v2525 = vpop.f32.mrf.mxu0
      %v2526 = vpop.f32.mrf.mxu0
      %v2527 = vadd.f32 0.0, %v2526
      %v2528 = vpop.f32.mrf.mxu0
      %2529 = vdwg.mxu0
      %v2530 = vadd.f32 %v2260, %v2404
      %v2531 = vadd.f32 %v2261, %v2407
      %v2532 = vadd.f32 %v2262, %v2412
      %v2533 = vadd.f32 %v2263, %v2415
      %v2534 = vadd.f32 %v2264, %v2420
      %v2535 = vadd.f32 %v2265, %v2423
      %v2536 = vadd.f32 %v2266, %v2428
      %v2537 = vadd.f32 %v2267, %v2431
      %v2538 = vadd.f32 %v2268, %v2436
      %v2539 = vadd.f32 %v2269, %v2439
      %v2540 = vadd.f32 %v2270, %v2444
      %v2541 = vadd.f32 %v2271, %v2447
      %v2542 = vadd.f32 %v2272, %v2452
      %v2543 = vadd.f32 %v2273, %v2455
      %v2544 = vadd.f32 %v2274, %v2460
      %v2545 = vadd.f32 %v2275, %v2463
      %v2546 = vadd.f32 %v2276, %v2468
      %v2547 = vadd.f32 %v2277, %v2471
      %v2548 = vadd.f32 %v2278, %v2476
      %v2549 = vadd.f32 %v2279, %v2479
      %v2550 = vadd.f32 %v2280, %v2484
      %v2551 = vadd.f32 %v2281, %v2487
      %v2552 = vadd.f32 %v2282, %v2492
      %v2553 = vadd.f32 %v2283, %v2495
      %v2554 = vadd.f32 %v2284, %v2500
      %v2555 = vadd.f32 %v2285, %v2503
      %v2556 = vadd.f32 %v2286, %v2508
      %v2557 = vadd.f32 %v2287, %v2511
      %v2558 = vadd.f32 %v2288, %v2516
      %v2559 = vadd.f32 %v2289, %v2519
      %v2560 = vadd.f32 %v2290, %v2524
      %v2561 = vadd.f32 %v2291, %v2527
      %s2562 = scalar_lea.vmem %s1, 384
      %v2563 = vld [vmem:[%s2562] sm:$0xf]
      %v2564 = vld [vmem:[%s2562 + $0x4] sm:$0xf]
      %v2565 = vld [vmem:[%s2562 + $0x8] sm:$0xf]
      %v2566 = vld [vmem:[%s2562 + $0xc] sm:$0xf]
      %v2567 = vld [vmem:[%s2562 + $0x10] sm:$0xf]
      %v2568 = vld [vmem:[%s2562 + $0x14] sm:$0xf]
      %v2569 = vld [vmem:[%s2562 + $0x18] sm:$0xf]
      %v2570 = vld [vmem:[%s2562 + $0x1c] sm:$0xf]
      %v2571 = vld [vmem:[%s2562 + $0x20] sm:$0xf]
      %v2572 = vld [vmem:[%s2562 + $0x24] sm:$0xf]
      %v2573 = vld [vmem:[%s2562 + $0x28] sm:$0xf]
      %v2574 = vld [vmem:[%s2562 + $0x2c] sm:$0xf]
      %v2575 = vld [vmem:[%s2562 + $0x30] sm:$0xf]
      %v2576 = vld [vmem:[%s2562 + $0x34] sm:$0xf]
      %v2577 = vld [vmem:[%s2562 + $0x38] sm:$0xf]
      %v2578 = vld [vmem:[%s2562 + $0x3c] sm:$0xf]
      %v2581 = vunpack.c.l.b16 %v288
      %v2582 = vunpack.c.l.b16 %v289
      %v2583 = vpack.c.b16 %v2582, %v2581
      %v2601 = vunpack.c.l.b16 %v2563
      %v2602 = vunpack.c.l.b16 %v2564
      %v2603 = vunpack.c.l.b16 %v2565
      %v2604 = vunpack.c.l.b16 %v2566
      %v2605 = vunpack.c.l.b16 %v2567
      %v2606 = vunpack.c.l.b16 %v2568
      %v2607 = vunpack.c.l.b16 %v2569
      %v2608 = vunpack.c.l.b16 %v2570
      %v2609 = vunpack.c.l.b16 %v2571
      %v2610 = vunpack.c.l.b16 %v2572
      %v2611 = vunpack.c.l.b16 %v2573
      %v2612 = vunpack.c.l.b16 %v2574
      %v2613 = vunpack.c.l.b16 %v2575
      %v2614 = vunpack.c.l.b16 %v2576
      %v2615 = vunpack.c.l.b16 %v2577
      %v2616 = vunpack.c.l.b16 %v2578
      %v2617 = vpack.c.b16 %v2602, %v2601
      %v2618 = vpack.c.b16 %v2604, %v2603
      %v2619 = vpack.c.b16 %v2606, %v2605
      %v2620 = vpack.c.b16 %v2608, %v2607
      %v2621 = vpack.c.b16 %v2610, %v2609
      %v2622 = vpack.c.b16 %v2612, %v2611
      %v2623 = vpack.c.b16 %v2614, %v2613
      %v2624 = vpack.c.b16 %v2616, %v2615
      %2633 = vmatprep.subr.bf16.mxu0 0
      %2634 = vmatpush1.bf16.msra.mxu0 %v2624
      %2635 = vmatprep.subr.bf16.mxu0 0
      %2636 = vmatpush1.bf16.msra.mxu0 %v2623
      %2637 = vmatprep.subr.bf16.mxu0 0
      %2638 = vmatpush1.bf16.msra.mxu0 %v2622
      %2639 = vmatprep.subr.bf16.mxu0 0
      %2640 = vmatpush1.bf16.msra.mxu0 %v2621
      %2641 = vmatprep.subr.bf16.mxu0 0
      %2642 = vmatpush1.bf16.msra.mxu0 %v2620
      %2643 = vmatprep.subr.bf16.mxu0 0
      %2644 = vmatpush1.bf16.msra.mxu0 %v2619
      %2645 = vmatprep.subr.bf16.mxu0 0
      %2646 = vmatpush1.bf16.msra.mxu0 %v2618
      %2647 = vmatprep.subr.bf16.mxu0 0
      %2648 = vmatpush1.bf16.msra.mxu0 %v2617
      %2649 = vmatprep.subr.bf16.mxu0 0
      %2650 = vmatpush2.bf16.msra.mxu0 0
      %2651 = vmatprep.subr.bf16.mxu0 0
      %2652 = vmatpush2.bf16.msra.mxu0 0
      %2653 = vmatprep.subr.bf16.mxu0 0
      %2654 = vmatpush2.bf16.msra.mxu0 0
      %2655 = vmatprep.subr.bf16.mxu0 0
      %2656 = vmatpush2.bf16.msra.mxu0 0
      %2657 = vmatprep.subr.bf16.mxu0 0
      %2658 = vmatpush2.bf16.msra.mxu0 0
      %2659 = vmatprep.subr.bf16.mxu0 0
      %2660 = vmatpush2.bf16.msra.mxu0 0
      %2661 = vmatprep.subr.bf16.mxu0 0
      %2662 = vmatpush2.bf16.msra.mxu0 0
      %2663 = vmatprep.subr.bf16.mxu0 0
      %2664 = vmatpush2.bf16.msra.mxu0 0
      %2665 = vmatprep.mubr.bf16.mxu0 0
      %2666 = vmatmul.mubr.bf16.gmra.mxu0 %v1050
      %v2667 = vpop.f32.mrf.mxu0
      %v2668 = vadd.f32 0.0, %v2667
      %v2669 = vpop.f32.mrf.mxu0
      %v2670 = vpop.f32.mrf.mxu0
      %v2671 = vadd.f32 0.0, %v2670
      %v2672 = vpop.f32.mrf.mxu0
      %2673 = vmatprep.mubr.bf16.mxu0 0
      %2674 = vmatmul.mubr.bf16.gmra.mxu0 %v1051
      %v2675 = vpop.f32.mrf.mxu0
      %v2676 = vadd.f32 0.0, %v2675
      %v2677 = vpop.f32.mrf.mxu0
      %v2678 = vpop.f32.mrf.mxu0
      %v2679 = vadd.f32 0.0, %v2678
      %v2680 = vpop.f32.mrf.mxu0
      %2681 = vmatprep.mubr.bf16.mxu0 0
      %2682 = vmatmul.mubr.bf16.gmra.mxu0 %v1052
      %v2683 = vpop.f32.mrf.mxu0
      %v2684 = vadd.f32 0.0, %v2683
      %v2685 = vpop.f32.mrf.mxu0
      %v2686 = vpop.f32.mrf.mxu0
      %v2687 = vadd.f32 0.0, %v2686
      %v2688 = vpop.f32.mrf.mxu0
      %2689 = vmatprep.mubr.bf16.mxu0 0
      %2690 = vmatmul.mubr.bf16.gmra.mxu0 %v1053
      %v2691 = vpop.f32.mrf.mxu0
      %v2692 = vadd.f32 0.0, %v2691
      %v2693 = vpop.f32.mrf.mxu0
      %v2694 = vpop.f32.mrf.mxu0
      %v2695 = vadd.f32 0.0, %v2694
      %v2696 = vpop.f32.mrf.mxu0
      %2697 = vmatprep.mubr.bf16.mxu0 0
      %2698 = vmatmul.mubr.bf16.gmra.mxu0 %v1054
      %v2699 = vpop.f32.mrf.mxu0
      %v2700 = vadd.f32 0.0, %v2699
      %v2701 = vpop.f32.mrf.mxu0
      %v2702 = vpop.f32.mrf.mxu0
      %v2703 = vadd.f32 0.0, %v2702
      %v2704 = vpop.f32.mrf.mxu0
      %2705 = vmatprep.mubr.bf16.mxu0 0
      %2706 = vmatmul.mubr.bf16.gmra.mxu0 %v1055
      %v2707 = vpop.f32.mrf.mxu0
      %v2708 = vadd.f32 0.0, %v2707
      %v2709 = vpop.f32.mrf.mxu0
      %v2710 = vpop.f32.mrf.mxu0
      %v2711 = vadd.f32 0.0, %v2710
      %v2712 = vpop.f32.mrf.mxu0
      %2713 = vmatprep.mubr.bf16.mxu0 0
      %2714 = vmatmul.mubr.bf16.gmra.mxu0 %v1056
      %v2715 = vpop.f32.mrf.mxu0
      %v2716 = vadd.f32 0.0, %v2715
      %v2717 = vpop.f32.mrf.mxu0
      %v2718 = vpop.f32.mrf.mxu0
      %v2719 = vadd.f32 0.0, %v2718
      %v2720 = vpop.f32.mrf.mxu0
      %2721 = vmatprep.mubr.bf16.mxu0 0
      %2722 = vmatmul.mubr.bf16.gmra.mxu0 %v1057
      %v2723 = vpop.f32.mrf.mxu0
      %v2724 = vadd.f32 0.0, %v2723
      %v2725 = vpop.f32.mrf.mxu0
      %v2726 = vpop.f32.mrf.mxu0
      %v2727 = vadd.f32 0.0, %v2726
      %v2728 = vpop.f32.mrf.mxu0
      %2729 = vmatprep.mubr.bf16.mxu0 0
      %2730 = vmatmul.mubr.bf16.gmra.mxu0 %v1058
      %v2731 = vpop.f32.mrf.mxu0
      %v2732 = vadd.f32 0.0, %v2731
      %v2733 = vpop.f32.mrf.mxu0
      %v2734 = vpop.f32.mrf.mxu0
      %v2735 = vadd.f32 0.0, %v2734
      %v2736 = vpop.f32.mrf.mxu0
      %2737 = vmatprep.mubr.bf16.mxu0 0
      %2738 = vmatmul.mubr.bf16.gmra.mxu0 %v1059
      %v2739 = vpop.f32.mrf.mxu0
      %v2740 = vadd.f32 0.0, %v2739
      %v2741 = vpop.f32.mrf.mxu0
      %v2742 = vpop.f32.mrf.mxu0
      %v2743 = vadd.f32 0.0, %v2742
      %v2744 = vpop.f32.mrf.mxu0
      %2745 = vmatprep.mubr.bf16.mxu0 0
      %2746 = vmatmul.mubr.bf16.gmra.mxu0 %v1060
      %v2747 = vpop.f32.mrf.mxu0
      %v2748 = vadd.f32 0.0, %v2747
      %v2749 = vpop.f32.mrf.mxu0
      %v2750 = vpop.f32.mrf.mxu0
      %v2751 = vadd.f32 0.0, %v2750
      %v2752 = vpop.f32.mrf.mxu0
      %2753 = vmatprep.mubr.bf16.mxu0 0
      %2754 = vmatmul.mubr.bf16.gmra.mxu0 %v1061
      %v2755 = vpop.f32.mrf.mxu0
      %v2756 = vadd.f32 0.0, %v2755
      %v2757 = vpop.f32.mrf.mxu0
      %v2758 = vpop.f32.mrf.mxu0
      %v2759 = vadd.f32 0.0, %v2758
      %v2760 = vpop.f32.mrf.mxu0
      %2761 = vmatprep.mubr.bf16.mxu0 0
      %2762 = vmatmul.mubr.bf16.gmra.mxu0 %v1062
      %v2763 = vpop.f32.mrf.mxu0
      %v2764 = vadd.f32 0.0, %v2763
      %v2765 = vpop.f32.mrf.mxu0
      %v2766 = vpop.f32.mrf.mxu0
      %v2767 = vadd.f32 0.0, %v2766
      %v2768 = vpop.f32.mrf.mxu0
      %2769 = vmatprep.mubr.bf16.mxu0 0
      %2770 = vmatmul.mubr.bf16.gmra.mxu0 %v1063
      %v2771 = vpop.f32.mrf.mxu0
      %v2772 = vadd.f32 0.0, %v2771
      %v2773 = vpop.f32.mrf.mxu0
      %v2774 = vpop.f32.mrf.mxu0
      %v2775 = vadd.f32 0.0, %v2774
      %v2776 = vpop.f32.mrf.mxu0
      %2777 = vmatprep.mubr.bf16.mxu0 0
      %2778 = vmatmul.mubr.bf16.gmra.mxu0 %v1763
      %v2779 = vpop.f32.mrf.mxu0
      %v2780 = vadd.f32 0.0, %v2779
      %v2781 = vpop.f32.mrf.mxu0
      %v2782 = vpop.f32.mrf.mxu0
      %v2783 = vadd.f32 0.0, %v2782
      %v2784 = vpop.f32.mrf.mxu0
      %2785 = vmatprep.mubr.bf16.mxu0 0
      %2786 = vmatmul.mubr.bf16.gmra.mxu0 %v2583
      %v2787 = vpop.f32.mrf.mxu0
      %v2788 = vadd.f32 0.0, %v2787
      %v2789 = vpop.f32.mrf.mxu0
      %v2790 = vpop.f32.mrf.mxu0
      %v2791 = vadd.f32 0.0, %v2790
      %v2792 = vpop.f32.mrf.mxu0
      %2793 = vdwg.mxu0
      %v2794 = vadd.f32 %v2530, %v2668
      %v2795 = vadd.f32 %v2531, %v2671
      %v2796 = vadd.f32 %v2532, %v2676
      %v2797 = vadd.f32 %v2533, %v2679
      %v2798 = vadd.f32 %v2534, %v2684
      %v2799 = vadd.f32 %v2535, %v2687
      %v2800 = vadd.f32 %v2536, %v2692
      %v2801 = vadd.f32 %v2537, %v2695
      %v2802 = vadd.f32 %v2538, %v2700
      %v2803 = vadd.f32 %v2539, %v2703
      %v2804 = vadd.f32 %v2540, %v2708
      %v2805 = vadd.f32 %v2541, %v2711
      %v2806 = vadd.f32 %v2542, %v2716
      %v2807 = vadd.f32 %v2543, %v2719
      %v2808 = vadd.f32 %v2544, %v2724
      %v2809 = vadd.f32 %v2545, %v2727
      %v2810 = vadd.f32 %v2546, %v2732
      %v2811 = vadd.f32 %v2547, %v2735
      %v2812 = vadd.f32 %v2548, %v2740
      %v2813 = vadd.f32 %v2549, %v2743
      %v2814 = vadd.f32 %v2550, %v2748
      %v2815 = vadd.f32 %v2551, %v2751
      %v2816 = vadd.f32 %v2552, %v2756
      %v2817 = vadd.f32 %v2553, %v2759
      %v2818 = vadd.f32 %v2554, %v2764
      %v2819 = vadd.f32 %v2555, %v2767
      %v2820 = vadd.f32 %v2556, %v2772
      %v2821 = vadd.f32 %v2557, %v2775
      %v2822 = vadd.f32 %v2558, %v2780
      %v2823 = vadd.f32 %v2559, %v2783
      %v2824 = vadd.f32 %v2560, %v2788
      %v2825 = vadd.f32 %v2561, %v2791
      %v2827 = vshrl.u32 %v288, 16
      %v2829 = vrot.slane %v2827, 4
      %v2830 = vshll.u32 %v288, 16
      %v2832 = vrot.slane %v2830, 5
      %v2833 = vor.u32 %v2829, %v2832
      %v2834 = vrot.slane %v2833, 4
      %v2836 = vshll.u32 %v289, 16
      %v2838 = vrot.slane %v2836, 5
      %v2839 = vsel %vm309, %v2834, %v2838
      %v2840 = vshrl.u32 %v289, 16
      %v2842 = vrot.slane %v2840, 4
      %v2843 = vor.u32 %v2842, %v2838
      %v2844 = vrot.slane %v2843, 4
      %v2846 = vshll.u32 %v290, 16
      %v2848 = vrot.slane %v2846, 5
      %v2849 = vsel %vm309, %v2844, %v2848
      %s2850 = scalar_lea.vmem %s1, 448
      %v2851 = vld [vmem:[%s2850] sm:$0xf]
      %v2852 = vld [vmem:[%s2850 + $0x4] sm:$0xf]
      %v2853 = vld [vmem:[%s2850 + $0x8] sm:$0xf]
      %v2854 = vld [vmem:[%s2850 + $0xc] sm:$0xf]
      %v2855 = vld [vmem:[%s2850 + $0x10] sm:$0xf]
      %v2856 = vld [vmem:[%s2850 + $0x14] sm:$0xf]
      %v2857 = vld [vmem:[%s2850 + $0x18] sm:$0xf]
      %v2858 = vld [vmem:[%s2850 + $0x1c] sm:$0xf]
      %v2859 = vld [vmem:[%s2850 + $0x20] sm:$0xf]
      %v2860 = vld [vmem:[%s2850 + $0x24] sm:$0xf]
      %v2861 = vld [vmem:[%s2850 + $0x28] sm:$0xf]
      %v2862 = vld [vmem:[%s2850 + $0x2c] sm:$0xf]
      %v2863 = vld [vmem:[%s2850 + $0x30] sm:$0xf]
      %v2864 = vld [vmem:[%s2850 + $0x34] sm:$0xf]
      %v2865 = vld [vmem:[%s2850 + $0x38] sm:$0xf]
      %v2866 = vld [vmem:[%s2850 + $0x3c] sm:$0xf]
      %v2867 = vunpack.c.l.b16 %v2839
      %v2868 = vunpack.c.l.b16 %v2849
      %v2869 = vpack.c.b16 %v2868, %v2867
      %v2887 = vunpack.c.l.b16 %v2851
      %v2888 = vunpack.c.l.b16 %v2852
      %v2889 = vunpack.c.l.b16 %v2853
      %v2890 = vunpack.c.l.b16 %v2854
      %v2891 = vunpack.c.l.b16 %v2855
      %v2892 = vunpack.c.l.b16 %v2856
      %v2893 = vunpack.c.l.b16 %v2857
      %v2894 = vunpack.c.l.b16 %v2858
      %v2895 = vunpack.c.l.b16 %v2859
      %v2896 = vunpack.c.l.b16 %v2860
      %v2897 = vunpack.c.l.b16 %v2861
      %v2898 = vunpack.c.l.b16 %v2862
      %v2899 = vunpack.c.l.b16 %v2863
      %v2900 = vunpack.c.l.b16 %v2864
      %v2901 = vunpack.c.l.b16 %v2865
      %v2902 = vunpack.c.l.b16 %v2866
      %v2903 = vpack.c.b16 %v2888, %v2887
      %v2904 = vpack.c.b16 %v2890, %v2889
      %v2905 = vpack.c.b16 %v2892, %v2891
      %v2906 = vpack.c.b16 %v2894, %v2893
      %v2907 = vpack.c.b16 %v2896, %v2895
      %v2908 = vpack.c.b16 %v2898, %v2897
      %v2909 = vpack.c.b16 %v2900, %v2899
      %v2910 = vpack.c.b16 %v2902, %v2901
      %2919 = vmatprep.subr.bf16.mxu0 0
      %2920 = vmatpush1.bf16.msra.mxu0 %v2910
      %2921 = vmatprep.subr.bf16.mxu0 0
      %2922 = vmatpush1.bf16.msra.mxu0 %v2909
      %2923 = vmatprep.subr.bf16.mxu0 0
      %2924 = vmatpush1.bf16.msra.mxu0 %v2908
      %2925 = vmatprep.subr.bf16.mxu0 0
      %2926 = vmatpush1.bf16.msra.mxu0 %v2907
      %2927 = vmatprep.subr.bf16.mxu0 0
      %2928 = vmatpush1.bf16.msra.mxu0 %v2906
      %2929 = vmatprep.subr.bf16.mxu0 0
      %2930 = vmatpush1.bf16.msra.mxu0 %v2905
      %2931 = vmatprep.subr.bf16.mxu0 0
      %2932 = vmatpush1.bf16.msra.mxu0 %v2904
      %2933 = vmatprep.subr.bf16.mxu0 0
      %2934 = vmatpush1.bf16.msra.mxu0 %v2903
      %2935 = vmatprep.subr.bf16.mxu0 0
      %2936 = vmatpush2.bf16.msra.mxu0 0
      %2937 = vmatprep.subr.bf16.mxu0 0
      %2938 = vmatpush2.bf16.msra.mxu0 0
      %2939 = vmatprep.subr.bf16.mxu0 0
      %2940 = vmatpush2.bf16.msra.mxu0 0
      %2941 = vmatprep.subr.bf16.mxu0 0
      %2942 = vmatpush2.bf16.msra.mxu0 0
      %2943 = vmatprep.subr.bf16.mxu0 0
      %2944 = vmatpush2.bf16.msra.mxu0 0
      %2945 = vmatprep.subr.bf16.mxu0 0
      %2946 = vmatpush2.bf16.msra.mxu0 0
      %2947 = vmatprep.subr.bf16.mxu0 0
      %2948 = vmatpush2.bf16.msra.mxu0 0
      %2949 = vmatprep.subr.bf16.mxu0 0
      %2950 = vmatpush2.bf16.msra.mxu0 0
      %2951 = vmatprep.mubr.bf16.mxu0 0
      %2952 = vmatmul.mubr.bf16.gmra.mxu0 %v745
      %v2953 = vpop.f32.mrf.mxu0
      %v2954 = vadd.f32 0.0, %v2953
      %v2955 = vpop.f32.mrf.mxu0
      %v2956 = vpop.f32.mrf.mxu0
      %v2957 = vadd.f32 0.0, %v2956
      %v2958 = vpop.f32.mrf.mxu0
      %2959 = vmatprep.mubr.bf16.mxu0 0
      %2960 = vmatmul.mubr.bf16.gmra.mxu0 %v746
      %v2961 = vpop.f32.mrf.mxu0
      %v2962 = vadd.f32 0.0, %v2961
      %v2963 = vpop.f32.mrf.mxu0
      %v2964 = vpop.f32.mrf.mxu0
      %v2965 = vadd.f32 0.0, %v2964
      %v2966 = vpop.f32.mrf.mxu0
      %2967 = vmatprep.mubr.bf16.mxu0 0
      %2968 = vmatmul.mubr.bf16.gmra.mxu0 %v747
      %v2969 = vpop.f32.mrf.mxu0
      %v2970 = vadd.f32 0.0, %v2969
      %v2971 = vpop.f32.mrf.mxu0
      %v2972 = vpop.f32.mrf.mxu0
      %v2973 = vadd.f32 0.0, %v2972
      %v2974 = vpop.f32.mrf.mxu0
      %2975 = vmatprep.mubr.bf16.mxu0 0
      %2976 = vmatmul.mubr.bf16.gmra.mxu0 %v748
      %v2977 = vpop.f32.mrf.mxu0
      %v2978 = vadd.f32 0.0, %v2977
      %v2979 = vpop.f32.mrf.mxu0
      %v2980 = vpop.f32.mrf.mxu0
      %v2981 = vadd.f32 0.0, %v2980
      %v2982 = vpop.f32.mrf.mxu0
      %2983 = vmatprep.mubr.bf16.mxu0 0
      %2984 = vmatmul.mubr.bf16.gmra.mxu0 %v749
      %v2985 = vpop.f32.mrf.mxu0
      %v2986 = vadd.f32 0.0, %v2985
      %v2987 = vpop.f32.mrf.mxu0
      %v2988 = vpop.f32.mrf.mxu0
      %v2989 = vadd.f32 0.0, %v2988
      %v2990 = vpop.f32.mrf.mxu0
      %2991 = vmatprep.mubr.bf16.mxu0 0
      %2992 = vmatmul.mubr.bf16.gmra.mxu0 %v750
      %v2993 = vpop.f32.mrf.mxu0
      %v2994 = vadd.f32 0.0, %v2993
      %v2995 = vpop.f32.mrf.mxu0
      %v2996 = vpop.f32.mrf.mxu0
      %v2997 = vadd.f32 0.0, %v2996
      %v2998 = vpop.f32.mrf.mxu0
      %2999 = vmatprep.mubr.bf16.mxu0 0
      %3000 = vmatmul.mubr.bf16.gmra.mxu0 %v751
      %v3001 = vpop.f32.mrf.mxu0
      %v3002 = vadd.f32 0.0, %v3001
      %v3003 = vpop.f32.mrf.mxu0
      %v3004 = vpop.f32.mrf.mxu0
      %v3005 = vadd.f32 0.0, %v3004
      %v3006 = vpop.f32.mrf.mxu0
      %3007 = vmatprep.mubr.bf16.mxu0 0
      %3008 = vmatmul.mubr.bf16.gmra.mxu0 %v752
      %v3009 = vpop.f32.mrf.mxu0
      %v3010 = vadd.f32 0.0, %v3009
      %v3011 = vpop.f32.mrf.mxu0
      %v3012 = vpop.f32.mrf.mxu0
      %v3013 = vadd.f32 0.0, %v3012
      %v3014 = vpop.f32.mrf.mxu0
      %3015 = vmatprep.mubr.bf16.mxu0 0
      %3016 = vmatmul.mubr.bf16.gmra.mxu0 %v753
      %v3017 = vpop.f32.mrf.mxu0
      %v3018 = vadd.f32 0.0, %v3017
      %v3019 = vpop.f32.mrf.mxu0
      %v3020 = vpop.f32.mrf.mxu0
      %v3021 = vadd.f32 0.0, %v3020
      %v3022 = vpop.f32.mrf.mxu0
      %3023 = vmatprep.mubr.bf16.mxu0 0
      %3024 = vmatmul.mubr.bf16.gmra.mxu0 %v754
      %v3025 = vpop.f32.mrf.mxu0
      %v3026 = vadd.f32 0.0, %v3025
      %v3027 = vpop.f32.mrf.mxu0
      %v3028 = vpop.f32.mrf.mxu0
      %v3029 = vadd.f32 0.0, %v3028
      %v3030 = vpop.f32.mrf.mxu0
      %3031 = vmatprep.mubr.bf16.mxu0 0
      %3032 = vmatmul.mubr.bf16.gmra.mxu0 %v755
      %v3033 = vpop.f32.mrf.mxu0
      %v3034 = vadd.f32 0.0, %v3033
      %v3035 = vpop.f32.mrf.mxu0
      %v3036 = vpop.f32.mrf.mxu0
      %v3037 = vadd.f32 0.0, %v3036
      %v3038 = vpop.f32.mrf.mxu0
      %3039 = vmatprep.mubr.bf16.mxu0 0
      %3040 = vmatmul.mubr.bf16.gmra.mxu0 %v756
      %v3041 = vpop.f32.mrf.mxu0
      %v3042 = vadd.f32 0.0, %v3041
      %v3043 = vpop.f32.mrf.mxu0
      %v3044 = vpop.f32.mrf.mxu0
      %v3045 = vadd.f32 0.0, %v3044
      %v3046 = vpop.f32.mrf.mxu0
      %3047 = vmatprep.mubr.bf16.mxu0 0
      %3048 = vmatmul.mubr.bf16.gmra.mxu0 %v757
      %v3049 = vpop.f32.mrf.mxu0
      %v3050 = vadd.f32 0.0, %v3049
      %v3051 = vpop.f32.mrf.mxu0
      %v3052 = vpop.f32.mrf.mxu0
      %v3053 = vadd.f32 0.0, %v3052
      %v3054 = vpop.f32.mrf.mxu0
      %3055 = vmatprep.mubr.bf16.mxu0 0
      %3056 = vmatmul.mubr.bf16.gmra.mxu0 %v758
      %v3057 = vpop.f32.mrf.mxu0
      %v3058 = vadd.f32 0.0, %v3057
      %v3059 = vpop.f32.mrf.mxu0
      %v3060 = vpop.f32.mrf.mxu0
      %v3061 = vadd.f32 0.0, %v3060
      %v3062 = vpop.f32.mrf.mxu0
      %3063 = vmatprep.mubr.bf16.mxu0 0
      %3064 = vmatmul.mubr.bf16.gmra.mxu0 %v2049
      %v3065 = vpop.f32.mrf.mxu0
      %v3066 = vadd.f32 0.0, %v3065
      %v3067 = vpop.f32.mrf.mxu0
      %v3068 = vpop.f32.mrf.mxu0
      %v3069 = vadd.f32 0.0, %v3068
      %v3070 = vpop.f32.mrf.mxu0
      %3071 = vmatprep.mubr.bf16.mxu0 0
      %3072 = vmatmul.mubr.bf16.gmra.mxu0 %v2869
      %v3073 = vpop.f32.mrf.mxu0
      %v3074 = vadd.f32 0.0, %v3073
      %v3075 = vpop.f32.mrf.mxu0
      %v3076 = vpop.f32.mrf.mxu0
      %v3077 = vadd.f32 0.0, %v3076
      %v3078 = vpop.f32.mrf.mxu0
      %3079 = vdwg.mxu0
      %v3080 = vadd.f32 %v2794, %v2954
      %v3081 = vadd.f32 %v2795, %v2957
      %v3082 = vadd.f32 %v2796, %v2962
      %v3083 = vadd.f32 %v2797, %v2965
      %v3084 = vadd.f32 %v2798, %v2970
      %v3085 = vadd.f32 %v2799, %v2973
      %v3086 = vadd.f32 %v2800, %v2978
      %v3087 = vadd.f32 %v2801, %v2981
      %v3088 = vadd.f32 %v2802, %v2986
      %v3089 = vadd.f32 %v2803, %v2989
      %v3090 = vadd.f32 %v2804, %v2994
      %v3091 = vadd.f32 %v2805, %v2997
      %v3092 = vadd.f32 %v2806, %v3002
      %v3093 = vadd.f32 %v2807, %v3005
      %v3094 = vadd.f32 %v2808, %v3010
      %v3095 = vadd.f32 %v2809, %v3013
      %v3096 = vadd.f32 %v2810, %v3018
      %v3097 = vadd.f32 %v2811, %v3021
      %v3098 = vadd.f32 %v2812, %v3026
      %v3099 = vadd.f32 %v2813, %v3029
      %v3100 = vadd.f32 %v2814, %v3034
      %v3101 = vadd.f32 %v2815, %v3037
      %v3102 = vadd.f32 %v2816, %v3042
      %v3103 = vadd.f32 %v2817, %v3045
      %v3104 = vadd.f32 %v2818, %v3050
      %v3105 = vadd.f32 %v2819, %v3053
      %v3106 = vadd.f32 %v2820, %v3058
      %v3107 = vadd.f32 %v2821, %v3061
      %v3108 = vadd.f32 %v2822, %v3066
      %v3109 = vadd.f32 %v2823, %v3069
      %v3110 = vadd.f32 %v2824, %v3074
      %v3111 = vadd.f32 %v2825, %v3077
      %v3113 = vrot.slane %v288, 5
      %v3114 = vrot.slane %v3113, 4
      %v3115 = vrot.slane %v289, 5
      %v3116 = vsel %vm1307, %v3114, %v3115
      %v3117 = vrot.slane %v3115, 4
      %v3118 = vrot.slane %v290, 5
      %v3119 = vsel %vm1307, %v3117, %v3118
      %s3120 = scalar_lea.vmem %s1, 512
      %v3121 = vld [vmem:[%s3120] sm:$0xf]
      %v3122 = vld [vmem:[%s3120 + $0x4] sm:$0xf]
      %v3123 = vld [vmem:[%s3120 + $0x8] sm:$0xf]
      %v3124 = vld [vmem:[%s3120 + $0xc] sm:$0xf]
      %v3125 = vld [vmem:[%s3120 + $0x10] sm:$0xf]
      %v3126 = vld [vmem:[%s3120 + $0x14] sm:$0xf]
      %v3127 = vld [vmem:[%s3120 + $0x18] sm:$0xf]
      %v3128 = vld [vmem:[%s3120 + $0x1c] sm:$0xf]
      %v3129 = vld [vmem:[%s3120 + $0x20] sm:$0xf]
      %v3130 = vld [vmem:[%s3120 + $0x24] sm:$0xf]
      %v3131 = vld [vmem:[%s3120 + $0x28] sm:$0xf]
      %v3132 = vld [vmem:[%s3120 + $0x2c] sm:$0xf]
      %v3133 = vld [vmem:[%s3120 + $0x30] sm:$0xf]
      %v3134 = vld [vmem:[%s3120 + $0x34] sm:$0xf]
      %v3135 = vld [vmem:[%s3120 + $0x38] sm:$0xf]
      %v3136 = vld [vmem:[%s3120 + $0x3c] sm:$0xf]
      %v3137 = vunpack.c.l.b16 %v3116
      %v3138 = vunpack.c.l.b16 %v3119
      %v3139 = vpack.c.b16 %v3138, %v3137
      %v3157 = vunpack.c.l.b16 %v3121
      %v3158 = vunpack.c.l.b16 %v3122
      %v3159 = vunpack.c.l.b16 %v3123
      %v3160 = vunpack.c.l.b16 %v3124
      %v3161 = vunpack.c.l.b16 %v3125
      %v3162 = vunpack.c.l.b16 %v3126
      %v3163 = vunpack.c.l.b16 %v3127
      %v3164 = vunpack.c.l.b16 %v3128
      %v3165 = vunpack.c.l.b16 %v3129
      %v3166 = vunpack.c.l.b16 %v3130
      %v3167 = vunpack.c.l.b16 %v3131
      %v3168 = vunpack.c.l.b16 %v3132
      %v3169 = vunpack.c.l.b16 %v3133
      %v3170 = vunpack.c.l.b16 %v3134
      %v3171 = vunpack.c.l.b16 %v3135
      %v3172 = vunpack.c.l.b16 %v3136
      %v3173 = vpack.c.b16 %v3158, %v3157
      %v3174 = vpack.c.b16 %v3160, %v3159
      %v3175 = vpack.c.b16 %v3162, %v3161
      %v3176 = vpack.c.b16 %v3164, %v3163
      %v3177 = vpack.c.b16 %v3166, %v3165
      %v3178 = vpack.c.b16 %v3168, %v3167
      %v3179 = vpack.c.b16 %v3170, %v3169
      %v3180 = vpack.c.b16 %v3172, %v3171
      %3189 = vmatprep.subr.bf16.mxu0 0
      %3190 = vmatpush1.bf16.msra.mxu0 %v3180
      %3191 = vmatprep.subr.bf16.mxu0 0
      %3192 = vmatpush1.bf16.msra.mxu0 %v3179
      %3193 = vmatprep.subr.bf16.mxu0 0
      %3194 = vmatpush1.bf16.msra.mxu0 %v3178
      %3195 = vmatprep.subr.bf16.mxu0 0
      %3196 = vmatpush1.bf16.msra.mxu0 %v3177
      %3197 = vmatprep.subr.bf16.mxu0 0
      %3198 = vmatpush1.bf16.msra.mxu0 %v3176
      %3199 = vmatprep.subr.bf16.mxu0 0
      %3200 = vmatpush1.bf16.msra.mxu0 %v3175
      %3201 = vmatprep.subr.bf16.mxu0 0
      %3202 = vmatpush1.bf16.msra.mxu0 %v3174
      %3203 = vmatprep.subr.bf16.mxu0 0
      %3204 = vmatpush1.bf16.msra.mxu0 %v3173
      %3205 = vmatprep.subr.bf16.mxu0 0
      %3206 = vmatpush2.bf16.msra.mxu0 0
      %3207 = vmatprep.subr.bf16.mxu0 0
      %3208 = vmatpush2.bf16.msra.mxu0 0
      %3209 = vmatprep.subr.bf16.mxu0 0
      %3210 = vmatpush2.bf16.msra.mxu0 0
      %3211 = vmatprep.subr.bf16.mxu0 0
      %3212 = vmatpush2.bf16.msra.mxu0 0
      %3213 = vmatprep.subr.bf16.mxu0 0
      %3214 = vmatpush2.bf16.msra.mxu0 0
      %3215 = vmatprep.subr.bf16.mxu0 0
      %3216 = vmatpush2.bf16.msra.mxu0 0
      %3217 = vmatprep.subr.bf16.mxu0 0
      %3218 = vmatpush2.bf16.msra.mxu0 0
      %3219 = vmatprep.subr.bf16.mxu0 0
      %3220 = vmatpush2.bf16.msra.mxu0 0
      %3221 = vmatprep.mubr.bf16.mxu0 0
      %3222 = vmatmul.mubr.bf16.gmra.mxu0 %v1471
      %v3223 = vpop.f32.mrf.mxu0
      %v3224 = vadd.f32 0.0, %v3223
      %v3225 = vpop.f32.mrf.mxu0
      %v3226 = vpop.f32.mrf.mxu0
      %v3227 = vadd.f32 0.0, %v3226
      %v3228 = vpop.f32.mrf.mxu0
      %3229 = vmatprep.mubr.bf16.mxu0 0
      %3230 = vmatmul.mubr.bf16.gmra.mxu0 %v1472
      %v3231 = vpop.f32.mrf.mxu0
      %v3232 = vadd.f32 0.0, %v3231
      %v3233 = vpop.f32.mrf.mxu0
      %v3234 = vpop.f32.mrf.mxu0
      %v3235 = vadd.f32 0.0, %v3234
      %v3236 = vpop.f32.mrf.mxu0
      %3237 = vmatprep.mubr.bf16.mxu0 0
      %3238 = vmatmul.mubr.bf16.gmra.mxu0 %v1473
      %v3239 = vpop.f32.mrf.mxu0
      %v3240 = vadd.f32 0.0, %v3239
      %v3241 = vpop.f32.mrf.mxu0
      %v3242 = vpop.f32.mrf.mxu0
      %v3243 = vadd.f32 0.0, %v3242
      %v3244 = vpop.f32.mrf.mxu0
      %3245 = vmatprep.mubr.bf16.mxu0 0
      %3246 = vmatmul.mubr.bf16.gmra.mxu0 %v1474
      %v3247 = vpop.f32.mrf.mxu0
      %v3248 = vadd.f32 0.0, %v3247
      %v3249 = vpop.f32.mrf.mxu0
      %v3250 = vpop.f32.mrf.mxu0
      %v3251 = vadd.f32 0.0, %v3250
      %v3252 = vpop.f32.mrf.mxu0
      %3253 = vmatprep.mubr.bf16.mxu0 0
      %3254 = vmatmul.mubr.bf16.gmra.mxu0 %v1475
      %v3255 = vpop.f32.mrf.mxu0
      %v3256 = vadd.f32 0.0, %v3255
      %v3257 = vpop.f32.mrf.mxu0
      %v3258 = vpop.f32.mrf.mxu0
      %v3259 = vadd.f32 0.0, %v3258
      %v3260 = vpop.f32.mrf.mxu0
      %3261 = vmatprep.mubr.bf16.mxu0 0
      %3262 = vmatmul.mubr.bf16.gmra.mxu0 %v1476
      %v3263 = vpop.f32.mrf.mxu0
      %v3264 = vadd.f32 0.0, %v3263
      %v3265 = vpop.f32.mrf.mxu0
      %v3266 = vpop.f32.mrf.mxu0
      %v3267 = vadd.f32 0.0, %v3266
      %v3268 = vpop.f32.mrf.mxu0
      %3269 = vmatprep.mubr.bf16.mxu0 0
      %3270 = vmatmul.mubr.bf16.gmra.mxu0 %v1477
      %v3271 = vpop.f32.mrf.mxu0
      %v3272 = vadd.f32 0.0, %v3271
      %v3273 = vpop.f32.mrf.mxu0
      %v3274 = vpop.f32.mrf.mxu0
      %v3275 = vadd.f32 0.0, %v3274
      %v3276 = vpop.f32.mrf.mxu0
      %3277 = vmatprep.mubr.bf16.mxu0 0
      %3278 = vmatmul.mubr.bf16.gmra.mxu0 %v1478
      %v3279 = vpop.f32.mrf.mxu0
      %v3280 = vadd.f32 0.0, %v3279
      %v3281 = vpop.f32.mrf.mxu0
      %v3282 = vpop.f32.mrf.mxu0
      %v3283 = vadd.f32 0.0, %v3282
      %v3284 = vpop.f32.mrf.mxu0
      %3285 = vmatprep.mubr.bf16.mxu0 0
      %3286 = vmatmul.mubr.bf16.gmra.mxu0 %v1479
      %v3287 = vpop.f32.mrf.mxu0
      %v3288 = vadd.f32 0.0, %v3287
      %v3289 = vpop.f32.mrf.mxu0
      %v3290 = vpop.f32.mrf.mxu0
      %v3291 = vadd.f32 0.0, %v3290
      %v3292 = vpop.f32.mrf.mxu0
      %3293 = vmatprep.mubr.bf16.mxu0 0
      %3294 = vmatmul.mubr.bf16.gmra.mxu0 %v1480
      %v3295 = vpop.f32.mrf.mxu0
      %v3296 = vadd.f32 0.0, %v3295
      %v3297 = vpop.f32.mrf.mxu0
      %v3298 = vpop.f32.mrf.mxu0
      %v3299 = vadd.f32 0.0, %v3298
      %v3300 = vpop.f32.mrf.mxu0
      %3301 = vmatprep.mubr.bf16.mxu0 0
      %3302 = vmatmul.mubr.bf16.gmra.mxu0 %v1481
      %v3303 = vpop.f32.mrf.mxu0
      %v3304 = vadd.f32 0.0, %v3303
      %v3305 = vpop.f32.mrf.mxu0
      %v3306 = vpop.f32.mrf.mxu0
      %v3307 = vadd.f32 0.0, %v3306
      %v3308 = vpop.f32.mrf.mxu0
      %3309 = vmatprep.mubr.bf16.mxu0 0
      %3310 = vmatmul.mubr.bf16.gmra.mxu0 %v1482
      %v3311 = vpop.f32.mrf.mxu0
      %v3312 = vadd.f32 0.0, %v3311
      %v3313 = vpop.f32.mrf.mxu0
      %v3314 = vpop.f32.mrf.mxu0
      %v3315 = vadd.f32 0.0, %v3314
      %v3316 = vpop.f32.mrf.mxu0
      %3317 = vmatprep.mubr.bf16.mxu0 0
      %3318 = vmatmul.mubr.bf16.gmra.mxu0 %v1483
      %v3319 = vpop.f32.mrf.mxu0
      %v3320 = vadd.f32 0.0, %v3319
      %v3321 = vpop.f32.mrf.mxu0
      %v3322 = vpop.f32.mrf.mxu0
      %v3323 = vadd.f32 0.0, %v3322
      %v3324 = vpop.f32.mrf.mxu0
      %3325 = vmatprep.mubr.bf16.mxu0 0
      %3326 = vmatmul.mubr.bf16.gmra.mxu0 %v1484
      %v3327 = vpop.f32.mrf.mxu0
      %v3328 = vadd.f32 0.0, %v3327
      %v3329 = vpop.f32.mrf.mxu0
      %v3330 = vpop.f32.mrf.mxu0
      %v3331 = vadd.f32 0.0, %v3330
      %v3332 = vpop.f32.mrf.mxu0
      %3333 = vmatprep.mubr.bf16.mxu0 0
      %3334 = vmatmul.mubr.bf16.gmra.mxu0 %v2319
      %v3335 = vpop.f32.mrf.mxu0
      %v3336 = vadd.f32 0.0, %v3335
      %v3337 = vpop.f32.mrf.mxu0
      %v3338 = vpop.f32.mrf.mxu0
      %v3339 = vadd.f32 0.0, %v3338
      %v3340 = vpop.f32.mrf.mxu0
      %3341 = vmatprep.mubr.bf16.mxu0 0
      %3342 = vmatmul.mubr.bf16.gmra.mxu0 %v3139
      %v3343 = vpop.f32.mrf.mxu0
      %v3344 = vadd.f32 0.0, %v3343
      %v3345 = vpop.f32.mrf.mxu0
      %v3346 = vpop.f32.mrf.mxu0
      %v3347 = vadd.f32 0.0, %v3346
      %v3348 = vpop.f32.mrf.mxu0
      %3349 = vdwg.mxu0
      %v3350 = vadd.f32 %v3080, %v3224
      %v3351 = vadd.f32 %v3081, %v3227
      %v3352 = vadd.f32 %v3082, %v3232
      %v3353 = vadd.f32 %v3083, %v3235
      %v3354 = vadd.f32 %v3084, %v3240
      %v3355 = vadd.f32 %v3085, %v3243
      %v3356 = vadd.f32 %v3086, %v3248
      %v3357 = vadd.f32 %v3087, %v3251
      %v3358 = vadd.f32 %v3088, %v3256
      %v3359 = vadd.f32 %v3089, %v3259
      %v3360 = vadd.f32 %v3090, %v3264
      %v3361 = vadd.f32 %v3091, %v3267
      %v3362 = vadd.f32 %v3092, %v3272
      %v3363 = vadd.f32 %v3093, %v3275
      %v3364 = vadd.f32 %v3094, %v3280
      %v3365 = vadd.f32 %v3095, %v3283
      %v3366 = vadd.f32 %v3096, %v3288
      %v3367 = vadd.f32 %v3097, %v3291
      %v3368 = vadd.f32 %v3098, %v3296
      %v3369 = vadd.f32 %v3099, %v3299
      %v3370 = vadd.f32 %v3100, %v3304
      %v3371 = vadd.f32 %v3101, %v3307
      %v3372 = vadd.f32 %v3102, %v3312
      %v3373 = vadd.f32 %v3103, %v3315
      %v3374 = vadd.f32 %v3104, %v3320
      %v3375 = vadd.f32 %v3105, %v3323
      %v3376 = vadd.f32 %v3106, %v3328
      %v3377 = vadd.f32 %v3107, %v3331
      %v3378 = vadd.f32 %v3108, %v3336
      %v3379 = vadd.f32 %v3109, %v3339
      %v3380 = vadd.f32 %v3110, %v3344
      %v3381 = vadd.f32 %v3111, %v3347
      %v3382 = vadd.f32 %v3350, %v3351
      %v3383 = vadd.f32 %v3382, %v3352
      %v3384 = vadd.f32 %v3383, %v3353
      %v3385 = vadd.f32 %v3384, %v3354
      %v3386 = vadd.f32 %v3385, %v3355
      %v3387 = vadd.f32 %v3386, %v3356
      %v3388 = vadd.f32 %v3387, %v3357
      %v3389 = vadd.f32 %v3388, %v3358
      %v3390 = vadd.f32 %v3389, %v3359
      %v3391 = vadd.f32 %v3390, %v3360
      %v3392 = vadd.f32 %v3391, %v3361
      %v3393 = vadd.f32 %v3392, %v3362
      %v3394 = vadd.f32 %v3393, %v3363
      %v3395 = vadd.f32 %v3394, %v3364
      %v3396 = vadd.f32 %v3395, %v3365
      %v3397 = vadd.f32 %v3396, %v3366
      %v3398 = vadd.f32 %v3397, %v3367
      %v3399 = vadd.f32 %v3398, %v3368
      %v3400 = vadd.f32 %v3399, %v3369
      %v3401 = vadd.f32 %v3400, %v3370
      %v3402 = vadd.f32 %v3401, %v3371
      %v3403 = vadd.f32 %v3402, %v3372
      %v3404 = vadd.f32 %v3403, %v3373
      %v3405 = vadd.f32 %v3404, %v3374
      %v3406 = vadd.f32 %v3405, %v3375
      %v3407 = vadd.f32 %v3406, %v3376
      %v3408 = vadd.f32 %v3407, %v3377
      %v3409 = vadd.f32 %v3408, %v3378
      %v3410 = vadd.f32 %v3409, %v3379
      %v3411 = vadd.f32 %v3410, %v3380
      %v3412 = vadd.f32 %v3411, %v3381
      %v3413 = vrot.slane %v3412, 4
      %v3414 = vadd.f32 %v3412, %v3413
      %v3415 = vrot.slane %v3414, 2
      %v3416 = vadd.f32 %v3414, %v3415
      %v3417 = vrot.slane %v3416, 1
      %v3418 = vadd.f32 %v3416, %v3417
      %3419 = vst [vmem:[%s235] sm:$0x1] %v3418
      %v3420 = vmul.f32 %v3350, %v3350
      %v3421 = vmul.f32 %v3351, %v3351
      %v3422 = vmul.f32 %v3352, %v3352
      %v3423 = vmul.f32 %v3353, %v3353
      %v3424 = vmul.f32 %v3354, %v3354
      %v3425 = vmul.f32 %v3355, %v3355
      %v3426 = vmul.f32 %v3356, %v3356
      %v3427 = vmul.f32 %v3357, %v3357
      %v3428 = vmul.f32 %v3358, %v3358
      %v3429 = vmul.f32 %v3359, %v3359
      %v3430 = vmul.f32 %v3360, %v3360
      %v3431 = vmul.f32 %v3361, %v3361
      %v3432 = vmul.f32 %v3362, %v3362
      %v3433 = vmul.f32 %v3363, %v3363
      %v3434 = vmul.f32 %v3364, %v3364
      %v3435 = vmul.f32 %v3365, %v3365
      %v3436 = vmul.f32 %v3366, %v3366
      %v3437 = vmul.f32 %v3367, %v3367
      %v3438 = vmul.f32 %v3368, %v3368
      %v3439 = vmul.f32 %v3369, %v3369
      %v3440 = vmul.f32 %v3370, %v3370
      %v3441 = vmul.f32 %v3371, %v3371
      %v3442 = vmul.f32 %v3372, %v3372
      %v3443 = vmul.f32 %v3373, %v3373
      %v3444 = vmul.f32 %v3374, %v3374
      %v3445 = vmul.f32 %v3375, %v3375
      %v3446 = vmul.f32 %v3376, %v3376
      %v3447 = vmul.f32 %v3377, %v3377
      %v3448 = vmul.f32 %v3378, %v3378
      %v3449 = vmul.f32 %v3379, %v3379
      %v3450 = vmul.f32 %v3380, %v3380
      %v3451 = vmul.f32 %v3381, %v3381
      %v3452 = vadd.f32 %v3420, %v3421
      %v3453 = vadd.f32 %v3452, %v3422
      %v3454 = vadd.f32 %v3453, %v3423
      %v3455 = vadd.f32 %v3454, %v3424
      %v3456 = vadd.f32 %v3455, %v3425
      %v3457 = vadd.f32 %v3456, %v3426
      %v3458 = vadd.f32 %v3457, %v3427
      %v3459 = vadd.f32 %v3458, %v3428
      %v3460 = vadd.f32 %v3459, %v3429
      %v3461 = vadd.f32 %v3460, %v3430
      %v3462 = vadd.f32 %v3461, %v3431
      %v3463 = vadd.f32 %v3462, %v3432
      %v3464 = vadd.f32 %v3463, %v3433
      %v3465 = vadd.f32 %v3464, %v3434
      %v3466 = vadd.f32 %v3465, %v3435
      %v3467 = vadd.f32 %v3466, %v3436
      %v3468 = vadd.f32 %v3467, %v3437
      %v3469 = vadd.f32 %v3468, %v3438
      %v3470 = vadd.f32 %v3469, %v3439
      %v3471 = vadd.f32 %v3470, %v3440
      %v3472 = vadd.f32 %v3471, %v3441
      %v3473 = vadd.f32 %v3472, %v3442
      %v3474 = vadd.f32 %v3473, %v3443
      %v3475 = vadd.f32 %v3474, %v3444
      %v3476 = vadd.f32 %v3475, %v3445
      %v3477 = vadd.f32 %v3476, %v3446
      %v3478 = vadd.f32 %v3477, %v3447
      %v3479 = vadd.f32 %v3478, %v3448
      %v3480 = vadd.f32 %v3479, %v3449
      %v3481 = vadd.f32 %v3480, %v3450
      %v3482 = vadd.f32 %v3481, %v3451
      %v3483 = vrot.slane %v3482, 4
      %v3484 = vadd.f32 %v3482, %v3483
      %v3485 = vrot.slane %v3484, 2
      %v3486 = vadd.f32 %v3484, %v3485
      %v3487 = vrot.slane %v3486, 1
      %v3488 = vadd.f32 %v3486, %v3487
      %3489 = vst [vmem:[%s235 + $0x1] sm:$0x1] %v3488
      %v3490 = vpack.c.bf16 %v3351, %v3350
      %v3491 = vpack.c.bf16 %v3353, %v3352
      %v3492 = vpack.c.bf16 %v3355, %v3354
      %v3493 = vpack.c.bf16 %v3357, %v3356
      %v3494 = vpack.c.bf16 %v3359, %v3358
      %v3495 = vpack.c.bf16 %v3361, %v3360
      %v3496 = vpack.c.bf16 %v3363, %v3362
      %v3497 = vpack.c.bf16 %v3365, %v3364
      %v3498 = vpack.c.bf16 %v3367, %v3366
      %v3499 = vpack.c.bf16 %v3369, %v3368
      %v3500 = vpack.c.bf16 %v3371, %v3370
      %v3501 = vpack.c.bf16 %v3373, %v3372
      %v3502 = vpack.c.bf16 %v3375, %v3374
      %v3503 = vpack.c.bf16 %v3377, %v3376
      %v3504 = vpack.c.bf16 %v3379, %v3378
      %v3505 = vpack.c.bf16 %v3381, %v3380
      %v3522 = vunpack.c.l.b16 %v3490
      %v3523 = vunpack.c.h.b16 %v3490
      %v3524 = vunpack.c.l.b16 %v3491
      %v3525 = vunpack.c.h.b16 %v3491
      %v3526 = vunpack.c.l.b16 %v3492
      %v3527 = vunpack.c.h.b16 %v3492
      %v3528 = vunpack.c.l.b16 %v3493
      %v3529 = vunpack.c.h.b16 %v3493
      %v3530 = vunpack.c.l.b16 %v3494
      %v3531 = vunpack.c.h.b16 %v3494
      %v3532 = vunpack.c.l.b16 %v3495
      %v3533 = vunpack.c.h.b16 %v3495
      %v3534 = vunpack.c.l.b16 %v3496
      %v3535 = vunpack.c.h.b16 %v3496
      %v3536 = vunpack.c.l.b16 %v3497
      %v3537 = vunpack.c.h.b16 %v3497
      %v3538 = vunpack.c.l.b16 %v3498
      %v3539 = vunpack.c.h.b16 %v3498
      %v3540 = vunpack.c.l.b16 %v3499
      %v3541 = vunpack.c.h.b16 %v3499
      %v3542 = vunpack.c.l.b16 %v3500
      %v3543 = vunpack.c.h.b16 %v3500
      %v3544 = vunpack.c.l.b16 %v3501
      %v3545 = vunpack.c.h.b16 %v3501
      %v3546 = vunpack.c.l.b16 %v3502
      %v3547 = vunpack.c.h.b16 %v3502
      %v3548 = vunpack.c.l.b16 %v3503
      %v3549 = vunpack.c.h.b16 %v3503
      %v3550 = vunpack.c.l.b16 %v3504
      %v3551 = vunpack.c.h.b16 %v3504
      %v3552 = vunpack.c.l.b16 %v3505
      %v3553 = vunpack.c.h.b16 %v3505
      %v3554 = vpack.c.b16 %v3522, %v3522
      %v3555 = vpack.c.b16 %v3523, %v3523
      %v3556 = vpack.c.b16 %v3524, %v3524
      %v3557 = vpack.c.b16 %v3525, %v3525
      %v3558 = vpack.c.b16 %v3526, %v3526
      %v3559 = vpack.c.b16 %v3527, %v3527
      %v3560 = vpack.c.b16 %v3528, %v3528
      %v3561 = vpack.c.b16 %v3529, %v3529
      %v3562 = vpack.c.b16 %v3530, %v3530
      %v3563 = vpack.c.b16 %v3531, %v3531
      %v3564 = vpack.c.b16 %v3532, %v3532
      %v3565 = vpack.c.b16 %v3533, %v3533
      %v3566 = vpack.c.b16 %v3534, %v3534
      %v3567 = vpack.c.b16 %v3535, %v3535
      %v3568 = vpack.c.b16 %v3536, %v3536
      %v3569 = vpack.c.b16 %v3537, %v3537
      %v3570 = vpack.c.b16 %v3538, %v3538
      %v3571 = vpack.c.b16 %v3539, %v3539
      %v3572 = vpack.c.b16 %v3540, %v3540
      %v3573 = vpack.c.b16 %v3541, %v3541
      %v3574 = vpack.c.b16 %v3542, %v3542
      %v3575 = vpack.c.b16 %v3543, %v3543
      %v3576 = vpack.c.b16 %v3544, %v3544
      %v3577 = vpack.c.b16 %v3545, %v3545
      %v3578 = vpack.c.b16 %v3546, %v3546
      %v3579 = vpack.c.b16 %v3547, %v3547
      %v3580 = vpack.c.b16 %v3548, %v3548
      %v3581 = vpack.c.b16 %v3549, %v3549
      %v3582 = vpack.c.b16 %v3550, %v3550
      %v3583 = vpack.c.b16 %v3551, %v3551
      %v3584 = vpack.c.b16 %v3552, %v3552
      %v3585 = vpack.c.b16 %v3553, %v3553
      %vm3586 = vsmask.f32 256
      %vm3587 = vsmask.f32 4368
      %vm3588 = vmor %vm3586, %vm3587
      %v3590 = vshrl.u32 %v3554, 16
      %v3592 = vrot.slane %v3590, 7
      %v3593 = vshll.u32 %v3554, 16
      %v3595 = vor.u32 %v3592, %v3593
      %v3596 = vrot.slane %v3592, 4
      %v3598 = vshrl.u32 %v3555, 16
      %v3600 = vrot.slane %v3598, 7
      %v3601 = vshll.u32 %v3555, 16
      %v3603 = vor.u32 %v3600, %v3601
      %v3604 = vsel %vm3588, %v3596, %v3603
      %v3605 = vrot.slane %v3600, 4
      %v3607 = vshrl.u32 %v3556, 16
      %v3609 = vrot.slane %v3607, 7
      %v3610 = vshll.u32 %v3556, 16
      %v3612 = vor.u32 %v3609, %v3610
      %v3613 = vrot.slane %v3609, 4
      %v3615 = vshrl.u32 %v3557, 16
      %v3617 = vrot.slane %v3615, 7
      %v3618 = vshll.u32 %v3557, 16
      %v3620 = vor.u32 %v3617, %v3618
      %v3621 = vsel %vm3588, %v3613, %v3620
      %v3622 = vrot.slane %v3617, 4
      %v3624 = vshrl.u32 %v3558, 16
      %v3626 = vrot.slane %v3624, 7
      %v3627 = vshll.u32 %v3558, 16
      %v3629 = vor.u32 %v3626, %v3627
      %v3630 = vrot.slane %v3626, 4
      %v3632 = vshrl.u32 %v3559, 16
      %v3634 = vrot.slane %v3632, 7
      %v3635 = vshll.u32 %v3559, 16
      %v3637 = vor.u32 %v3634, %v3635
      %v3638 = vsel %vm3588, %v3630, %v3637
      %v3639 = vrot.slane %v3634, 4
      %v3641 = vshrl.u32 %v3560, 16
      %v3643 = vrot.slane %v3641, 7
      %v3644 = vshll.u32 %v3560, 16
      %v3646 = vor.u32 %v3643, %v3644
      %v3647 = vrot.slane %v3643, 4
      %v3649 = vshrl.u32 %v3561, 16
      %v3651 = vrot.slane %v3649, 7
      %v3652 = vshll.u32 %v3561, 16
      %v3654 = vor.u32 %v3651, %v3652
      %v3655 = vsel %vm3588, %v3647, %v3654
      %v3656 = vrot.slane %v3651, 4
      %v3658 = vshrl.u32 %v3562, 16
      %v3660 = vrot.slane %v3658, 7
      %v3661 = vshll.u32 %v3562, 16
      %v3663 = vor.u32 %v3660, %v3661
      %v3664 = vrot.slane %v3660, 4
      %v3666 = vshrl.u32 %v3563, 16
      %v3668 = vrot.slane %v3666, 7
      %v3669 = vshll.u32 %v3563, 16
      %v3671 = vor.u32 %v3668, %v3669
      %v3672 = vsel %vm3588, %v3664, %v3671
      %v3673 = vrot.slane %v3668, 4
      %v3675 = vshrl.u32 %v3564, 16
      %v3677 = vrot.slane %v3675, 7
      %v3678 = vshll.u32 %v3564, 16
      %v3680 = vor.u32 %v3677, %v3678
      %v3681 = vrot.slane %v3677, 4
      %v3683 = vshrl.u32 %v3565, 16
      %v3685 = vrot.slane %v3683, 7
      %v3686 = vshll.u32 %v3565, 16
      %v3688 = vor.u32 %v3685, %v3686
      %v3689 = vsel %vm3588, %v3681, %v3688
      %v3690 = vrot.slane %v3685, 4
      %v3692 = vshrl.u32 %v3566, 16
      %v3694 = vrot.slane %v3692, 7
      %v3695 = vshll.u32 %v3566, 16
      %v3697 = vor.u32 %v3694, %v3695
      %v3698 = vrot.slane %v3694, 4
      %v3700 = vshrl.u32 %v3567, 16
      %v3702 = vrot.slane %v3700, 7
      %v3703 = vshll.u32 %v3567, 16
      %v3705 = vor.u32 %v3702, %v3703
      %v3706 = vsel %vm3588, %v3698, %v3705
      %v3707 = vrot.slane %v3702, 4
      %v3709 = vshrl.u32 %v3568, 16
      %v3711 = vrot.slane %v3709, 7
      %v3712 = vshll.u32 %v3568, 16
      %v3714 = vor.u32 %v3711, %v3712
      %v3715 = vrot.slane %v3711, 4
      %v3717 = vshrl.u32 %v3569, 16
      %v3719 = vrot.slane %v3717, 7
      %v3720 = vshll.u32 %v3569, 16
      %v3722 = vor.u32 %v3719, %v3720
      %v3723 = vsel %vm3588, %v3715, %v3722
      %v3724 = vrot.slane %v3719, 4
      %v3726 = vshrl.u32 %v3570, 16
      %v3728 = vrot.slane %v3726, 7
      %v3729 = vshll.u32 %v3570, 16
      %v3731 = vor.u32 %v3728, %v3729
      %v3732 = vrot.slane %v3728, 4
      %v3734 = vshrl.u32 %v3571, 16
      %v3736 = vrot.slane %v3734, 7
      %v3737 = vshll.u32 %v3571, 16
      %v3739 = vor.u32 %v3736, %v3737
      %v3740 = vsel %vm3588, %v3732, %v3739
      %v3741 = vrot.slane %v3736, 4
      %v3743 = vshrl.u32 %v3572, 16
      %v3745 = vrot.slane %v3743, 7
      %v3746 = vshll.u32 %v3572, 16
      %v3748 = vor.u32 %v3745, %v3746
      %v3749 = vrot.slane %v3745, 4
      %v3751 = vshrl.u32 %v3573, 16
      %v3753 = vrot.slane %v3751, 7
      %v3754 = vshll.u32 %v3573, 16
      %v3756 = vor.u32 %v3753, %v3754
      %v3757 = vsel %vm3588, %v3749, %v3756
      %v3758 = vrot.slane %v3753, 4
      %v3760 = vshrl.u32 %v3574, 16
      %v3762 = vrot.slane %v3760, 7
      %v3763 = vshll.u32 %v3574, 16
      %v3765 = vor.u32 %v3762, %v3763
      %v3766 = vrot.slane %v3762, 4
      %v3768 = vshrl.u32 %v3575, 16
      %v3770 = vrot.slane %v3768, 7
      %v3771 = vshll.u32 %v3575, 16
      %v3773 = vor.u32 %v3770, %v3771
      %v3774 = vsel %vm3588, %v3766, %v3773
      %v3775 = vrot.slane %v3770, 4
      %v3777 = vshrl.u32 %v3576, 16
      %v3779 = vrot.slane %v3777, 7
      %v3780 = vshll.u32 %v3576, 16
      %v3782 = vor.u32 %v3779, %v3780
      %v3783 = vrot.slane %v3779, 4
      %v3785 = vshrl.u32 %v3577, 16
      %v3787 = vrot.slane %v3785, 7
      %v3788 = vshll.u32 %v3577, 16
      %v3790 = vor.u32 %v3787, %v3788
      %v3791 = vsel %vm3588, %v3783, %v3790
      %v3792 = vrot.slane %v3787, 4
      %v3794 = vshrl.u32 %v3578, 16
      %v3796 = vrot.slane %v3794, 7
      %v3797 = vshll.u32 %v3578, 16
      %v3799 = vor.u32 %v3796, %v3797
      %v3800 = vrot.slane %v3796, 4
      %v3802 = vshrl.u32 %v3579, 16
      %v3804 = vrot.slane %v3802, 7
      %v3805 = vshll.u32 %v3579, 16
      %v3807 = vor.u32 %v3804, %v3805
      %v3808 = vsel %vm3588, %v3800, %v3807
      %v3809 = vrot.slane %v3804, 4
      %v3811 = vshrl.u32 %v3580, 16
      %v3813 = vrot.slane %v3811, 7
      %v3814 = vshll.u32 %v3580, 16
      %v3816 = vor.u32 %v3813, %v3814
      %v3817 = vrot.slane %v3813, 4
      %v3819 = vshrl.u32 %v3581, 16
      %v3821 = vrot.slane %v3819, 7
      %v3822 = vshll.u32 %v3581, 16
      %v3824 = vor.u32 %v3821, %v3822
      %v3825 = vsel %vm3588, %v3817, %v3824
      %v3826 = vrot.slane %v3821, 4
      %v3828 = vshrl.u32 %v3582, 16
      %v3830 = vrot.slane %v3828, 7
      %v3831 = vshll.u32 %v3582, 16
      %v3833 = vor.u32 %v3830, %v3831
      %v3834 = vrot.slane %v3830, 4
      %v3836 = vshrl.u32 %v3583, 16
      %v3838 = vrot.slane %v3836, 7
      %v3839 = vshll.u32 %v3583, 16
      %v3841 = vor.u32 %v3838, %v3839
      %v3842 = vsel %vm3588, %v3834, %v3841
      %v3843 = vrot.slane %v3838, 4
      %v3845 = vshrl.u32 %v3584, 16
      %v3847 = vrot.slane %v3845, 7
      %v3848 = vshll.u32 %v3584, 16
      %v3850 = vor.u32 %v3847, %v3848
      %v3851 = vrot.slane %v3847, 4
      %v3853 = vshrl.u32 %v3585, 16
      %v3855 = vrot.slane %v3853, 7
      %v3856 = vshll.u32 %v3585, 16
      %v3858 = vor.u32 %v3855, %v3856
      %v3859 = vsel %vm3588, %v3851, %v3858
      %v3860 = vrot.slane %v3855, 4
      %s3909 = scalar_lea.vmem %s231, 12
      %vm3910 = vcmask 1043456
      %vm3911 = vsmask.f32 7938
      %vm3912 = vmand %vm3910, %vm3911
      %v3913 = vld [vmem:[%s3909] sm:$0xf]
      %v3914 = vsel %vm3912, %v3595, %v3913
      %3915 = vst [vmem:[%s3909] sm:$0xf] %v3914
      %3916 = vst [vmem:[%s3909 + $0x4] sm:$0xf] %v3604
      %vm3917 = vcmask 1040384
      %vm3918 = vmand %vm3917, %vm3586
      %v3919 = vld [vmem:[%s3909 + $0x8] sm:$0x1]
      %v3920 = vsel %vm3918, %v3605, %v3919
      %3921 = vst [vmem:[%s3909 + $0x8] sm:$0x1] %v3920
      %v3922 = vld [vmem:[%s3909 + $0xc] sm:$0xf]
      %v3923 = vsel %vm3912, %v3612, %v3922
      %3924 = vst [vmem:[%s3909 + $0xc] sm:$0xf] %v3923
      %3925 = vst [vmem:[%s3909 + $0x10] sm:$0xf] %v3621
      %v3926 = vld [vmem:[%s3909 + $0x14] sm:$0x1]
      %v3927 = vsel %vm3918, %v3622, %v3926
      %3928 = vst [vmem:[%s3909 + $0x14] sm:$0x1] %v3927
      %v3929 = vld [vmem:[%s3909 + $0x18] sm:$0xf]
      %v3930 = vsel %vm3912, %v3629, %v3929
      %3931 = vst [vmem:[%s3909 + $0x18] sm:$0xf] %v3930
      %3932 = vst [vmem:[%s3909 + $0x1c] sm:$0xf] %v3638
      %v3933 = vld [vmem:[%s3909 + $0x20] sm:$0x1]
      %v3934 = vsel %vm3918, %v3639, %v3933
      %3935 = vst [vmem:[%s3909 + $0x20] sm:$0x1] %v3934
      %v3936 = vld [vmem:[%s3909 + $0x24] sm:$0xf]
      %v3937 = vsel %vm3912, %v3646, %v3936
      %3938 = vst [vmem:[%s3909 + $0x24] sm:$0xf] %v3937
      %3939 = vst [vmem:[%s3909 + $0x28] sm:$0xf] %v3655
      %v3940 = vld [vmem:[%s3909 + $0x2c] sm:$0x1]
      %v3941 = vsel %vm3918, %v3656, %v3940
      %3942 = vst [vmem:[%s3909 + $0x2c] sm:$0x1] %v3941
      %v3943 = vld [vmem:[%s3909 + $0x30] sm:$0xf]
      %v3944 = vsel %vm3912, %v3663, %v3943
      %3945 = vst [vmem:[%s3909 + $0x30] sm:$0xf] %v3944
      %3946 = vst [vmem:[%s3909 + $0x34] sm:$0xf] %v3672
      %v3947 = vld [vmem:[%s3909 + $0x38] sm:$0x1]
      %v3948 = vsel %vm3918, %v3673, %v3947
      %3949 = vst [vmem:[%s3909 + $0x38] sm:$0x1] %v3948
      %v3950 = vld [vmem:[%s3909 + $0x3c] sm:$0xf]
      %v3951 = vsel %vm3912, %v3680, %v3950
      %3952 = vst [vmem:[%s3909 + $0x3c] sm:$0xf] %v3951
      %3953 = vst [vmem:[%s3909 + $0x40] sm:$0xf] %v3689
      %v3954 = vld [vmem:[%s3909 + $0x44] sm:$0x1]
      %v3955 = vsel %vm3918, %v3690, %v3954
      %3956 = vst [vmem:[%s3909 + $0x44] sm:$0x1] %v3955
      %v3957 = vld [vmem:[%s3909 + $0x48] sm:$0xf]
      %v3958 = vsel %vm3912, %v3697, %v3957
      %3959 = vst [vmem:[%s3909 + $0x48] sm:$0xf] %v3958
      %3960 = vst [vmem:[%s3909 + $0x4c] sm:$0xf] %v3706
      %v3961 = vld [vmem:[%s3909 + $0x50] sm:$0x1]
      %v3962 = vsel %vm3918, %v3707, %v3961
      %3963 = vst [vmem:[%s3909 + $0x50] sm:$0x1] %v3962
      %v3964 = vld [vmem:[%s3909 + $0x54] sm:$0xf]
      %v3965 = vsel %vm3912, %v3714, %v3964
      %3966 = vst [vmem:[%s3909 + $0x54] sm:$0xf] %v3965
      %3967 = vst [vmem:[%s3909 + $0x58] sm:$0xf] %v3723
      %v3968 = vld [vmem:[%s3909 + $0x5c] sm:$0x1]
      %v3969 = vsel %vm3918, %v3724, %v3968
      %3970 = vst [vmem:[%s3909 + $0x5c] sm:$0x1] %v3969
      %v3971 = vld [vmem:[%s3909 + $0x60] sm:$0xf]
      %v3972 = vsel %vm3912, %v3731, %v3971
      %3973 = vst [vmem:[%s3909 + $0x60] sm:$0xf] %v3972
      %3974 = vst [vmem:[%s3909 + $0x64] sm:$0xf] %v3740
      %v3975 = vld [vmem:[%s3909 + $0x68] sm:$0x1]
      %v3976 = vsel %vm3918, %v3741, %v3975
      %3977 = vst [vmem:[%s3909 + $0x68] sm:$0x1] %v3976
      %v3978 = vld [vmem:[%s3909 + $0x6c] sm:$0xf]
      %v3979 = vsel %vm3912, %v3748, %v3978
      %3980 = vst [vmem:[%s3909 + $0x6c] sm:$0xf] %v3979
      %3981 = vst [vmem:[%s3909 + $0x70] sm:$0xf] %v3757
      %v3982 = vld [vmem:[%s3909 + $0x74] sm:$0x1]
      %v3983 = vsel %vm3918, %v3758, %v3982
      %3984 = vst [vmem:[%s3909 + $0x74] sm:$0x1] %v3983
      %v3985 = vld [vmem:[%s3909 + $0x78] sm:$0xf]
      %v3986 = vsel %vm3912, %v3765, %v3985
      %3987 = vst [vmem:[%s3909 + $0x78] sm:$0xf] %v3986
      %3988 = vst [vmem:[%s3909 + $0x7c] sm:$0xf] %v3774
      %v3989 = vld [vmem:[%s3909 + $0x80] sm:$0x1]
      %v3990 = vsel %vm3918, %v3775, %v3989
      %3991 = vst [vmem:[%s3909 + $0x80] sm:$0x1] %v3990
      %v3992 = vld [vmem:[%s3909 + $0x84] sm:$0xf]
      %v3993 = vsel %vm3912, %v3782, %v3992
      %3994 = vst [vmem:[%s3909 + $0x84] sm:$0xf] %v3993
      %3995 = vst [vmem:[%s3909 + $0x88] sm:$0xf] %v3791
      %v3996 = vld [vmem:[%s3909 + $0x8c] sm:$0x1]
      %v3997 = vsel %vm3918, %v3792, %v3996
      %3998 = vst [vmem:[%s3909 + $0x8c] sm:$0x1] %v3997
      %v3999 = vld [vmem:[%s3909 + $0x90] sm:$0xf]
      %v4000 = vsel %vm3912, %v3799, %v3999
      %4001 = vst [vmem:[%s3909 + $0x90] sm:$0xf] %v4000
      %4002 = vst [vmem:[%s3909 + $0x94] sm:$0xf] %v3808
      %v4003 = vld [vmem:[%s3909 + $0x98] sm:$0x1]
      %v4004 = vsel %vm3918, %v3809, %v4003
      %4005 = vst [vmem:[%s3909 + $0x98] sm:$0x1] %v4004
      %v4006 = vld [vmem:[%s3909 + $0x9c] sm:$0xf]
      %v4007 = vsel %vm3912, %v3816, %v4006
      %4008 = vst [vmem:[%s3909 + $0x9c] sm:$0xf] %v4007
      %4009 = vst [vmem:[%s3909 + $0xa0] sm:$0xf] %v3825
      %v4010 = vld [vmem:[%s3909 + $0xa4] sm:$0x1]
      %v4011 = vsel %vm3918, %v3826, %v4010
      %4012 = vst [vmem:[%s3909 + $0xa4] sm:$0x1] %v4011
      %v4013 = vld [vmem:[%s3909 + $0xa8] sm:$0xf]
      %v4014 = vsel %vm3912, %v3833, %v4013
      %4015 = vst [vmem:[%s3909 + $0xa8] sm:$0xf] %v4014
      %4016 = vst [vmem:[%s3909 + $0xac] sm:$0xf] %v3842
      %v4017 = vld [vmem:[%s3909 + $0xb0] sm:$0x1]
      %v4018 = vsel %vm3918, %v3843, %v4017
      %4019 = vst [vmem:[%s3909 + $0xb0] sm:$0x1] %v4018
      %v4020 = vld [vmem:[%s3909 + $0xb4] sm:$0xf]
      %v4021 = vsel %vm3912, %v3850, %v4020
      %4022 = vst [vmem:[%s3909 + $0xb4] sm:$0xf] %v4021
      %4023 = vst [vmem:[%s3909 + $0xb8] sm:$0xf] %v3859
      %v4024 = vld [vmem:[%s3909 + $0xbc] sm:$0x1]
      %v4025 = vsel %vm3918, %v3860, %v4024
      %4026 = vst [vmem:[%s3909 + $0xbc] sm:$0x1] %v4025
      %p4027 = scmp.lt.s32.totalorder %s17, 1
      %s4028 = scalar_select %p4027, %s17, 1
      %s4029 = smul.addr %s4028, 54
      %s4030 = smul.addr %s4029, 4
      %s4031 = scalar_lea.vmem %s4, %s4030
      %p4032 = scmp.lt.s32.totalorder %s17, 1
      %s4033 = scalar_select %p4032, %s17, 1
      %s4034 = smul.addr %s4033, 8
      %s4035 = scalar_lea.vmem %s5, %s4034
      // Predicated region
      $region37: #{conv_block_forward.3} parent=35 // pred_check
        %p4036 = pneg %p124
      $region38: #{conv_block_forward.3} parent=35 // pred_check_branch
        %4038 = sbr.rel (%p4036) target = $region40
      $region39: #{conv_block_forward.3} parent=35 // pred_region
        _
      $region40: #{conv_block_forward.3} parent=35 // pred_fallthru
        _
      // Predicated region
      $region41: #{conv_block_forward.3} parent=35 // pred_check
        %p4039 = pneg %p150
      $region42: #{conv_block_forward.3} parent=35 // pred_check_branch
        %4041 = sbr.rel (%p4039) target = $region44
      $region43: #{conv_block_forward.3} parent=35 // pred_region
        _
      $region44: #{conv_block_forward.3} parent=35 // pred_fallthru
        _
    $region36: #{conv_block_forward.3} parent=5 // pred_fallthru
      _
    %p4042 = scmp.le.s32.totalorder 2, %s12
    // Predicated region
    $region45: #{conv_block_forward.3} parent=5 // pred_check
      %p4043 = pneg %p4042
    $region46: #{conv_block_forward.3} parent=5 // pred_check_branch
      %4045 = sbr.rel (%p4043) target = $region48
    $region47: #{conv_block_forward.3} parent=5 // pred_region
      %s4046 = ssub.s32 %s12, 2
      // Predicated region
      $region49: #{conv_block_forward.3} parent=47 // pred_check
        %p4047 = pneg %p130
      $region50: #{conv_block_forward.3} parent=47 // pred_check_branch
        %4049 = sbr.rel (%p4047) target = $region52
      $region51: #{conv_block_forward.3} parent=47 // pred_region
        %p4050 = scmp.lt.s32.totalorder %s18, 1
        %s4051 = scalar_select %p4050, %s18, 1
        %s4052 = smul.addr %s4051, 54
        %s4053 = smul.addr %s4052, 4
        %s4054 = scalar_lea.vmem %s4, %s4053
      $region52: #{conv_block_forward.3} parent=47 // pred_fallthru
        _
      // Predicated region
      $region53: #{conv_block_forward.3} parent=47 // pred_check
        %p4055 = pneg %p156
      $region54: #{conv_block_forward.3} parent=47 // pred_check_branch
        %4057 = sbr.rel (%p4055) target = $region56
      $region55: #{conv_block_forward.3} parent=47 // pred_region
        %p4058 = scmp.lt.s32.totalorder %s18, 1
        %s4059 = scalar_select %p4058, %s18, 1
        %s4060 = smul.addr %s4059, 8
        %s4061 = scalar_lea.vmem %s5, %s4060
      $region56: #{conv_block_forward.3} parent=47 // pred_fallthru
        _
    $region48: #{conv_block_forward.3} parent=5 // pred_fallthru
      _
  $region6: #{conv_block_forward.3} parent=0 // loop_footer
    %s16 = sadd.s32 1, %s12
  $region7: #{conv_block_forward.3} parent=0 // loop_footer_branch
    %11 = sbr.rel target = $region3
  $region8: #{conv_block_forward.3} parent=0 // loop_exit
    _

</llo_original>
